<compile_context>
chip_gen: v7x
topology: tpu7x:2x2x1
jax: 0.10.0
libtpu: 0.0.40
codegen_flags: <defaults>
</compile_context>

<pallas_src>
import jax
import jax.numpy as jnp
from jax import lax
from jax.experimental import pallas as pl
from jax.experimental.pallas import tpu as pltpu

D = 16                 # voxel grid edge
LANES = D * D          # fused X*Y lane width = 256
AVE_K = 5              # Morph(_ave_kernel_size=5)
STD_K = 5              # calculate_patched_std(_kernel_size=5)
BIG = 1e30             # finite stand-in for +inf inside the distance kernel

NORM1, NORM2, NORM3 = 1.0, 0.7071, 0.5773

# direction / displacement tables in (z, x, y) channel order (Python floats ->
# compile-time constants inside the kernel; no in-kernel gather needed).
DIRS = [
    [NORM1, 0.0, 0.0], [-NORM1, 0.0, 0.0], [0.0, NORM1, 0.0], [0.0, -NORM1, 0.0],
    [0.0, 0.0, NORM1], [0.0, 0.0, -NORM1],
    [NORM2, NORM2, 0.0], [NORM2, -NORM2, 0.0], [-NORM2, NORM2, 0.0], [-NORM2, -NORM2, 0.0],
    [NORM2, 0.0, NORM2], [NORM2, 0.0, -NORM2], [-NORM2, 0.0, NORM2], [-NORM2, 0.0, -NORM2],
    [0.0, NORM2, NORM2], [0.0, NORM2, -NORM2], [0.0, -NORM2, NORM2], [0.0, -NORM2, -NORM2],
    [NORM3, NORM3, NORM3], [NORM3, NORM3, -NORM3], [NORM3, -NORM3, NORM3],
    [-NORM3, NORM3, NORM3], [-NORM3, -NORM3, NORM3], [-NORM3, NORM3, -NORM3],
    [NORM3, -NORM3, -NORM3], [-NORM3, -NORM3, -NORM3]]

DISPS = [
    [1.0, 0.5, 0.5], [0.0, 0.5, 0.5], [0.5, 1.0, 0.5], [0.5, 0.0, 0.5],
    [0.5, 0.5, 1.0], [0.5, 0.5, 0.0], [1.0, 1.0, 0.5], [1.0, 0.0, 0.5],
    [0.0, 1.0, 0.5], [0.0, 0.0, 0.5], [1.0, 0.5, 1.0], [1.0, 0.5, 0.0],
    [0.0, 0.5, 1.0], [0.0, 0.5, 0.0], [0.5, 1.0, 1.0], [0.5, 1.0, 0.0],
    [0.5, 0.0, 1.0], [0.5, 0.0, 0.0], [1.0, 1.0, 1.0], [1.0, 1.0, 0.0],
    [1.0, 0.0, 1.0], [0.0, 1.0, 1.0], [0.0, 0.0, 1.0], [0.0, 1.0, 0.0],
    [1.0, 0.0, 0.0], [0.0, 0.0, 0.0]]


# ----------------------------------------------------------------------------
# in-kernel helpers for the fused (Z, C*X*Y) lane layout
# ----------------------------------------------------------------------------
def _make_shifts(shape):
  """Zero-filled per-axis shift ops; out[i] = in[i + off] along that axis."""
  z_extent = shape[0]
  lane = lax.broadcasted_iota(jnp.int32, shape, 1)
  row = lax.broadcasted_iota(jnp.int32, shape, 0)
  yd = lane & (D - 1)            # y digit inside a 16x16 channel block
  xd = (lane >> 4) & (D - 1)     # x digit inside a 16x16 channel block

  def shift_z(x, off):
    if off == 0:
      return x
    ok = (row < z_extent - off) if off > 0 else (row >= -off)
    return jnp.where(ok, jnp.roll(x, -off, axis=0), 0.0)

  def shift_x(x, off):
    if off == 0:
      return x
    ok = (xd < D - off) if off > 0 else (xd >= -off)
    return jnp.where(ok, jnp.roll(x, -D * off, axis=1), 0.0)

  def shift_y(x, off):
    if off == 0:
      return x
    ok = (yd < D - off) if off > 0 else (yd >= -off)
    return jnp.where(ok, jnp.roll(x, -off, axis=1), 0.0)

  return (shift_z, shift_x, shift_y), (row, xd, yd)


def _box3(x, sh):
  return sh(x, -1) + x + sh(x, 1)


def _box5(x, sh):
  return sh(x, -2) + sh(x, -1) + x + sh(x, 1) + sh(x, 2)


def _box3_all(x, shifts):
  for sh in shifts:
    x = _box3(x, sh)
  return x


def _box5_all(x, shifts):
  for sh in shifts:
    x = _box5(x, sh)
  return x


def _reflect_box5(x, sh, pos, n):
  """5-wide box conv along one axis with reflect padding (pad=2), length n."""
  sm2, sm1, sp1, sp2 = sh(x, -2), sh(x, -1), sh(x, 1), sh(x, 2)
  out = sm2 + sm1 + x + sp1 + sp2
  out = out + jnp.where(pos == 0, sp1 + sp2, 0.0)
  out = out + jnp.where(pos == 1, x, 0.0)
  out = out + jnp.where(pos == n - 2, x, 0.0)
  out = out + jnp.where(pos == n - 1, sm1 + sm2, 0.0)
  return out


# ----------------------------------------------------------------------------
# Kernel 1: surface detection + slopes + averaged slopes + bumpiness (fused)
# ----------------------------------------------------------------------------
def _fused_conv_kernel(v_ref, mask_ref, slopes_ref, bump_ref):
  v = v_ref[...]                                        # (16, 256)
  shifts1, _ = _make_shifts(v.shape)

  # F.conv3d(voxel, surface_kernel): 3^3 box of ones with a zero center.
  sconv = _box3_all(v, shifts1) - v
  s = sconv * v
  s = jnp.where(s == 0.0, 128.0, s)
  s = jnp.where(s < 26.0, 1.0, s)
  s = jnp.where(s == 128.0, 0.0, s)
  mask = (s == 1.0).astype(jnp.float32)
  s = jnp.where(s == 26.0, 1.0, s)
  mask_ref[...] = mask

  # slope convs, channel order (z, x, y)
  raw = []
  for ax in range(3):
    sh = shifts1[ax]
    d = sh(s, 1) - sh(s, -1)                 # [-1, 0, +1] along `ax`
    for o in range(3):
      if o != ax:
        d = _box3(d, shifts1[o])             # ones over the other two axes
    raw.append(d * mask)
  divs = [(r != 0.0).astype(jnp.float32) for r in raw]

  # 5^3 averaging box conv for all six channels in one packed lane slab
  slab = jnp.concatenate(raw + divs, axis=1)            # (16, 1536)
  shiftsw, (roww, xdw, ydw) = _make_shifts(slab.shape)
  slab = _box5_all(slab, shiftsw)
  num = slab[:, :3 * LANES]
  den = slab[:, 3 * LANES:]
  den = jnp.where(den == 0.0, 1.0, den)
  avg = num / den                                       # (16, 768): avg_z|x|y
  slopes_ref[...] = avg

  # bumpiness: 5^3 patched std (reflect pad, unbiased) on the averaged slopes
  slab2 = jnp.concatenate([avg, avg * avg], axis=1)     # (16, 1536)
  for sh, pos in ((shiftsw[2], ydw), (shiftsw[1], xdw), (shiftsw[0], roww)):
    slab2 = _reflect_box5(slab2, sh, pos, D)
  cnt = float(STD_K ** 3)
  ssum = slab2[:, :3 * LANES]
  ssq = slab2[:, 3 * LANES:]
  mean = ssum * (1.0 / cnt)
  var = (ssq - cnt * mean * mean) * (1.0 / (cnt - 1.0))  # torch .std default
  var = jnp.maximum(var, 0.0)                            # std^2 == clamped var
  bump = var[:, :LANES] + var[:, LANES:2 * LANES] + var[:, 2 * LANES:]
  bump = jnp.where(mask == 0.0, 0.0, bump)
  bump = _box5_all(bump, shifts1)                        # 'same' zero-pad conv
  bump = jnp.where(mask == 0.0, 0.0, bump)
  bump_ref[...] = bump


# ----------------------------------------------------------------------------
# Kernel 2: ray / grid-plane intersection distances (squared), per axis
# ----------------------------------------------------------------------------
def _distance_kernel(pk_ref, slopes_ref, out_ref):
  a_id = pl.program_id(0)                               # plane-normal axis
  sz = slopes_ref[:, 0:LANES]
  sx = slopes_ref[:, LANES:2 * LANES]
  sy = slopes_ref[:, 2 * LANES:3 * LANES]
  shp = sz.shape                                        # (16, 256)

  lane = lax.broadcasted_iota(jnp.int32, shp, 1)
  row = lax.broadcasted_iota(jnp.int32, shp, 0)
  izf = row.astype(jnp.float32)
  ixf = ((lane >> 4) & (D - 1)).astype(jnp.float32)
  iyf = (lane & (D - 1)).astype(jnp.float32)

  # argmax over the 26 direction vectors -> displacement (unrolled selects,
  # strict ">" + -BIG init == first-occurrence argmax, as in torch/jnp)
  m = jnp.full(shp, -BIG, jnp.float32)
  pz = jnp.zeros(shp, jnp.float32)
  px = jnp.zeros(shp, jnp.float32)
  py = jnp.zeros(shp, jnp.float32)
  for di in range(26):
    dz, dx, dy = DIRS[di]
    dot = sz * dz + sx * dx + sy * dy
    upd = dot > m
    m = jnp.where(upd, dot, m)
    pz = jnp.where(upd, DISPS[di][0], pz)
    px = jnp.where(upd, DISPS[di][1], px)
    py = jnp.where(upd, DISPS[di][2], py)
  pz = pz + izf
  px = px + ixf
  py = py + iyf

  # select plane-normal ("a") and in-plane ("o1","o2") roles for this axis
  w0 = jnp.maximum(1 - a_id, 0).astype(jnp.float32)     # axis == 0 (z planes)
  w2 = jnp.maximum(a_id - 1, 0).astype(jnp.float32)     # axis == 2 (y planes)
  w1 = 1.0 - w0 - w2                                    # axis == 1 (x planes)
  s_a = sz * w0 + sx * w1 + sy * w2
  p_a = pz * w0 + px * w1 + py * w2
  s_o1 = sx * w0 + sz * (w1 + w2)                       # o1: x for ax0, else z
  p_o1 = px * w0 + pz * (w1 + w2)
  s_o2 = sy * (w0 + w1) + sx * w2                       # o2: y for ax0/1, x for ax2
  p_o2 = py * (w0 + w1) + px * w2

  wbase0 = a_id * (D * D)
  fD = float(D)

  def body(r, shortest):
    rf = r.astype(jnp.float32)
    # zero slope components give inf/nan here; the validity chain below
    # filters them (NaN comparisons are False), matching the reference.
    t = (rf - p_a) / s_a
    c1 = s_o1 * t + p_o1
    c2 = s_o2 * t + p_o2
    tr1 = jnp.where(c1 >= 0.0, jnp.floor(c1), -jnp.floor(-c1))   # trunc
    tr2 = jnp.where(c2 >= 0.0, jnp.floor(c2), -jnp.floor(-c2))
    valid = (tr1 >= 0.0) & (tr1 < fD) & (tr2 >= 0.0) & (tr2 < fD)

    # bit-packed surface-mask plane lookup: 16-way row-word select (SMEM
    # scalars) followed by a 16-way constant-shift bit select. No gathers.
    wbase = wbase0 + r * D
    word = jnp.zeros(shp, jnp.int32)
    for a_row in range(D):
      word = jnp.where(tr1 == float(a_row), pk_ref[wbase + a_row], word)
    bit = jnp.zeros(shp, jnp.int32)
    for b in range(D):
      bit = jnp.where(tr2 == float(b), (word >> b) & 1, bit)
    valid = valid & (bit > 0)

    d_a = rf - p_a
    d1 = tr1 - p_o1
    d2 = tr2 - p_o2
    validation = d_a * s_a + d1 * s_o1 + d2 * s_o2
    valid = valid & (validation > 0.0)
    dd = d_a * d_a + d1 * d1 + d2 * d2
    valid = valid & (dd > 1.7)
    dd = jnp.where(valid, dd, BIG)
    return jnp.minimum(shortest, dd)

  shortest = lax.fori_loop(0, D, body, jnp.full(shp, BIG, jnp.float32))
  out_ref[0] = shortest


# ----------------------------------------------------------------------------
# pallas_call wrappers
# ----------------------------------------------------------------------------
def _fused_conv(v2):
  spec1 = pl.BlockSpec((D, LANES), lambda i: (0, 0))
  spec3 = pl.BlockSpec((D, 3 * LANES), lambda i: (0, 0))
  return pl.pallas_call(
      _fused_conv_kernel,
      grid=(1,),
      in_specs=[spec1],
      out_specs=[spec1, spec3, spec1],
      out_shape=[jax.ShapeDtypeStruct((D, LANES), jnp.float32),
                 jax.ShapeDtypeStruct((D, 3 * LANES), jnp.float32),
                 jax.ShapeDtypeStruct((D, LANES), jnp.float32)],
  )(v2)


def _distance(packed, slopes_slab):
  grid_spec = pltpu.PrefetchScalarGridSpec(
      num_scalar_prefetch=1,                  # packed mask words -> SMEM
      grid=(3,),                              # one step per plane-normal axis
      in_specs=[pl.BlockSpec((D, 3 * LANES), lambda a, pk: (0, 0))],
      out_specs=pl.BlockSpec((1, D, LANES), lambda a, pk: (a, 0, 0)),
  )
  return pl.pallas_call(
      _distance_kernel,
      grid_spec=grid_spec,
      out_shape=jax.ShapeDtypeStruct((3, D, LANES), jnp.float32),
      compiler_params=pltpu.CompilerParams(
          dimension_semantics=("parallel",)),   # lets v7x use both TCs
  )(packed, slopes_slab)


# ----------------------------------------------------------------------------
# full forward
# ----------------------------------------------------------------------------
@jax.jit
def morph_forward(voxel):
  assert voxel.shape == (D, D, D), "kernels are specialized to 16^3 volumes"
  v2 = voxel.astype(jnp.float32).reshape(D, D * D)      # lane-dense layout

  mask2, slopes_slab, bump2 = _fused_conv(v2)

  # Bit-pack the surface-mask planes into 16-bit row words for the distance
  # kernel (trivial plain-JAX glue; no gathers).
  mask3i = mask2.reshape(D, D, D).astype(jnp.int32)
  w = jnp.left_shift(1, jnp.arange(D, dtype=jnp.int32))
  y_words = (mask3i * w[None, None, :]).sum(axis=2)     # [z, x], bits over y
  x_words = (mask3i * w[None, :, None]).sum(axis=1)     # [z, y], bits over x
  packed = jnp.stack([y_words,          # axis 0: plane r=z, rows=x, bits=y
                      y_words.T,        # axis 1: plane r=x, rows=z, bits=y
                      x_words.T])       # axis 2: plane r=y, rows=z, bits=x
  packed = packed.reshape(-1).astype(jnp.int32)         # (768,)

  dist_ax = _distance(packed, slopes_slab)              # (3, 16, 256)
  shortest = jnp.min(dist_ax, axis=0)
  dist2 = jnp.where(shortest >= 0.5 * BIG, 0.0, shortest)   # "isinf" -> 0
  dist2 = jnp.where(mask2 <= 0.0, 0.0, dist2)

  # distances are squared, exactly as the PyTorch reference returns them
  return dist2.reshape(D, D, D), bump2.reshape(D, D, D)


if __name__ == "__main__":
  key = jax.random.PRNGKey(0)
  # deterministic synthetic binary voxel occupancy (what the module expects)
  voxel_space = (jax.random.uniform(key, (D, D, D)) > 0.5).astype(jnp.float32)

  distance_tensor, bumpiness_tensor = morph_forward(voxel_space)
  jax.block_until_ready((distance_tensor, bumpiness_tensor))

  assert distance_tensor.shape == (D, D, D)
  assert bumpiness_tensor.shape == (D, D, D)
  assert bool(jnp.all(jnp.isfinite(distance_tensor)))
  assert bool(jnp.all(jnp.isfinite(bumpiness_tensor)))
  print("KERNEL_OK")
</pallas_src>

<mosaic_0001>
module attributes {stable_mosaic.version = 11 : i64} {
  func.func @_fused_conv_kernel(%arg0: i32, %arg1: memref<16x256xf32, #tpu.memory_space<vmem>>, %arg2: memref<16x256xf32, #tpu.memory_space<vmem>>, %arg3: memref<16x768xf32, #tpu.memory_space<vmem>>, %arg4: memref<16x256xf32, #tpu.memory_space<vmem>>) attributes {dimension_semantics = [#tpu.dimension_semantics<arbitrary>], iteration_bounds = array<i64: 1>, scalar_prefetch = 0 : i64, scratch_operands = 0 : i64, tpu.core_type = #tpu.core_type<tc>, window_params = [{pipeline_mode = #tpu.pipeline_mode<synchronous>, transform_indices = @transform_0, window_bounds = array<i64: 16, 256>}, {pipeline_mode = #tpu.pipeline_mode<synchronous>, transform_indices = @transform_1, window_bounds = array<i64: 16, 256>}, {pipeline_mode = #tpu.pipeline_mode<synchronous>, transform_indices = @transform_2, window_bounds = array<i64: 16, 768>}, {pipeline_mode = #tpu.pipeline_mode<synchronous>, transform_indices = @transform_3, window_bounds = array<i64: 16, 256>}]} {
    %c0 = arith.constant 0 : index
    %c0_0 = arith.constant 0 : index
    %0 = vector.load %arg1[%c0, %c0_0] : memref<16x256xf32, #tpu.memory_space<vmem>>, vector<16x256xf32>
    %1 = tpu.iota {dimensions = array<i32: 1>} : vector<16x256xi32>
    %2 = tpu.iota {dimensions = array<i32: 0>} : vector<16x256xi32>
    %c15_i32 = arith.constant 15 : i32
    %3 = vector.broadcast %c15_i32 : i32 to vector<16x256xi32>
    %4 = arith.andi %1, %3 : vector<16x256xi32>
    %c4_i32 = arith.constant 4 : i32
    %5 = vector.broadcast %c4_i32 : i32 to vector<16x256xi32>
    %6 = arith.shrsi %1, %5 : vector<16x256xi32>
    %c15_i32_1 = arith.constant 15 : i32
    %7 = vector.broadcast %c15_i32_1 : i32 to vector<16x256xi32>
    %8 = arith.andi %6, %7 : vector<16x256xi32>
    %c1_i32 = arith.constant 1 : i32
    %9 = vector.broadcast %c1_i32 : i32 to vector<16x256xi32>
    %10 = arith.cmpi sge, %2, %9 : vector<16x256xi32>
    %11 = vector.extract_strided_slice %0 {offsets = [15, 0], sizes = [1, 256], strides = [1, 1]} : vector<16x256xf32> to vector<1x256xf32>
    %12 = vector.extract_strided_slice %0 {offsets = [0, 0], sizes = [15, 256], strides = [1, 1]} : vector<16x256xf32> to vector<15x256xf32>
    %13 = tpu.concatenate %11, %12 in 0 : vector<1x256xf32>, vector<15x256xf32> -> vector<16x256xf32>
    %cst = arith.constant 0.000000e+00 : f32
    %14 = vector.broadcast %cst : f32 to vector<16x256xf32>
    %15 = arith.select %10, %13, %14 : vector<16x256xi1>, vector<16x256xf32>
    %16 = arith.addf %15, %0 : vector<16x256xf32>
    %c15_i32_2 = arith.constant 15 : i32
    %17 = vector.broadcast %c15_i32_2 : i32 to vector<16x256xi32>
    %18 = arith.cmpi slt, %2, %17 : vector<16x256xi32>
    %19 = vector.extract_strided_slice %0 {offsets = [1, 0], sizes = [15, 256], strides = [1, 1]} : vector<16x256xf32> to vector<15x256xf32>
    %20 = vector.extract_strided_slice %0 {offsets = [0, 0], sizes = [1, 256], strides = [1, 1]} : vector<16x256xf32> to vector<1x256xf32>
    %21 = tpu.concatenate %19, %20 in 0 : vector<15x256xf32>, vector<1x256xf32> -> vector<16x256xf32>
    %cst_3 = arith.constant 0.000000e+00 : f32
    %22 = vector.broadcast %cst_3 : f32 to vector<16x256xf32>
    %23 = arith.select %18, %21, %22 : vector<16x256xi1>, vector<16x256xf32>
    %24 = arith.addf %16, %23 : vector<16x256xf32>
    %c1_i32_4 = arith.constant 1 : i32
    %25 = vector.broadcast %c1_i32_4 : i32 to vector<16x256xi32>
    %26 = arith.cmpi sge, %8, %25 : vector<16x256xi32>
    %27 = vector.extract_strided_slice %24 {offsets = [0, 240], sizes = [16, 16], strides = [1, 1]} : vector<16x256xf32> to vector<16x16xf32>
    %28 = vector.extract_strided_slice %24 {offsets = [0, 0], sizes = [16, 240], strides = [1, 1]} : vector<16x256xf32> to vector<16x240xf32>
    %29 = tpu.concatenate %27, %28 in 1 : vector<16x16xf32>, vector<16x240xf32> -> vector<16x256xf32>
    %cst_5 = arith.constant 0.000000e+00 : f32
    %30 = vector.broadcast %cst_5 : f32 to vector<16x256xf32>
    %31 = arith.select %26, %29, %30 : vector<16x256xi1>, vector<16x256xf32>
    %32 = arith.addf %31, %24 : vector<16x256xf32>
    %c15_i32_6 = arith.constant 15 : i32
    %33 = vector.broadcast %c15_i32_6 : i32 to vector<16x256xi32>
    %34 = arith.cmpi slt, %8, %33 : vector<16x256xi32>
    %35 = vector.extract_strided_slice %24 {offsets = [0, 16], sizes = [16, 240], strides = [1, 1]} : vector<16x256xf32> to vector<16x240xf32>
    %36 = vector.extract_strided_slice %24 {offsets = [0, 0], sizes = [16, 16], strides = [1, 1]} : vector<16x256xf32> to vector<16x16xf32>
    %37 = tpu.concatenate %35, %36 in 1 : vector<16x240xf32>, vector<16x16xf32> -> vector<16x256xf32>
    %cst_7 = arith.constant 0.000000e+00 : f32
    %38 = vector.broadcast %cst_7 : f32 to vector<16x256xf32>
    %39 = arith.select %34, %37, %38 : vector<16x256xi1>, vector<16x256xf32>
    %40 = arith.addf %32, %39 : vector<16x256xf32>
    %c1_i32_8 = arith.constant 1 : i32
    %41 = vector.broadcast %c1_i32_8 : i32 to vector<16x256xi32>
    %42 = arith.cmpi sge, %4, %41 : vector<16x256xi32>
    %43 = vector.extract_strided_slice %40 {offsets = [0, 255], sizes = [16, 1], strides = [1, 1]} : vector<16x256xf32> to vector<16x1xf32>
    %44 = vector.extract_strided_slice %40 {offsets = [0, 0], sizes = [16, 255], strides = [1, 1]} : vector<16x256xf32> to vector<16x255xf32>
    %45 = tpu.concatenate %43, %44 in 1 : vector<16x1xf32>, vector<16x255xf32> -> vector<16x256xf32>
    %cst_9 = arith.constant 0.000000e+00 : f32
    %46 = vector.broadcast %cst_9 : f32 to vector<16x256xf32>
    %47 = arith.select %42, %45, %46 : vector<16x256xi1>, vector<16x256xf32>
    %48 = arith.addf %47, %40 : vector<16x256xf32>
    %c15_i32_10 = arith.constant 15 : i32
    %49 = vector.broadcast %c15_i32_10 : i32 to vector<16x256xi32>
    %50 = arith.cmpi slt, %4, %49 : vector<16x256xi32>
    %51 = vector.extract_strided_slice %40 {offsets = [0, 1], sizes = [16, 255], strides = [1, 1]} : vector<16x256xf32> to vector<16x255xf32>
    %52 = vector.extract_strided_slice %40 {offsets = [0, 0], sizes = [16, 1], strides = [1, 1]} : vector<16x256xf32> to vector<16x1xf32>
    %53 = tpu.concatenate %51, %52 in 1 : vector<16x255xf32>, vector<16x1xf32> -> vector<16x256xf32>
    %cst_11 = arith.constant 0.000000e+00 : f32
    %54 = vector.broadcast %cst_11 : f32 to vector<16x256xf32>
    %55 = arith.select %50, %53, %54 : vector<16x256xi1>, vector<16x256xf32>
    %56 = arith.addf %48, %55 : vector<16x256xf32>
    %57 = arith.subf %56, %0 : vector<16x256xf32>
    %58 = arith.mulf %57, %0 : vector<16x256xf32>
    %cst_12 = arith.constant 0.000000e+00 : f32
    %59 = vector.broadcast %cst_12 : f32 to vector<16x256xf32>
    %60 = arith.cmpf oeq, %58, %59 : vector<16x256xf32>
    %cst_13 = arith.constant 1.280000e+02 : f32
    %61 = vector.broadcast %cst_13 : f32 to vector<16x256xf32>
    %62 = arith.select %60, %61, %58 : vector<16x256xi1>, vector<16x256xf32>
    %cst_14 = arith.constant 2.600000e+01 : f32
    %63 = vector.broadcast %cst_14 : f32 to vector<16x256xf32>
    %64 = arith.cmpf olt, %62, %63 : vector<16x256xf32>
    %cst_15 = arith.constant 1.000000e+00 : f32
    %65 = vector.broadcast %cst_15 : f32 to vector<16x256xf32>
    %66 = arith.select %64, %65, %62 : vector<16x256xi1>, vector<16x256xf32>
    %cst_16 = arith.constant 1.280000e+02 : f32
    %67 = vector.broadcast %cst_16 : f32 to vector<16x256xf32>
    %68 = arith.cmpf oeq, %66, %67 : vector<16x256xf32>
    %cst_17 = arith.constant 0.000000e+00 : f32
    %69 = vector.broadcast %cst_17 : f32 to vector<16x256xf32>
    %70 = arith.select %68, %69, %66 : vector<16x256xi1>, vector<16x256xf32>
    %cst_18 = arith.constant 1.000000e+00 : f32
    %71 = vector.broadcast %cst_18 : f32 to vector<16x256xf32>
    %72 = arith.cmpf oeq, %70, %71 : vector<16x256xf32>
    %73 = arith.extui %72 : vector<16x256xi1> to vector<16x256xi32>
    %74 = arith.sitofp %73 : vector<16x256xi32> to vector<16x256xf32>
    %cst_19 = arith.constant 2.600000e+01 : f32
    %75 = vector.broadcast %cst_19 : f32 to vector<16x256xf32>
    %76 = arith.cmpf oeq, %70, %75 : vector<16x256xf32>
    %cst_20 = arith.constant 1.000000e+00 : f32
    %77 = vector.broadcast %cst_20 : f32 to vector<16x256xf32>
    %78 = arith.select %76, %77, %70 : vector<16x256xi1>, vector<16x256xf32>
    %c0_21 = arith.constant 0 : index
    %c0_22 = arith.constant 0 : index
    %79 = vector.load %arg2[%c0_21, %c0_22] : memref<16x256xf32, #tpu.memory_space<vmem>>, vector<16x256xf32>
    tpu.vector_store %arg2[%c0_21, %c0_22], %74 {strides = array<i32>} : memref<16x256xf32, #tpu.memory_space<vmem>>, vector<16x256xf32>,
    %c15_i32_23 = arith.constant 15 : i32
    %80 = vector.broadcast %c15_i32_23 : i32 to vector<16x256xi32>
    %81 = arith.cmpi slt, %2, %80 : vector<16x256xi32>
    %82 = vector.extract_strided_slice %78 {offsets = [1, 0], sizes = [15, 256], strides = [1, 1]} : vector<16x256xf32> to vector<15x256xf32>
    %83 = vector.extract_strided_slice %78 {offsets = [0, 0], sizes = [1, 256], strides = [1, 1]} : vector<16x256xf32> to vector<1x256xf32>
    %84 = tpu.concatenate %82, %83 in 0 : vector<15x256xf32>, vector<1x256xf32> -> vector<16x256xf32>
    %cst_24 = arith.constant 0.000000e+00 : f32
    %85 = vector.broadcast %cst_24 : f32 to vector<16x256xf32>
    %86 = arith.select %81, %84, %85 : vector<16x256xi1>, vector<16x256xf32>
    %c1_i32_25 = arith.constant 1 : i32
    %87 = vector.broadcast %c1_i32_25 : i32 to vector<16x256xi32>
    %88 = arith.cmpi sge, %2, %87 : vector<16x256xi32>
    %89 = vector.extract_strided_slice %78 {offsets = [15, 0], sizes = [1, 256], strides = [1, 1]} : vector<16x256xf32> to vector<1x256xf32>
    %90 = vector.extract_strided_slice %78 {offsets = [0, 0], sizes = [15, 256], strides = [1, 1]} : vector<16x256xf32> to vector<15x256xf32>
    %91 = tpu.concatenate %89, %90 in 0 : vector<1x256xf32>, vector<15x256xf32> -> vector<16x256xf32>
    %cst_26 = arith.constant 0.000000e+00 : f32
    %92 = vector.broadcast %cst_26 : f32 to vector<16x256xf32>
    %93 = arith.select %88, %91, %92 : vector<16x256xi1>, vector<16x256xf32>
    %94 = arith.subf %86, %93 : vector<16x256xf32>
    %c1_i32_27 = arith.constant 1 : i32
    %95 = vector.broadcast %c1_i32_27 : i32 to vector<16x256xi32>
    %96 = arith.cmpi sge, %8, %95 : vector<16x256xi32>
    %97 = vector.extract_strided_slice %94 {offsets = [0, 240], sizes = [16, 16], strides = [1, 1]} : vector<16x256xf32> to vector<16x16xf32>
    %98 = vector.extract_strided_slice %94 {offsets = [0, 0], sizes = [16, 240], strides = [1, 1]} : vector<16x256xf32> to vector<16x240xf32>
    %99 = tpu.concatenate %97, %98 in 1 : vector<16x16xf32>, vector<16x240xf32> -> vector<16x256xf32>
    %cst_28 = arith.constant 0.000000e+00 : f32
    %100 = vector.broadcast %cst_28 : f32 to vector<16x256xf32>
    %101 = arith.select %96, %99, %100 : vector<16x256xi1>, vector<16x256xf32>
    %102 = arith.addf %101, %94 : vector<16x256xf32>
    %c15_i32_29 = arith.constant 15 : i32
    %103 = vector.broadcast %c15_i32_29 : i32 to vector<16x256xi32>
    %104 = arith.cmpi slt, %8, %103 : vector<16x256xi32>
    %105 = vector.extract_strided_slice %94 {offsets = [0, 16], sizes = [16, 240], strides = [1, 1]} : vector<16x256xf32> to vector<16x240xf32>
    %106 = vector.extract_strided_slice %94 {offsets = [0, 0], sizes = [16, 16], strides = [1, 1]} : vector<16x256xf32> to vector<16x16xf32>
    %107 = tpu.concatenate %105, %106 in 1 : vector<16x240xf32>, vector<16x16xf32> -> vector<16x256xf32>
    %cst_30 = arith.constant 0.000000e+00 : f32
    %108 = vector.broadcast %cst_30 : f32 to vector<16x256xf32>
    %109 = arith.select %104, %107, %108 : vector<16x256xi1>, vector<16x256xf32>
    %110 = arith.addf %102, %109 : vector<16x256xf32>
    %c1_i32_31 = arith.constant 1 : i32
    %111 = vector.broadcast %c1_i32_31 : i32 to vector<16x256xi32>
    %112 = arith.cmpi sge, %4, %111 : vector<16x256xi32>
    %113 = vector.extract_strided_slice %110 {offsets = [0, 255], sizes = [16, 1], strides = [1, 1]} : vector<16x256xf32> to vector<16x1xf32>
    %114 = vector.extract_strided_slice %110 {offsets = [0, 0], sizes = [16, 255], strides = [1, 1]} : vector<16x256xf32> to vector<16x255xf32>
    %115 = tpu.concatenate %113, %114 in 1 : vector<16x1xf32>, vector<16x255xf32> -> vector<16x256xf32>
    %cst_32 = arith.constant 0.000000e+00 : f32
    %116 = vector.broadcast %cst_32 : f32 to vector<16x256xf32>
    %117 = arith.select %112, %115, %116 : vector<16x256xi1>, vector<16x256xf32>
    %118 = arith.addf %117, %110 : vector<16x256xf32>
    %c15_i32_33 = arith.constant 15 : i32
    %119 = vector.broadcast %c15_i32_33 : i32 to vector<16x256xi32>
    %120 = arith.cmpi slt, %4, %119 : vector<16x256xi32>
    %121 = vector.extract_strided_slice %110 {offsets = [0, 1], sizes = [16, 255], strides = [1, 1]} : vector<16x256xf32> to vector<16x255xf32>
    %122 = vector.extract_strided_slice %110 {offsets = [0, 0], sizes = [16, 1], strides = [1, 1]} : vector<16x256xf32> to vector<16x1xf32>
    %123 = tpu.concatenate %121, %122 in 1 : vector<16x255xf32>, vector<16x1xf32> -> vector<16x256xf32>
    %cst_34 = arith.constant 0.000000e+00 : f32
    %124 = vector.broadcast %cst_34 : f32 to vector<16x256xf32>
    %125 = arith.select %120, %123, %124 : vector<16x256xi1>, vector<16x256xf32>
    %126 = arith.addf %118, %125 : vector<16x256xf32>
    %127 = arith.mulf %126, %74 : vector<16x256xf32>
    %c15_i32_35 = arith.constant 15 : i32
    %128 = vector.broadcast %c15_i32_35 : i32 to vector<16x256xi32>
    %129 = arith.cmpi slt, %8, %128 : vector<16x256xi32>
    %130 = vector.extract_strided_slice %78 {offsets = [0, 16], sizes = [16, 240], strides = [1, 1]} : vector<16x256xf32> to vector<16x240xf32>
    %131 = vector.extract_strided_slice %78 {offsets = [0, 0], sizes = [16, 16], strides = [1, 1]} : vector<16x256xf32> to vector<16x16xf32>
    %132 = tpu.concatenate %130, %131 in 1 : vector<16x240xf32>, vector<16x16xf32> -> vector<16x256xf32>
    %cst_36 = arith.constant 0.000000e+00 : f32
    %133 = vector.broadcast %cst_36 : f32 to vector<16x256xf32>
    %134 = arith.select %129, %132, %133 : vector<16x256xi1>, vector<16x256xf32>
    %c1_i32_37 = arith.constant 1 : i32
    %135 = vector.broadcast %c1_i32_37 : i32 to vector<16x256xi32>
    %136 = arith.cmpi sge, %8, %135 : vector<16x256xi32>
    %137 = vector.extract_strided_slice %78 {offsets = [0, 240], sizes = [16, 16], strides = [1, 1]} : vector<16x256xf32> to vector<16x16xf32>
    %138 = vector.extract_strided_slice %78 {offsets = [0, 0], sizes = [16, 240], strides = [1, 1]} : vector<16x256xf32> to vector<16x240xf32>
    %139 = tpu.concatenate %137, %138 in 1 : vector<16x16xf32>, vector<16x240xf32> -> vector<16x256xf32>
    %cst_38 = arith.constant 0.000000e+00 : f32
    %140 = vector.broadcast %cst_38 : f32 to vector<16x256xf32>
    %141 = arith.select %136, %139, %140 : vector<16x256xi1>, vector<16x256xf32>
    %142 = arith.subf %134, %141 : vector<16x256xf32>
    %c1_i32_39 = arith.constant 1 : i32
    %143 = vector.broadcast %c1_i32_39 : i32 to vector<16x256xi32>
    %144 = arith.cmpi sge, %2, %143 : vector<16x256xi32>
    %145 = vector.extract_strided_slice %142 {offsets = [15, 0], sizes = [1, 256], strides = [1, 1]} : vector<16x256xf32> to vector<1x256xf32>
    %146 = vector.extract_strided_slice %142 {offsets = [0, 0], sizes = [15, 256], strides = [1, 1]} : vector<16x256xf32> to vector<15x256xf32>
    %147 = tpu.concatenate %145, %146 in 0 : vector<1x256xf32>, vector<15x256xf32> -> vector<16x256xf32>
    %cst_40 = arith.constant 0.000000e+00 : f32
    %148 = vector.broadcast %cst_40 : f32 to vector<16x256xf32>
    %149 = arith.select %144, %147, %148 : vector<16x256xi1>, vector<16x256xf32>
    %150 = arith.addf %149, %142 : vector<16x256xf32>
    %c15_i32_41 = arith.constant 15 : i32
    %151 = vector.broadcast %c15_i32_41 : i32 to vector<16x256xi32>
    %152 = arith.cmpi slt, %2, %151 : vector<16x256xi32>
    %153 = vector.extract_strided_slice %142 {offsets = [1, 0], sizes = [15, 256], strides = [1, 1]} : vector<16x256xf32> to vector<15x256xf32>
    %154 = vector.extract_strided_slice %142 {offsets = [0, 0], sizes = [1, 256], strides = [1, 1]} : vector<16x256xf32> to vector<1x256xf32>
    %155 = tpu.concatenate %153, %154 in 0 : vector<15x256xf32>, vector<1x256xf32> -> vector<16x256xf32>
    %cst_42 = arith.constant 0.000000e+00 : f32
    %156 = vector.broadcast %cst_42 : f32 to vector<16x256xf32>
    %157 = arith.select %152, %155, %156 : vector<16x256xi1>, vector<16x256xf32>
    %158 = arith.addf %150, %157 : vector<16x256xf32>
    %c1_i32_43 = arith.constant 1 : i32
    %159 = vector.broadcast %c1_i32_43 : i32 to vector<16x256xi32>
    %160 = arith.cmpi sge, %4, %159 : vector<16x256xi32>
    %161 = vector.extract_strided_slice %158 {offsets = [0, 255], sizes = [16, 1], strides = [1, 1]} : vector<16x256xf32> to vector<16x1xf32>
    %162 = vector.extract_strided_slice %158 {offsets = [0, 0], sizes = [16, 255], strides = [1, 1]} : vector<16x256xf32> to vector<16x255xf32>
    %163 = tpu.concatenate %161, %162 in 1 : vector<16x1xf32>, vector<16x255xf32> -> vector<16x256xf32>
    %cst_44 = arith.constant 0.000000e+00 : f32
    %164 = vector.broadcast %cst_44 : f32 to vector<16x256xf32>
    %165 = arith.select %160, %163, %164 : vector<16x256xi1>, vector<16x256xf32>
    %166 = arith.addf %165, %158 : vector<16x256xf32>
    %c15_i32_45 = arith.constant 15 : i32
    %167 = vector.broadcast %c15_i32_45 : i32 to vector<16x256xi32>
    %168 = arith.cmpi slt, %4, %167 : vector<16x256xi32>
    %169 = vector.extract_strided_slice %158 {offsets = [0, 1], sizes = [16, 255], strides = [1, 1]} : vector<16x256xf32> to vector<16x255xf32>
    %170 = vector.extract_strided_slice %158 {offsets = [0, 0], sizes = [16, 1], strides = [1, 1]} : vector<16x256xf32> to vector<16x1xf32>
    %171 = tpu.concatenate %169, %170 in 1 : vector<16x255xf32>, vector<16x1xf32> -> vector<16x256xf32>
    %cst_46 = arith.constant 0.000000e+00 : f32
    %172 = vector.broadcast %cst_46 : f32 to vector<16x256xf32>
    %173 = arith.select %168, %171, %172 : vector<16x256xi1>, vector<16x256xf32>
    %174 = arith.addf %166, %173 : vector<16x256xf32>
    %175 = arith.mulf %174, %74 : vector<16x256xf32>
    %c15_i32_47 = arith.constant 15 : i32
    %176 = vector.broadcast %c15_i32_47 : i32 to vector<16x256xi32>
    %177 = arith.cmpi slt, %4, %176 : vector<16x256xi32>
    %178 = vector.extract_strided_slice %78 {offsets = [0, 1], sizes = [16, 255], strides = [1, 1]} : vector<16x256xf32> to vector<16x255xf32>
    %179 = vector.extract_strided_slice %78 {offsets = [0, 0], sizes = [16, 1], strides = [1, 1]} : vector<16x256xf32> to vector<16x1xf32>
    %180 = tpu.concatenate %178, %179 in 1 : vector<16x255xf32>, vector<16x1xf32> -> vector<16x256xf32>
    %cst_48 = arith.constant 0.000000e+00 : f32
    %181 = vector.broadcast %cst_48 : f32 to vector<16x256xf32>
    %182 = arith.select %177, %180, %181 : vector<16x256xi1>, vector<16x256xf32>
    %c1_i32_49 = arith.constant 1 : i32
    %183 = vector.broadcast %c1_i32_49 : i32 to vector<16x256xi32>
    %184 = arith.cmpi sge, %4, %183 : vector<16x256xi32>
    %185 = vector.extract_strided_slice %78 {offsets = [0, 255], sizes = [16, 1], strides = [1, 1]} : vector<16x256xf32> to vector<16x1xf32>
    %186 = vector.extract_strided_slice %78 {offsets = [0, 0], sizes = [16, 255], strides = [1, 1]} : vector<16x256xf32> to vector<16x255xf32>
    %187 = tpu.concatenate %185, %186 in 1 : vector<16x1xf32>, vector<16x255xf32> -> vector<16x256xf32>
    %cst_50 = arith.constant 0.000000e+00 : f32
    %188 = vector.broadcast %cst_50 : f32 to vector<16x256xf32>
    %189 = arith.select %184, %187, %188 : vector<16x256xi1>, vector<16x256xf32>
    %190 = arith.subf %182, %189 : vector<16x256xf32>
    %c1_i32_51 = arith.constant 1 : i32
    %191 = vector.broadcast %c1_i32_51 : i32 to vector<16x256xi32>
    %192 = arith.cmpi sge, %2, %191 : vector<16x256xi32>
    %193 = vector.extract_strided_slice %190 {offsets = [15, 0], sizes = [1, 256], strides = [1, 1]} : vector<16x256xf32> to vector<1x256xf32>
    %194 = vector.extract_strided_slice %190 {offsets = [0, 0], sizes = [15, 256], strides = [1, 1]} : vector<16x256xf32> to vector<15x256xf32>
    %195 = tpu.concatenate %193, %194 in 0 : vector<1x256xf32>, vector<15x256xf32> -> vector<16x256xf32>
    %cst_52 = arith.constant 0.000000e+00 : f32
    %196 = vector.broadcast %cst_52 : f32 to vector<16x256xf32>
    %197 = arith.select %192, %195, %196 : vector<16x256xi1>, vector<16x256xf32>
    %198 = arith.addf %197, %190 : vector<16x256xf32>
    %c15_i32_53 = arith.constant 15 : i32
    %199 = vector.broadcast %c15_i32_53 : i32 to vector<16x256xi32>
    %200 = arith.cmpi slt, %2, %199 : vector<16x256xi32>
    %201 = vector.extract_strided_slice %190 {offsets = [1, 0], sizes = [15, 256], strides = [1, 1]} : vector<16x256xf32> to vector<15x256xf32>
    %202 = vector.extract_strided_slice %190 {offsets = [0, 0], sizes = [1, 256], strides = [1, 1]} : vector<16x256xf32> to vector<1x256xf32>
    %203 = tpu.concatenate %201, %202 in 0 : vector<15x256xf32>, vector<1x256xf32> -> vector<16x256xf32>
    %cst_54 = arith.constant 0.000000e+00 : f32
    %204 = vector.broadcast %cst_54 : f32 to vector<16x256xf32>
    %205 = arith.select %200, %203, %204 : vector<16x256xi1>, vector<16x256xf32>
    %206 = arith.addf %198, %205 : vector<16x256xf32>
    %c1_i32_55 = arith.constant 1 : i32
    %207 = vector.broadcast %c1_i32_55 : i32 to vector<16x256xi32>
    %208 = arith.cmpi sge, %8, %207 : vector<16x256xi32>
    %209 = vector.extract_strided_slice %206 {offsets = [0, 240], sizes = [16, 16], strides = [1, 1]} : vector<16x256xf32> to vector<16x16xf32>
    %210 = vector.extract_strided_slice %206 {offsets = [0, 0], sizes = [16, 240], strides = [1, 1]} : vector<16x256xf32> to vector<16x240xf32>
    %211 = tpu.concatenate %209, %210 in 1 : vector<16x16xf32>, vector<16x240xf32> -> vector<16x256xf32>
    %cst_56 = arith.constant 0.000000e+00 : f32
    %212 = vector.broadcast %cst_56 : f32 to vector<16x256xf32>
    %213 = arith.select %208, %211, %212 : vector<16x256xi1>, vector<16x256xf32>
    %214 = arith.addf %213, %206 : vector<16x256xf32>
    %c15_i32_57 = arith.constant 15 : i32
    %215 = vector.broadcast %c15_i32_57 : i32 to vector<16x256xi32>
    %216 = arith.cmpi slt, %8, %215 : vector<16x256xi32>
    %217 = vector.extract_strided_slice %206 {offsets = [0, 16], sizes = [16, 240], strides = [1, 1]} : vector<16x256xf32> to vector<16x240xf32>
    %218 = vector.extract_strided_slice %206 {offsets = [0, 0], sizes = [16, 16], strides = [1, 1]} : vector<16x256xf32> to vector<16x16xf32>
    %219 = tpu.concatenate %217, %218 in 1 : vector<16x240xf32>, vector<16x16xf32> -> vector<16x256xf32>
    %cst_58 = arith.constant 0.000000e+00 : f32
    %220 = vector.broadcast %cst_58 : f32 to vector<16x256xf32>
    %221 = arith.select %216, %219, %220 : vector<16x256xi1>, vector<16x256xf32>
    %222 = arith.addf %214, %221 : vector<16x256xf32>
    %223 = arith.mulf %222, %74 : vector<16x256xf32>
    %cst_59 = arith.constant 0.000000e+00 : f32
    %224 = vector.broadcast %cst_59 : f32 to vector<16x256xf32>
    %225 = arith.cmpf one, %127, %224 : vector<16x256xf32>
    %226 = arith.extui %225 : vector<16x256xi1> to vector<16x256xi32>
    %227 = arith.sitofp %226 : vector<16x256xi32> to vector<16x256xf32>
    %cst_60 = arith.constant 0.000000e+00 : f32
    %228 = vector.broadcast %cst_60 : f32 to vector<16x256xf32>
    %229 = arith.cmpf one, %175, %228 : vector<16x256xf32>
    %230 = arith.extui %229 : vector<16x256xi1> to vector<16x256xi32>
    %231 = arith.sitofp %230 : vector<16x256xi32> to vector<16x256xf32>
    %cst_61 = arith.constant 0.000000e+00 : f32
    %232 = vector.broadcast %cst_61 : f32 to vector<16x256xf32>
    %233 = arith.cmpf one, %223, %232 : vector<16x256xf32>
    %234 = arith.extui %233 : vector<16x256xi1> to vector<16x256xi32>
    %235 = arith.sitofp %234 : vector<16x256xi32> to vector<16x256xf32>
    %236 = tpu.concatenate %127, %175, %223, %227, %231, %235 in 1 : vector<16x256xf32>, vector<16x256xf32>, vector<16x256xf32>, vector<16x256xf32>, vector<16x256xf32>, vector<16x256xf32> -> vector<16x1536xf32>
    %237 = tpu.iota {dimensions = array<i32: 1>} : vector<16x1536xi32>
    %238 = tpu.iota {dimensions = array<i32: 0>} : vector<16x1536xi32>
    %c15_i32_62 = arith.constant 15 : i32
    %239 = vector.broadcast %c15_i32_62 : i32 to vector<16x1536xi32>
    %240 = arith.andi %237, %239 : vector<16x1536xi32>
    %c4_i32_63 = arith.constant 4 : i32
    %241 = vector.broadcast %c4_i32_63 : i32 to vector<16x1536xi32>
    %242 = arith.shrsi %237, %241 : vector<16x1536xi32>
    %c15_i32_64 = arith.constant 15 : i32
    %243 = vector.broadcast %c15_i32_64 : i32 to vector<16x1536xi32>
    %244 = arith.andi %242, %243 : vector<16x1536xi32>
    %c2_i32 = arith.constant 2 : i32
    %245 = vector.broadcast %c2_i32 : i32 to vector<16x1536xi32>
    %246 = arith.cmpi sge, %238, %245 : vector<16x1536xi32>
    %247 = vector.extract_strided_slice %236 {offsets = [14, 0], sizes = [2, 1536], strides = [1, 1]} : vector<16x1536xf32> to vector<2x1536xf32>
    %248 = vector.extract_strided_slice %236 {offsets = [0, 0], sizes = [14, 1536], strides = [1, 1]} : vector<16x1536xf32> to vector<14x1536xf32>
    %249 = tpu.concatenate %247, %248 in 0 : vector<2x1536xf32>, vector<14x1536xf32> -> vector<16x1536xf32>
    %cst_65 = arith.constant 0.000000e+00 : f32
    %250 = vector.broadcast %cst_65 : f32 to vector<16x1536xf32>
    %251 = arith.select %246, %249, %250 : vector<16x1536xi1>, vector<16x1536xf32>
    %c1_i32_66 = arith.constant 1 : i32
    %252 = vector.broadcast %c1_i32_66 : i32 to vector<16x1536xi32>
    %253 = arith.cmpi sge, %238, %252 : vector<16x1536xi32>
    %254 = vector.extract_strided_slice %236 {offsets = [15, 0], sizes = [1, 1536], strides = [1, 1]} : vector<16x1536xf32> to vector<1x1536xf32>
    %255 = vector.extract_strided_slice %236 {offsets = [0, 0], sizes = [15, 1536], strides = [1, 1]} : vector<16x1536xf32> to vector<15x1536xf32>
    %256 = tpu.concatenate %254, %255 in 0 : vector<1x1536xf32>, vector<15x1536xf32> -> vector<16x1536xf32>
    %cst_67 = arith.constant 0.000000e+00 : f32
    %257 = vector.broadcast %cst_67 : f32 to vector<16x1536xf32>
    %258 = arith.select %253, %256, %257 : vector<16x1536xi1>, vector<16x1536xf32>
    %259 = arith.addf %251, %258 : vector<16x1536xf32>
    %260 = arith.addf %259, %236 : vector<16x1536xf32>
    %c15_i32_68 = arith.constant 15 : i32
    %261 = vector.broadcast %c15_i32_68 : i32 to vector<16x1536xi32>
    %262 = arith.cmpi slt, %238, %261 : vector<16x1536xi32>
    %263 = vector.extract_strided_slice %236 {offsets = [1, 0], sizes = [15, 1536], strides = [1, 1]} : vector<16x1536xf32> to vector<15x1536xf32>
    %264 = vector.extract_strided_slice %236 {offsets = [0, 0], sizes = [1, 1536], strides = [1, 1]} : vector<16x1536xf32> to vector<1x1536xf32>
    %265 = tpu.concatenate %263, %264 in 0 : vector<15x1536xf32>, vector<1x1536xf32> -> vector<16x1536xf32>
    %cst_69 = arith.constant 0.000000e+00 : f32
    %266 = vector.broadcast %cst_69 : f32 to vector<16x1536xf32>
    %267 = arith.select %262, %265, %266 : vector<16x1536xi1>, vector<16x1536xf32>
    %268 = arith.addf %260, %267 : vector<16x1536xf32>
    %c14_i32 = arith.constant 14 : i32
    %269 = vector.broadcast %c14_i32 : i32 to vector<16x1536xi32>
    %270 = arith.cmpi slt, %238, %269 : vector<16x1536xi32>
    %271 = vector.extract_strided_slice %236 {offsets = [2, 0], sizes = [14, 1536], strides = [1, 1]} : vector<16x1536xf32> to vector<14x1536xf32>
    %272 = vector.extract_strided_slice %236 {offsets = [0, 0], sizes = [2, 1536], strides = [1, 1]} : vector<16x1536xf32> to vector<2x1536xf32>
    %273 = tpu.concatenate %271, %272 in 0 : vector<14x1536xf32>, vector<2x1536xf32> -> vector<16x1536xf32>
    %cst_70 = arith.constant 0.000000e+00 : f32
    %274 = vector.broadcast %cst_70 : f32 to vector<16x1536xf32>
    %275 = arith.select %270, %273, %274 : vector<16x1536xi1>, vector<16x1536xf32>
    %276 = arith.addf %268, %275 : vector<16x1536xf32>
    %c2_i32_71 = arith.constant 2 : i32
    %277 = vector.broadcast %c2_i32_71 : i32 to vector<16x1536xi32>
    %278 = arith.cmpi sge, %244, %277 : vector<16x1536xi32>
    %279 = vector.extract_strided_slice %276 {offsets = [0, 1504], sizes = [16, 32], strides = [1, 1]} : vector<16x1536xf32> to vector<16x32xf32>
    %280 = vector.extract_strided_slice %276 {offsets = [0, 0], sizes = [16, 1504], strides = [1, 1]} : vector<16x1536xf32> to vector<16x1504xf32>
    %281 = tpu.concatenate %279, %280 in 1 : vector<16x32xf32>, vector<16x1504xf32> -> vector<16x1536xf32>
    %cst_72 = arith.constant 0.000000e+00 : f32
    %282 = vector.broadcast %cst_72 : f32 to vector<16x1536xf32>
    %283 = arith.select %278, %281, %282 : vector<16x1536xi1>, vector<16x1536xf32>
    %c1_i32_73 = arith.constant 1 : i32
    %284 = vector.broadcast %c1_i32_73 : i32 to vector<16x1536xi32>
    %285 = arith.cmpi sge, %244, %284 : vector<16x1536xi32>
    %286 = vector.extract_strided_slice %276 {offsets = [0, 1520], sizes = [16, 16], strides = [1, 1]} : vector<16x1536xf32> to vector<16x16xf32>
    %287 = vector.extract_strided_slice %276 {offsets = [0, 0], sizes = [16, 1520], strides = [1, 1]} : vector<16x1536xf32> to vector<16x1520xf32>
    %288 = tpu.concatenate %286, %287 in 1 : vector<16x16xf32>, vector<16x1520xf32> -> vector<16x1536xf32>
    %cst_74 = arith.constant 0.000000e+00 : f32
    %289 = vector.broadcast %cst_74 : f32 to vector<16x1536xf32>
    %290 = arith.select %285, %288, %289 : vector<16x1536xi1>, vector<16x1536xf32>
    %291 = arith.addf %283, %290 : vector<16x1536xf32>
    %292 = arith.addf %291, %276 : vector<16x1536xf32>
    %c15_i32_75 = arith.constant 15 : i32
    %293 = vector.broadcast %c15_i32_75 : i32 to vector<16x1536xi32>
    %294 = arith.cmpi slt, %244, %293 : vector<16x1536xi32>
    %295 = vector.extract_strided_slice %276 {offsets = [0, 16], sizes = [16, 1520], strides = [1, 1]} : vector<16x1536xf32> to vector<16x1520xf32>
    %296 = vector.extract_strided_slice %276 {offsets = [0, 0], sizes = [16, 16], strides = [1, 1]} : vector<16x1536xf32> to vector<16x16xf32>
    %297 = tpu.concatenate %295, %296 in 1 : vector<16x1520xf32>, vector<16x16xf32> -> vector<16x1536xf32>
    %cst_76 = arith.constant 0.000000e+00 : f32
    %298 = vector.broadcast %cst_76 : f32 to vector<16x1536xf32>
    %299 = arith.select %294, %297, %298 : vector<16x1536xi1>, vector<16x1536xf32>
    %300 = arith.addf %292, %299 : vector<16x1536xf32>
    %c14_i32_77 = arith.constant 14 : i32
    %301 = vector.broadcast %c14_i32_77 : i32 to vector<16x1536xi32>
    %302 = arith.cmpi slt, %244, %301 : vector<16x1536xi32>
    %303 = vector.extract_strided_slice %276 {offsets = [0, 32], sizes = [16, 1504], strides = [1, 1]} : vector<16x1536xf32> to vector<16x1504xf32>
    %304 = vector.extract_strided_slice %276 {offsets = [0, 0], sizes = [16, 32], strides = [1, 1]} : vector<16x1536xf32> to vector<16x32xf32>
    %305 = tpu.concatenate %303, %304 in 1 : vector<16x1504xf32>, vector<16x32xf32> -> vector<16x1536xf32>
    %cst_78 = arith.constant 0.000000e+00 : f32
    %306 = vector.broadcast %cst_78 : f32 to vector<16x1536xf32>
    %307 = arith.select %302, %305, %306 : vector<16x1536xi1>, vector<16x1536xf32>
    %308 = arith.addf %300, %307 : vector<16x1536xf32>
    %c2_i32_79 = arith.constant 2 : i32
    %309 = vector.broadcast %c2_i32_79 : i32 to vector<16x1536xi32>
    %310 = arith.cmpi sge, %240, %309 : vector<16x1536xi32>
    %311 = vector.extract_strided_slice %308 {offsets = [0, 1534], sizes = [16, 2], strides = [1, 1]} : vector<16x1536xf32> to vector<16x2xf32>
    %312 = vector.extract_strided_slice %308 {offsets = [0, 0], sizes = [16, 1534], strides = [1, 1]} : vector<16x1536xf32> to vector<16x1534xf32>
    %313 = tpu.concatenate %311, %312 in 1 : vector<16x2xf32>, vector<16x1534xf32> -> vector<16x1536xf32>
    %cst_80 = arith.constant 0.000000e+00 : f32
    %314 = vector.broadcast %cst_80 : f32 to vector<16x1536xf32>
    %315 = arith.select %310, %313, %314 : vector<16x1536xi1>, vector<16x1536xf32>
    %c1_i32_81 = arith.constant 1 : i32
    %316 = vector.broadcast %c1_i32_81 : i32 to vector<16x1536xi32>
    %317 = arith.cmpi sge, %240, %316 : vector<16x1536xi32>
    %318 = vector.extract_strided_slice %308 {offsets = [0, 1535], sizes = [16, 1], strides = [1, 1]} : vector<16x1536xf32> to vector<16x1xf32>
    %319 = vector.extract_strided_slice %308 {offsets = [0, 0], sizes = [16, 1535], strides = [1, 1]} : vector<16x1536xf32> to vector<16x1535xf32>
    %320 = tpu.concatenate %318, %319 in 1 : vector<16x1xf32>, vector<16x1535xf32> -> vector<16x1536xf32>
    %cst_82 = arith.constant 0.000000e+00 : f32
    %321 = vector.broadcast %cst_82 : f32 to vector<16x1536xf32>
    %322 = arith.select %317, %320, %321 : vector<16x1536xi1>, vector<16x1536xf32>
    %323 = arith.addf %315, %322 : vector<16x1536xf32>
    %324 = arith.addf %323, %308 : vector<16x1536xf32>
    %c15_i32_83 = arith.constant 15 : i32
    %325 = vector.broadcast %c15_i32_83 : i32 to vector<16x1536xi32>
    %326 = arith.cmpi slt, %240, %325 : vector<16x1536xi32>
    %327 = vector.extract_strided_slice %308 {offsets = [0, 1], sizes = [16, 1535], strides = [1, 1]} : vector<16x1536xf32> to vector<16x1535xf32>
    %328 = vector.extract_strided_slice %308 {offsets = [0, 0], sizes = [16, 1], strides = [1, 1]} : vector<16x1536xf32> to vector<16x1xf32>
    %329 = tpu.concatenate %327, %328 in 1 : vector<16x1535xf32>, vector<16x1xf32> -> vector<16x1536xf32>
    %cst_84 = arith.constant 0.000000e+00 : f32
    %330 = vector.broadcast %cst_84 : f32 to vector<16x1536xf32>
    %331 = arith.select %326, %329, %330 : vector<16x1536xi1>, vector<16x1536xf32>
    %332 = arith.addf %324, %331 : vector<16x1536xf32>
    %c14_i32_85 = arith.constant 14 : i32
    %333 = vector.broadcast %c14_i32_85 : i32 to vector<16x1536xi32>
    %334 = arith.cmpi slt, %240, %333 : vector<16x1536xi32>
    %335 = vector.extract_strided_slice %308 {offsets = [0, 2], sizes = [16, 1534], strides = [1, 1]} : vector<16x1536xf32> to vector<16x1534xf32>
    %336 = vector.extract_strided_slice %308 {offsets = [0, 0], sizes = [16, 2], strides = [1, 1]} : vector<16x1536xf32> to vector<16x2xf32>
    %337 = tpu.concatenate %335, %336 in 1 : vector<16x1534xf32>, vector<16x2xf32> -> vector<16x1536xf32>
    %cst_86 = arith.constant 0.000000e+00 : f32
    %338 = vector.broadcast %cst_86 : f32 to vector<16x1536xf32>
    %339 = arith.select %334, %337, %338 : vector<16x1536xi1>, vector<16x1536xf32>
    %340 = arith.addf %332, %339 : vector<16x1536xf32>
    %341 = vector.extract_strided_slice %340 {offsets = [0, 0], sizes = [16, 768], strides = [1, 1]} : vector<16x1536xf32> to vector<16x768xf32>
    %342 = vector.extract_strided_slice %340 {offsets = [0, 768], sizes = [16, 768], strides = [1, 1]} : vector<16x1536xf32> to vector<16x768xf32>
    %cst_87 = arith.constant 0.000000e+00 : f32
    %343 = vector.broadcast %cst_87 : f32 to vector<16x768xf32>
    %344 = arith.cmpf oeq, %342, %343 : vector<16x768xf32>
    %cst_88 = arith.constant 1.000000e+00 : f32
    %345 = vector.broadcast %cst_88 : f32 to vector<16x768xf32>
    %346 = arith.select %344, %345, %342 : vector<16x768xi1>, vector<16x768xf32>
    %347 = arith.divf %341, %346 : vector<16x768xf32>
    %c0_89 = arith.constant 0 : index
    %c0_90 = arith.constant 0 : index
    %348 = vector.load %arg3[%c0_89, %c0_90] : memref<16x768xf32, #tpu.memory_space<vmem>>, vector<16x768xf32>
    tpu.vector_store %arg3[%c0_89, %c0_90], %347 {strides = array<i32>} : memref<16x768xf32, #tpu.memory_space<vmem>>, vector<16x768xf32>,
    %349 = arith.mulf %347, %347 : vector<16x768xf32>
    %350 = tpu.concatenate %347, %349 in 1 : vector<16x768xf32>, vector<16x768xf32> -> vector<16x1536xf32>
    %c2_i32_91 = arith.constant 2 : i32
    %351 = vector.broadcast %c2_i32_91 : i32 to vector<16x1536xi32>
    %352 = arith.cmpi sge, %240, %351 : vector<16x1536xi32>
    %353 = vector.extract_strided_slice %350 {offsets = [0, 1534], sizes = [16, 2], strides = [1, 1]} : vector<16x1536xf32> to vector<16x2xf32>
    %354 = vector.extract_strided_slice %350 {offsets = [0, 0], sizes = [16, 1534], strides = [1, 1]} : vector<16x1536xf32> to vector<16x1534xf32>
    %355 = tpu.concatenate %353, %354 in 1 : vector<16x2xf32>, vector<16x1534xf32> -> vector<16x1536xf32>
    %cst_92 = arith.constant 0.000000e+00 : f32
    %356 = vector.broadcast %cst_92 : f32 to vector<16x1536xf32>
    %357 = arith.select %352, %355, %356 : vector<16x1536xi1>, vector<16x1536xf32>
    %c1_i32_93 = arith.constant 1 : i32
    %358 = vector.broadcast %c1_i32_93 : i32 to vector<16x1536xi32>
    %359 = arith.cmpi sge, %240, %358 : vector<16x1536xi32>
    %360 = vector.extract_strided_slice %350 {offsets = [0, 1535], sizes = [16, 1], strides = [1, 1]} : vector<16x1536xf32> to vector<16x1xf32>
    %361 = vector.extract_strided_slice %350 {offsets = [0, 0], sizes = [16, 1535], strides = [1, 1]} : vector<16x1536xf32> to vector<16x1535xf32>
    %362 = tpu.concatenate %360, %361 in 1 : vector<16x1xf32>, vector<16x1535xf32> -> vector<16x1536xf32>
    %cst_94 = arith.constant 0.000000e+00 : f32
    %363 = vector.broadcast %cst_94 : f32 to vector<16x1536xf32>
    %364 = arith.select %359, %362, %363 : vector<16x1536xi1>, vector<16x1536xf32>
    %c15_i32_95 = arith.constant 15 : i32
    %365 = vector.broadcast %c15_i32_95 : i32 to vector<16x1536xi32>
    %366 = arith.cmpi slt, %240, %365 : vector<16x1536xi32>
    %367 = vector.extract_strided_slice %350 {offsets = [0, 1], sizes = [16, 1535], strides = [1, 1]} : vector<16x1536xf32> to vector<16x1535xf32>
    %368 = vector.extract_strided_slice %350 {offsets = [0, 0], sizes = [16, 1], strides = [1, 1]} : vector<16x1536xf32> to vector<16x1xf32>
    %369 = tpu.concatenate %367, %368 in 1 : vector<16x1535xf32>, vector<16x1xf32> -> vector<16x1536xf32>
    %cst_96 = arith.constant 0.000000e+00 : f32
    %370 = vector.broadcast %cst_96 : f32 to vector<16x1536xf32>
    %371 = arith.select %366, %369, %370 : vector<16x1536xi1>, vector<16x1536xf32>
    %c14_i32_97 = arith.constant 14 : i32
    %372 = vector.broadcast %c14_i32_97 : i32 to vector<16x1536xi32>
    %373 = arith.cmpi slt, %240, %372 : vector<16x1536xi32>
    %374 = vector.extract_strided_slice %350 {offsets = [0, 2], sizes = [16, 1534], strides = [1, 1]} : vector<16x1536xf32> to vector<16x1534xf32>
    %375 = vector.extract_strided_slice %350 {offsets = [0, 0], sizes = [16, 2], strides = [1, 1]} : vector<16x1536xf32> to vector<16x2xf32>
    %376 = tpu.concatenate %374, %375 in 1 : vector<16x1534xf32>, vector<16x2xf32> -> vector<16x1536xf32>
    %cst_98 = arith.constant 0.000000e+00 : f32
    %377 = vector.broadcast %cst_98 : f32 to vector<16x1536xf32>
    %378 = arith.select %373, %376, %377 : vector<16x1536xi1>, vector<16x1536xf32>
    %379 = arith.addf %357, %364 : vector<16x1536xf32>
    %380 = arith.addf %379, %350 : vector<16x1536xf32>
    %381 = arith.addf %380, %371 : vector<16x1536xf32>
    %382 = arith.addf %381, %378 : vector<16x1536xf32>
    %c0_i32 = arith.constant 0 : i32
    %383 = vector.broadcast %c0_i32 : i32 to vector<16x1536xi32>
    %384 = arith.cmpi eq, %240, %383 : vector<16x1536xi32>
    %385 = arith.addf %371, %378 : vector<16x1536xf32>
    %cst_99 = arith.constant 0.000000e+00 : f32
    %386 = vector.broadcast %cst_99 : f32 to vector<16x1536xf32>
    %387 = arith.select %384, %385, %386 : vector<16x1536xi1>, vector<16x1536xf32>
    %388 = arith.addf %382, %387 : vector<16x1536xf32>
    %c1_i32_100 = arith.constant 1 : i32
    %389 = vector.broadcast %c1_i32_100 : i32 to vector<16x1536xi32>
    %390 = arith.cmpi eq, %240, %389 : vector<16x1536xi32>
    %cst_101 = arith.constant 0.000000e+00 : f32
    %391 = vector.broadcast %cst_101 : f32 to vector<16x1536xf32>
    %392 = arith.select %390, %350, %391 : vector<16x1536xi1>, vector<16x1536xf32>
    %393 = arith.addf %388, %392 : vector<16x1536xf32>
    %c14_i32_102 = arith.constant 14 : i32
    %394 = vector.broadcast %c14_i32_102 : i32 to vector<16x1536xi32>
    %395 = arith.cmpi eq, %240, %394 : vector<16x1536xi32>
    %cst_103 = arith.constant 0.000000e+00 : f32
    %396 = vector.broadcast %cst_103 : f32 to vector<16x1536xf32>
    %397 = arith.select %395, %350, %396 : vector<16x1536xi1>, vector<16x1536xf32>
    %398 = arith.addf %393, %397 : vector<16x1536xf32>
    %c15_i32_104 = arith.constant 15 : i32
    %399 = vector.broadcast %c15_i32_104 : i32 to vector<16x1536xi32>
    %400 = arith.cmpi eq, %240, %399 : vector<16x1536xi32>
    %401 = arith.addf %364, %357 : vector<16x1536xf32>
    %cst_105 = arith.constant 0.000000e+00 : f32
    %402 = vector.broadcast %cst_105 : f32 to vector<16x1536xf32>
    %403 = arith.select %400, %401, %402 : vector<16x1536xi1>, vector<16x1536xf32>
    %404 = arith.addf %398, %403 : vector<16x1536xf32>
    %c2_i32_106 = arith.constant 2 : i32
    %405 = vector.broadcast %c2_i32_106 : i32 to vector<16x1536xi32>
    %406 = arith.cmpi sge, %244, %405 : vector<16x1536xi32>
    %407 = vector.extract_strided_slice %404 {offsets = [0, 1504], sizes = [16, 32], strides = [1, 1]} : vector<16x1536xf32> to vector<16x32xf32>
    %408 = vector.extract_strided_slice %404 {offsets = [0, 0], sizes = [16, 1504], strides = [1, 1]} : vector<16x1536xf32> to vector<16x1504xf32>
    %409 = tpu.concatenate %407, %408 in 1 : vector<16x32xf32>, vector<16x1504xf32> -> vector<16x1536xf32>
    %cst_107 = arith.constant 0.000000e+00 : f32
    %410 = vector.broadcast %cst_107 : f32 to vector<16x1536xf32>
    %411 = arith.select %406, %409, %410 : vector<16x1536xi1>, vector<16x1536xf32>
    %c1_i32_108 = arith.constant 1 : i32
    %412 = vector.broadcast %c1_i32_108 : i32 to vector<16x1536xi32>
    %413 = arith.cmpi sge, %244, %412 : vector<16x1536xi32>
    %414 = vector.extract_strided_slice %404 {offsets = [0, 1520], sizes = [16, 16], strides = [1, 1]} : vector<16x1536xf32> to vector<16x16xf32>
    %415 = vector.extract_strided_slice %404 {offsets = [0, 0], sizes = [16, 1520], strides = [1, 1]} : vector<16x1536xf32> to vector<16x1520xf32>
    %416 = tpu.concatenate %414, %415 in 1 : vector<16x16xf32>, vector<16x1520xf32> -> vector<16x1536xf32>
    %cst_109 = arith.constant 0.000000e+00 : f32
    %417 = vector.broadcast %cst_109 : f32 to vector<16x1536xf32>
    %418 = arith.select %413, %416, %417 : vector<16x1536xi1>, vector<16x1536xf32>
    %c15_i32_110 = arith.constant 15 : i32
    %419 = vector.broadcast %c15_i32_110 : i32 to vector<16x1536xi32>
    %420 = arith.cmpi slt, %244, %419 : vector<16x1536xi32>
    %421 = vector.extract_strided_slice %404 {offsets = [0, 16], sizes = [16, 1520], strides = [1, 1]} : vector<16x1536xf32> to vector<16x1520xf32>
    %422 = vector.extract_strided_slice %404 {offsets = [0, 0], sizes = [16, 16], strides = [1, 1]} : vector<16x1536xf32> to vector<16x16xf32>
    %423 = tpu.concatenate %421, %422 in 1 : vector<16x1520xf32>, vector<16x16xf32> -> vector<16x1536xf32>
    %cst_111 = arith.constant 0.000000e+00 : f32
    %424 = vector.broadcast %cst_111 : f32 to vector<16x1536xf32>
    %425 = arith.select %420, %423, %424 : vector<16x1536xi1>, vector<16x1536xf32>
    %c14_i32_112 = arith.constant 14 : i32
    %426 = vector.broadcast %c14_i32_112 : i32 to vector<16x1536xi32>
    %427 = arith.cmpi slt, %244, %426 : vector<16x1536xi32>
    %428 = vector.extract_strided_slice %404 {offsets = [0, 32], sizes = [16, 1504], strides = [1, 1]} : vector<16x1536xf32> to vector<16x1504xf32>
    %429 = vector.extract_strided_slice %404 {offsets = [0, 0], sizes = [16, 32], strides = [1, 1]} : vector<16x1536xf32> to vector<16x32xf32>
    %430 = tpu.concatenate %428, %429 in 1 : vector<16x1504xf32>, vector<16x32xf32> -> vector<16x1536xf32>
    %cst_113 = arith.constant 0.000000e+00 : f32
    %431 = vector.broadcast %cst_113 : f32 to vector<16x1536xf32>
    %432 = arith.select %427, %430, %431 : vector<16x1536xi1>, vector<16x1536xf32>
    %433 = arith.addf %411, %418 : vector<16x1536xf32>
    %434 = arith.addf %433, %404 : vector<16x1536xf32>
    %435 = arith.addf %434, %425 : vector<16x1536xf32>
    %436 = arith.addf %435, %432 : vector<16x1536xf32>
    %c0_i32_114 = arith.constant 0 : i32
    %437 = vector.broadcast %c0_i32_114 : i32 to vector<16x1536xi32>
    %438 = arith.cmpi eq, %244, %437 : vector<16x1536xi32>
    %439 = arith.addf %425, %432 : vector<16x1536xf32>
    %cst_115 = arith.constant 0.000000e+00 : f32
    %440 = vector.broadcast %cst_115 : f32 to vector<16x1536xf32>
    %441 = arith.select %438, %439, %440 : vector<16x1536xi1>, vector<16x1536xf32>
    %442 = arith.addf %436, %441 : vector<16x1536xf32>
    %c1_i32_116 = arith.constant 1 : i32
    %443 = vector.broadcast %c1_i32_116 : i32 to vector<16x1536xi32>
    %444 = arith.cmpi eq, %244, %443 : vector<16x1536xi32>
    %cst_117 = arith.constant 0.000000e+00 : f32
    %445 = vector.broadcast %cst_117 : f32 to vector<16x1536xf32>
    %446 = arith.select %444, %404, %445 : vector<16x1536xi1>, vector<16x1536xf32>
    %447 = arith.addf %442, %446 : vector<16x1536xf32>
    %c14_i32_118 = arith.constant 14 : i32
    %448 = vector.broadcast %c14_i32_118 : i32 to vector<16x1536xi32>
    %449 = arith.cmpi eq, %244, %448 : vector<16x1536xi32>
    %cst_119 = arith.constant 0.000000e+00 : f32
    %450 = vector.broadcast %cst_119 : f32 to vector<16x1536xf32>
    %451 = arith.select %449, %404, %450 : vector<16x1536xi1>, vector<16x1536xf32>
    %452 = arith.addf %447, %451 : vector<16x1536xf32>
    %c15_i32_120 = arith.constant 15 : i32
    %453 = vector.broadcast %c15_i32_120 : i32 to vector<16x1536xi32>
    %454 = arith.cmpi eq, %244, %453 : vector<16x1536xi32>
    %455 = arith.addf %418, %411 : vector<16x1536xf32>
    %cst_121 = arith.constant 0.000000e+00 : f32
    %456 = vector.broadcast %cst_121 : f32 to vector<16x1536xf32>
    %457 = arith.select %454, %455, %456 : vector<16x1536xi1>, vector<16x1536xf32>
    %458 = arith.addf %452, %457 : vector<16x1536xf32>
    %c2_i32_122 = arith.constant 2 : i32
    %459 = vector.broadcast %c2_i32_122 : i32 to vector<16x1536xi32>
    %460 = arith.cmpi sge, %238, %459 : vector<16x1536xi32>
    %461 = vector.extract_strided_slice %458 {offsets = [14, 0], sizes = [2, 1536], strides = [1, 1]} : vector<16x1536xf32> to vector<2x1536xf32>
    %462 = vector.extract_strided_slice %458 {offsets = [0, 0], sizes = [14, 1536], strides = [1, 1]} : vector<16x1536xf32> to vector<14x1536xf32>
    %463 = tpu.concatenate %461, %462 in 0 : vector<2x1536xf32>, vector<14x1536xf32> -> vector<16x1536xf32>
    %cst_123 = arith.constant 0.000000e+00 : f32
    %464 = vector.broadcast %cst_123 : f32 to vector<16x1536xf32>
    %465 = arith.select %460, %463, %464 : vector<16x1536xi1>, vector<16x1536xf32>
    %c1_i32_124 = arith.constant 1 : i32
    %466 = vector.broadcast %c1_i32_124 : i32 to vector<16x1536xi32>
    %467 = arith.cmpi sge, %238, %466 : vector<16x1536xi32>
    %468 = vector.extract_strided_slice %458 {offsets = [15, 0], sizes = [1, 1536], strides = [1, 1]} : vector<16x1536xf32> to vector<1x1536xf32>
    %469 = vector.extract_strided_slice %458 {offsets = [0, 0], sizes = [15, 1536], strides = [1, 1]} : vector<16x1536xf32> to vector<15x1536xf32>
    %470 = tpu.concatenate %468, %469 in 0 : vector<1x1536xf32>, vector<15x1536xf32> -> vector<16x1536xf32>
    %cst_125 = arith.constant 0.000000e+00 : f32
    %471 = vector.broadcast %cst_125 : f32 to vector<16x1536xf32>
    %472 = arith.select %467, %470, %471 : vector<16x1536xi1>, vector<16x1536xf32>
    %c15_i32_126 = arith.constant 15 : i32
    %473 = vector.broadcast %c15_i32_126 : i32 to vector<16x1536xi32>
    %474 = arith.cmpi slt, %238, %473 : vector<16x1536xi32>
    %475 = vector.extract_strided_slice %458 {offsets = [1, 0], sizes = [15, 1536], strides = [1, 1]} : vector<16x1536xf32> to vector<15x1536xf32>
    %476 = vector.extract_strided_slice %458 {offsets = [0, 0], sizes = [1, 1536], strides = [1, 1]} : vector<16x1536xf32> to vector<1x1536xf32>
    %477 = tpu.concatenate %475, %476 in 0 : vector<15x1536xf32>, vector<1x1536xf32> -> vector<16x1536xf32>
    %cst_127 = arith.constant 0.000000e+00 : f32
    %478 = vector.broadcast %cst_127 : f32 to vector<16x1536xf32>
    %479 = arith.select %474, %477, %478 : vector<16x1536xi1>, vector<16x1536xf32>
    %c14_i32_128 = arith.constant 14 : i32
    %480 = vector.broadcast %c14_i32_128 : i32 to vector<16x1536xi32>
    %481 = arith.cmpi slt, %238, %480 : vector<16x1536xi32>
    %482 = vector.extract_strided_slice %458 {offsets = [2, 0], sizes = [14, 1536], strides = [1, 1]} : vector<16x1536xf32> to vector<14x1536xf32>
    %483 = vector.extract_strided_slice %458 {offsets = [0, 0], sizes = [2, 1536], strides = [1, 1]} : vector<16x1536xf32> to vector<2x1536xf32>
    %484 = tpu.concatenate %482, %483 in 0 : vector<14x1536xf32>, vector<2x1536xf32> -> vector<16x1536xf32>
    %cst_129 = arith.constant 0.000000e+00 : f32
    %485 = vector.broadcast %cst_129 : f32 to vector<16x1536xf32>
    %486 = arith.select %481, %484, %485 : vector<16x1536xi1>, vector<16x1536xf32>
    %487 = arith.addf %465, %472 : vector<16x1536xf32>
    %488 = arith.addf %487, %458 : vector<16x1536xf32>
    %489 = arith.addf %488, %479 : vector<16x1536xf32>
    %490 = arith.addf %489, %486 : vector<16x1536xf32>
    %c0_i32_130 = arith.constant 0 : i32
    %491 = vector.broadcast %c0_i32_130 : i32 to vector<16x1536xi32>
    %492 = arith.cmpi eq, %238, %491 : vector<16x1536xi32>
    %493 = arith.addf %479, %486 : vector<16x1536xf32>
    %cst_131 = arith.constant 0.000000e+00 : f32
    %494 = vector.broadcast %cst_131 : f32 to vector<16x1536xf32>
    %495 = arith.select %492, %493, %494 : vector<16x1536xi1>, vector<16x1536xf32>
    %496 = arith.addf %490, %495 : vector<16x1536xf32>
    %c1_i32_132 = arith.constant 1 : i32
    %497 = vector.broadcast %c1_i32_132 : i32 to vector<16x1536xi32>
    %498 = arith.cmpi eq, %238, %497 : vector<16x1536xi32>
    %cst_133 = arith.constant 0.000000e+00 : f32
    %499 = vector.broadcast %cst_133 : f32 to vector<16x1536xf32>
    %500 = arith.select %498, %458, %499 : vector<16x1536xi1>, vector<16x1536xf32>
    %501 = arith.addf %496, %500 : vector<16x1536xf32>
    %c14_i32_134 = arith.constant 14 : i32
    %502 = vector.broadcast %c14_i32_134 : i32 to vector<16x1536xi32>
    %503 = arith.cmpi eq, %238, %502 : vector<16x1536xi32>
    %cst_135 = arith.constant 0.000000e+00 : f32
    %504 = vector.broadcast %cst_135 : f32 to vector<16x1536xf32>
    %505 = arith.select %503, %458, %504 : vector<16x1536xi1>, vector<16x1536xf32>
    %506 = arith.addf %501, %505 : vector<16x1536xf32>
    %c15_i32_136 = arith.constant 15 : i32
    %507 = vector.broadcast %c15_i32_136 : i32 to vector<16x1536xi32>
    %508 = arith.cmpi eq, %238, %507 : vector<16x1536xi32>
    %509 = arith.addf %472, %465 : vector<16x1536xf32>
    %cst_137 = arith.constant 0.000000e+00 : f32
    %510 = vector.broadcast %cst_137 : f32 to vector<16x1536xf32>
    %511 = arith.select %508, %509, %510 : vector<16x1536xi1>, vector<16x1536xf32>
    %512 = arith.addf %506, %511 : vector<16x1536xf32>
    %513 = vector.extract_strided_slice %512 {offsets = [0, 0], sizes = [16, 768], strides = [1, 1]} : vector<16x1536xf32> to vector<16x768xf32>
    %514 = vector.extract_strided_slice %512 {offsets = [0, 768], sizes = [16, 768], strides = [1, 1]} : vector<16x1536xf32> to vector<16x768xf32>
    %cst_138 = arith.constant 8.000000e-03 : f32
    %515 = vector.broadcast %cst_138 : f32 to vector<16x768xf32>
    %516 = arith.mulf %513, %515 : vector<16x768xf32>
    %cst_139 = arith.constant 1.250000e+02 : f32
    %517 = vector.broadcast %cst_139 : f32 to vector<16x768xf32>
    %518 = arith.mulf %517, %516 : vector<16x768xf32>
    %519 = arith.mulf %518, %516 : vector<16x768xf32>
    %520 = arith.subf %514, %519 : vector<16x768xf32>
    %cst_140 = arith.constant 0.00806451589 : f32
    %521 = vector.broadcast %cst_140 : f32 to vector<16x768xf32>
    %522 = arith.mulf %520, %521 : vector<16x768xf32>
    %cst_141 = arith.constant 0.000000e+00 : f32
    %523 = vector.broadcast %cst_141 : f32 to vector<16x768xf32>
    %524 = arith.maximumf %522, %523 : vector<16x768xf32>
    %525 = vector.extract_strided_slice %524 {offsets = [0, 0], sizes = [16, 256], strides = [1, 1]} : vector<16x768xf32> to vector<16x256xf32>
    %526 = vector.extract_strided_slice %524 {offsets = [0, 256], sizes = [16, 256], strides = [1, 1]} : vector<16x768xf32> to vector<16x256xf32>
    %527 = arith.addf %525, %526 : vector<16x256xf32>
    %528 = vector.extract_strided_slice %524 {offsets = [0, 512], sizes = [16, 256], strides = [1, 1]} : vector<16x768xf32> to vector<16x256xf32>
    %529 = arith.addf %527, %528 : vector<16x256xf32>
    %cst_142 = arith.constant 0.000000e+00 : f32
    %530 = vector.broadcast %cst_142 : f32 to vector<16x256xf32>
    %531 = arith.cmpf oeq, %74, %530 : vector<16x256xf32>
    %cst_143 = arith.constant 0.000000e+00 : f32
    %532 = vector.broadcast %cst_143 : f32 to vector<16x256xf32>
    %533 = arith.select %531, %532, %529 : vector<16x256xi1>, vector<16x256xf32>
    %c2_i32_144 = arith.constant 2 : i32
    %534 = vector.broadcast %c2_i32_144 : i32 to vector<16x256xi32>
    %535 = arith.cmpi sge, %2, %534 : vector<16x256xi32>
    %536 = vector.extract_strided_slice %533 {offsets = [14, 0], sizes = [2, 256], strides = [1, 1]} : vector<16x256xf32> to vector<2x256xf32>
    %537 = vector.extract_strided_slice %533 {offsets = [0, 0], sizes = [14, 256], strides = [1, 1]} : vector<16x256xf32> to vector<14x256xf32>
    %538 = tpu.concatenate %536, %537 in 0 : vector<2x256xf32>, vector<14x256xf32> -> vector<16x256xf32>
    %cst_145 = arith.constant 0.000000e+00 : f32
    %539 = vector.broadcast %cst_145 : f32 to vector<16x256xf32>
    %540 = arith.select %535, %538, %539 : vector<16x256xi1>, vector<16x256xf32>
    %c1_i32_146 = arith.constant 1 : i32
    %541 = vector.broadcast %c1_i32_146 : i32 to vector<16x256xi32>
    %542 = arith.cmpi sge, %2, %541 : vector<16x256xi32>
    %543 = vector.extract_strided_slice %533 {offsets = [15, 0], sizes = [1, 256], strides = [1, 1]} : vector<16x256xf32> to vector<1x256xf32>
    %544 = vector.extract_strided_slice %533 {offsets = [0, 0], sizes = [15, 256], strides = [1, 1]} : vector<16x256xf32> to vector<15x256xf32>
    %545 = tpu.concatenate %543, %544 in 0 : vector<1x256xf32>, vector<15x256xf32> -> vector<16x256xf32>
    %cst_147 = arith.constant 0.000000e+00 : f32
    %546 = vector.broadcast %cst_147 : f32 to vector<16x256xf32>
    %547 = arith.select %542, %545, %546 : vector<16x256xi1>, vector<16x256xf32>
    %548 = arith.addf %540, %547 : vector<16x256xf32>
    %549 = arith.addf %548, %533 : vector<16x256xf32>
    %c15_i32_148 = arith.constant 15 : i32
    %550 = vector.broadcast %c15_i32_148 : i32 to vector<16x256xi32>
    %551 = arith.cmpi slt, %2, %550 : vector<16x256xi32>
    %552 = vector.extract_strided_slice %533 {offsets = [1, 0], sizes = [15, 256], strides = [1, 1]} : vector<16x256xf32> to vector<15x256xf32>
    %553 = vector.extract_strided_slice %533 {offsets = [0, 0], sizes = [1, 256], strides = [1, 1]} : vector<16x256xf32> to vector<1x256xf32>
    %554 = tpu.concatenate %552, %553 in 0 : vector<15x256xf32>, vector<1x256xf32> -> vector<16x256xf32>
    %cst_149 = arith.constant 0.000000e+00 : f32
    %555 = vector.broadcast %cst_149 : f32 to vector<16x256xf32>
    %556 = arith.select %551, %554, %555 : vector<16x256xi1>, vector<16x256xf32>
    %557 = arith.addf %549, %556 : vector<16x256xf32>
    %c14_i32_150 = arith.constant 14 : i32
    %558 = vector.broadcast %c14_i32_150 : i32 to vector<16x256xi32>
    %559 = arith.cmpi slt, %2, %558 : vector<16x256xi32>
    %560 = vector.extract_strided_slice %533 {offsets = [2, 0], sizes = [14, 256], strides = [1, 1]} : vector<16x256xf32> to vector<14x256xf32>
    %561 = vector.extract_strided_slice %533 {offsets = [0, 0], sizes = [2, 256], strides = [1, 1]} : vector<16x256xf32> to vector<2x256xf32>
    %562 = tpu.concatenate %560, %561 in 0 : vector<14x256xf32>, vector<2x256xf32> -> vector<16x256xf32>
    %cst_151 = arith.constant 0.000000e+00 : f32
    %563 = vector.broadcast %cst_151 : f32 to vector<16x256xf32>
    %564 = arith.select %559, %562, %563 : vector<16x256xi1>, vector<16x256xf32>
    %565 = arith.addf %557, %564 : vector<16x256xf32>
    %c2_i32_152 = arith.constant 2 : i32
    %566 = vector.broadcast %c2_i32_152 : i32 to vector<16x256xi32>
    %567 = arith.cmpi sge, %8, %566 : vector<16x256xi32>
    %568 = vector.extract_strided_slice %565 {offsets = [0, 224], sizes = [16, 32], strides = [1, 1]} : vector<16x256xf32> to vector<16x32xf32>
    %569 = vector.extract_strided_slice %565 {offsets = [0, 0], sizes = [16, 224], strides = [1, 1]} : vector<16x256xf32> to vector<16x224xf32>
    %570 = tpu.concatenate %568, %569 in 1 : vector<16x32xf32>, vector<16x224xf32> -> vector<16x256xf32>
    %cst_153 = arith.constant 0.000000e+00 : f32
    %571 = vector.broadcast %cst_153 : f32 to vector<16x256xf32>
    %572 = arith.select %567, %570, %571 : vector<16x256xi1>, vector<16x256xf32>
    %c1_i32_154 = arith.constant 1 : i32
    %573 = vector.broadcast %c1_i32_154 : i32 to vector<16x256xi32>
    %574 = arith.cmpi sge, %8, %573 : vector<16x256xi32>
    %575 = vector.extract_strided_slice %565 {offsets = [0, 240], sizes = [16, 16], strides = [1, 1]} : vector<16x256xf32> to vector<16x16xf32>
    %576 = vector.extract_strided_slice %565 {offsets = [0, 0], sizes = [16, 240], strides = [1, 1]} : vector<16x256xf32> to vector<16x240xf32>
    %577 = tpu.concatenate %575, %576 in 1 : vector<16x16xf32>, vector<16x240xf32> -> vector<16x256xf32>
    %cst_155 = arith.constant 0.000000e+00 : f32
    %578 = vector.broadcast %cst_155 : f32 to vector<16x256xf32>
    %579 = arith.select %574, %577, %578 : vector<16x256xi1>, vector<16x256xf32>
    %580 = arith.addf %572, %579 : vector<16x256xf32>
    %581 = arith.addf %580, %565 : vector<16x256xf32>
    %c15_i32_156 = arith.constant 15 : i32
    %582 = vector.broadcast %c15_i32_156 : i32 to vector<16x256xi32>
    %583 = arith.cmpi slt, %8, %582 : vector<16x256xi32>
    %584 = vector.extract_strided_slice %565 {offsets = [0, 16], sizes = [16, 240], strides = [1, 1]} : vector<16x256xf32> to vector<16x240xf32>
    %585 = vector.extract_strided_slice %565 {offsets = [0, 0], sizes = [16, 16], strides = [1, 1]} : vector<16x256xf32> to vector<16x16xf32>
    %586 = tpu.concatenate %584, %585 in 1 : vector<16x240xf32>, vector<16x16xf32> -> vector<16x256xf32>
    %cst_157 = arith.constant 0.000000e+00 : f32
    %587 = vector.broadcast %cst_157 : f32 to vector<16x256xf32>
    %588 = arith.select %583, %586, %587 : vector<16x256xi1>, vector<16x256xf32>
    %589 = arith.addf %581, %588 : vector<16x256xf32>
    %c14_i32_158 = arith.constant 14 : i32
    %590 = vector.broadcast %c14_i32_158 : i32 to vector<16x256xi32>
    %591 = arith.cmpi slt, %8, %590 : vector<16x256xi32>
    %592 = vector.extract_strided_slice %565 {offsets = [0, 32], sizes = [16, 224], strides = [1, 1]} : vector<16x256xf32> to vector<16x224xf32>
    %593 = vector.extract_strided_slice %565 {offsets = [0, 0], sizes = [16, 32], strides = [1, 1]} : vector<16x256xf32> to vector<16x32xf32>
    %594 = tpu.concatenate %592, %593 in 1 : vector<16x224xf32>, vector<16x32xf32> -> vector<16x256xf32>
    %cst_159 = arith.constant 0.000000e+00 : f32
    %595 = vector.broadcast %cst_159 : f32 to vector<16x256xf32>
    %596 = arith.select %591, %594, %595 : vector<16x256xi1>, vector<16x256xf32>
    %597 = arith.addf %589, %596 : vector<16x256xf32>
    %c2_i32_160 = arith.constant 2 : i32
    %598 = vector.broadcast %c2_i32_160 : i32 to vector<16x256xi32>
    %599 = arith.cmpi sge, %4, %598 : vector<16x256xi32>
    %600 = vector.extract_strided_slice %597 {offsets = [0, 254], sizes = [16, 2], strides = [1, 1]} : vector<16x256xf32> to vector<16x2xf32>
    %601 = vector.extract_strided_slice %597 {offsets = [0, 0], sizes = [16, 254], strides = [1, 1]} : vector<16x256xf32> to vector<16x254xf32>
    %602 = tpu.concatenate %600, %601 in 1 : vector<16x2xf32>, vector<16x254xf32> -> vector<16x256xf32>
    %cst_161 = arith.constant 0.000000e+00 : f32
    %603 = vector.broadcast %cst_161 : f32 to vector<16x256xf32>
    %604 = arith.select %599, %602, %603 : vector<16x256xi1>, vector<16x256xf32>
    %c1_i32_162 = arith.constant 1 : i32
    %605 = vector.broadcast %c1_i32_162 : i32 to vector<16x256xi32>
    %606 = arith.cmpi sge, %4, %605 : vector<16x256xi32>
    %607 = vector.extract_strided_slice %597 {offsets = [0, 255], sizes = [16, 1], strides = [1, 1]} : vector<16x256xf32> to vector<16x1xf32>
    %608 = vector.extract_strided_slice %597 {offsets = [0, 0], sizes = [16, 255], strides = [1, 1]} : vector<16x256xf32> to vector<16x255xf32>
    %609 = tpu.concatenate %607, %608 in 1 : vector<16x1xf32>, vector<16x255xf32> -> vector<16x256xf32>
    %cst_163 = arith.constant 0.000000e+00 : f32
    %610 = vector.broadcast %cst_163 : f32 to vector<16x256xf32>
    %611 = arith.select %606, %609, %610 : vector<16x256xi1>, vector<16x256xf32>
    %612 = arith.addf %604, %611 : vector<16x256xf32>
    %613 = arith.addf %612, %597 : vector<16x256xf32>
    %c15_i32_164 = arith.constant 15 : i32
    %614 = vector.broadcast %c15_i32_164 : i32 to vector<16x256xi32>
    %615 = arith.cmpi slt, %4, %614 : vector<16x256xi32>
    %616 = vector.extract_strided_slice %597 {offsets = [0, 1], sizes = [16, 255], strides = [1, 1]} : vector<16x256xf32> to vector<16x255xf32>
    %617 = vector.extract_strided_slice %597 {offsets = [0, 0], sizes = [16, 1], strides = [1, 1]} : vector<16x256xf32> to vector<16x1xf32>
    %618 = tpu.concatenate %616, %617 in 1 : vector<16x255xf32>, vector<16x1xf32> -> vector<16x256xf32>
    %cst_165 = arith.constant 0.000000e+00 : f32
    %619 = vector.broadcast %cst_165 : f32 to vector<16x256xf32>
    %620 = arith.select %615, %618, %619 : vector<16x256xi1>, vector<16x256xf32>
    %621 = arith.addf %613, %620 : vector<16x256xf32>
    %c14_i32_166 = arith.constant 14 : i32
    %622 = vector.broadcast %c14_i32_166 : i32 to vector<16x256xi32>
    %623 = arith.cmpi slt, %4, %622 : vector<16x256xi32>
    %624 = vector.extract_strided_slice %597 {offsets = [0, 2], sizes = [16, 254], strides = [1, 1]} : vector<16x256xf32> to vector<16x254xf32>
    %625 = vector.extract_strided_slice %597 {offsets = [0, 0], sizes = [16, 2], strides = [1, 1]} : vector<16x256xf32> to vector<16x2xf32>
    %626 = tpu.concatenate %624, %625 in 1 : vector<16x254xf32>, vector<16x2xf32> -> vector<16x256xf32>
    %cst_167 = arith.constant 0.000000e+00 : f32
    %627 = vector.broadcast %cst_167 : f32 to vector<16x256xf32>
    %628 = arith.select %623, %626, %627 : vector<16x256xi1>, vector<16x256xf32>
    %629 = arith.addf %621, %628 : vector<16x256xf32>
    %cst_168 = arith.constant 0.000000e+00 : f32
    %630 = vector.broadcast %cst_168 : f32 to vector<16x256xf32>
    %631 = arith.cmpf oeq, %74, %630 : vector<16x256xf32>
    %cst_169 = arith.constant 0.000000e+00 : f32
    %632 = vector.broadcast %cst_169 : f32 to vector<16x256xf32>
    %633 = arith.select %631, %632, %629 : vector<16x256xi1>, vector<16x256xf32>
    %c0_170 = arith.constant 0 : index
    %c0_171 = arith.constant 0 : index
    %634 = vector.load %arg4[%c0_170, %c0_171] : memref<16x256xf32, #tpu.memory_space<vmem>>, vector<16x256xf32>
    tpu.vector_store %arg4[%c0_170, %c0_171], %633 {strides = array<i32>} : memref<16x256xf32, #tpu.memory_space<vmem>>, vector<16x256xf32>,
    return
  }
  func.func @transform_0(%arg0: i32) -> (i32, i32) {
    %c0_i32 = arith.constant 0 : i32
    %c0_i32_0 = arith.constant 0 : i32
    %c0_i32_1 = arith.constant 0 : i32
    return %c0_i32, %c0_i32_0 : i32, i32
  }
  func.func @transform_1(%arg0: i32) -> (i32, i32) {
    %c0_i32 = arith.constant 0 : i32
    %c0_i32_0 = arith.constant 0 : i32
    %c0_i32_1 = arith.constant 0 : i32
    return %c0_i32, %c0_i32_0 : i32, i32
  }
  func.func @transform_2(%arg0: i32) -> (i32, i32) {
    %c0_i32 = arith.constant 0 : i32
    %c0_i32_0 = arith.constant 0 : i32
    %c0_i32_1 = arith.constant 0 : i32
    return %c0_i32, %c0_i32_0 : i32, i32
  }
  func.func @transform_3(%arg0: i32) -> (i32, i32) {
    %c0_i32 = arith.constant 0 : i32
    %c0_i32_0 = arith.constant 0 : i32
    %c0_i32_1 = arith.constant 0 : i32
    return %c0_i32, %c0_i32_0 : i32, i32
  }
}

module attributes {stable_mosaic.version = 11 : i64} {
  func.func @_distance_kernel(%arg0: i32, %arg1: memref<768xi32, #tpu.memory_space<smem>>, %arg2: memref<16x768xf32, #tpu.memory_space<vmem>>, %arg3: memref<1x16x256xf32, #tpu.memory_space<vmem>>) attributes {dimension_semantics = [#tpu.dimension_semantics<parallel>], iteration_bounds = array<i64: 3>, scalar_prefetch = 1 : i64, scratch_operands = 0 : i64, tpu.core_type = #tpu.core_type<tc>, window_params = [{pipeline_mode = #tpu.pipeline_mode<synchronous>, transform_indices = @transform_0, window_bounds = array<i64: 16, 768>}, {transform_indices = @transform_1, window_bounds = array<i64: 1, 16, 256>}]} {
    %c0 = arith.constant 0 : index
    %c0_0 = arith.constant 0 : index
    %0 = vector.load %arg2[%c0, %c0_0] : memref<16x768xf32, #tpu.memory_space<vmem>>, vector<16x256xf32>
    %c0_1 = arith.constant 0 : index
    %c256 = arith.constant 256 : index
    %1 = vector.load %arg2[%c0_1, %c256] : memref<16x768xf32, #tpu.memory_space<vmem>>, vector<16x256xf32>
    %c0_2 = arith.constant 0 : index
    %c512 = arith.constant 512 : index
    %2 = vector.load %arg2[%c0_2, %c512] : memref<16x768xf32, #tpu.memory_space<vmem>>, vector<16x256xf32>
    %3 = tpu.iota {dimensions = array<i32: 1>} : vector<16x256xi32>
    %4 = tpu.iota {dimensions = array<i32: 0>} : vector<16x256xi32>
    %5 = arith.sitofp %4 : vector<16x256xi32> to vector<16x256xf32>
    %c4_i32 = arith.constant 4 : i32
    %6 = vector.broadcast %c4_i32 : i32 to vector<16x256xi32>
    %7 = arith.shrsi %3, %6 : vector<16x256xi32>
    %c15_i32 = arith.constant 15 : i32
    %8 = vector.broadcast %c15_i32 : i32 to vector<16x256xi32>
    %9 = arith.andi %7, %8 : vector<16x256xi32>
    %10 = arith.sitofp %9 : vector<16x256xi32> to vector<16x256xf32>
    %c15_i32_3 = arith.constant 15 : i32
    %11 = vector.broadcast %c15_i32_3 : i32 to vector<16x256xi32>
    %12 = arith.andi %3, %11 : vector<16x256xi32>
    %13 = arith.sitofp %12 : vector<16x256xi32> to vector<16x256xf32>
    %cst = arith.constant -1.000000e+30 : f32
    %14 = vector.broadcast %cst : f32 to vector<16x256xf32>
    %cst_4 = arith.constant 0.000000e+00 : f32
    %15 = vector.broadcast %cst_4 : f32 to vector<16x256xf32>
    %cst_5 = arith.constant 0.000000e+00 : f32
    %16 = vector.broadcast %cst_5 : f32 to vector<16x256xf32>
    %cst_6 = arith.constant 0.000000e+00 : f32
    %17 = vector.broadcast %cst_6 : f32 to vector<16x256xf32>
    %cst_7 = arith.constant 1.000000e+00 : f32
    %18 = vector.broadcast %cst_7 : f32 to vector<16x256xf32>
    %19 = arith.mulf %0, %18 : vector<16x256xf32>
    %cst_8 = arith.constant 0.000000e+00 : f32
    %20 = vector.broadcast %cst_8 : f32 to vector<16x256xf32>
    %21 = arith.mulf %1, %20 : vector<16x256xf32>
    %22 = arith.addf %19, %21 : vector<16x256xf32>
    %cst_9 = arith.constant 0.000000e+00 : f32
    %23 = vector.broadcast %cst_9 : f32 to vector<16x256xf32>
    %24 = arith.mulf %2, %23 : vector<16x256xf32>
    %25 = arith.addf %22, %24 : vector<16x256xf32>
    %26 = arith.cmpf ogt, %25, %14 : vector<16x256xf32>
    %27 = arith.select %26, %25, %14 : vector<16x256xi1>, vector<16x256xf32>
    %cst_10 = arith.constant 1.000000e+00 : f32
    %28 = vector.broadcast %cst_10 : f32 to vector<16x256xf32>
    %29 = arith.select %26, %28, %15 : vector<16x256xi1>, vector<16x256xf32>
    %cst_11 = arith.constant 5.000000e-01 : f32
    %30 = vector.broadcast %cst_11 : f32 to vector<16x256xf32>
    %31 = arith.select %26, %30, %16 : vector<16x256xi1>, vector<16x256xf32>
    %cst_12 = arith.constant 5.000000e-01 : f32
    %32 = vector.broadcast %cst_12 : f32 to vector<16x256xf32>
    %33 = arith.select %26, %32, %17 : vector<16x256xi1>, vector<16x256xf32>
    %cst_13 = arith.constant -1.000000e+00 : f32
    %34 = vector.broadcast %cst_13 : f32 to vector<16x256xf32>
    %35 = arith.mulf %0, %34 : vector<16x256xf32>
    %cst_14 = arith.constant 0.000000e+00 : f32
    %36 = vector.broadcast %cst_14 : f32 to vector<16x256xf32>
    %37 = arith.mulf %1, %36 : vector<16x256xf32>
    %38 = arith.addf %35, %37 : vector<16x256xf32>
    %cst_15 = arith.constant 0.000000e+00 : f32
    %39 = vector.broadcast %cst_15 : f32 to vector<16x256xf32>
    %40 = arith.mulf %2, %39 : vector<16x256xf32>
    %41 = arith.addf %38, %40 : vector<16x256xf32>
    %42 = arith.cmpf ogt, %41, %27 : vector<16x256xf32>
    %43 = arith.select %42, %41, %27 : vector<16x256xi1>, vector<16x256xf32>
    %cst_16 = arith.constant 0.000000e+00 : f32
    %44 = vector.broadcast %cst_16 : f32 to vector<16x256xf32>
    %45 = arith.select %42, %44, %29 : vector<16x256xi1>, vector<16x256xf32>
    %cst_17 = arith.constant 5.000000e-01 : f32
    %46 = vector.broadcast %cst_17 : f32 to vector<16x256xf32>
    %47 = arith.select %42, %46, %31 : vector<16x256xi1>, vector<16x256xf32>
    %cst_18 = arith.constant 5.000000e-01 : f32
    %48 = vector.broadcast %cst_18 : f32 to vector<16x256xf32>
    %49 = arith.select %42, %48, %33 : vector<16x256xi1>, vector<16x256xf32>
    %cst_19 = arith.constant 0.000000e+00 : f32
    %50 = vector.broadcast %cst_19 : f32 to vector<16x256xf32>
    %51 = arith.mulf %0, %50 : vector<16x256xf32>
    %cst_20 = arith.constant 1.000000e+00 : f32
    %52 = vector.broadcast %cst_20 : f32 to vector<16x256xf32>
    %53 = arith.mulf %1, %52 : vector<16x256xf32>
    %54 = arith.addf %51, %53 : vector<16x256xf32>
    %cst_21 = arith.constant 0.000000e+00 : f32
    %55 = vector.broadcast %cst_21 : f32 to vector<16x256xf32>
    %56 = arith.mulf %2, %55 : vector<16x256xf32>
    %57 = arith.addf %54, %56 : vector<16x256xf32>
    %58 = arith.cmpf ogt, %57, %43 : vector<16x256xf32>
    %59 = arith.select %58, %57, %43 : vector<16x256xi1>, vector<16x256xf32>
    %cst_22 = arith.constant 5.000000e-01 : f32
    %60 = vector.broadcast %cst_22 : f32 to vector<16x256xf32>
    %61 = arith.select %58, %60, %45 : vector<16x256xi1>, vector<16x256xf32>
    %cst_23 = arith.constant 1.000000e+00 : f32
    %62 = vector.broadcast %cst_23 : f32 to vector<16x256xf32>
    %63 = arith.select %58, %62, %47 : vector<16x256xi1>, vector<16x256xf32>
    %cst_24 = arith.constant 5.000000e-01 : f32
    %64 = vector.broadcast %cst_24 : f32 to vector<16x256xf32>
    %65 = arith.select %58, %64, %49 : vector<16x256xi1>, vector<16x256xf32>
    %cst_25 = arith.constant 0.000000e+00 : f32
    %66 = vector.broadcast %cst_25 : f32 to vector<16x256xf32>
    %67 = arith.mulf %0, %66 : vector<16x256xf32>
    %cst_26 = arith.constant -1.000000e+00 : f32
    %68 = vector.broadcast %cst_26 : f32 to vector<16x256xf32>
    %69 = arith.mulf %1, %68 : vector<16x256xf32>
    %70 = arith.addf %67, %69 : vector<16x256xf32>
    %cst_27 = arith.constant 0.000000e+00 : f32
    %71 = vector.broadcast %cst_27 : f32 to vector<16x256xf32>
    %72 = arith.mulf %2, %71 : vector<16x256xf32>
    %73 = arith.addf %70, %72 : vector<16x256xf32>
    %74 = arith.cmpf ogt, %73, %59 : vector<16x256xf32>
    %75 = arith.select %74, %73, %59 : vector<16x256xi1>, vector<16x256xf32>
    %cst_28 = arith.constant 5.000000e-01 : f32
    %76 = vector.broadcast %cst_28 : f32 to vector<16x256xf32>
    %77 = arith.select %74, %76, %61 : vector<16x256xi1>, vector<16x256xf32>
    %cst_29 = arith.constant 0.000000e+00 : f32
    %78 = vector.broadcast %cst_29 : f32 to vector<16x256xf32>
    %79 = arith.select %74, %78, %63 : vector<16x256xi1>, vector<16x256xf32>
    %cst_30 = arith.constant 5.000000e-01 : f32
    %80 = vector.broadcast %cst_30 : f32 to vector<16x256xf32>
    %81 = arith.select %74, %80, %65 : vector<16x256xi1>, vector<16x256xf32>
    %cst_31 = arith.constant 0.000000e+00 : f32
    %82 = vector.broadcast %cst_31 : f32 to vector<16x256xf32>
    %83 = arith.mulf %0, %82 : vector<16x256xf32>
    %cst_32 = arith.constant 0.000000e+00 : f32
    %84 = vector.broadcast %cst_32 : f32 to vector<16x256xf32>
    %85 = arith.mulf %1, %84 : vector<16x256xf32>
    %86 = arith.addf %83, %85 : vector<16x256xf32>
    %cst_33 = arith.constant 1.000000e+00 : f32
    %87 = vector.broadcast %cst_33 : f32 to vector<16x256xf32>
    %88 = arith.mulf %2, %87 : vector<16x256xf32>
    %89 = arith.addf %86, %88 : vector<16x256xf32>
    %90 = arith.cmpf ogt, %89, %75 : vector<16x256xf32>
    %91 = arith.select %90, %89, %75 : vector<16x256xi1>, vector<16x256xf32>
    %cst_34 = arith.constant 5.000000e-01 : f32
    %92 = vector.broadcast %cst_34 : f32 to vector<16x256xf32>
    %93 = arith.select %90, %92, %77 : vector<16x256xi1>, vector<16x256xf32>
    %cst_35 = arith.constant 5.000000e-01 : f32
    %94 = vector.broadcast %cst_35 : f32 to vector<16x256xf32>
    %95 = arith.select %90, %94, %79 : vector<16x256xi1>, vector<16x256xf32>
    %cst_36 = arith.constant 1.000000e+00 : f32
    %96 = vector.broadcast %cst_36 : f32 to vector<16x256xf32>
    %97 = arith.select %90, %96, %81 : vector<16x256xi1>, vector<16x256xf32>
    %cst_37 = arith.constant 0.000000e+00 : f32
    %98 = vector.broadcast %cst_37 : f32 to vector<16x256xf32>
    %99 = arith.mulf %0, %98 : vector<16x256xf32>
    %cst_38 = arith.constant 0.000000e+00 : f32
    %100 = vector.broadcast %cst_38 : f32 to vector<16x256xf32>
    %101 = arith.mulf %1, %100 : vector<16x256xf32>
    %102 = arith.addf %99, %101 : vector<16x256xf32>
    %cst_39 = arith.constant -1.000000e+00 : f32
    %103 = vector.broadcast %cst_39 : f32 to vector<16x256xf32>
    %104 = arith.mulf %2, %103 : vector<16x256xf32>
    %105 = arith.addf %102, %104 : vector<16x256xf32>
    %106 = arith.cmpf ogt, %105, %91 : vector<16x256xf32>
    %107 = arith.select %106, %105, %91 : vector<16x256xi1>, vector<16x256xf32>
    %cst_40 = arith.constant 5.000000e-01 : f32
    %108 = vector.broadcast %cst_40 : f32 to vector<16x256xf32>
    %109 = arith.select %106, %108, %93 : vector<16x256xi1>, vector<16x256xf32>
    %cst_41 = arith.constant 5.000000e-01 : f32
    %110 = vector.broadcast %cst_41 : f32 to vector<16x256xf32>
    %111 = arith.select %106, %110, %95 : vector<16x256xi1>, vector<16x256xf32>
    %cst_42 = arith.constant 0.000000e+00 : f32
    %112 = vector.broadcast %cst_42 : f32 to vector<16x256xf32>
    %113 = arith.select %106, %112, %97 : vector<16x256xi1>, vector<16x256xf32>
    %cst_43 = arith.constant 0.707099974 : f32
    %114 = vector.broadcast %cst_43 : f32 to vector<16x256xf32>
    %115 = arith.mulf %0, %114 : vector<16x256xf32>
    %cst_44 = arith.constant 0.707099974 : f32
    %116 = vector.broadcast %cst_44 : f32 to vector<16x256xf32>
    %117 = arith.mulf %1, %116 : vector<16x256xf32>
    %118 = arith.addf %115, %117 : vector<16x256xf32>
    %cst_45 = arith.constant 0.000000e+00 : f32
    %119 = vector.broadcast %cst_45 : f32 to vector<16x256xf32>
    %120 = arith.mulf %2, %119 : vector<16x256xf32>
    %121 = arith.addf %118, %120 : vector<16x256xf32>
    %122 = arith.cmpf ogt, %121, %107 : vector<16x256xf32>
    %123 = arith.select %122, %121, %107 : vector<16x256xi1>, vector<16x256xf32>
    %cst_46 = arith.constant 1.000000e+00 : f32
    %124 = vector.broadcast %cst_46 : f32 to vector<16x256xf32>
    %125 = arith.select %122, %124, %109 : vector<16x256xi1>, vector<16x256xf32>
    %cst_47 = arith.constant 1.000000e+00 : f32
    %126 = vector.broadcast %cst_47 : f32 to vector<16x256xf32>
    %127 = arith.select %122, %126, %111 : vector<16x256xi1>, vector<16x256xf32>
    %cst_48 = arith.constant 5.000000e-01 : f32
    %128 = vector.broadcast %cst_48 : f32 to vector<16x256xf32>
    %129 = arith.select %122, %128, %113 : vector<16x256xi1>, vector<16x256xf32>
    %cst_49 = arith.constant 0.707099974 : f32
    %130 = vector.broadcast %cst_49 : f32 to vector<16x256xf32>
    %131 = arith.mulf %0, %130 : vector<16x256xf32>
    %cst_50 = arith.constant -0.707099974 : f32
    %132 = vector.broadcast %cst_50 : f32 to vector<16x256xf32>
    %133 = arith.mulf %1, %132 : vector<16x256xf32>
    %134 = arith.addf %131, %133 : vector<16x256xf32>
    %cst_51 = arith.constant 0.000000e+00 : f32
    %135 = vector.broadcast %cst_51 : f32 to vector<16x256xf32>
    %136 = arith.mulf %2, %135 : vector<16x256xf32>
    %137 = arith.addf %134, %136 : vector<16x256xf32>
    %138 = arith.cmpf ogt, %137, %123 : vector<16x256xf32>
    %139 = arith.select %138, %137, %123 : vector<16x256xi1>, vector<16x256xf32>
    %cst_52 = arith.constant 1.000000e+00 : f32
    %140 = vector.broadcast %cst_52 : f32 to vector<16x256xf32>
    %141 = arith.select %138, %140, %125 : vector<16x256xi1>, vector<16x256xf32>
    %cst_53 = arith.constant 0.000000e+00 : f32
    %142 = vector.broadcast %cst_53 : f32 to vector<16x256xf32>
    %143 = arith.select %138, %142, %127 : vector<16x256xi1>, vector<16x256xf32>
    %cst_54 = arith.constant 5.000000e-01 : f32
    %144 = vector.broadcast %cst_54 : f32 to vector<16x256xf32>
    %145 = arith.select %138, %144, %129 : vector<16x256xi1>, vector<16x256xf32>
    %cst_55 = arith.constant -0.707099974 : f32
    %146 = vector.broadcast %cst_55 : f32 to vector<16x256xf32>
    %147 = arith.mulf %0, %146 : vector<16x256xf32>
    %cst_56 = arith.constant 0.707099974 : f32
    %148 = vector.broadcast %cst_56 : f32 to vector<16x256xf32>
    %149 = arith.mulf %1, %148 : vector<16x256xf32>
    %150 = arith.addf %147, %149 : vector<16x256xf32>
    %cst_57 = arith.constant 0.000000e+00 : f32
    %151 = vector.broadcast %cst_57 : f32 to vector<16x256xf32>
    %152 = arith.mulf %2, %151 : vector<16x256xf32>
    %153 = arith.addf %150, %152 : vector<16x256xf32>
    %154 = arith.cmpf ogt, %153, %139 : vector<16x256xf32>
    %155 = arith.select %154, %153, %139 : vector<16x256xi1>, vector<16x256xf32>
    %cst_58 = arith.constant 0.000000e+00 : f32
    %156 = vector.broadcast %cst_58 : f32 to vector<16x256xf32>
    %157 = arith.select %154, %156, %141 : vector<16x256xi1>, vector<16x256xf32>
    %cst_59 = arith.constant 1.000000e+00 : f32
    %158 = vector.broadcast %cst_59 : f32 to vector<16x256xf32>
    %159 = arith.select %154, %158, %143 : vector<16x256xi1>, vector<16x256xf32>
    %cst_60 = arith.constant 5.000000e-01 : f32
    %160 = vector.broadcast %cst_60 : f32 to vector<16x256xf32>
    %161 = arith.select %154, %160, %145 : vector<16x256xi1>, vector<16x256xf32>
    %cst_61 = arith.constant -0.707099974 : f32
    %162 = vector.broadcast %cst_61 : f32 to vector<16x256xf32>
    %163 = arith.mulf %0, %162 : vector<16x256xf32>
    %cst_62 = arith.constant -0.707099974 : f32
    %164 = vector.broadcast %cst_62 : f32 to vector<16x256xf32>
    %165 = arith.mulf %1, %164 : vector<16x256xf32>
    %166 = arith.addf %163, %165 : vector<16x256xf32>
    %cst_63 = arith.constant 0.000000e+00 : f32
    %167 = vector.broadcast %cst_63 : f32 to vector<16x256xf32>
    %168 = arith.mulf %2, %167 : vector<16x256xf32>
    %169 = arith.addf %166, %168 : vector<16x256xf32>
    %170 = arith.cmpf ogt, %169, %155 : vector<16x256xf32>
    %171 = arith.select %170, %169, %155 : vector<16x256xi1>, vector<16x256xf32>
    %cst_64 = arith.constant 0.000000e+00 : f32
    %172 = vector.broadcast %cst_64 : f32 to vector<16x256xf32>
    %173 = arith.select %170, %172, %157 : vector<16x256xi1>, vector<16x256xf32>
    %cst_65 = arith.constant 0.000000e+00 : f32
    %174 = vector.broadcast %cst_65 : f32 to vector<16x256xf32>
    %175 = arith.select %170, %174, %159 : vector<16x256xi1>, vector<16x256xf32>
    %cst_66 = arith.constant 5.000000e-01 : f32
    %176 = vector.broadcast %cst_66 : f32 to vector<16x256xf32>
    %177 = arith.select %170, %176, %161 : vector<16x256xi1>, vector<16x256xf32>
    %cst_67 = arith.constant 0.707099974 : f32
    %178 = vector.broadcast %cst_67 : f32 to vector<16x256xf32>
    %179 = arith.mulf %0, %178 : vector<16x256xf32>
    %cst_68 = arith.constant 0.000000e+00 : f32
    %180 = vector.broadcast %cst_68 : f32 to vector<16x256xf32>
    %181 = arith.mulf %1, %180 : vector<16x256xf32>
    %182 = arith.addf %179, %181 : vector<16x256xf32>
    %cst_69 = arith.constant 0.707099974 : f32
    %183 = vector.broadcast %cst_69 : f32 to vector<16x256xf32>
    %184 = arith.mulf %2, %183 : vector<16x256xf32>
    %185 = arith.addf %182, %184 : vector<16x256xf32>
    %186 = arith.cmpf ogt, %185, %171 : vector<16x256xf32>
    %187 = arith.select %186, %185, %171 : vector<16x256xi1>, vector<16x256xf32>
    %cst_70 = arith.constant 1.000000e+00 : f32
    %188 = vector.broadcast %cst_70 : f32 to vector<16x256xf32>
    %189 = arith.select %186, %188, %173 : vector<16x256xi1>, vector<16x256xf32>
    %cst_71 = arith.constant 5.000000e-01 : f32
    %190 = vector.broadcast %cst_71 : f32 to vector<16x256xf32>
    %191 = arith.select %186, %190, %175 : vector<16x256xi1>, vector<16x256xf32>
    %cst_72 = arith.constant 1.000000e+00 : f32
    %192 = vector.broadcast %cst_72 : f32 to vector<16x256xf32>
    %193 = arith.select %186, %192, %177 : vector<16x256xi1>, vector<16x256xf32>
    %cst_73 = arith.constant 0.707099974 : f32
    %194 = vector.broadcast %cst_73 : f32 to vector<16x256xf32>
    %195 = arith.mulf %0, %194 : vector<16x256xf32>
    %cst_74 = arith.constant 0.000000e+00 : f32
    %196 = vector.broadcast %cst_74 : f32 to vector<16x256xf32>
    %197 = arith.mulf %1, %196 : vector<16x256xf32>
    %198 = arith.addf %195, %197 : vector<16x256xf32>
    %cst_75 = arith.constant -0.707099974 : f32
    %199 = vector.broadcast %cst_75 : f32 to vector<16x256xf32>
    %200 = arith.mulf %2, %199 : vector<16x256xf32>
    %201 = arith.addf %198, %200 : vector<16x256xf32>
    %202 = arith.cmpf ogt, %201, %187 : vector<16x256xf32>
    %203 = arith.select %202, %201, %187 : vector<16x256xi1>, vector<16x256xf32>
    %cst_76 = arith.constant 1.000000e+00 : f32
    %204 = vector.broadcast %cst_76 : f32 to vector<16x256xf32>
    %205 = arith.select %202, %204, %189 : vector<16x256xi1>, vector<16x256xf32>
    %cst_77 = arith.constant 5.000000e-01 : f32
    %206 = vector.broadcast %cst_77 : f32 to vector<16x256xf32>
    %207 = arith.select %202, %206, %191 : vector<16x256xi1>, vector<16x256xf32>
    %cst_78 = arith.constant 0.000000e+00 : f32
    %208 = vector.broadcast %cst_78 : f32 to vector<16x256xf32>
    %209 = arith.select %202, %208, %193 : vector<16x256xi1>, vector<16x256xf32>
    %cst_79 = arith.constant -0.707099974 : f32
    %210 = vector.broadcast %cst_79 : f32 to vector<16x256xf32>
    %211 = arith.mulf %0, %210 : vector<16x256xf32>
    %cst_80 = arith.constant 0.000000e+00 : f32
    %212 = vector.broadcast %cst_80 : f32 to vector<16x256xf32>
    %213 = arith.mulf %1, %212 : vector<16x256xf32>
    %214 = arith.addf %211, %213 : vector<16x256xf32>
    %cst_81 = arith.constant 0.707099974 : f32
    %215 = vector.broadcast %cst_81 : f32 to vector<16x256xf32>
    %216 = arith.mulf %2, %215 : vector<16x256xf32>
    %217 = arith.addf %214, %216 : vector<16x256xf32>
    %218 = arith.cmpf ogt, %217, %203 : vector<16x256xf32>
    %219 = arith.select %218, %217, %203 : vector<16x256xi1>, vector<16x256xf32>
    %cst_82 = arith.constant 0.000000e+00 : f32
    %220 = vector.broadcast %cst_82 : f32 to vector<16x256xf32>
    %221 = arith.select %218, %220, %205 : vector<16x256xi1>, vector<16x256xf32>
    %cst_83 = arith.constant 5.000000e-01 : f32
    %222 = vector.broadcast %cst_83 : f32 to vector<16x256xf32>
    %223 = arith.select %218, %222, %207 : vector<16x256xi1>, vector<16x256xf32>
    %cst_84 = arith.constant 1.000000e+00 : f32
    %224 = vector.broadcast %cst_84 : f32 to vector<16x256xf32>
    %225 = arith.select %218, %224, %209 : vector<16x256xi1>, vector<16x256xf32>
    %cst_85 = arith.constant -0.707099974 : f32
    %226 = vector.broadcast %cst_85 : f32 to vector<16x256xf32>
    %227 = arith.mulf %0, %226 : vector<16x256xf32>
    %cst_86 = arith.constant 0.000000e+00 : f32
    %228 = vector.broadcast %cst_86 : f32 to vector<16x256xf32>
    %229 = arith.mulf %1, %228 : vector<16x256xf32>
    %230 = arith.addf %227, %229 : vector<16x256xf32>
    %cst_87 = arith.constant -0.707099974 : f32
    %231 = vector.broadcast %cst_87 : f32 to vector<16x256xf32>
    %232 = arith.mulf %2, %231 : vector<16x256xf32>
    %233 = arith.addf %230, %232 : vector<16x256xf32>
    %234 = arith.cmpf ogt, %233, %219 : vector<16x256xf32>
    %235 = arith.select %234, %233, %219 : vector<16x256xi1>, vector<16x256xf32>
    %cst_88 = arith.constant 0.000000e+00 : f32
    %236 = vector.broadcast %cst_88 : f32 to vector<16x256xf32>
    %237 = arith.select %234, %236, %221 : vector<16x256xi1>, vector<16x256xf32>
    %cst_89 = arith.constant 5.000000e-01 : f32
    %238 = vector.broadcast %cst_89 : f32 to vector<16x256xf32>
    %239 = arith.select %234, %238, %223 : vector<16x256xi1>, vector<16x256xf32>
    %cst_90 = arith.constant 0.000000e+00 : f32
    %240 = vector.broadcast %cst_90 : f32 to vector<16x256xf32>
    %241 = arith.select %234, %240, %225 : vector<16x256xi1>, vector<16x256xf32>
    %cst_91 = arith.constant 0.000000e+00 : f32
    %242 = vector.broadcast %cst_91 : f32 to vector<16x256xf32>
    %243 = arith.mulf %0, %242 : vector<16x256xf32>
    %cst_92 = arith.constant 0.707099974 : f32
    %244 = vector.broadcast %cst_92 : f32 to vector<16x256xf32>
    %245 = arith.mulf %1, %244 : vector<16x256xf32>
    %246 = arith.addf %243, %245 : vector<16x256xf32>
    %cst_93 = arith.constant 0.707099974 : f32
    %247 = vector.broadcast %cst_93 : f32 to vector<16x256xf32>
    %248 = arith.mulf %2, %247 : vector<16x256xf32>
    %249 = arith.addf %246, %248 : vector<16x256xf32>
    %250 = arith.cmpf ogt, %249, %235 : vector<16x256xf32>
    %251 = arith.select %250, %249, %235 : vector<16x256xi1>, vector<16x256xf32>
    %cst_94 = arith.constant 5.000000e-01 : f32
    %252 = vector.broadcast %cst_94 : f32 to vector<16x256xf32>
    %253 = arith.select %250, %252, %237 : vector<16x256xi1>, vector<16x256xf32>
    %cst_95 = arith.constant 1.000000e+00 : f32
    %254 = vector.broadcast %cst_95 : f32 to vector<16x256xf32>
    %255 = arith.select %250, %254, %239 : vector<16x256xi1>, vector<16x256xf32>
    %cst_96 = arith.constant 1.000000e+00 : f32
    %256 = vector.broadcast %cst_96 : f32 to vector<16x256xf32>
    %257 = arith.select %250, %256, %241 : vector<16x256xi1>, vector<16x256xf32>
    %cst_97 = arith.constant 0.000000e+00 : f32
    %258 = vector.broadcast %cst_97 : f32 to vector<16x256xf32>
    %259 = arith.mulf %0, %258 : vector<16x256xf32>
    %cst_98 = arith.constant 0.707099974 : f32
    %260 = vector.broadcast %cst_98 : f32 to vector<16x256xf32>
    %261 = arith.mulf %1, %260 : vector<16x256xf32>
    %262 = arith.addf %259, %261 : vector<16x256xf32>
    %cst_99 = arith.constant -0.707099974 : f32
    %263 = vector.broadcast %cst_99 : f32 to vector<16x256xf32>
    %264 = arith.mulf %2, %263 : vector<16x256xf32>
    %265 = arith.addf %262, %264 : vector<16x256xf32>
    %266 = arith.cmpf ogt, %265, %251 : vector<16x256xf32>
    %267 = arith.select %266, %265, %251 : vector<16x256xi1>, vector<16x256xf32>
    %cst_100 = arith.constant 5.000000e-01 : f32
    %268 = vector.broadcast %cst_100 : f32 to vector<16x256xf32>
    %269 = arith.select %266, %268, %253 : vector<16x256xi1>, vector<16x256xf32>
    %cst_101 = arith.constant 1.000000e+00 : f32
    %270 = vector.broadcast %cst_101 : f32 to vector<16x256xf32>
    %271 = arith.select %266, %270, %255 : vector<16x256xi1>, vector<16x256xf32>
    %cst_102 = arith.constant 0.000000e+00 : f32
    %272 = vector.broadcast %cst_102 : f32 to vector<16x256xf32>
    %273 = arith.select %266, %272, %257 : vector<16x256xi1>, vector<16x256xf32>
    %cst_103 = arith.constant 0.000000e+00 : f32
    %274 = vector.broadcast %cst_103 : f32 to vector<16x256xf32>
    %275 = arith.mulf %0, %274 : vector<16x256xf32>
    %cst_104 = arith.constant -0.707099974 : f32
    %276 = vector.broadcast %cst_104 : f32 to vector<16x256xf32>
    %277 = arith.mulf %1, %276 : vector<16x256xf32>
    %278 = arith.addf %275, %277 : vector<16x256xf32>
    %cst_105 = arith.constant 0.707099974 : f32
    %279 = vector.broadcast %cst_105 : f32 to vector<16x256xf32>
    %280 = arith.mulf %2, %279 : vector<16x256xf32>
    %281 = arith.addf %278, %280 : vector<16x256xf32>
    %282 = arith.cmpf ogt, %281, %267 : vector<16x256xf32>
    %283 = arith.select %282, %281, %267 : vector<16x256xi1>, vector<16x256xf32>
    %cst_106 = arith.constant 5.000000e-01 : f32
    %284 = vector.broadcast %cst_106 : f32 to vector<16x256xf32>
    %285 = arith.select %282, %284, %269 : vector<16x256xi1>, vector<16x256xf32>
    %cst_107 = arith.constant 0.000000e+00 : f32
    %286 = vector.broadcast %cst_107 : f32 to vector<16x256xf32>
    %287 = arith.select %282, %286, %271 : vector<16x256xi1>, vector<16x256xf32>
    %cst_108 = arith.constant 1.000000e+00 : f32
    %288 = vector.broadcast %cst_108 : f32 to vector<16x256xf32>
    %289 = arith.select %282, %288, %273 : vector<16x256xi1>, vector<16x256xf32>
    %cst_109 = arith.constant 0.000000e+00 : f32
    %290 = vector.broadcast %cst_109 : f32 to vector<16x256xf32>
    %291 = arith.mulf %0, %290 : vector<16x256xf32>
    %cst_110 = arith.constant -0.707099974 : f32
    %292 = vector.broadcast %cst_110 : f32 to vector<16x256xf32>
    %293 = arith.mulf %1, %292 : vector<16x256xf32>
    %294 = arith.addf %291, %293 : vector<16x256xf32>
    %cst_111 = arith.constant -0.707099974 : f32
    %295 = vector.broadcast %cst_111 : f32 to vector<16x256xf32>
    %296 = arith.mulf %2, %295 : vector<16x256xf32>
    %297 = arith.addf %294, %296 : vector<16x256xf32>
    %298 = arith.cmpf ogt, %297, %283 : vector<16x256xf32>
    %299 = arith.select %298, %297, %283 : vector<16x256xi1>, vector<16x256xf32>
    %cst_112 = arith.constant 5.000000e-01 : f32
    %300 = vector.broadcast %cst_112 : f32 to vector<16x256xf32>
    %301 = arith.select %298, %300, %285 : vector<16x256xi1>, vector<16x256xf32>
    %cst_113 = arith.constant 0.000000e+00 : f32
    %302 = vector.broadcast %cst_113 : f32 to vector<16x256xf32>
    %303 = arith.select %298, %302, %287 : vector<16x256xi1>, vector<16x256xf32>
    %cst_114 = arith.constant 0.000000e+00 : f32
    %304 = vector.broadcast %cst_114 : f32 to vector<16x256xf32>
    %305 = arith.select %298, %304, %289 : vector<16x256xi1>, vector<16x256xf32>
    %cst_115 = arith.constant 5.773000e-01 : f32
    %306 = vector.broadcast %cst_115 : f32 to vector<16x256xf32>
    %307 = arith.mulf %0, %306 : vector<16x256xf32>
    %cst_116 = arith.constant 5.773000e-01 : f32
    %308 = vector.broadcast %cst_116 : f32 to vector<16x256xf32>
    %309 = arith.mulf %1, %308 : vector<16x256xf32>
    %310 = arith.addf %307, %309 : vector<16x256xf32>
    %cst_117 = arith.constant 5.773000e-01 : f32
    %311 = vector.broadcast %cst_117 : f32 to vector<16x256xf32>
    %312 = arith.mulf %2, %311 : vector<16x256xf32>
    %313 = arith.addf %310, %312 : vector<16x256xf32>
    %314 = arith.cmpf ogt, %313, %299 : vector<16x256xf32>
    %315 = arith.select %314, %313, %299 : vector<16x256xi1>, vector<16x256xf32>
    %cst_118 = arith.constant 1.000000e+00 : f32
    %316 = vector.broadcast %cst_118 : f32 to vector<16x256xf32>
    %317 = arith.select %314, %316, %301 : vector<16x256xi1>, vector<16x256xf32>
    %cst_119 = arith.constant 1.000000e+00 : f32
    %318 = vector.broadcast %cst_119 : f32 to vector<16x256xf32>
    %319 = arith.select %314, %318, %303 : vector<16x256xi1>, vector<16x256xf32>
    %cst_120 = arith.constant 1.000000e+00 : f32
    %320 = vector.broadcast %cst_120 : f32 to vector<16x256xf32>
    %321 = arith.select %314, %320, %305 : vector<16x256xi1>, vector<16x256xf32>
    %cst_121 = arith.constant 5.773000e-01 : f32
    %322 = vector.broadcast %cst_121 : f32 to vector<16x256xf32>
    %323 = arith.mulf %0, %322 : vector<16x256xf32>
    %cst_122 = arith.constant 5.773000e-01 : f32
    %324 = vector.broadcast %cst_122 : f32 to vector<16x256xf32>
    %325 = arith.mulf %1, %324 : vector<16x256xf32>
    %326 = arith.addf %323, %325 : vector<16x256xf32>
    %cst_123 = arith.constant -5.773000e-01 : f32
    %327 = vector.broadcast %cst_123 : f32 to vector<16x256xf32>
    %328 = arith.mulf %2, %327 : vector<16x256xf32>
    %329 = arith.addf %326, %328 : vector<16x256xf32>
    %330 = arith.cmpf ogt, %329, %315 : vector<16x256xf32>
    %331 = arith.select %330, %329, %315 : vector<16x256xi1>, vector<16x256xf32>
    %cst_124 = arith.constant 1.000000e+00 : f32
    %332 = vector.broadcast %cst_124 : f32 to vector<16x256xf32>
    %333 = arith.select %330, %332, %317 : vector<16x256xi1>, vector<16x256xf32>
    %cst_125 = arith.constant 1.000000e+00 : f32
    %334 = vector.broadcast %cst_125 : f32 to vector<16x256xf32>
    %335 = arith.select %330, %334, %319 : vector<16x256xi1>, vector<16x256xf32>
    %cst_126 = arith.constant 0.000000e+00 : f32
    %336 = vector.broadcast %cst_126 : f32 to vector<16x256xf32>
    %337 = arith.select %330, %336, %321 : vector<16x256xi1>, vector<16x256xf32>
    %cst_127 = arith.constant 5.773000e-01 : f32
    %338 = vector.broadcast %cst_127 : f32 to vector<16x256xf32>
    %339 = arith.mulf %0, %338 : vector<16x256xf32>
    %cst_128 = arith.constant -5.773000e-01 : f32
    %340 = vector.broadcast %cst_128 : f32 to vector<16x256xf32>
    %341 = arith.mulf %1, %340 : vector<16x256xf32>
    %342 = arith.addf %339, %341 : vector<16x256xf32>
    %cst_129 = arith.constant 5.773000e-01 : f32
    %343 = vector.broadcast %cst_129 : f32 to vector<16x256xf32>
    %344 = arith.mulf %2, %343 : vector<16x256xf32>
    %345 = arith.addf %342, %344 : vector<16x256xf32>
    %346 = arith.cmpf ogt, %345, %331 : vector<16x256xf32>
    %347 = arith.select %346, %345, %331 : vector<16x256xi1>, vector<16x256xf32>
    %cst_130 = arith.constant 1.000000e+00 : f32
    %348 = vector.broadcast %cst_130 : f32 to vector<16x256xf32>
    %349 = arith.select %346, %348, %333 : vector<16x256xi1>, vector<16x256xf32>
    %cst_131 = arith.constant 0.000000e+00 : f32
    %350 = vector.broadcast %cst_131 : f32 to vector<16x256xf32>
    %351 = arith.select %346, %350, %335 : vector<16x256xi1>, vector<16x256xf32>
    %cst_132 = arith.constant 1.000000e+00 : f32
    %352 = vector.broadcast %cst_132 : f32 to vector<16x256xf32>
    %353 = arith.select %346, %352, %337 : vector<16x256xi1>, vector<16x256xf32>
    %cst_133 = arith.constant -5.773000e-01 : f32
    %354 = vector.broadcast %cst_133 : f32 to vector<16x256xf32>
    %355 = arith.mulf %0, %354 : vector<16x256xf32>
    %cst_134 = arith.constant 5.773000e-01 : f32
    %356 = vector.broadcast %cst_134 : f32 to vector<16x256xf32>
    %357 = arith.mulf %1, %356 : vector<16x256xf32>
    %358 = arith.addf %355, %357 : vector<16x256xf32>
    %cst_135 = arith.constant 5.773000e-01 : f32
    %359 = vector.broadcast %cst_135 : f32 to vector<16x256xf32>
    %360 = arith.mulf %2, %359 : vector<16x256xf32>
    %361 = arith.addf %358, %360 : vector<16x256xf32>
    %362 = arith.cmpf ogt, %361, %347 : vector<16x256xf32>
    %363 = arith.select %362, %361, %347 : vector<16x256xi1>, vector<16x256xf32>
    %cst_136 = arith.constant 0.000000e+00 : f32
    %364 = vector.broadcast %cst_136 : f32 to vector<16x256xf32>
    %365 = arith.select %362, %364, %349 : vector<16x256xi1>, vector<16x256xf32>
    %cst_137 = arith.constant 1.000000e+00 : f32
    %366 = vector.broadcast %cst_137 : f32 to vector<16x256xf32>
    %367 = arith.select %362, %366, %351 : vector<16x256xi1>, vector<16x256xf32>
    %cst_138 = arith.constant 1.000000e+00 : f32
    %368 = vector.broadcast %cst_138 : f32 to vector<16x256xf32>
    %369 = arith.select %362, %368, %353 : vector<16x256xi1>, vector<16x256xf32>
    %cst_139 = arith.constant -5.773000e-01 : f32
    %370 = vector.broadcast %cst_139 : f32 to vector<16x256xf32>
    %371 = arith.mulf %0, %370 : vector<16x256xf32>
    %cst_140 = arith.constant -5.773000e-01 : f32
    %372 = vector.broadcast %cst_140 : f32 to vector<16x256xf32>
    %373 = arith.mulf %1, %372 : vector<16x256xf32>
    %374 = arith.addf %371, %373 : vector<16x256xf32>
    %cst_141 = arith.constant 5.773000e-01 : f32
    %375 = vector.broadcast %cst_141 : f32 to vector<16x256xf32>
    %376 = arith.mulf %2, %375 : vector<16x256xf32>
    %377 = arith.addf %374, %376 : vector<16x256xf32>
    %378 = arith.cmpf ogt, %377, %363 : vector<16x256xf32>
    %379 = arith.select %378, %377, %363 : vector<16x256xi1>, vector<16x256xf32>
    %cst_142 = arith.constant 0.000000e+00 : f32
    %380 = vector.broadcast %cst_142 : f32 to vector<16x256xf32>
    %381 = arith.select %378, %380, %365 : vector<16x256xi1>, vector<16x256xf32>
    %cst_143 = arith.constant 0.000000e+00 : f32
    %382 = vector.broadcast %cst_143 : f32 to vector<16x256xf32>
    %383 = arith.select %378, %382, %367 : vector<16x256xi1>, vector<16x256xf32>
    %cst_144 = arith.constant 1.000000e+00 : f32
    %384 = vector.broadcast %cst_144 : f32 to vector<16x256xf32>
    %385 = arith.select %378, %384, %369 : vector<16x256xi1>, vector<16x256xf32>
    %cst_145 = arith.constant -5.773000e-01 : f32
    %386 = vector.broadcast %cst_145 : f32 to vector<16x256xf32>
    %387 = arith.mulf %0, %386 : vector<16x256xf32>
    %cst_146 = arith.constant 5.773000e-01 : f32
    %388 = vector.broadcast %cst_146 : f32 to vector<16x256xf32>
    %389 = arith.mulf %1, %388 : vector<16x256xf32>
    %390 = arith.addf %387, %389 : vector<16x256xf32>
    %cst_147 = arith.constant -5.773000e-01 : f32
    %391 = vector.broadcast %cst_147 : f32 to vector<16x256xf32>
    %392 = arith.mulf %2, %391 : vector<16x256xf32>
    %393 = arith.addf %390, %392 : vector<16x256xf32>
    %394 = arith.cmpf ogt, %393, %379 : vector<16x256xf32>
    %395 = arith.select %394, %393, %379 : vector<16x256xi1>, vector<16x256xf32>
    %cst_148 = arith.constant 0.000000e+00 : f32
    %396 = vector.broadcast %cst_148 : f32 to vector<16x256xf32>
    %397 = arith.select %394, %396, %381 : vector<16x256xi1>, vector<16x256xf32>
    %cst_149 = arith.constant 1.000000e+00 : f32
    %398 = vector.broadcast %cst_149 : f32 to vector<16x256xf32>
    %399 = arith.select %394, %398, %383 : vector<16x256xi1>, vector<16x256xf32>
    %cst_150 = arith.constant 0.000000e+00 : f32
    %400 = vector.broadcast %cst_150 : f32 to vector<16x256xf32>
    %401 = arith.select %394, %400, %385 : vector<16x256xi1>, vector<16x256xf32>
    %cst_151 = arith.constant 5.773000e-01 : f32
    %402 = vector.broadcast %cst_151 : f32 to vector<16x256xf32>
    %403 = arith.mulf %0, %402 : vector<16x256xf32>
    %cst_152 = arith.constant -5.773000e-01 : f32
    %404 = vector.broadcast %cst_152 : f32 to vector<16x256xf32>
    %405 = arith.mulf %1, %404 : vector<16x256xf32>
    %406 = arith.addf %403, %405 : vector<16x256xf32>
    %cst_153 = arith.constant -5.773000e-01 : f32
    %407 = vector.broadcast %cst_153 : f32 to vector<16x256xf32>
    %408 = arith.mulf %2, %407 : vector<16x256xf32>
    %409 = arith.addf %406, %408 : vector<16x256xf32>
    %410 = arith.cmpf ogt, %409, %395 : vector<16x256xf32>
    %411 = arith.select %410, %409, %395 : vector<16x256xi1>, vector<16x256xf32>
    %cst_154 = arith.constant 1.000000e+00 : f32
    %412 = vector.broadcast %cst_154 : f32 to vector<16x256xf32>
    %413 = arith.select %410, %412, %397 : vector<16x256xi1>, vector<16x256xf32>
    %cst_155 = arith.constant 0.000000e+00 : f32
    %414 = vector.broadcast %cst_155 : f32 to vector<16x256xf32>
    %415 = arith.select %410, %414, %399 : vector<16x256xi1>, vector<16x256xf32>
    %cst_156 = arith.constant 0.000000e+00 : f32
    %416 = vector.broadcast %cst_156 : f32 to vector<16x256xf32>
    %417 = arith.select %410, %416, %401 : vector<16x256xi1>, vector<16x256xf32>
    %cst_157 = arith.constant -5.773000e-01 : f32
    %418 = vector.broadcast %cst_157 : f32 to vector<16x256xf32>
    %419 = arith.mulf %0, %418 : vector<16x256xf32>
    %cst_158 = arith.constant -5.773000e-01 : f32
    %420 = vector.broadcast %cst_158 : f32 to vector<16x256xf32>
    %421 = arith.mulf %1, %420 : vector<16x256xf32>
    %422 = arith.addf %419, %421 : vector<16x256xf32>
    %cst_159 = arith.constant -5.773000e-01 : f32
    %423 = vector.broadcast %cst_159 : f32 to vector<16x256xf32>
    %424 = arith.mulf %2, %423 : vector<16x256xf32>
    %425 = arith.addf %422, %424 : vector<16x256xf32>
    %426 = arith.cmpf ogt, %425, %411 : vector<16x256xf32>
    %cst_160 = arith.constant 0.000000e+00 : f32
    %427 = vector.broadcast %cst_160 : f32 to vector<16x256xf32>
    %428 = arith.select %426, %427, %413 : vector<16x256xi1>, vector<16x256xf32>
    %cst_161 = arith.constant 0.000000e+00 : f32
    %429 = vector.broadcast %cst_161 : f32 to vector<16x256xf32>
    %430 = arith.select %426, %429, %415 : vector<16x256xi1>, vector<16x256xf32>
    %cst_162 = arith.constant 0.000000e+00 : f32
    %431 = vector.broadcast %cst_162 : f32 to vector<16x256xf32>
    %432 = arith.select %426, %431, %417 : vector<16x256xi1>, vector<16x256xf32>
    %433 = arith.addf %428, %5 : vector<16x256xf32>
    %434 = arith.addf %430, %10 : vector<16x256xf32>
    %435 = arith.addf %432, %13 : vector<16x256xf32>
    %c1_i32 = arith.constant 1 : i32
    %436 = arith.subi %c1_i32, %arg0 : i32
    %c0_i32 = arith.constant 0 : i32
    %437 = arith.maxsi %436, %c0_i32 : i32
    %438 = arith.sitofp %437 : i32 to f32
    %c1_i32_163 = arith.constant 1 : i32
    %439 = arith.subi %arg0, %c1_i32_163 : i32
    %c0_i32_164 = arith.constant 0 : i32
    %440 = arith.maxsi %439, %c0_i32_164 : i32
    %441 = arith.sitofp %440 : i32 to f32
    %cst_165 = arith.constant 1.000000e+00 : f32
    %442 = arith.subf %cst_165, %438 : f32
    %443 = arith.subf %442, %441 : f32
    %444 = vector.broadcast %438 : f32 to vector<16x256xf32>
    %445 = arith.mulf %0, %444 : vector<16x256xf32>
    %446 = vector.broadcast %443 : f32 to vector<16x256xf32>
    %447 = arith.mulf %1, %446 : vector<16x256xf32>
    %448 = arith.addf %445, %447 : vector<16x256xf32>
    %449 = vector.broadcast %441 : f32 to vector<16x256xf32>
    %450 = arith.mulf %2, %449 : vector<16x256xf32>
    %451 = arith.addf %448, %450 : vector<16x256xf32>
    %452 = vector.broadcast %438 : f32 to vector<16x256xf32>
    %453 = arith.mulf %433, %452 : vector<16x256xf32>
    %454 = vector.broadcast %443 : f32 to vector<16x256xf32>
    %455 = arith.mulf %434, %454 : vector<16x256xf32>
    %456 = arith.addf %453, %455 : vector<16x256xf32>
    %457 = vector.broadcast %441 : f32 to vector<16x256xf32>
    %458 = arith.mulf %435, %457 : vector<16x256xf32>
    %459 = arith.addf %456, %458 : vector<16x256xf32>
    %460 = vector.broadcast %438 : f32 to vector<16x256xf32>
    %461 = arith.mulf %1, %460 : vector<16x256xf32>
    %462 = arith.addf %443, %441 : f32
    %463 = vector.broadcast %462 : f32 to vector<16x256xf32>
    %464 = arith.mulf %0, %463 : vector<16x256xf32>
    %465 = arith.addf %461, %464 : vector<16x256xf32>
    %466 = vector.broadcast %438 : f32 to vector<16x256xf32>
    %467 = arith.mulf %434, %466 : vector<16x256xf32>
    %468 = arith.addf %443, %441 : f32
    %469 = vector.broadcast %468 : f32 to vector<16x256xf32>
    %470 = arith.mulf %433, %469 : vector<16x256xf32>
    %471 = arith.addf %467, %470 : vector<16x256xf32>
    %472 = arith.addf %438, %443 : f32
    %473 = vector.broadcast %472 : f32 to vector<16x256xf32>
    %474 = arith.mulf %2, %473 : vector<16x256xf32>
    %475 = vector.broadcast %441 : f32 to vector<16x256xf32>
    %476 = arith.mulf %1, %475 : vector<16x256xf32>
    %477 = arith.addf %474, %476 : vector<16x256xf32>
    %478 = arith.addf %438, %443 : f32
    %479 = vector.broadcast %478 : f32 to vector<16x256xf32>
    %480 = arith.mulf %435, %479 : vector<16x256xf32>
    %481 = vector.broadcast %441 : f32 to vector<16x256xf32>
    %482 = arith.mulf %434, %481 : vector<16x256xf32>
    %483 = arith.addf %480, %482 : vector<16x256xf32>
    %c256_i32 = arith.constant 256 : i32
    %484 = arith.muli %arg0, %c256_i32 : i32
    %cst_166 = arith.constant 1.000000e+30 : f32
    %485 = vector.broadcast %cst_166 : f32 to vector<16x256xf32>
    %c0_i32_167 = arith.constant 0 : i32
    %c16_i32 = arith.constant 16 : i32
    %486 = arith.addi %c0_i32_167, %c16_i32 : i32
    %c1_i32_168 = arith.constant 1 : i32
    %487 = scf.for %arg4 = %c0_i32_167 to %486 step %c1_i32_168 iter_args(%arg5 = %485) -> (vector<16x256xf32>)  : i32 {
      %491 = arith.sitofp %arg4 : i32 to f32
      %492 = vector.broadcast %491 : f32 to vector<16x256xf32>
      %493 = arith.subf %492, %459 : vector<16x256xf32>
      %494 = arith.divf %493, %451 : vector<16x256xf32>
      %495 = arith.mulf %465, %494 : vector<16x256xf32>
      %496 = arith.addf %495, %471 : vector<16x256xf32>
      %497 = arith.mulf %477, %494 : vector<16x256xf32>
      %498 = arith.addf %497, %483 : vector<16x256xf32>
      %cst_173 = arith.constant 0.000000e+00 : f32
      %499 = vector.broadcast %cst_173 : f32 to vector<16x256xf32>
      %500 = arith.cmpf oge, %496, %499 : vector<16x256xf32>
      %501 = math.floor %496 : vector<16x256xf32>
      %cst_174 = arith.constant 0.000000e+00 : f32
      %502 = vector.broadcast %cst_174 : f32 to vector<16x256xf32>
      %503 = arith.subf %502, %496 : vector<16x256xf32>
      %504 = math.floor %503 : vector<16x256xf32>
      %cst_175 = arith.constant 0.000000e+00 : f32
      %505 = vector.broadcast %cst_175 : f32 to vector<16x256xf32>
      %506 = arith.subf %505, %504 : vector<16x256xf32>
      %507 = arith.select %500, %501, %506 : vector<16x256xi1>, vector<16x256xf32>
      %cst_176 = arith.constant 0.000000e+00 : f32
      %508 = vector.broadcast %cst_176 : f32 to vector<16x256xf32>
      %509 = arith.cmpf oge, %498, %508 : vector<16x256xf32>
      %510 = math.floor %498 : vector<16x256xf32>
      %cst_177 = arith.constant 0.000000e+00 : f32
      %511 = vector.broadcast %cst_177 : f32 to vector<16x256xf32>
      %512 = arith.subf %511, %498 : vector<16x256xf32>
      %513 = math.floor %512 : vector<16x256xf32>
      %cst_178 = arith.constant 0.000000e+00 : f32
      %514 = vector.broadcast %cst_178 : f32 to vector<16x256xf32>
      %515 = arith.subf %514, %513 : vector<16x256xf32>
      %516 = arith.select %509, %510, %515 : vector<16x256xi1>, vector<16x256xf32>
      %cst_179 = arith.constant 0.000000e+00 : f32
      %517 = vector.broadcast %cst_179 : f32 to vector<16x256xf32>
      %518 = arith.cmpf oge, %507, %517 : vector<16x256xf32>
      %cst_180 = arith.constant 1.600000e+01 : f32
      %519 = vector.broadcast %cst_180 : f32 to vector<16x256xf32>
      %520 = arith.cmpf olt, %507, %519 : vector<16x256xf32>
      %521 = arith.andi %518, %520 : vector<16x256xi1>
      %cst_181 = arith.constant 0.000000e+00 : f32
      %522 = vector.broadcast %cst_181 : f32 to vector<16x256xf32>
      %523 = arith.cmpf oge, %516, %522 : vector<16x256xf32>
      %524 = arith.andi %521, %523 : vector<16x256xi1>
      %cst_182 = arith.constant 1.600000e+01 : f32
      %525 = vector.broadcast %cst_182 : f32 to vector<16x256xf32>
      %526 = arith.cmpf olt, %516, %525 : vector<16x256xf32>
      %527 = arith.andi %524, %526 : vector<16x256xi1>
      %c16_i32_183 = arith.constant 16 : i32
      %528 = arith.muli %arg4, %c16_i32_183 : i32
      %529 = arith.addi %484, %528 : i32
      %c0_i32_184 = arith.constant 0 : i32
      %530 = vector.broadcast %c0_i32_184 : i32 to vector<16x256xi32>
      %cst_185 = arith.constant 0.000000e+00 : f32
      %531 = vector.broadcast %cst_185 : f32 to vector<16x256xf32>
      %532 = arith.cmpf oeq, %507, %531 : vector<16x256xf32>
      %c0_i32_186 = arith.constant 0 : i32
      %533 = arith.addi %529, %c0_i32_186 : i32
      %534 = arith.index_cast %533 : i32 to index
      %535 = memref.load %arg1[%534] : memref<768xi32, #tpu.memory_space<smem>>
      %536 = vector.broadcast %535 : i32 to vector<16x256xi32>
      %537 = arith.select %532, %536, %530 : vector<16x256xi1>, vector<16x256xi32>
      %cst_187 = arith.constant 1.000000e+00 : f32
      %538 = vector.broadcast %cst_187 : f32 to vector<16x256xf32>
      %539 = arith.cmpf oeq, %507, %538 : vector<16x256xf32>
      %c1_i32_188 = arith.constant 1 : i32
      %540 = arith.addi %529, %c1_i32_188 : i32
      %541 = arith.index_cast %540 : i32 to index
      %542 = memref.load %arg1[%541] : memref<768xi32, #tpu.memory_space<smem>>
      %543 = vector.broadcast %542 : i32 to vector<16x256xi32>
      %544 = arith.select %539, %543, %537 : vector<16x256xi1>, vector<16x256xi32>
      %cst_189 = arith.constant 2.000000e+00 : f32
      %545 = vector.broadcast %cst_189 : f32 to vector<16x256xf32>
      %546 = arith.cmpf oeq, %507, %545 : vector<16x256xf32>
      %c2_i32 = arith.constant 2 : i32
      %547 = arith.addi %529, %c2_i32 : i32
      %548 = arith.index_cast %547 : i32 to index
      %549 = memref.load %arg1[%548] : memref<768xi32, #tpu.memory_space<smem>>
      %550 = vector.broadcast %549 : i32 to vector<16x256xi32>
      %551 = arith.select %546, %550, %544 : vector<16x256xi1>, vector<16x256xi32>
      %cst_190 = arith.constant 3.000000e+00 : f32
      %552 = vector.broadcast %cst_190 : f32 to vector<16x256xf32>
      %553 = arith.cmpf oeq, %507, %552 : vector<16x256xf32>
      %c3_i32 = arith.constant 3 : i32
      %554 = arith.addi %529, %c3_i32 : i32
      %555 = arith.index_cast %554 : i32 to index
      %556 = memref.load %arg1[%555] : memref<768xi32, #tpu.memory_space<smem>>
      %557 = vector.broadcast %556 : i32 to vector<16x256xi32>
      %558 = arith.select %553, %557, %551 : vector<16x256xi1>, vector<16x256xi32>
      %cst_191 = arith.constant 4.000000e+00 : f32
      %559 = vector.broadcast %cst_191 : f32 to vector<16x256xf32>
      %560 = arith.cmpf oeq, %507, %559 : vector<16x256xf32>
      %c4_i32_192 = arith.constant 4 : i32
      %561 = arith.addi %529, %c4_i32_192 : i32
      %562 = arith.index_cast %561 : i32 to index
      %563 = memref.load %arg1[%562] : memref<768xi32, #tpu.memory_space<smem>>
      %564 = vector.broadcast %563 : i32 to vector<16x256xi32>
      %565 = arith.select %560, %564, %558 : vector<16x256xi1>, vector<16x256xi32>
      %cst_193 = arith.constant 5.000000e+00 : f32
      %566 = vector.broadcast %cst_193 : f32 to vector<16x256xf32>
      %567 = arith.cmpf oeq, %507, %566 : vector<16x256xf32>
      %c5_i32 = arith.constant 5 : i32
      %568 = arith.addi %529, %c5_i32 : i32
      %569 = arith.index_cast %568 : i32 to index
      %570 = memref.load %arg1[%569] : memref<768xi32, #tpu.memory_space<smem>>
      %571 = vector.broadcast %570 : i32 to vector<16x256xi32>
      %572 = arith.select %567, %571, %565 : vector<16x256xi1>, vector<16x256xi32>
      %cst_194 = arith.constant 6.000000e+00 : f32
      %573 = vector.broadcast %cst_194 : f32 to vector<16x256xf32>
      %574 = arith.cmpf oeq, %507, %573 : vector<16x256xf32>
      %c6_i32 = arith.constant 6 : i32
      %575 = arith.addi %529, %c6_i32 : i32
      %576 = arith.index_cast %575 : i32 to index
      %577 = memref.load %arg1[%576] : memref<768xi32, #tpu.memory_space<smem>>
      %578 = vector.broadcast %577 : i32 to vector<16x256xi32>
      %579 = arith.select %574, %578, %572 : vector<16x256xi1>, vector<16x256xi32>
      %cst_195 = arith.constant 7.000000e+00 : f32
      %580 = vector.broadcast %cst_195 : f32 to vector<16x256xf32>
      %581 = arith.cmpf oeq, %507, %580 : vector<16x256xf32>
      %c7_i32 = arith.constant 7 : i32
      %582 = arith.addi %529, %c7_i32 : i32
      %583 = arith.index_cast %582 : i32 to index
      %584 = memref.load %arg1[%583] : memref<768xi32, #tpu.memory_space<smem>>
      %585 = vector.broadcast %584 : i32 to vector<16x256xi32>
      %586 = arith.select %581, %585, %579 : vector<16x256xi1>, vector<16x256xi32>
      %cst_196 = arith.constant 8.000000e+00 : f32
      %587 = vector.broadcast %cst_196 : f32 to vector<16x256xf32>
      %588 = arith.cmpf oeq, %507, %587 : vector<16x256xf32>
      %c8_i32 = arith.constant 8 : i32
      %589 = arith.addi %529, %c8_i32 : i32
      %590 = arith.index_cast %589 : i32 to index
      %591 = memref.load %arg1[%590] : memref<768xi32, #tpu.memory_space<smem>>
      %592 = vector.broadcast %591 : i32 to vector<16x256xi32>
      %593 = arith.select %588, %592, %586 : vector<16x256xi1>, vector<16x256xi32>
      %cst_197 = arith.constant 9.000000e+00 : f32
      %594 = vector.broadcast %cst_197 : f32 to vector<16x256xf32>
      %595 = arith.cmpf oeq, %507, %594 : vector<16x256xf32>
      %c9_i32 = arith.constant 9 : i32
      %596 = arith.addi %529, %c9_i32 : i32
      %597 = arith.index_cast %596 : i32 to index
      %598 = memref.load %arg1[%597] : memref<768xi32, #tpu.memory_space<smem>>
      %599 = vector.broadcast %598 : i32 to vector<16x256xi32>
      %600 = arith.select %595, %599, %593 : vector<16x256xi1>, vector<16x256xi32>
      %cst_198 = arith.constant 1.000000e+01 : f32
      %601 = vector.broadcast %cst_198 : f32 to vector<16x256xf32>
      %602 = arith.cmpf oeq, %507, %601 : vector<16x256xf32>
      %c10_i32 = arith.constant 10 : i32
      %603 = arith.addi %529, %c10_i32 : i32
      %604 = arith.index_cast %603 : i32 to index
      %605 = memref.load %arg1[%604] : memref<768xi32, #tpu.memory_space<smem>>
      %606 = vector.broadcast %605 : i32 to vector<16x256xi32>
      %607 = arith.select %602, %606, %600 : vector<16x256xi1>, vector<16x256xi32>
      %cst_199 = arith.constant 1.100000e+01 : f32
      %608 = vector.broadcast %cst_199 : f32 to vector<16x256xf32>
      %609 = arith.cmpf oeq, %507, %608 : vector<16x256xf32>
      %c11_i32 = arith.constant 11 : i32
      %610 = arith.addi %529, %c11_i32 : i32
      %611 = arith.index_cast %610 : i32 to index
      %612 = memref.load %arg1[%611] : memref<768xi32, #tpu.memory_space<smem>>
      %613 = vector.broadcast %612 : i32 to vector<16x256xi32>
      %614 = arith.select %609, %613, %607 : vector<16x256xi1>, vector<16x256xi32>
      %cst_200 = arith.constant 1.200000e+01 : f32
      %615 = vector.broadcast %cst_200 : f32 to vector<16x256xf32>
      %616 = arith.cmpf oeq, %507, %615 : vector<16x256xf32>
      %c12_i32 = arith.constant 12 : i32
      %617 = arith.addi %529, %c12_i32 : i32
      %618 = arith.index_cast %617 : i32 to index
      %619 = memref.load %arg1[%618] : memref<768xi32, #tpu.memory_space<smem>>
      %620 = vector.broadcast %619 : i32 to vector<16x256xi32>
      %621 = arith.select %616, %620, %614 : vector<16x256xi1>, vector<16x256xi32>
      %cst_201 = arith.constant 1.300000e+01 : f32
      %622 = vector.broadcast %cst_201 : f32 to vector<16x256xf32>
      %623 = arith.cmpf oeq, %507, %622 : vector<16x256xf32>
      %c13_i32 = arith.constant 13 : i32
      %624 = arith.addi %529, %c13_i32 : i32
      %625 = arith.index_cast %624 : i32 to index
      %626 = memref.load %arg1[%625] : memref<768xi32, #tpu.memory_space<smem>>
      %627 = vector.broadcast %626 : i32 to vector<16x256xi32>
      %628 = arith.select %623, %627, %621 : vector<16x256xi1>, vector<16x256xi32>
      %cst_202 = arith.constant 1.400000e+01 : f32
      %629 = vector.broadcast %cst_202 : f32 to vector<16x256xf32>
      %630 = arith.cmpf oeq, %507, %629 : vector<16x256xf32>
      %c14_i32 = arith.constant 14 : i32
      %631 = arith.addi %529, %c14_i32 : i32
      %632 = arith.index_cast %631 : i32 to index
      %633 = memref.load %arg1[%632] : memref<768xi32, #tpu.memory_space<smem>>
      %634 = vector.broadcast %633 : i32 to vector<16x256xi32>
      %635 = arith.select %630, %634, %628 : vector<16x256xi1>, vector<16x256xi32>
      %cst_203 = arith.constant 1.500000e+01 : f32
      %636 = vector.broadcast %cst_203 : f32 to vector<16x256xf32>
      %637 = arith.cmpf oeq, %507, %636 : vector<16x256xf32>
      %c15_i32_204 = arith.constant 15 : i32
      %638 = arith.addi %529, %c15_i32_204 : i32
      %639 = arith.index_cast %638 : i32 to index
      %640 = memref.load %arg1[%639] : memref<768xi32, #tpu.memory_space<smem>>
      %641 = vector.broadcast %640 : i32 to vector<16x256xi32>
      %642 = arith.select %637, %641, %635 : vector<16x256xi1>, vector<16x256xi32>
      %c0_i32_205 = arith.constant 0 : i32
      %643 = vector.broadcast %c0_i32_205 : i32 to vector<16x256xi32>
      %cst_206 = arith.constant 0.000000e+00 : f32
      %644 = vector.broadcast %cst_206 : f32 to vector<16x256xf32>
      %645 = arith.cmpf oeq, %516, %644 : vector<16x256xf32>
      %c0_i32_207 = arith.constant 0 : i32
      %646 = vector.broadcast %c0_i32_207 : i32 to vector<16x256xi32>
      %647 = arith.shrsi %642, %646 : vector<16x256xi32>
      %c1_i32_208 = arith.constant 1 : i32
      %648 = vector.broadcast %c1_i32_208 : i32 to vector<16x256xi32>
      %649 = arith.andi %647, %648 : vector<16x256xi32>
      %650 = arith.select %645, %649, %643 : vector<16x256xi1>, vector<16x256xi32>
      %cst_209 = arith.constant 1.000000e+00 : f32
      %651 = vector.broadcast %cst_209 : f32 to vector<16x256xf32>
      %652 = arith.cmpf oeq, %516, %651 : vector<16x256xf32>
      %c1_i32_210 = arith.constant 1 : i32
      %653 = vector.broadcast %c1_i32_210 : i32 to vector<16x256xi32>
      %654 = arith.shrsi %642, %653 : vector<16x256xi32>
      %c1_i32_211 = arith.constant 1 : i32
      %655 = vector.broadcast %c1_i32_211 : i32 to vector<16x256xi32>
      %656 = arith.andi %654, %655 : vector<16x256xi32>
      %657 = arith.select %652, %656, %650 : vector<16x256xi1>, vector<16x256xi32>
      %cst_212 = arith.constant 2.000000e+00 : f32
      %658 = vector.broadcast %cst_212 : f32 to vector<16x256xf32>
      %659 = arith.cmpf oeq, %516, %658 : vector<16x256xf32>
      %c2_i32_213 = arith.constant 2 : i32
      %660 = vector.broadcast %c2_i32_213 : i32 to vector<16x256xi32>
      %661 = arith.shrsi %642, %660 : vector<16x256xi32>
      %c1_i32_214 = arith.constant 1 : i32
      %662 = vector.broadcast %c1_i32_214 : i32 to vector<16x256xi32>
      %663 = arith.andi %661, %662 : vector<16x256xi32>
      %664 = arith.select %659, %663, %657 : vector<16x256xi1>, vector<16x256xi32>
      %cst_215 = arith.constant 3.000000e+00 : f32
      %665 = vector.broadcast %cst_215 : f32 to vector<16x256xf32>
      %666 = arith.cmpf oeq, %516, %665 : vector<16x256xf32>
      %c3_i32_216 = arith.constant 3 : i32
      %667 = vector.broadcast %c3_i32_216 : i32 to vector<16x256xi32>
      %668 = arith.shrsi %642, %667 : vector<16x256xi32>
      %c1_i32_217 = arith.constant 1 : i32
      %669 = vector.broadcast %c1_i32_217 : i32 to vector<16x256xi32>
      %670 = arith.andi %668, %669 : vector<16x256xi32>
      %671 = arith.select %666, %670, %664 : vector<16x256xi1>, vector<16x256xi32>
      %cst_218 = arith.constant 4.000000e+00 : f32
      %672 = vector.broadcast %cst_218 : f32 to vector<16x256xf32>
      %673 = arith.cmpf oeq, %516, %672 : vector<16x256xf32>
      %c4_i32_219 = arith.constant 4 : i32
      %674 = vector.broadcast %c4_i32_219 : i32 to vector<16x256xi32>
      %675 = arith.shrsi %642, %674 : vector<16x256xi32>
      %c1_i32_220 = arith.constant 1 : i32
      %676 = vector.broadcast %c1_i32_220 : i32 to vector<16x256xi32>
      %677 = arith.andi %675, %676 : vector<16x256xi32>
      %678 = arith.select %673, %677, %671 : vector<16x256xi1>, vector<16x256xi32>
      %cst_221 = arith.constant 5.000000e+00 : f32
      %679 = vector.broadcast %cst_221 : f32 to vector<16x256xf32>
      %680 = arith.cmpf oeq, %516, %679 : vector<16x256xf32>
      %c5_i32_222 = arith.constant 5 : i32
      %681 = vector.broadcast %c5_i32_222 : i32 to vector<16x256xi32>
      %682 = arith.shrsi %642, %681 : vector<16x256xi32>
      %c1_i32_223 = arith.constant 1 : i32
      %683 = vector.broadcast %c1_i32_223 : i32 to vector<16x256xi32>
      %684 = arith.andi %682, %683 : vector<16x256xi32>
      %685 = arith.select %680, %684, %678 : vector<16x256xi1>, vector<16x256xi32>
      %cst_224 = arith.constant 6.000000e+00 : f32
      %686 = vector.broadcast %cst_224 : f32 to vector<16x256xf32>
      %687 = arith.cmpf oeq, %516, %686 : vector<16x256xf32>
      %c6_i32_225 = arith.constant 6 : i32
      %688 = vector.broadcast %c6_i32_225 : i32 to vector<16x256xi32>
      %689 = arith.shrsi %642, %688 : vector<16x256xi32>
      %c1_i32_226 = arith.constant 1 : i32
      %690 = vector.broadcast %c1_i32_226 : i32 to vector<16x256xi32>
      %691 = arith.andi %689, %690 : vector<16x256xi32>
      %692 = arith.select %687, %691, %685 : vector<16x256xi1>, vector<16x256xi32>
      %cst_227 = arith.constant 7.000000e+00 : f32
      %693 = vector.broadcast %cst_227 : f32 to vector<16x256xf32>
      %694 = arith.cmpf oeq, %516, %693 : vector<16x256xf32>
      %c7_i32_228 = arith.constant 7 : i32
      %695 = vector.broadcast %c7_i32_228 : i32 to vector<16x256xi32>
      %696 = arith.shrsi %642, %695 : vector<16x256xi32>
      %c1_i32_229 = arith.constant 1 : i32
      %697 = vector.broadcast %c1_i32_229 : i32 to vector<16x256xi32>
      %698 = arith.andi %696, %697 : vector<16x256xi32>
      %699 = arith.select %694, %698, %692 : vector<16x256xi1>, vector<16x256xi32>
      %cst_230 = arith.constant 8.000000e+00 : f32
      %700 = vector.broadcast %cst_230 : f32 to vector<16x256xf32>
      %701 = arith.cmpf oeq, %516, %700 : vector<16x256xf32>
      %c8_i32_231 = arith.constant 8 : i32
      %702 = vector.broadcast %c8_i32_231 : i32 to vector<16x256xi32>
      %703 = arith.shrsi %642, %702 : vector<16x256xi32>
      %c1_i32_232 = arith.constant 1 : i32
      %704 = vector.broadcast %c1_i32_232 : i32 to vector<16x256xi32>
      %705 = arith.andi %703, %704 : vector<16x256xi32>
      %706 = arith.select %701, %705, %699 : vector<16x256xi1>, vector<16x256xi32>
      %cst_233 = arith.constant 9.000000e+00 : f32
      %707 = vector.broadcast %cst_233 : f32 to vector<16x256xf32>
      %708 = arith.cmpf oeq, %516, %707 : vector<16x256xf32>
      %c9_i32_234 = arith.constant 9 : i32
      %709 = vector.broadcast %c9_i32_234 : i32 to vector<16x256xi32>
      %710 = arith.shrsi %642, %709 : vector<16x256xi32>
      %c1_i32_235 = arith.constant 1 : i32
      %711 = vector.broadcast %c1_i32_235 : i32 to vector<16x256xi32>
      %712 = arith.andi %710, %711 : vector<16x256xi32>
      %713 = arith.select %708, %712, %706 : vector<16x256xi1>, vector<16x256xi32>
      %cst_236 = arith.constant 1.000000e+01 : f32
      %714 = vector.broadcast %cst_236 : f32 to vector<16x256xf32>
      %715 = arith.cmpf oeq, %516, %714 : vector<16x256xf32>
      %c10_i32_237 = arith.constant 10 : i32
      %716 = vector.broadcast %c10_i32_237 : i32 to vector<16x256xi32>
      %717 = arith.shrsi %642, %716 : vector<16x256xi32>
      %c1_i32_238 = arith.constant 1 : i32
      %718 = vector.broadcast %c1_i32_238 : i32 to vector<16x256xi32>
      %719 = arith.andi %717, %718 : vector<16x256xi32>
      %720 = arith.select %715, %719, %713 : vector<16x256xi1>, vector<16x256xi32>
      %cst_239 = arith.constant 1.100000e+01 : f32
      %721 = vector.broadcast %cst_239 : f32 to vector<16x256xf32>
      %722 = arith.cmpf oeq, %516, %721 : vector<16x256xf32>
      %c11_i32_240 = arith.constant 11 : i32
      %723 = vector.broadcast %c11_i32_240 : i32 to vector<16x256xi32>
      %724 = arith.shrsi %642, %723 : vector<16x256xi32>
      %c1_i32_241 = arith.constant 1 : i32
      %725 = vector.broadcast %c1_i32_241 : i32 to vector<16x256xi32>
      %726 = arith.andi %724, %725 : vector<16x256xi32>
      %727 = arith.select %722, %726, %720 : vector<16x256xi1>, vector<16x256xi32>
      %cst_242 = arith.constant 1.200000e+01 : f32
      %728 = vector.broadcast %cst_242 : f32 to vector<16x256xf32>
      %729 = arith.cmpf oeq, %516, %728 : vector<16x256xf32>
      %c12_i32_243 = arith.constant 12 : i32
      %730 = vector.broadcast %c12_i32_243 : i32 to vector<16x256xi32>
      %731 = arith.shrsi %642, %730 : vector<16x256xi32>
      %c1_i32_244 = arith.constant 1 : i32
      %732 = vector.broadcast %c1_i32_244 : i32 to vector<16x256xi32>
      %733 = arith.andi %731, %732 : vector<16x256xi32>
      %734 = arith.select %729, %733, %727 : vector<16x256xi1>, vector<16x256xi32>
      %cst_245 = arith.constant 1.300000e+01 : f32
      %735 = vector.broadcast %cst_245 : f32 to vector<16x256xf32>
      %736 = arith.cmpf oeq, %516, %735 : vector<16x256xf32>
      %c13_i32_246 = arith.constant 13 : i32
      %737 = vector.broadcast %c13_i32_246 : i32 to vector<16x256xi32>
      %738 = arith.shrsi %642, %737 : vector<16x256xi32>
      %c1_i32_247 = arith.constant 1 : i32
      %739 = vector.broadcast %c1_i32_247 : i32 to vector<16x256xi32>
      %740 = arith.andi %738, %739 : vector<16x256xi32>
      %741 = arith.select %736, %740, %734 : vector<16x256xi1>, vector<16x256xi32>
      %cst_248 = arith.constant 1.400000e+01 : f32
      %742 = vector.broadcast %cst_248 : f32 to vector<16x256xf32>
      %743 = arith.cmpf oeq, %516, %742 : vector<16x256xf32>
      %c14_i32_249 = arith.constant 14 : i32
      %744 = vector.broadcast %c14_i32_249 : i32 to vector<16x256xi32>
      %745 = arith.shrsi %642, %744 : vector<16x256xi32>
      %c1_i32_250 = arith.constant 1 : i32
      %746 = vector.broadcast %c1_i32_250 : i32 to vector<16x256xi32>
      %747 = arith.andi %745, %746 : vector<16x256xi32>
      %748 = arith.select %743, %747, %741 : vector<16x256xi1>, vector<16x256xi32>
      %cst_251 = arith.constant 1.500000e+01 : f32
      %749 = vector.broadcast %cst_251 : f32 to vector<16x256xf32>
      %750 = arith.cmpf oeq, %516, %749 : vector<16x256xf32>
      %c15_i32_252 = arith.constant 15 : i32
      %751 = vector.broadcast %c15_i32_252 : i32 to vector<16x256xi32>
      %752 = arith.shrsi %642, %751 : vector<16x256xi32>
      %c1_i32_253 = arith.constant 1 : i32
      %753 = vector.broadcast %c1_i32_253 : i32 to vector<16x256xi32>
      %754 = arith.andi %752, %753 : vector<16x256xi32>
      %755 = arith.select %750, %754, %748 : vector<16x256xi1>, vector<16x256xi32>
      %c0_i32_254 = arith.constant 0 : i32
      %756 = vector.broadcast %c0_i32_254 : i32 to vector<16x256xi32>
      %757 = arith.cmpi sgt, %755, %756 : vector<16x256xi32>
      %758 = arith.andi %527, %757 : vector<16x256xi1>
      %759 = vector.broadcast %491 : f32 to vector<16x256xf32>
      %760 = arith.subf %759, %459 : vector<16x256xf32>
      %761 = arith.subf %507, %471 : vector<16x256xf32>
      %762 = arith.subf %516, %483 : vector<16x256xf32>
      %763 = arith.mulf %760, %451 : vector<16x256xf32>
      %764 = arith.mulf %761, %465 : vector<16x256xf32>
      %765 = arith.addf %763, %764 : vector<16x256xf32>
      %766 = arith.mulf %762, %477 : vector<16x256xf32>
      %767 = arith.addf %765, %766 : vector<16x256xf32>
      %cst_255 = arith.constant 0.000000e+00 : f32
      %768 = vector.broadcast %cst_255 : f32 to vector<16x256xf32>
      %769 = arith.cmpf ogt, %767, %768 : vector<16x256xf32>
      %770 = arith.andi %758, %769 : vector<16x256xi1>
      %771 = arith.mulf %760, %760 : vector<16x256xf32>
      %772 = arith.mulf %761, %761 : vector<16x256xf32>
      %773 = arith.addf %771, %772 : vector<16x256xf32>
      %774 = arith.mulf %762, %762 : vector<16x256xf32>
      %775 = arith.addf %773, %774 : vector<16x256xf32>
      %cst_256 = arith.constant 1.700000e+00 : f32
      %776 = vector.broadcast %cst_256 : f32 to vector<16x256xf32>
      %777 = arith.cmpf ogt, %775, %776 : vector<16x256xf32>
      %778 = arith.andi %770, %777 : vector<16x256xi1>
      %cst_257 = arith.constant 1.000000e+30 : f32
      %779 = vector.broadcast %cst_257 : f32 to vector<16x256xf32>
      %780 = arith.select %778, %775, %779 : vector<16x256xi1>, vector<16x256xf32>
      %781 = arith.minimumf %arg5, %780 : vector<16x256xf32>
      scf.yield %781 : vector<16x256xf32>
    }
    %c16_i32_169 = arith.constant 16 : i32
    %c0_170 = arith.constant 0 : index
    %c0_171 = arith.constant 0 : index
    %c0_172 = arith.constant 0 : index
    %488 = vector.load %arg3[%c0_170, %c0_171, %c0_172] : memref<1x16x256xf32, #tpu.memory_space<vmem>>, vector<1x16x256xf32>
    %489 = vector.shape_cast %488 : vector<1x16x256xf32> to vector<16x256xf32>
    %490 = vector.shape_cast %487 : vector<16x256xf32> to vector<1x16x256xf32>
    tpu.vector_store %arg3[%c0_170, %c0_171, %c0_172], %490 {strides = array<i32>} : memref<1x16x256xf32, #tpu.memory_space<vmem>>, vector<1x16x256xf32>,
    return
  }
  func.func @transform_0(%arg0: i32, %arg1: memref<768xi32, #tpu.memory_space<smem>>) -> (i32, i32) {
    %c0_i32 = arith.constant 0 : i32
    %c0_i32_0 = arith.constant 0 : i32
    %c0_i32_1 = arith.constant 0 : i32
    return %c0_i32, %c0_i32_0 : i32, i32
  }
  func.func @transform_1(%arg0: i32, %arg1: memref<768xi32, #tpu.memory_space<smem>>) -> (i32, i32, i32) {
    %c0_i32 = arith.constant 0 : i32
    %c0_i32_0 = arith.constant 0 : i32
    %c0_i32_1 = arith.constant 0 : i32
    return %arg0, %c0_i32, %c0_i32_0 : i32, i32, i32
  }
}

</mosaic_0001>

<llo_original>
// kernel: morph_forward.3
$region0: #{morph_forward.3}
  #allocation0 [shape = 'u32[]', space=smem, size = 0x4, offset = 0x4, fixed_abs, tag = 'smem constant byte address 0x4 - core index']
  #allocation1 [shape = 'u32[144,128]{1,0:T(1,128)}', space=vmem, size = 0x12000, scoped, tag = 'internal scratch']
  #allocation2 [shape = 's32[1]{0}', space=sflag, size = 0x4, scoped, tag = 'scoped memory for morph_forward.3']
  #allocation3 [shape = 'u8[3072]{0}', space=smem, size = 0xc00, scoped, tag = 'prefetched SMEM operand 0']
  %s0 = inlined_call_operand.vmem [shape: s32[768], index: 0, kind: input, shape index: {}]
  %s1 = inlined_call_operand.vmem [shape: f32[16,768], index: 1, kind: input, shape index: {}]
  %s2 = inlined_call_operand.vmem [shape: f32[3,16,256], index: 2, kind: output, shape index: {}]
  %s3 = sld [smem:[#allocation0]]
  $region44: #{morph_forward.3} parent=0
    _
  %s5 = ssub.s32 1, %s3
  %s6 = scalar_select 0, %s5, %s3
  %s7 = sshll.u32 %s0, 4
  %s8 = int_to_ptr.vmem [resolvable:$true] %s7
  %10 = dma.vmem_to_smem %s8, 96, [#allocation3], [#allocation2]
  %11 = dma.done [#allocation2], 96
  %12 = sfence
  loop: start=0, step=1, limit=5
  $region2: #{morph_forward.3} parent=0 // loop_pre_header
    _
  $region3: #{morph_forward.3} parent=0 // loop_header
    %s14 = sphi 0, %s18
    %p15 = scmp.ge.s32.totalorder %s14, 5
    %s22 = sphi 0, %s22
    %s24 = sphi 0, %s22
    %s25 = sphi 0, %s24
    %s39 = sphi 0, %s25
    %s45 = sphi 0, %s47
    %s48 = sphi 0, %s45
    %s49 = sphi 0, %s48
    %s65 = sphi 0, %s49
  $region4: #{morph_forward.3} parent=0 // loop_header_branch
    %17 = sbr.rel (%p15) target = $region8
  $region5: #{morph_forward.3} parent=0 // loop_body
    %s19 = ssub.s32 %s14, 1
    %s20 = ssub.s32 %s14, 2
    %s21 = sadd.s32 %s14, 1
    %s23 = sadd.s32 %s22, 1
    %p26 = scmp.eq.s32.totalorder %s14, 2
    %p27 = scmp.ne.s32.totalorder %s22, %s24
    %p28 = scmp.eq.s32.totalorder %s14, 0
    %p29 = por %p27, %p28
    %p30 = scmp.ne.s32.totalorder %s22, %s24
    %p31 = scmp.eq.s32.totalorder %s19, 2
    %p32 = por %p30, %p31
    %p33 = scmp.ne.s32.totalorder %s24, %s25
    %p34 = scmp.eq.s32.totalorder %s19, 0
    %p35 = por %p33, %p34
    %p36 = scmp.ne.s32.totalorder %s24, %s25
    %p37 = scmp.eq.s32.totalorder %s20, 2
    %p38 = por %p36, %p37
    %p40 = scmp.ne.s32.totalorder %s25, %s39
    %p41 = scmp.eq.s32.totalorder %s20, 0
    %p42 = por %p40, %p41
    %s43 = ssub.s32 %s14, %s21
    %p44 = scmp.eq.s32.totalorder %s43, 0
    %s46 = sadd.s32 %s45, 1
    %s47 = scalar_select %p44, %s45, %s46
    %p50 = pneg %p44
    %p51 = scmp.eq.s32.totalorder %s14, 2
    %p52 = por %p50, %p51
    %p53 = scmp.ne.s32.totalorder %s45, %s48
    %p54 = scmp.eq.s32.totalorder %s14, 0
    %p55 = por %p53, %p54
    %p56 = scmp.ne.s32.totalorder %s45, %s48
    %p57 = scmp.eq.s32.totalorder %s19, 2
    %p58 = por %p56, %p57
    %p59 = scmp.ne.s32.totalorder %s48, %s49
    %p60 = scmp.eq.s32.totalorder %s19, 0
    %p61 = por %p59, %p60
    %p62 = scmp.ne.s32.totalorder %s48, %s49
    %p63 = scmp.eq.s32.totalorder %s20, 2
    %p64 = por %p62, %p63
    %p66 = scmp.ne.s32.totalorder %s49, %s65
    %p67 = scmp.eq.s32.totalorder %s20, 0
    %p68 = por %p66, %p67
    %p69 = scmp.le.s32.totalorder 1, %s14
    %p70 = scmp.lt.s32.totalorder %s14, 4
    %p71 = pnand %p69, %p70
    %p72 = pneg %p71
    // Predicated region
    $region9: #{morph_forward.3} parent=5 // pred_check
      _
    $region10: #{morph_forward.3} parent=5 // pred_check_branch
      %74 = sbr.rel (%p71) target = $region12
    $region11: #{morph_forward.3} parent=5 // pred_region
      %s75 = ssub.s32 %s14, 1
      // Predicated region
      $region13: #{morph_forward.3} parent=11 // pred_check
        %p76 = pneg %p35
      $region14: #{morph_forward.3} parent=11 // pred_check_branch
        %78 = sbr.rel (%p76) target = $region16
      $region15: #{morph_forward.3} parent=11 // pred_region
        _
      $region16: #{morph_forward.3} parent=11 // pred_fallthru
        _
    $region12: #{morph_forward.3} parent=5 // pred_fallthru
      _
    %p79 = scmp.lt.s32.totalorder %s14, 3
    // Predicated region
    $region17: #{morph_forward.3} parent=5 // pred_check
      %p80 = pneg %p79
    $region18: #{morph_forward.3} parent=5 // pred_check_branch
      %82 = sbr.rel (%p80) target = $region20
    $region19: #{morph_forward.3} parent=5 // pred_region
      _
    $region20: #{morph_forward.3} parent=5 // pred_fallthru
      _
    %p83 = scmp.le.s32.totalorder 1, %s14
    %p84 = scmp.lt.s32.totalorder %s14, 4
    %p85 = pnand %p83, %p84
    %p86 = pneg %p85
    // Predicated region
    $region21: #{morph_forward.3} parent=5 // pred_check
      _
    $region22: #{morph_forward.3} parent=5 // pred_check_branch
      %88 = sbr.rel (%p85) target = $region24
    $region23: #{morph_forward.3} parent=5 // pred_region
      %s89 = ssub.s32 %s14, 1
      %p90 = pneg %p35
      %p91 = pneg %p32
      %p92 = pneg %p61
      %p93 = pneg %p58
      %p94 = scmp.lt.s32.totalorder %s19, 2
      %s95 = scalar_select %p94, %s19, 2
      %s96 = smul.addr %s95, 4
      %s97 = smul.addr %s96, 8
      %s98 = scalar_lea.vmem %s2, %s97
      %p99 = scmp.lt.s32.totalorder %s19, 2
      %s100 = scalar_select %p99, %s19, 2
      %s101 = smul.addr %s100, 4
      %s102 = smul.addr %s101, 8
      %s103 = scalar_lea.vmem %s2, %s102
      %v104 = vld [vmem:[%s1] sm:$0xff]
      %v105 = vld [vmem:[%s1 + $0x8] sm:$0xff]
      %v106 = vld [vmem:[%s1 + $0x30] sm:$0xff]
      %v107 = vld [vmem:[%s1 + $0x38] sm:$0xff]
      %v108 = vld [vmem:[%s1 + $0x10] sm:$0xff]
      %v109 = vld [vmem:[%s1 + $0x18] sm:$0xff]
      %v110 = vld [vmem:[%s1 + $0x40] sm:$0xff]
      %v111 = vld [vmem:[%s1 + $0x48] sm:$0xff]
      %v112 = vld [vmem:[%s1 + $0x20] sm:$0xff]
      %v113 = vld [vmem:[%s1 + $0x28] sm:$0xff]
      %v114 = vld [vmem:[%s1 + $0x50] sm:$0xff]
      %v115 = vld [vmem:[%s1 + $0x58] sm:$0xff]
      %v116 = vlaneseq
      %v117 = vand.u32 %v116, 127
      %v118 = vadd.s32 %v117, 128
      %v119 = vlaneseq
      %v120 = vshrl.u32 %v119, 7
      %v121 = vadd.s32 %v120, 8
      %v122 = vcvt.s32.f32 %v120
      %v123 = vcvt.s32.f32 %v121
      %v124 = vshra.s32 %v117, 4
      %v125 = vshra.s32 %v118, 4
      %v126 = vand.u32 %v124, 15
      %v127 = vand.u32 %v125, 15
      %v128 = vcvt.s32.f32 %v126
      %v129 = vcvt.s32.f32 %v127
      %v130 = vand.u32 %v117, 15
      %v131 = vand.u32 %v118, 15
      %v132 = vcvt.s32.f32 %v130
      %v133 = vcvt.s32.f32 %v131
      %v134 = vmul.f32 %v108, 0.0
      %v135 = vmul.f32 %v109, 0.0
      %v136 = vmul.f32 %v110, 0.0
      %v137 = vmul.f32 %v111, 0.0
      %v138 = vadd.f32 %v104, %v134
      %v139 = vadd.f32 %v105, %v135
      %v140 = vadd.f32 %v106, %v136
      %v141 = vadd.f32 %v107, %v137
      %v142 = vmul.f32 %v112, 0.0
      %v143 = vmul.f32 %v113, 0.0
      %v144 = vmul.f32 %v114, 0.0
      %v145 = vmul.f32 %v115, 0.0
      %v146 = vadd.f32 %v138, %v142
      %v147 = vadd.f32 %v139, %v143
      %v148 = vadd.f32 %v140, %v144
      %v149 = vadd.f32 %v141, %v145
      %vm150 = vcmp.gt.f32.partialorder %v146, -1e+30
      %vm151 = vcmp.gt.f32.partialorder %v147, -1e+30
      %vm152 = vcmp.gt.f32.partialorder %v148, -1e+30
      %vm153 = vcmp.gt.f32.partialorder %v149, -1e+30
      %v154 = vsel %vm150, %v146, -1e+30
      %v155 = vsel %vm151, %v147, -1e+30
      %v156 = vsel %vm152, %v148, -1e+30
      %v157 = vsel %vm153, %v149, -1e+30
      %v158 = vsel %vm150, 1.0, 0.0
      %v159 = vsel %vm151, 1.0, 0.0
      %v160 = vsel %vm152, 1.0, 0.0
      %v161 = vsel %vm153, 1.0, 0.0
      %v162 = vsel %vm150, 0.5, 0.0
      %v163 = vsel %vm151, 0.5, 0.0
      %v164 = vsel %vm152, 0.5, 0.0
      %v165 = vsel %vm153, 0.5, 0.0
      %v166 = vmul.f32 %v104, -1.0
      %v167 = vmul.f32 %v105, -1.0
      %v168 = vmul.f32 %v106, -1.0
      %v169 = vmul.f32 %v107, -1.0
      %v170 = vadd.f32 %v166, %v134
      %v171 = vadd.f32 %v167, %v135
      %v172 = vadd.f32 %v168, %v136
      %v173 = vadd.f32 %v169, %v137
      %v174 = vadd.f32 %v170, %v142
      %v175 = vadd.f32 %v171, %v143
      %v176 = vadd.f32 %v172, %v144
      %v177 = vadd.f32 %v173, %v145
      %vm178 = vcmp.gt.f32.partialorder %v174, %v154
      %vm179 = vcmp.gt.f32.partialorder %v175, %v155
      %vm180 = vcmp.gt.f32.partialorder %v176, %v156
      %vm181 = vcmp.gt.f32.partialorder %v177, %v157
      %v182 = vsel %vm178, %v174, %v154
      %v183 = vsel %vm179, %v175, %v155
      %v184 = vsel %vm180, %v176, %v156
      %v185 = vsel %vm181, %v177, %v157
      %v186 = vsel %vm178, 0.0, %v158
      %v187 = vsel %vm179, 0.0, %v159
      %v188 = vsel %vm180, 0.0, %v160
      %v189 = vsel %vm181, 0.0, %v161
      %v190 = vsel %vm178, 0.5, %v162
      %v191 = vsel %vm179, 0.5, %v163
      %v192 = vsel %vm180, 0.5, %v164
      %v193 = vsel %vm181, 0.5, %v165
      %v194 = vmul.f32 %v104, 0.0
      %v195 = vmul.f32 %v105, 0.0
      %v196 = vmul.f32 %v106, 0.0
      %v197 = vmul.f32 %v107, 0.0
      %v198 = vadd.f32 %v194, %v108
      %v199 = vadd.f32 %v195, %v109
      %v200 = vadd.f32 %v196, %v110
      %v201 = vadd.f32 %v197, %v111
      %v202 = vadd.f32 %v198, %v142
      %v203 = vadd.f32 %v199, %v143
      %v204 = vadd.f32 %v200, %v144
      %v205 = vadd.f32 %v201, %v145
      %vm206 = vcmp.gt.f32.partialorder %v202, %v182
      %vm207 = vcmp.gt.f32.partialorder %v203, %v183
      %vm208 = vcmp.gt.f32.partialorder %v204, %v184
      %vm209 = vcmp.gt.f32.partialorder %v205, %v185
      %v210 = vsel %vm206, %v202, %v182
      %v211 = vsel %vm207, %v203, %v183
      %v212 = vsel %vm208, %v204, %v184
      %v213 = vsel %vm209, %v205, %v185
      %v214 = vsel %vm206, 0.5, %v186
      %v215 = vsel %vm207, 0.5, %v187
      %v216 = vsel %vm208, 0.5, %v188
      %v217 = vsel %vm209, 0.5, %v189
      %v218 = vsel %vm206, 1.0, %v190
      %v219 = vsel %vm207, 1.0, %v191
      %v220 = vsel %vm208, 1.0, %v192
      %v221 = vsel %vm209, 1.0, %v193
      %v222 = vsel %vm206, 0.5, %v190
      %v223 = vsel %vm207, 0.5, %v191
      %v224 = vsel %vm208, 0.5, %v192
      %v225 = vsel %vm209, 0.5, %v193
      %v226 = vmul.f32 %v108, -1.0
      %v227 = vmul.f32 %v109, -1.0
      %v228 = vmul.f32 %v110, -1.0
      %v229 = vmul.f32 %v111, -1.0
      %v230 = vadd.f32 %v194, %v226
      %v231 = vadd.f32 %v195, %v227
      %v232 = vadd.f32 %v196, %v228
      %v233 = vadd.f32 %v197, %v229
      %v234 = vadd.f32 %v230, %v142
      %v235 = vadd.f32 %v231, %v143
      %v236 = vadd.f32 %v232, %v144
      %v237 = vadd.f32 %v233, %v145
      %vm238 = vcmp.gt.f32.partialorder %v234, %v210
      %vm239 = vcmp.gt.f32.partialorder %v235, %v211
      %vm240 = vcmp.gt.f32.partialorder %v236, %v212
      %vm241 = vcmp.gt.f32.partialorder %v237, %v213
      %v242 = vsel %vm238, %v234, %v210
      %v243 = vsel %vm239, %v235, %v211
      %v244 = vsel %vm240, %v236, %v212
      %v245 = vsel %vm241, %v237, %v213
      %v246 = vsel %vm238, 0.5, %v214
      %v247 = vsel %vm239, 0.5, %v215
      %v248 = vsel %vm240, 0.5, %v216
      %v249 = vsel %vm241, 0.5, %v217
      %v250 = vsel %vm238, 0.0, %v218
      %v251 = vsel %vm239, 0.0, %v219
      %v252 = vsel %vm240, 0.0, %v220
      %v253 = vsel %vm241, 0.0, %v221
      %v254 = vsel %vm238, 0.5, %v222
      %v255 = vsel %vm239, 0.5, %v223
      %v256 = vsel %vm240, 0.5, %v224
      %v257 = vsel %vm241, 0.5, %v225
      %v258 = vadd.f32 %v194, %v134
      %v259 = vadd.f32 %v195, %v135
      %v260 = vadd.f32 %v196, %v136
      %v261 = vadd.f32 %v197, %v137
      %v262 = vadd.f32 %v258, %v112
      %v263 = vadd.f32 %v259, %v113
      %v264 = vadd.f32 %v260, %v114
      %v265 = vadd.f32 %v261, %v115
      %vm266 = vcmp.gt.f32.partialorder %v262, %v242
      %vm267 = vcmp.gt.f32.partialorder %v263, %v243
      %vm268 = vcmp.gt.f32.partialorder %v264, %v244
      %vm269 = vcmp.gt.f32.partialorder %v265, %v245
      %v270 = vsel %vm266, %v262, %v242
      %v271 = vsel %vm267, %v263, %v243
      %v272 = vsel %vm268, %v264, %v244
      %v273 = vsel %vm269, %v265, %v245
      %v274 = vsel %vm266, 0.5, %v246
      %v275 = vsel %vm267, 0.5, %v247
      %v276 = vsel %vm268, 0.5, %v248
      %v277 = vsel %vm269, 0.5, %v249
      %v278 = vsel %vm266, 0.5, %v250
      %v279 = vsel %vm267, 0.5, %v251
      %v280 = vsel %vm268, 0.5, %v252
      %v281 = vsel %vm269, 0.5, %v253
      %v282 = vsel %vm266, 1.0, %v254
      %v283 = vsel %vm267, 1.0, %v255
      %v284 = vsel %vm268, 1.0, %v256
      %v285 = vsel %vm269, 1.0, %v257
      %v286 = vmul.f32 %v112, -1.0
      %v287 = vmul.f32 %v113, -1.0
      %v288 = vmul.f32 %v114, -1.0
      %v289 = vmul.f32 %v115, -1.0
      %v290 = vadd.f32 %v258, %v286
      %v291 = vadd.f32 %v259, %v287
      %v292 = vadd.f32 %v260, %v288
      %v293 = vadd.f32 %v261, %v289
      %vm294 = vcmp.gt.f32.partialorder %v290, %v270
      %vm295 = vcmp.gt.f32.partialorder %v291, %v271
      %vm296 = vcmp.gt.f32.partialorder %v292, %v272
      %vm297 = vcmp.gt.f32.partialorder %v293, %v273
      %v298 = vsel %vm294, %v290, %v270
      %v299 = vsel %vm295, %v291, %v271
      %v300 = vsel %vm296, %v292, %v272
      %v301 = vsel %vm297, %v293, %v273
      %v302 = vsel %vm294, 0.5, %v274
      %v303 = vsel %vm295, 0.5, %v275
      %v304 = vsel %vm296, 0.5, %v276
      %v305 = vsel %vm297, 0.5, %v277
      %v306 = vsel %vm294, 0.5, %v278
      %v307 = vsel %vm295, 0.5, %v279
      %v308 = vsel %vm296, 0.5, %v280
      %v309 = vsel %vm297, 0.5, %v281
      %v310 = vsel %vm294, 0.0, %v282
      %v311 = vsel %vm295, 0.0, %v283
      %v312 = vsel %vm296, 0.0, %v284
      %v313 = vsel %vm297, 0.0, %v285
      %v314 = vmul.f32 %v104, 0.7071
      %v315 = vmul.f32 %v105, 0.7071
      %v316 = vmul.f32 %v106, 0.7071
      %v317 = vmul.f32 %v107, 0.7071
      %v318 = vmul.f32 %v108, 0.7071
      %v319 = vmul.f32 %v109, 0.7071
      %v320 = vmul.f32 %v110, 0.7071
      %v321 = vmul.f32 %v111, 0.7071
      %v322 = vadd.f32 %v314, %v318
      %v323 = vadd.f32 %v315, %v319
      %v324 = vadd.f32 %v316, %v320
      %v325 = vadd.f32 %v317, %v321
      %v326 = vadd.f32 %v322, %v142
      %v327 = vadd.f32 %v323, %v143
      %v328 = vadd.f32 %v324, %v144
      %v329 = vadd.f32 %v325, %v145
      %vm330 = vcmp.gt.f32.partialorder %v326, %v298
      %vm331 = vcmp.gt.f32.partialorder %v327, %v299
      %vm332 = vcmp.gt.f32.partialorder %v328, %v300
      %vm333 = vcmp.gt.f32.partialorder %v329, %v301
      %v334 = vsel %vm330, %v326, %v298
      %v335 = vsel %vm331, %v327, %v299
      %v336 = vsel %vm332, %v328, %v300
      %v337 = vsel %vm333, %v329, %v301
      %v338 = vsel %vm330, 1.0, %v302
      %v339 = vsel %vm331, 1.0, %v303
      %v340 = vsel %vm332, 1.0, %v304
      %v341 = vsel %vm333, 1.0, %v305
      %v342 = vsel %vm330, 1.0, %v306
      %v343 = vsel %vm331, 1.0, %v307
      %v344 = vsel %vm332, 1.0, %v308
      %v345 = vsel %vm333, 1.0, %v309
      %v346 = vsel %vm330, 0.5, %v310
      %v347 = vsel %vm331, 0.5, %v311
      %v348 = vsel %vm332, 0.5, %v312
      %v349 = vsel %vm333, 0.5, %v313
      %v350 = vmul.f32 %v108, -0.7071
      %v351 = vmul.f32 %v109, -0.7071
      %v352 = vmul.f32 %v110, -0.7071
      %v353 = vmul.f32 %v111, -0.7071
      %v354 = vadd.f32 %v314, %v350
      %v355 = vadd.f32 %v315, %v351
      %v356 = vadd.f32 %v316, %v352
      %v357 = vadd.f32 %v317, %v353
      %v358 = vadd.f32 %v354, %v142
      %v359 = vadd.f32 %v355, %v143
      %v360 = vadd.f32 %v356, %v144
      %v361 = vadd.f32 %v357, %v145
      %vm362 = vcmp.gt.f32.partialorder %v358, %v334
      %vm363 = vcmp.gt.f32.partialorder %v359, %v335
      %vm364 = vcmp.gt.f32.partialorder %v360, %v336
      %vm365 = vcmp.gt.f32.partialorder %v361, %v337
      %v366 = vsel %vm362, %v358, %v334
      %v367 = vsel %vm363, %v359, %v335
      %v368 = vsel %vm364, %v360, %v336
      %v369 = vsel %vm365, %v361, %v337
      %v370 = vsel %vm362, 1.0, %v338
      %v371 = vsel %vm363, 1.0, %v339
      %v372 = vsel %vm364, 1.0, %v340
      %v373 = vsel %vm365, 1.0, %v341
      %v374 = vsel %vm362, 0.0, %v342
      %v375 = vsel %vm363, 0.0, %v343
      %v376 = vsel %vm364, 0.0, %v344
      %v377 = vsel %vm365, 0.0, %v345
      %v378 = vsel %vm362, 0.5, %v346
      %v379 = vsel %vm363, 0.5, %v347
      %v380 = vsel %vm364, 0.5, %v348
      %v381 = vsel %vm365, 0.5, %v349
      %v382 = vmul.f32 %v104, -0.7071
      %v383 = vmul.f32 %v105, -0.7071
      %v384 = vmul.f32 %v106, -0.7071
      %v385 = vmul.f32 %v107, -0.7071
      %v386 = vadd.f32 %v382, %v318
      %v387 = vadd.f32 %v383, %v319
      %v388 = vadd.f32 %v384, %v320
      %v389 = vadd.f32 %v385, %v321
      %v390 = vadd.f32 %v386, %v142
      %v391 = vadd.f32 %v387, %v143
      %v392 = vadd.f32 %v388, %v144
      %v393 = vadd.f32 %v389, %v145
      %vm394 = vcmp.gt.f32.partialorder %v390, %v366
      %vm395 = vcmp.gt.f32.partialorder %v391, %v367
      %vm396 = vcmp.gt.f32.partialorder %v392, %v368
      %vm397 = vcmp.gt.f32.partialorder %v393, %v369
      %v398 = vsel %vm394, %v390, %v366
      %v399 = vsel %vm395, %v391, %v367
      %v400 = vsel %vm396, %v392, %v368
      %v401 = vsel %vm397, %v393, %v369
      %v402 = vsel %vm394, 0.0, %v370
      %v403 = vsel %vm395, 0.0, %v371
      %v404 = vsel %vm396, 0.0, %v372
      %v405 = vsel %vm397, 0.0, %v373
      %v406 = vsel %vm394, 1.0, %v374
      %v407 = vsel %vm395, 1.0, %v375
      %v408 = vsel %vm396, 1.0, %v376
      %v409 = vsel %vm397, 1.0, %v377
      %v410 = vsel %vm394, 0.5, %v378
      %v411 = vsel %vm395, 0.5, %v379
      %v412 = vsel %vm396, 0.5, %v380
      %v413 = vsel %vm397, 0.5, %v381
      %v414 = vadd.f32 %v382, %v350
      %v415 = vadd.f32 %v383, %v351
      %v416 = vadd.f32 %v384, %v352
      %v417 = vadd.f32 %v385, %v353
      %v418 = vadd.f32 %v414, %v142
      %v419 = vadd.f32 %v415, %v143
      %v420 = vadd.f32 %v416, %v144
      %v421 = vadd.f32 %v417, %v145
      %vm422 = vcmp.gt.f32.partialorder %v418, %v398
      %vm423 = vcmp.gt.f32.partialorder %v419, %v399
      %vm424 = vcmp.gt.f32.partialorder %v420, %v400
      %vm425 = vcmp.gt.f32.partialorder %v421, %v401
      %v426 = vsel %vm422, %v418, %v398
      %v427 = vsel %vm423, %v419, %v399
      %v428 = vsel %vm424, %v420, %v400
      %v429 = vsel %vm425, %v421, %v401
      %v430 = vsel %vm422, 0.0, %v402
      %v431 = vsel %vm423, 0.0, %v403
      %v432 = vsel %vm424, 0.0, %v404
      %v433 = vsel %vm425, 0.0, %v405
      %v434 = vsel %vm422, 0.0, %v406
      %v435 = vsel %vm423, 0.0, %v407
      %v436 = vsel %vm424, 0.0, %v408
      %v437 = vsel %vm425, 0.0, %v409
      %v438 = vsel %vm422, 0.5, %v410
      %v439 = vsel %vm423, 0.5, %v411
      %v440 = vsel %vm424, 0.5, %v412
      %v441 = vsel %vm425, 0.5, %v413
      %v442 = vadd.f32 %v314, %v134
      %v443 = vadd.f32 %v315, %v135
      %v444 = vadd.f32 %v316, %v136
      %v445 = vadd.f32 %v317, %v137
      %v446 = vmul.f32 %v112, 0.7071
      %v447 = vmul.f32 %v113, 0.7071
      %v448 = vmul.f32 %v114, 0.7071
      %v449 = vmul.f32 %v115, 0.7071
      %v450 = vadd.f32 %v442, %v446
      %v451 = vadd.f32 %v443, %v447
      %v452 = vadd.f32 %v444, %v448
      %v453 = vadd.f32 %v445, %v449
      %vm454 = vcmp.gt.f32.partialorder %v450, %v426
      %vm455 = vcmp.gt.f32.partialorder %v451, %v427
      %vm456 = vcmp.gt.f32.partialorder %v452, %v428
      %vm457 = vcmp.gt.f32.partialorder %v453, %v429
      %v458 = vsel %vm454, %v450, %v426
      %v459 = vsel %vm455, %v451, %v427
      %v460 = vsel %vm456, %v452, %v428
      %v461 = vsel %vm457, %v453, %v429
      %v462 = vsel %vm454, 1.0, %v430
      %v463 = vsel %vm455, 1.0, %v431
      %v464 = vsel %vm456, 1.0, %v432
      %v465 = vsel %vm457, 1.0, %v433
      %v466 = vsel %vm454, 0.5, %v434
      %v467 = vsel %vm455, 0.5, %v435
      %v468 = vsel %vm456, 0.5, %v436
      %v469 = vsel %vm457, 0.5, %v437
      %v470 = vsel %vm454, 1.0, %v438
      %v471 = vsel %vm455, 1.0, %v439
      %v472 = vsel %vm456, 1.0, %v440
      %v473 = vsel %vm457, 1.0, %v441
      %v474 = vmul.f32 %v112, -0.7071
      %v475 = vmul.f32 %v113, -0.7071
      %v476 = vmul.f32 %v114, -0.7071
      %v477 = vmul.f32 %v115, -0.7071
      %v478 = vadd.f32 %v442, %v474
      %v479 = vadd.f32 %v443, %v475
      %v480 = vadd.f32 %v444, %v476
      %v481 = vadd.f32 %v445, %v477
      %vm482 = vcmp.gt.f32.partialorder %v478, %v458
      %vm483 = vcmp.gt.f32.partialorder %v479, %v459
      %vm484 = vcmp.gt.f32.partialorder %v480, %v460
      %vm485 = vcmp.gt.f32.partialorder %v481, %v461
      %v486 = vsel %vm482, %v478, %v458
      %v487 = vsel %vm483, %v479, %v459
      %v488 = vsel %vm484, %v480, %v460
      %v489 = vsel %vm485, %v481, %v461
      %v490 = vsel %vm482, 1.0, %v462
      %v491 = vsel %vm483, 1.0, %v463
      %v492 = vsel %vm484, 1.0, %v464
      %v493 = vsel %vm485, 1.0, %v465
      %v494 = vsel %vm482, 0.5, %v466
      %v495 = vsel %vm483, 0.5, %v467
      %v496 = vsel %vm484, 0.5, %v468
      %v497 = vsel %vm485, 0.5, %v469
      %v498 = vsel %vm482, 0.0, %v470
      %v499 = vsel %vm483, 0.0, %v471
      %v500 = vsel %vm484, 0.0, %v472
      %v501 = vsel %vm485, 0.0, %v473
      %v502 = vadd.f32 %v382, %v134
      %v503 = vadd.f32 %v383, %v135
      %v504 = vadd.f32 %v384, %v136
      %v505 = vadd.f32 %v385, %v137
      %v506 = vadd.f32 %v502, %v446
      %v507 = vadd.f32 %v503, %v447
      %v508 = vadd.f32 %v504, %v448
      %v509 = vadd.f32 %v505, %v449
      %vm510 = vcmp.gt.f32.partialorder %v506, %v486
      %vm511 = vcmp.gt.f32.partialorder %v507, %v487
      %vm512 = vcmp.gt.f32.partialorder %v508, %v488
      %vm513 = vcmp.gt.f32.partialorder %v509, %v489
      %v514 = vsel %vm510, %v506, %v486
      %v515 = vsel %vm511, %v507, %v487
      %v516 = vsel %vm512, %v508, %v488
      %v517 = vsel %vm513, %v509, %v489
      %v518 = vsel %vm510, 0.0, %v490
      %v519 = vsel %vm511, 0.0, %v491
      %v520 = vsel %vm512, 0.0, %v492
      %v521 = vsel %vm513, 0.0, %v493
      %v522 = vsel %vm510, 0.5, %v494
      %v523 = vsel %vm511, 0.5, %v495
      %v524 = vsel %vm512, 0.5, %v496
      %v525 = vsel %vm513, 0.5, %v497
      %v526 = vsel %vm510, 1.0, %v498
      %v527 = vsel %vm511, 1.0, %v499
      %v528 = vsel %vm512, 1.0, %v500
      %v529 = vsel %vm513, 1.0, %v501
      %v530 = vadd.f32 %v502, %v474
      %v531 = vadd.f32 %v503, %v475
      %v532 = vadd.f32 %v504, %v476
      %v533 = vadd.f32 %v505, %v477
      %vm534 = vcmp.gt.f32.partialorder %v530, %v514
      %vm535 = vcmp.gt.f32.partialorder %v531, %v515
      %vm536 = vcmp.gt.f32.partialorder %v532, %v516
      %vm537 = vcmp.gt.f32.partialorder %v533, %v517
      %v538 = vsel %vm534, %v530, %v514
      %v539 = vsel %vm535, %v531, %v515
      %v540 = vsel %vm536, %v532, %v516
      %v541 = vsel %vm537, %v533, %v517
      %v542 = vsel %vm534, 0.0, %v518
      %v543 = vsel %vm535, 0.0, %v519
      %v544 = vsel %vm536, 0.0, %v520
      %v545 = vsel %vm537, 0.0, %v521
      %v546 = vsel %vm534, 0.5, %v522
      %v547 = vsel %vm535, 0.5, %v523
      %v548 = vsel %vm536, 0.5, %v524
      %v549 = vsel %vm537, 0.5, %v525
      %v550 = vsel %vm534, 0.0, %v526
      %v551 = vsel %vm535, 0.0, %v527
      %v552 = vsel %vm536, 0.0, %v528
      %v553 = vsel %vm537, 0.0, %v529
      %v554 = vadd.f32 %v194, %v318
      %v555 = vadd.f32 %v195, %v319
      %v556 = vadd.f32 %v196, %v320
      %v557 = vadd.f32 %v197, %v321
      %v558 = vadd.f32 %v554, %v446
      %v559 = vadd.f32 %v555, %v447
      %v560 = vadd.f32 %v556, %v448
      %v561 = vadd.f32 %v557, %v449
      %vm562 = vcmp.gt.f32.partialorder %v558, %v538
      %vm563 = vcmp.gt.f32.partialorder %v559, %v539
      %vm564 = vcmp.gt.f32.partialorder %v560, %v540
      %vm565 = vcmp.gt.f32.partialorder %v561, %v541
      %v566 = vsel %vm562, %v558, %v538
      %v567 = vsel %vm563, %v559, %v539
      %v568 = vsel %vm564, %v560, %v540
      %v569 = vsel %vm565, %v561, %v541
      %v570 = vsel %vm562, 0.5, %v542
      %v571 = vsel %vm563, 0.5, %v543
      %v572 = vsel %vm564, 0.5, %v544
      %v573 = vsel %vm565, 0.5, %v545
      %v574 = vsel %vm562, 1.0, %v546
      %v575 = vsel %vm563, 1.0, %v547
      %v576 = vsel %vm564, 1.0, %v548
      %v577 = vsel %vm565, 1.0, %v549
      %v578 = vsel %vm562, 1.0, %v550
      %v579 = vsel %vm563, 1.0, %v551
      %v580 = vsel %vm564, 1.0, %v552
      %v581 = vsel %vm565, 1.0, %v553
      %v582 = vadd.f32 %v554, %v474
      %v583 = vadd.f32 %v555, %v475
      %v584 = vadd.f32 %v556, %v476
      %v585 = vadd.f32 %v557, %v477
      %vm586 = vcmp.gt.f32.partialorder %v582, %v566
      %vm587 = vcmp.gt.f32.partialorder %v583, %v567
      %vm588 = vcmp.gt.f32.partialorder %v584, %v568
      %vm589 = vcmp.gt.f32.partialorder %v585, %v569
      %v590 = vsel %vm586, %v582, %v566
      %v591 = vsel %vm587, %v583, %v567
      %v592 = vsel %vm588, %v584, %v568
      %v593 = vsel %vm589, %v585, %v569
      %v594 = vsel %vm586, 0.5, %v570
      %v595 = vsel %vm587, 0.5, %v571
      %v596 = vsel %vm588, 0.5, %v572
      %v597 = vsel %vm589, 0.5, %v573
      %v598 = vsel %vm586, 1.0, %v574
      %v599 = vsel %vm587, 1.0, %v575
      %v600 = vsel %vm588, 1.0, %v576
      %v601 = vsel %vm589, 1.0, %v577
      %v602 = vsel %vm586, 0.0, %v578
      %v603 = vsel %vm587, 0.0, %v579
      %v604 = vsel %vm588, 0.0, %v580
      %v605 = vsel %vm589, 0.0, %v581
      %v606 = vadd.f32 %v194, %v350
      %v607 = vadd.f32 %v195, %v351
      %v608 = vadd.f32 %v196, %v352
      %v609 = vadd.f32 %v197, %v353
      %v610 = vadd.f32 %v606, %v446
      %v611 = vadd.f32 %v607, %v447
      %v612 = vadd.f32 %v608, %v448
      %v613 = vadd.f32 %v609, %v449
      %vm614 = vcmp.gt.f32.partialorder %v610, %v590
      %vm615 = vcmp.gt.f32.partialorder %v611, %v591
      %vm616 = vcmp.gt.f32.partialorder %v612, %v592
      %vm617 = vcmp.gt.f32.partialorder %v613, %v593
      %v618 = vsel %vm614, %v610, %v590
      %v619 = vsel %vm615, %v611, %v591
      %v620 = vsel %vm616, %v612, %v592
      %v621 = vsel %vm617, %v613, %v593
      %v622 = vsel %vm614, 0.5, %v594
      %v623 = vsel %vm615, 0.5, %v595
      %v624 = vsel %vm616, 0.5, %v596
      %v625 = vsel %vm617, 0.5, %v597
      %v626 = vsel %vm614, 0.0, %v598
      %v627 = vsel %vm615, 0.0, %v599
      %v628 = vsel %vm616, 0.0, %v600
      %v629 = vsel %vm617, 0.0, %v601
      %v630 = vsel %vm614, 1.0, %v602
      %v631 = vsel %vm615, 1.0, %v603
      %v632 = vsel %vm616, 1.0, %v604
      %v633 = vsel %vm617, 1.0, %v605
      %v634 = vadd.f32 %v606, %v474
      %v635 = vadd.f32 %v607, %v475
      %v636 = vadd.f32 %v608, %v476
      %v637 = vadd.f32 %v609, %v477
      %vm638 = vcmp.gt.f32.partialorder %v634, %v618
      %vm639 = vcmp.gt.f32.partialorder %v635, %v619
      %vm640 = vcmp.gt.f32.partialorder %v636, %v620
      %vm641 = vcmp.gt.f32.partialorder %v637, %v621
      %v642 = vsel %vm638, %v634, %v618
      %v643 = vsel %vm639, %v635, %v619
      %v644 = vsel %vm640, %v636, %v620
      %v645 = vsel %vm641, %v637, %v621
      %v646 = vsel %vm638, 0.5, %v622
      %v647 = vsel %vm639, 0.5, %v623
      %v648 = vsel %vm640, 0.5, %v624
      %v649 = vsel %vm641, 0.5, %v625
      %v650 = vsel %vm638, 0.0, %v626
      %v651 = vsel %vm639, 0.0, %v627
      %v652 = vsel %vm640, 0.0, %v628
      %v653 = vsel %vm641, 0.0, %v629
      %v654 = vsel %vm638, 0.0, %v630
      %v655 = vsel %vm639, 0.0, %v631
      %v656 = vsel %vm640, 0.0, %v632
      %v657 = vsel %vm641, 0.0, %v633
      %v658 = vmul.f32 %v104, 0.5773
      %v659 = vmul.f32 %v105, 0.5773
      %v660 = vmul.f32 %v106, 0.5773
      %v661 = vmul.f32 %v107, 0.5773
      %v662 = vmul.f32 %v108, 0.5773
      %v663 = vmul.f32 %v109, 0.5773
      %v664 = vmul.f32 %v110, 0.5773
      %v665 = vmul.f32 %v111, 0.5773
      %v666 = vadd.f32 %v658, %v662
      %v667 = vadd.f32 %v659, %v663
      %v668 = vadd.f32 %v660, %v664
      %v669 = vadd.f32 %v661, %v665
      %v670 = vmul.f32 %v112, 0.5773
      %v671 = vmul.f32 %v113, 0.5773
      %v672 = vmul.f32 %v114, 0.5773
      %v673 = vmul.f32 %v115, 0.5773
      %v674 = vadd.f32 %v666, %v670
      %v675 = vadd.f32 %v667, %v671
      %v676 = vadd.f32 %v668, %v672
      %v677 = vadd.f32 %v669, %v673
      %vm678 = vcmp.gt.f32.partialorder %v674, %v642
      %vm679 = vcmp.gt.f32.partialorder %v675, %v643
      %vm680 = vcmp.gt.f32.partialorder %v676, %v644
      %vm681 = vcmp.gt.f32.partialorder %v677, %v645
      %v682 = vsel %vm678, %v674, %v642
      %v683 = vsel %vm679, %v675, %v643
      %v684 = vsel %vm680, %v676, %v644
      %v685 = vsel %vm681, %v677, %v645
      %v686 = vsel %vm678, 1.0, %v646
      %v687 = vsel %vm679, 1.0, %v647
      %v688 = vsel %vm680, 1.0, %v648
      %v689 = vsel %vm681, 1.0, %v649
      %v690 = vsel %vm678, 1.0, %v650
      %v691 = vsel %vm679, 1.0, %v651
      %v692 = vsel %vm680, 1.0, %v652
      %v693 = vsel %vm681, 1.0, %v653
      %v694 = vsel %vm678, 1.0, %v654
      %v695 = vsel %vm679, 1.0, %v655
      %v696 = vsel %vm680, 1.0, %v656
      %v697 = vsel %vm681, 1.0, %v657
      %v698 = vmul.f32 %v112, -0.5773
      %v699 = vmul.f32 %v113, -0.5773
      %v700 = vmul.f32 %v114, -0.5773
      %v701 = vmul.f32 %v115, -0.5773
      %v702 = vadd.f32 %v666, %v698
      %v703 = vadd.f32 %v667, %v699
      %v704 = vadd.f32 %v668, %v700
      %v705 = vadd.f32 %v669, %v701
      %vm706 = vcmp.gt.f32.partialorder %v702, %v682
      %vm707 = vcmp.gt.f32.partialorder %v703, %v683
      %vm708 = vcmp.gt.f32.partialorder %v704, %v684
      %vm709 = vcmp.gt.f32.partialorder %v705, %v685
      %v710 = vsel %vm706, %v702, %v682
      %v711 = vsel %vm707, %v703, %v683
      %v712 = vsel %vm708, %v704, %v684
      %v713 = vsel %vm709, %v705, %v685
      %v714 = vsel %vm706, 1.0, %v686
      %v715 = vsel %vm707, 1.0, %v687
      %v716 = vsel %vm708, 1.0, %v688
      %v717 = vsel %vm709, 1.0, %v689
      %v718 = vsel %vm706, 1.0, %v690
      %v719 = vsel %vm707, 1.0, %v691
      %v720 = vsel %vm708, 1.0, %v692
      %v721 = vsel %vm709, 1.0, %v693
      %v722 = vsel %vm706, 0.0, %v694
      %v723 = vsel %vm707, 0.0, %v695
      %v724 = vsel %vm708, 0.0, %v696
      %v725 = vsel %vm709, 0.0, %v697
      %v726 = vmul.f32 %v108, -0.5773
      %v727 = vmul.f32 %v109, -0.5773
      %v728 = vmul.f32 %v110, -0.5773
      %v729 = vmul.f32 %v111, -0.5773
      %v730 = vadd.f32 %v658, %v726
      %v731 = vadd.f32 %v659, %v727
      %v732 = vadd.f32 %v660, %v728
      %v733 = vadd.f32 %v661, %v729
      %v734 = vadd.f32 %v730, %v670
      %v735 = vadd.f32 %v731, %v671
      %v736 = vadd.f32 %v732, %v672
      %v737 = vadd.f32 %v733, %v673
      %vm738 = vcmp.gt.f32.partialorder %v734, %v710
      %vm739 = vcmp.gt.f32.partialorder %v735, %v711
      %vm740 = vcmp.gt.f32.partialorder %v736, %v712
      %vm741 = vcmp.gt.f32.partialorder %v737, %v713
      %v742 = vsel %vm738, %v734, %v710
      %v743 = vsel %vm739, %v735, %v711
      %v744 = vsel %vm740, %v736, %v712
      %v745 = vsel %vm741, %v737, %v713
      %v746 = vsel %vm738, 1.0, %v714
      %v747 = vsel %vm739, 1.0, %v715
      %v748 = vsel %vm740, 1.0, %v716
      %v749 = vsel %vm741, 1.0, %v717
      %v750 = vsel %vm738, 0.0, %v718
      %v751 = vsel %vm739, 0.0, %v719
      %v752 = vsel %vm740, 0.0, %v720
      %v753 = vsel %vm741, 0.0, %v721
      %v754 = vsel %vm738, 1.0, %v722
      %v755 = vsel %vm739, 1.0, %v723
      %v756 = vsel %vm740, 1.0, %v724
      %v757 = vsel %vm741, 1.0, %v725
      %v758 = vmul.f32 %v104, -0.5773
      %v759 = vmul.f32 %v105, -0.5773
      %v760 = vmul.f32 %v106, -0.5773
      %v761 = vmul.f32 %v107, -0.5773
      %v762 = vadd.f32 %v758, %v662
      %v763 = vadd.f32 %v759, %v663
      %v764 = vadd.f32 %v760, %v664
      %v765 = vadd.f32 %v761, %v665
      %v766 = vadd.f32 %v762, %v670
      %v767 = vadd.f32 %v763, %v671
      %v768 = vadd.f32 %v764, %v672
      %v769 = vadd.f32 %v765, %v673
      %vm770 = vcmp.gt.f32.partialorder %v766, %v742
      %vm771 = vcmp.gt.f32.partialorder %v767, %v743
      %vm772 = vcmp.gt.f32.partialorder %v768, %v744
      %vm773 = vcmp.gt.f32.partialorder %v769, %v745
      %v774 = vsel %vm770, %v766, %v742
      %v775 = vsel %vm771, %v767, %v743
      %v776 = vsel %vm772, %v768, %v744
      %v777 = vsel %vm773, %v769, %v745
      %v778 = vsel %vm770, 0.0, %v746
      %v779 = vsel %vm771, 0.0, %v747
      %v780 = vsel %vm772, 0.0, %v748
      %v781 = vsel %vm773, 0.0, %v749
      %v782 = vsel %vm770, 1.0, %v750
      %v783 = vsel %vm771, 1.0, %v751
      %v784 = vsel %vm772, 1.0, %v752
      %v785 = vsel %vm773, 1.0, %v753
      %v786 = vsel %vm770, 1.0, %v754
      %v787 = vsel %vm771, 1.0, %v755
      %v788 = vsel %vm772, 1.0, %v756
      %v789 = vsel %vm773, 1.0, %v757
      %v790 = vadd.f32 %v758, %v726
      %v791 = vadd.f32 %v759, %v727
      %v792 = vadd.f32 %v760, %v728
      %v793 = vadd.f32 %v761, %v729
      %v794 = vadd.f32 %v790, %v670
      %v795 = vadd.f32 %v791, %v671
      %v796 = vadd.f32 %v792, %v672
      %v797 = vadd.f32 %v793, %v673
      %vm798 = vcmp.gt.f32.partialorder %v794, %v774
      %vm799 = vcmp.gt.f32.partialorder %v795, %v775
      %vm800 = vcmp.gt.f32.partialorder %v796, %v776
      %vm801 = vcmp.gt.f32.partialorder %v797, %v777
      %v802 = vsel %vm798, %v794, %v774
      %v803 = vsel %vm799, %v795, %v775
      %v804 = vsel %vm800, %v796, %v776
      %v805 = vsel %vm801, %v797, %v777
      %v806 = vsel %vm798, 0.0, %v778
      %v807 = vsel %vm799, 0.0, %v779
      %v808 = vsel %vm800, 0.0, %v780
      %v809 = vsel %vm801, 0.0, %v781
      %v810 = vsel %vm798, 0.0, %v782
      %v811 = vsel %vm799, 0.0, %v783
      %v812 = vsel %vm800, 0.0, %v784
      %v813 = vsel %vm801, 0.0, %v785
      %v814 = vsel %vm798, 1.0, %v786
      %v815 = vsel %vm799, 1.0, %v787
      %v816 = vsel %vm800, 1.0, %v788
      %v817 = vsel %vm801, 1.0, %v789
      %v818 = vadd.f32 %v762, %v698
      %v819 = vadd.f32 %v763, %v699
      %v820 = vadd.f32 %v764, %v700
      %v821 = vadd.f32 %v765, %v701
      %vm822 = vcmp.gt.f32.partialorder %v818, %v802
      %vm823 = vcmp.gt.f32.partialorder %v819, %v803
      %vm824 = vcmp.gt.f32.partialorder %v820, %v804
      %vm825 = vcmp.gt.f32.partialorder %v821, %v805
      %v826 = vsel %vm822, %v818, %v802
      %v827 = vsel %vm823, %v819, %v803
      %v828 = vsel %vm824, %v820, %v804
      %v829 = vsel %vm825, %v821, %v805
      %v830 = vsel %vm822, 0.0, %v806
      %v831 = vsel %vm823, 0.0, %v807
      %v832 = vsel %vm824, 0.0, %v808
      %v833 = vsel %vm825, 0.0, %v809
      %v834 = vsel %vm822, 1.0, %v810
      %v835 = vsel %vm823, 1.0, %v811
      %v836 = vsel %vm824, 1.0, %v812
      %v837 = vsel %vm825, 1.0, %v813
      %v838 = vsel %vm822, 0.0, %v814
      %v839 = vsel %vm823, 0.0, %v815
      %v840 = vsel %vm824, 0.0, %v816
      %v841 = vsel %vm825, 0.0, %v817
      %v842 = vadd.f32 %v730, %v698
      %v843 = vadd.f32 %v731, %v699
      %v844 = vadd.f32 %v732, %v700
      %v845 = vadd.f32 %v733, %v701
      %vm846 = vcmp.gt.f32.partialorder %v842, %v826
      %vm847 = vcmp.gt.f32.partialorder %v843, %v827
      %vm848 = vcmp.gt.f32.partialorder %v844, %v828
      %vm849 = vcmp.gt.f32.partialorder %v845, %v829
      %v850 = vsel %vm846, %v842, %v826
      %v851 = vsel %vm847, %v843, %v827
      %v852 = vsel %vm848, %v844, %v828
      %v853 = vsel %vm849, %v845, %v829
      %v854 = vsel %vm846, 1.0, %v830
      %v855 = vsel %vm847, 1.0, %v831
      %v856 = vsel %vm848, 1.0, %v832
      %v857 = vsel %vm849, 1.0, %v833
      %v858 = vsel %vm846, 0.0, %v834
      %v859 = vsel %vm847, 0.0, %v835
      %v860 = vsel %vm848, 0.0, %v836
      %v861 = vsel %vm849, 0.0, %v837
      %v862 = vsel %vm846, 0.0, %v838
      %v863 = vsel %vm847, 0.0, %v839
      %v864 = vsel %vm848, 0.0, %v840
      %v865 = vsel %vm849, 0.0, %v841
      %v866 = vadd.f32 %v790, %v698
      %v867 = vadd.f32 %v791, %v699
      %v868 = vadd.f32 %v792, %v700
      %v869 = vadd.f32 %v793, %v701
      %vm870 = vcmp.gt.f32.partialorder %v866, %v850
      %vm871 = vcmp.gt.f32.partialorder %v867, %v851
      %vm872 = vcmp.gt.f32.partialorder %v868, %v852
      %vm873 = vcmp.gt.f32.partialorder %v869, %v853
      %v874 = vsel %vm870, 0.0, %v854
      %v875 = vsel %vm871, 0.0, %v855
      %v876 = vsel %vm872, 0.0, %v856
      %v877 = vsel %vm873, 0.0, %v857
      %v878 = vsel %vm870, 0.0, %v858
      %v879 = vsel %vm871, 0.0, %v859
      %v880 = vsel %vm872, 0.0, %v860
      %v881 = vsel %vm873, 0.0, %v861
      %v882 = vsel %vm870, 0.0, %v862
      %v883 = vsel %vm871, 0.0, %v863
      %v884 = vsel %vm872, 0.0, %v864
      %v885 = vsel %vm873, 0.0, %v865
      %v886 = vadd.f32 %v874, %v122
      %v887 = vadd.f32 %v875, %v122
      %v888 = vadd.f32 %v876, %v123
      %v889 = vadd.f32 %v877, %v123
      %v890 = vadd.f32 %v878, %v128
      %v891 = vadd.f32 %v879, %v129
      %v892 = vadd.f32 %v880, %v128
      %v893 = vadd.f32 %v881, %v129
      %v894 = vadd.f32 %v882, %v132
      %v895 = vadd.f32 %v883, %v133
      %v896 = vadd.f32 %v884, %v132
      %v897 = vadd.f32 %v885, %v133
      %s898 = ssub.s32 1, %s19
      %p899 = scmp.gt.s32.totalorder %s898, 0
      %s900 = scalar_select %p899, %s898, 0
      %s901 = scvt.s32.f32 %s900
      %s902 = ssub.s32 %s19, 1
      %p903 = scmp.gt.s32.totalorder %s902, 0
      %s904 = scalar_select %p903, %s902, 0
      %s905 = scvt.s32.f32 %s904
      %s906 = ssub.f32 1.0, %s901
      %s907 = ssub.f32 %s906, %s905
      %v908 = vstv %s901
      %v909 = vmul.f32 %v104, %v908
      %v910 = vmul.f32 %v105, %v908
      %v911 = vmul.f32 %v106, %v908
      %v912 = vmul.f32 %v107, %v908
      %v913 = vstv %s907
      %v914 = vmul.f32 %v108, %v913
      %v915 = vmul.f32 %v109, %v913
      %v916 = vmul.f32 %v110, %v913
      %v917 = vmul.f32 %v111, %v913
      %v918 = vadd.f32 %v909, %v914
      %v919 = vadd.f32 %v910, %v915
      %v920 = vadd.f32 %v911, %v916
      %v921 = vadd.f32 %v912, %v917
      %v922 = vstv %s905
      %v923 = vmul.f32 %v112, %v922
      %v924 = vmul.f32 %v113, %v922
      %v925 = vmul.f32 %v114, %v922
      %v926 = vmul.f32 %v115, %v922
      %v927 = vadd.f32 %v918, %v923
      %v928 = vadd.f32 %v919, %v924
      %v929 = vadd.f32 %v920, %v925
      %v930 = vadd.f32 %v921, %v926
      %v931 = vmul.f32 %v886, %v908
      %v932 = vmul.f32 %v887, %v908
      %v933 = vmul.f32 %v888, %v908
      %v934 = vmul.f32 %v889, %v908
      %v935 = vmul.f32 %v890, %v913
      %v936 = vmul.f32 %v891, %v913
      %v937 = vmul.f32 %v892, %v913
      %v938 = vmul.f32 %v893, %v913
      %v939 = vadd.f32 %v931, %v935
      %v940 = vadd.f32 %v932, %v936
      %v941 = vadd.f32 %v933, %v937
      %v942 = vadd.f32 %v934, %v938
      %v943 = vmul.f32 %v894, %v922
      %v944 = vmul.f32 %v895, %v922
      %v945 = vmul.f32 %v896, %v922
      %v946 = vmul.f32 %v897, %v922
      %v947 = vadd.f32 %v939, %v943
      %v948 = vadd.f32 %v940, %v944
      %v949 = vadd.f32 %v941, %v945
      %v950 = vadd.f32 %v942, %v946
      %v951 = vmul.f32 %v108, %v908
      %v952 = vmul.f32 %v109, %v908
      %v953 = vmul.f32 %v110, %v908
      %v954 = vmul.f32 %v111, %v908
      %s955 = sadd.f32 %s907, %s905
      %v956 = vstv %s955
      %v957 = vmul.f32 %v104, %v956
      %v958 = vmul.f32 %v105, %v956
      %v959 = vmul.f32 %v106, %v956
      %v960 = vmul.f32 %v107, %v956
      %v961 = vadd.f32 %v951, %v957
      %v962 = vadd.f32 %v952, %v958
      %v963 = vadd.f32 %v953, %v959
      %v964 = vadd.f32 %v954, %v960
      %v965 = vmul.f32 %v890, %v908
      %v966 = vmul.f32 %v891, %v908
      %v967 = vmul.f32 %v892, %v908
      %v968 = vmul.f32 %v893, %v908
      %v969 = vmul.f32 %v886, %v956
      %v970 = vmul.f32 %v887, %v956
      %v971 = vmul.f32 %v888, %v956
      %v972 = vmul.f32 %v889, %v956
      %v973 = vadd.f32 %v965, %v969
      %v974 = vadd.f32 %v966, %v970
      %v975 = vadd.f32 %v967, %v971
      %v976 = vadd.f32 %v968, %v972
      %s977 = sadd.f32 %s901, %s907
      %v978 = vstv %s977
      %v979 = vmul.f32 %v112, %v978
      %v980 = vmul.f32 %v113, %v978
      %v981 = vmul.f32 %v114, %v978
      %v982 = vmul.f32 %v115, %v978
      %v983 = vmul.f32 %v108, %v922
      %v984 = vmul.f32 %v109, %v922
      %v985 = vmul.f32 %v110, %v922
      %v986 = vmul.f32 %v111, %v922
      %v987 = vadd.f32 %v979, %v983
      %v988 = vadd.f32 %v980, %v984
      %v989 = vadd.f32 %v981, %v985
      %v990 = vadd.f32 %v982, %v986
      %v991 = vmul.f32 %v894, %v978
      %v992 = vmul.f32 %v895, %v978
      %v993 = vmul.f32 %v896, %v978
      %v994 = vmul.f32 %v897, %v978
      %v995 = vmul.f32 %v890, %v922
      %v996 = vmul.f32 %v891, %v922
      %v997 = vmul.f32 %v892, %v922
      %v998 = vmul.f32 %v893, %v922
      %v999 = vadd.f32 %v991, %v995
      %v1000 = vadd.f32 %v992, %v996
      %v1001 = vadd.f32 %v993, %v997
      %v1002 = vadd.f32 %v994, %v998
      %s1003 = smul.u32 %s19, 256
      loop: start=0, step=1, limit=16
      $region25: #{morph_forward.3} parent=23 // loop_pre_header
        _
      $region26: #{morph_forward.3} parent=23 // loop_header
        %s1005 = sphi 0, %s1009
        %p1006 = scmp.ge.s32.totalorder %s1005, 16
        %v1010 = vphi 1e+30, %v1625
        %v1011 = vphi 1e+30, %v1626
        %v1012 = vphi 1e+30, %v1627
        %v1013 = vphi 1e+30, %v1628
      $region27: #{morph_forward.3} parent=23 // loop_header_branch
        %1008 = sbr.rel (%p1006) target = $region31
      $region28: #{morph_forward.3} parent=23 // loop_body
        %s1014 = scvt.s32.f32 %s1005
        %v1015 = vstv %s1014
        %v1016 = vsub.f32 %v1015, %v947
        %v1017 = vsub.f32 %v1015, %v948
        %v1018 = vsub.f32 %v1015, %v949
        %v1019 = vsub.f32 %v1015, %v950
        %v1020 = vrcp.pop %v927
        %v1021 = vmul.f32 %v1016, %v1020
        %v1022 = vrcp.pop %v928
        %v1023 = vmul.f32 %v1017, %v1022
        %v1024 = vrcp.pop %v929
        %v1025 = vmul.f32 %v1018, %v1024
        %v1026 = vrcp.pop %v930
        %v1027 = vmul.f32 %v1019, %v1026
        %v1028 = vmul.f32 %v961, %v1021
        %v1029 = vmul.f32 %v962, %v1023
        %v1030 = vmul.f32 %v963, %v1025
        %v1031 = vmul.f32 %v964, %v1027
        %v1032 = vadd.f32 %v1028, %v973
        %v1033 = vadd.f32 %v1029, %v974
        %v1034 = vadd.f32 %v1030, %v975
        %v1035 = vadd.f32 %v1031, %v976
        %v1036 = vmul.f32 %v987, %v1021
        %v1037 = vmul.f32 %v988, %v1023
        %v1038 = vmul.f32 %v989, %v1025
        %v1039 = vmul.f32 %v990, %v1027
        %v1040 = vadd.f32 %v1036, %v999
        %v1041 = vadd.f32 %v1037, %v1000
        %v1042 = vadd.f32 %v1038, %v1001
        %v1043 = vadd.f32 %v1039, %v1002
        %vm1044 = vcmp.ge.f32.partialorder %v1032, 0.0
        %vm1045 = vcmp.ge.f32.partialorder %v1033, 0.0
        %vm1046 = vcmp.ge.f32.partialorder %v1034, 0.0
        %vm1047 = vcmp.ge.f32.partialorder %v1035, 0.0
        %v1048 = vfloor.f32 %v1032
        %v1049 = vfloor.f32 %v1033
        %v1050 = vfloor.f32 %v1034
        %v1051 = vfloor.f32 %v1035
        %v1052 = vsub.f32 0.0, %v1032
        %v1053 = vsub.f32 0.0, %v1033
        %v1054 = vsub.f32 0.0, %v1034
        %v1055 = vsub.f32 0.0, %v1035
        %v1056 = vfloor.f32 %v1052
        %v1057 = vfloor.f32 %v1053
        %v1058 = vfloor.f32 %v1054
        %v1059 = vfloor.f32 %v1055
        %v1060 = vsub.f32 0.0, %v1056
        %v1061 = vsub.f32 0.0, %v1057
        %v1062 = vsub.f32 0.0, %v1058
        %v1063 = vsub.f32 0.0, %v1059
        %v1064 = vsel %vm1044, %v1048, %v1060
        %v1065 = vsel %vm1045, %v1049, %v1061
        %v1066 = vsel %vm1046, %v1050, %v1062
        %v1067 = vsel %vm1047, %v1051, %v1063
        %vm1068 = vcmp.ge.f32.partialorder %v1040, 0.0
        %vm1069 = vcmp.ge.f32.partialorder %v1041, 0.0
        %vm1070 = vcmp.ge.f32.partialorder %v1042, 0.0
        %vm1071 = vcmp.ge.f32.partialorder %v1043, 0.0
        %v1072 = vfloor.f32 %v1040
        %v1073 = vfloor.f32 %v1041
        %v1074 = vfloor.f32 %v1042
        %v1075 = vfloor.f32 %v1043
        %v1076 = vsub.f32 0.0, %v1040
        %v1077 = vsub.f32 0.0, %v1041
        %v1078 = vsub.f32 0.0, %v1042
        %v1079 = vsub.f32 0.0, %v1043
        %v1080 = vfloor.f32 %v1076
        %v1081 = vfloor.f32 %v1077
        %v1082 = vfloor.f32 %v1078
        %v1083 = vfloor.f32 %v1079
        %v1084 = vsub.f32 0.0, %v1080
        %v1085 = vsub.f32 0.0, %v1081
        %v1086 = vsub.f32 0.0, %v1082
        %v1087 = vsub.f32 0.0, %v1083
        %v1088 = vsel %vm1068, %v1072, %v1084
        %v1089 = vsel %vm1069, %v1073, %v1085
        %v1090 = vsel %vm1070, %v1074, %v1086
        %v1091 = vsel %vm1071, %v1075, %v1087
        %vm1092 = vcmp.ge.f32.partialorder %v1064, 0.0
        %vm1093 = vcmp.ge.f32.partialorder %v1065, 0.0
        %vm1094 = vcmp.ge.f32.partialorder %v1066, 0.0
        %vm1095 = vcmp.ge.f32.partialorder %v1067, 0.0
        %vm1096 = vcmp.lt.f32.partialorder %v1064, 16.0
        %vm1097 = vcmp.lt.f32.partialorder %v1065, 16.0
        %vm1098 = vcmp.lt.f32.partialorder %v1066, 16.0
        %vm1099 = vcmp.lt.f32.partialorder %v1067, 16.0
        %vm1100 = vmand %vm1092, %vm1096
        %vm1101 = vmand %vm1093, %vm1097
        %vm1102 = vmand %vm1094, %vm1098
        %vm1103 = vmand %vm1095, %vm1099
        %vm1104 = vcmp.ge.f32.partialorder %v1088, 0.0
        %vm1105 = vcmp.ge.f32.partialorder %v1089, 0.0
        %vm1106 = vcmp.ge.f32.partialorder %v1090, 0.0
        %vm1107 = vcmp.ge.f32.partialorder %v1091, 0.0
        %vm1108 = vmand %vm1100, %vm1104
        %vm1109 = vmand %vm1101, %vm1105
        %vm1110 = vmand %vm1102, %vm1106
        %vm1111 = vmand %vm1103, %vm1107
        %vm1112 = vcmp.lt.f32.partialorder %v1088, 16.0
        %vm1113 = vcmp.lt.f32.partialorder %v1089, 16.0
        %vm1114 = vcmp.lt.f32.partialorder %v1090, 16.0
        %vm1115 = vcmp.lt.f32.partialorder %v1091, 16.0
        %vm1116 = vmand %vm1108, %vm1112
        %vm1117 = vmand %vm1109, %vm1113
        %vm1118 = vmand %vm1110, %vm1114
        %vm1119 = vmand %vm1111, %vm1115
        %s1120 = smul.u32 %s1005, 16
        %s1121 = sadd.s32 %s1003, %s1120
        %vm1122 = vcmp.eq.f32.partialorder %v1064, 0.0
        %vm1123 = vcmp.eq.f32.partialorder %v1065, 0.0
        %vm1124 = vcmp.eq.f32.partialorder %v1066, 0.0
        %vm1125 = vcmp.eq.f32.partialorder %v1067, 0.0
        %s1126 = sld [smem:[#allocation3 + %s1121]]
        %v1127 = vstv %s1126
        %v1128 = vsel %vm1122, %v1127, 0
        %v1129 = vsel %vm1123, %v1127, 0
        %v1130 = vsel %vm1124, %v1127, 0
        %v1131 = vsel %vm1125, %v1127, 0
        %vm1132 = vcmp.eq.f32.partialorder %v1064, 1.0
        %vm1133 = vcmp.eq.f32.partialorder %v1065, 1.0
        %vm1134 = vcmp.eq.f32.partialorder %v1066, 1.0
        %vm1135 = vcmp.eq.f32.partialorder %v1067, 1.0
        %s1136 = sadd.s32 %s1121, 1
        %s1137 = sld [smem:[#allocation3 + %s1136]]
        %v1138 = vstv %s1137
        %v1139 = vsel %vm1132, %v1138, %v1128
        %v1140 = vsel %vm1133, %v1138, %v1129
        %v1141 = vsel %vm1134, %v1138, %v1130
        %v1142 = vsel %vm1135, %v1138, %v1131
        %vm1143 = vcmp.eq.f32.partialorder %v1064, 2.0
        %vm1144 = vcmp.eq.f32.partialorder %v1065, 2.0
        %vm1145 = vcmp.eq.f32.partialorder %v1066, 2.0
        %vm1146 = vcmp.eq.f32.partialorder %v1067, 2.0
        %s1147 = sadd.s32 %s1121, 2
        %s1148 = sld [smem:[#allocation3 + %s1147]]
        %v1149 = vstv %s1148
        %v1150 = vsel %vm1143, %v1149, %v1139
        %v1151 = vsel %vm1144, %v1149, %v1140
        %v1152 = vsel %vm1145, %v1149, %v1141
        %v1153 = vsel %vm1146, %v1149, %v1142
        %vm1154 = vcmp.eq.f32.partialorder %v1064, 3.0
        %vm1155 = vcmp.eq.f32.partialorder %v1065, 3.0
        %vm1156 = vcmp.eq.f32.partialorder %v1066, 3.0
        %vm1157 = vcmp.eq.f32.partialorder %v1067, 3.0
        %s1158 = sadd.s32 %s1121, 3
        %s1159 = sld [smem:[#allocation3 + %s1158]]
        %v1160 = vstv %s1159
        %v1161 = vsel %vm1154, %v1160, %v1150
        %v1162 = vsel %vm1155, %v1160, %v1151
        %v1163 = vsel %vm1156, %v1160, %v1152
        %v1164 = vsel %vm1157, %v1160, %v1153
        %vm1165 = vcmp.eq.f32.partialorder %v1064, 4.0
        %vm1166 = vcmp.eq.f32.partialorder %v1065, 4.0
        %vm1167 = vcmp.eq.f32.partialorder %v1066, 4.0
        %vm1168 = vcmp.eq.f32.partialorder %v1067, 4.0
        %s1169 = sadd.s32 %s1121, 4
        %s1170 = sld [smem:[#allocation3 + %s1169]]
        %v1171 = vstv %s1170
        %v1172 = vsel %vm1165, %v1171, %v1161
        %v1173 = vsel %vm1166, %v1171, %v1162
        %v1174 = vsel %vm1167, %v1171, %v1163
        %v1175 = vsel %vm1168, %v1171, %v1164
        %vm1176 = vcmp.eq.f32.partialorder %v1064, 5.0
        %vm1177 = vcmp.eq.f32.partialorder %v1065, 5.0
        %vm1178 = vcmp.eq.f32.partialorder %v1066, 5.0
        %vm1179 = vcmp.eq.f32.partialorder %v1067, 5.0
        %s1180 = sadd.s32 %s1121, 5
        %s1181 = sld [smem:[#allocation3 + %s1180]]
        %v1182 = vstv %s1181
        %v1183 = vsel %vm1176, %v1182, %v1172
        %v1184 = vsel %vm1177, %v1182, %v1173
        %v1185 = vsel %vm1178, %v1182, %v1174
        %v1186 = vsel %vm1179, %v1182, %v1175
        %vm1187 = vcmp.eq.f32.partialorder %v1064, 6.0
        %vm1188 = vcmp.eq.f32.partialorder %v1065, 6.0
        %vm1189 = vcmp.eq.f32.partialorder %v1066, 6.0
        %vm1190 = vcmp.eq.f32.partialorder %v1067, 6.0
        %s1191 = sadd.s32 %s1121, 6
        %s1192 = sld [smem:[#allocation3 + %s1191]]
        %v1193 = vstv %s1192
        %v1194 = vsel %vm1187, %v1193, %v1183
        %v1195 = vsel %vm1188, %v1193, %v1184
        %v1196 = vsel %vm1189, %v1193, %v1185
        %v1197 = vsel %vm1190, %v1193, %v1186
        %vm1198 = vcmp.eq.f32.partialorder %v1064, 7.0
        %vm1199 = vcmp.eq.f32.partialorder %v1065, 7.0
        %vm1200 = vcmp.eq.f32.partialorder %v1066, 7.0
        %vm1201 = vcmp.eq.f32.partialorder %v1067, 7.0
        %s1202 = sadd.s32 %s1121, 7
        %s1203 = sld [smem:[#allocation3 + %s1202]]
        %v1204 = vstv %s1203
        %v1205 = vsel %vm1198, %v1204, %v1194
        %v1206 = vsel %vm1199, %v1204, %v1195
        %v1207 = vsel %vm1200, %v1204, %v1196
        %v1208 = vsel %vm1201, %v1204, %v1197
        %vm1209 = vcmp.eq.f32.partialorder %v1064, 8.0
        %vm1210 = vcmp.eq.f32.partialorder %v1065, 8.0
        %vm1211 = vcmp.eq.f32.partialorder %v1066, 8.0
        %vm1212 = vcmp.eq.f32.partialorder %v1067, 8.0
        %s1213 = sadd.s32 %s1121, 8
        %s1214 = sld [smem:[#allocation3 + %s1213]]
        %v1215 = vstv %s1214
        %v1216 = vsel %vm1209, %v1215, %v1205
        %v1217 = vsel %vm1210, %v1215, %v1206
        %v1218 = vsel %vm1211, %v1215, %v1207
        %v1219 = vsel %vm1212, %v1215, %v1208
        %vm1220 = vcmp.eq.f32.partialorder %v1064, 9.0
        %vm1221 = vcmp.eq.f32.partialorder %v1065, 9.0
        %vm1222 = vcmp.eq.f32.partialorder %v1066, 9.0
        %vm1223 = vcmp.eq.f32.partialorder %v1067, 9.0
        %s1224 = sadd.s32 %s1121, 9
        %s1225 = sld [smem:[#allocation3 + %s1224]]
        %v1226 = vstv %s1225
        %v1227 = vsel %vm1220, %v1226, %v1216
        %v1228 = vsel %vm1221, %v1226, %v1217
        %v1229 = vsel %vm1222, %v1226, %v1218
        %v1230 = vsel %vm1223, %v1226, %v1219
        %vm1231 = vcmp.eq.f32.partialorder %v1064, 10.0
        %vm1232 = vcmp.eq.f32.partialorder %v1065, 10.0
        %vm1233 = vcmp.eq.f32.partialorder %v1066, 10.0
        %vm1234 = vcmp.eq.f32.partialorder %v1067, 10.0
        %s1235 = sadd.s32 %s1121, 10
        %s1236 = sld [smem:[#allocation3 + %s1235]]
        %v1237 = vstv %s1236
        %v1238 = vsel %vm1231, %v1237, %v1227
        %v1239 = vsel %vm1232, %v1237, %v1228
        %v1240 = vsel %vm1233, %v1237, %v1229
        %v1241 = vsel %vm1234, %v1237, %v1230
        %vm1242 = vcmp.eq.f32.partialorder %v1064, 11.0
        %vm1243 = vcmp.eq.f32.partialorder %v1065, 11.0
        %vm1244 = vcmp.eq.f32.partialorder %v1066, 11.0
        %vm1245 = vcmp.eq.f32.partialorder %v1067, 11.0
        %s1246 = sadd.s32 %s1121, 11
        %s1247 = sld [smem:[#allocation3 + %s1246]]
        %v1248 = vstv %s1247
        %v1249 = vsel %vm1242, %v1248, %v1238
        %v1250 = vsel %vm1243, %v1248, %v1239
        %v1251 = vsel %vm1244, %v1248, %v1240
        %v1252 = vsel %vm1245, %v1248, %v1241
        %vm1253 = vcmp.eq.f32.partialorder %v1064, 12.0
        %vm1254 = vcmp.eq.f32.partialorder %v1065, 12.0
        %vm1255 = vcmp.eq.f32.partialorder %v1066, 12.0
        %vm1256 = vcmp.eq.f32.partialorder %v1067, 12.0
        %s1257 = sadd.s32 %s1121, 12
        %s1258 = sld [smem:[#allocation3 + %s1257]]
        %v1259 = vstv %s1258
        %v1260 = vsel %vm1253, %v1259, %v1249
        %v1261 = vsel %vm1254, %v1259, %v1250
        %v1262 = vsel %vm1255, %v1259, %v1251
        %v1263 = vsel %vm1256, %v1259, %v1252
        %vm1264 = vcmp.eq.f32.partialorder %v1064, 13.0
        %vm1265 = vcmp.eq.f32.partialorder %v1065, 13.0
        %vm1266 = vcmp.eq.f32.partialorder %v1066, 13.0
        %vm1267 = vcmp.eq.f32.partialorder %v1067, 13.0
        %s1268 = sadd.s32 %s1121, 13
        %s1269 = sld [smem:[#allocation3 + %s1268]]
        %v1270 = vstv %s1269
        %v1271 = vsel %vm1264, %v1270, %v1260
        %v1272 = vsel %vm1265, %v1270, %v1261
        %v1273 = vsel %vm1266, %v1270, %v1262
        %v1274 = vsel %vm1267, %v1270, %v1263
        %vm1275 = vcmp.eq.f32.partialorder %v1064, 14.0
        %vm1276 = vcmp.eq.f32.partialorder %v1065, 14.0
        %vm1277 = vcmp.eq.f32.partialorder %v1066, 14.0
        %vm1278 = vcmp.eq.f32.partialorder %v1067, 14.0
        %s1279 = sadd.s32 %s1121, 14
        %s1280 = sld [smem:[#allocation3 + %s1279]]
        %v1281 = vstv %s1280
        %v1282 = vsel %vm1275, %v1281, %v1271
        %v1283 = vsel %vm1276, %v1281, %v1272
        %v1284 = vsel %vm1277, %v1281, %v1273
        %v1285 = vsel %vm1278, %v1281, %v1274
        %vm1286 = vcmp.eq.f32.partialorder %v1064, 15.0
        %vm1287 = vcmp.eq.f32.partialorder %v1065, 15.0
        %vm1288 = vcmp.eq.f32.partialorder %v1066, 15.0
        %vm1289 = vcmp.eq.f32.partialorder %v1067, 15.0
        %s1290 = sadd.s32 %s1121, 15
        %s1291 = sld [smem:[#allocation3 + %s1290]]
        %v1292 = vstv %s1291
        %v1293 = vsel %vm1286, %v1292, %v1282
        %v1294 = vsel %vm1287, %v1292, %v1283
        %v1295 = vsel %vm1288, %v1292, %v1284
        %v1296 = vsel %vm1289, %v1292, %v1285
        %vm1297 = vcmp.eq.f32.partialorder %v1088, 0.0
        %vm1298 = vcmp.eq.f32.partialorder %v1089, 0.0
        %vm1299 = vcmp.eq.f32.partialorder %v1090, 0.0
        %vm1300 = vcmp.eq.f32.partialorder %v1091, 0.0
        %v1301 = vand.u32 %v1293, 1
        %v1302 = vand.u32 %v1294, 1
        %v1303 = vand.u32 %v1295, 1
        %v1304 = vand.u32 %v1296, 1
        %v1305 = vsel %vm1297, %v1301, 0
        %v1306 = vsel %vm1298, %v1302, 0
        %v1307 = vsel %vm1299, %v1303, 0
        %v1308 = vsel %vm1300, %v1304, 0
        %vm1309 = vcmp.eq.f32.partialorder %v1088, 1.0
        %vm1310 = vcmp.eq.f32.partialorder %v1089, 1.0
        %vm1311 = vcmp.eq.f32.partialorder %v1090, 1.0
        %vm1312 = vcmp.eq.f32.partialorder %v1091, 1.0
        %v1313 = vshra.s32 %v1293, 1
        %v1314 = vshra.s32 %v1294, 1
        %v1315 = vshra.s32 %v1295, 1
        %v1316 = vshra.s32 %v1296, 1
        %v1317 = vand.u32 %v1313, 1
        %v1318 = vand.u32 %v1314, 1
        %v1319 = vand.u32 %v1315, 1
        %v1320 = vand.u32 %v1316, 1
        %v1321 = vsel %vm1309, %v1317, %v1305
        %v1322 = vsel %vm1310, %v1318, %v1306
        %v1323 = vsel %vm1311, %v1319, %v1307
        %v1324 = vsel %vm1312, %v1320, %v1308
        %vm1325 = vcmp.eq.f32.partialorder %v1088, 2.0
        %vm1326 = vcmp.eq.f32.partialorder %v1089, 2.0
        %vm1327 = vcmp.eq.f32.partialorder %v1090, 2.0
        %vm1328 = vcmp.eq.f32.partialorder %v1091, 2.0
        %v1329 = vshra.s32 %v1293, 2
        %v1330 = vshra.s32 %v1294, 2
        %v1331 = vshra.s32 %v1295, 2
        %v1332 = vshra.s32 %v1296, 2
        %v1333 = vand.u32 %v1329, 1
        %v1334 = vand.u32 %v1330, 1
        %v1335 = vand.u32 %v1331, 1
        %v1336 = vand.u32 %v1332, 1
        %v1337 = vsel %vm1325, %v1333, %v1321
        %v1338 = vsel %vm1326, %v1334, %v1322
        %v1339 = vsel %vm1327, %v1335, %v1323
        %v1340 = vsel %vm1328, %v1336, %v1324
        %vm1341 = vcmp.eq.f32.partialorder %v1088, 3.0
        %vm1342 = vcmp.eq.f32.partialorder %v1089, 3.0
        %vm1343 = vcmp.eq.f32.partialorder %v1090, 3.0
        %vm1344 = vcmp.eq.f32.partialorder %v1091, 3.0
        %v1345 = vshra.s32 %v1293, 3
        %v1346 = vshra.s32 %v1294, 3
        %v1347 = vshra.s32 %v1295, 3
        %v1348 = vshra.s32 %v1296, 3
        %v1349 = vand.u32 %v1345, 1
        %v1350 = vand.u32 %v1346, 1
        %v1351 = vand.u32 %v1347, 1
        %v1352 = vand.u32 %v1348, 1
        %v1353 = vsel %vm1341, %v1349, %v1337
        %v1354 = vsel %vm1342, %v1350, %v1338
        %v1355 = vsel %vm1343, %v1351, %v1339
        %v1356 = vsel %vm1344, %v1352, %v1340
        %vm1357 = vcmp.eq.f32.partialorder %v1088, 4.0
        %vm1358 = vcmp.eq.f32.partialorder %v1089, 4.0
        %vm1359 = vcmp.eq.f32.partialorder %v1090, 4.0
        %vm1360 = vcmp.eq.f32.partialorder %v1091, 4.0
        %v1361 = vshra.s32 %v1293, 4
        %v1362 = vshra.s32 %v1294, 4
        %v1363 = vshra.s32 %v1295, 4
        %v1364 = vshra.s32 %v1296, 4
        %v1365 = vand.u32 %v1361, 1
        %v1366 = vand.u32 %v1362, 1
        %v1367 = vand.u32 %v1363, 1
        %v1368 = vand.u32 %v1364, 1
        %v1369 = vsel %vm1357, %v1365, %v1353
        %v1370 = vsel %vm1358, %v1366, %v1354
        %v1371 = vsel %vm1359, %v1367, %v1355
        %v1372 = vsel %vm1360, %v1368, %v1356
        %vm1373 = vcmp.eq.f32.partialorder %v1088, 5.0
        %vm1374 = vcmp.eq.f32.partialorder %v1089, 5.0
        %vm1375 = vcmp.eq.f32.partialorder %v1090, 5.0
        %vm1376 = vcmp.eq.f32.partialorder %v1091, 5.0
        %v1377 = vshra.s32 %v1293, 5
        %v1378 = vshra.s32 %v1294, 5
        %v1379 = vshra.s32 %v1295, 5
        %v1380 = vshra.s32 %v1296, 5
        %v1381 = vand.u32 %v1377, 1
        %v1382 = vand.u32 %v1378, 1
        %v1383 = vand.u32 %v1379, 1
        %v1384 = vand.u32 %v1380, 1
        %v1385 = vsel %vm1373, %v1381, %v1369
        %v1386 = vsel %vm1374, %v1382, %v1370
        %v1387 = vsel %vm1375, %v1383, %v1371
        %v1388 = vsel %vm1376, %v1384, %v1372
        %vm1389 = vcmp.eq.f32.partialorder %v1088, 6.0
        %vm1390 = vcmp.eq.f32.partialorder %v1089, 6.0
        %vm1391 = vcmp.eq.f32.partialorder %v1090, 6.0
        %vm1392 = vcmp.eq.f32.partialorder %v1091, 6.0
        %v1393 = vshra.s32 %v1293, 6
        %v1394 = vshra.s32 %v1294, 6
        %v1395 = vshra.s32 %v1295, 6
        %v1396 = vshra.s32 %v1296, 6
        %v1397 = vand.u32 %v1393, 1
        %v1398 = vand.u32 %v1394, 1
        %v1399 = vand.u32 %v1395, 1
        %v1400 = vand.u32 %v1396, 1
        %v1401 = vsel %vm1389, %v1397, %v1385
        %v1402 = vsel %vm1390, %v1398, %v1386
        %v1403 = vsel %vm1391, %v1399, %v1387
        %v1404 = vsel %vm1392, %v1400, %v1388
        %vm1405 = vcmp.eq.f32.partialorder %v1088, 7.0
        %vm1406 = vcmp.eq.f32.partialorder %v1089, 7.0
        %vm1407 = vcmp.eq.f32.partialorder %v1090, 7.0
        %vm1408 = vcmp.eq.f32.partialorder %v1091, 7.0
        %v1409 = vshra.s32 %v1293, 7
        %v1410 = vshra.s32 %v1294, 7
        %v1411 = vshra.s32 %v1295, 7
        %v1412 = vshra.s32 %v1296, 7
        %v1413 = vand.u32 %v1409, 1
        %v1414 = vand.u32 %v1410, 1
        %v1415 = vand.u32 %v1411, 1
        %v1416 = vand.u32 %v1412, 1
        %v1417 = vsel %vm1405, %v1413, %v1401
        %v1418 = vsel %vm1406, %v1414, %v1402
        %v1419 = vsel %vm1407, %v1415, %v1403
        %v1420 = vsel %vm1408, %v1416, %v1404
        %vm1421 = vcmp.eq.f32.partialorder %v1088, 8.0
        %vm1422 = vcmp.eq.f32.partialorder %v1089, 8.0
        %vm1423 = vcmp.eq.f32.partialorder %v1090, 8.0
        %vm1424 = vcmp.eq.f32.partialorder %v1091, 8.0
        %v1425 = vshra.s32 %v1293, 8
        %v1426 = vshra.s32 %v1294, 8
        %v1427 = vshra.s32 %v1295, 8
        %v1428 = vshra.s32 %v1296, 8
        %v1429 = vand.u32 %v1425, 1
        %v1430 = vand.u32 %v1426, 1
        %v1431 = vand.u32 %v1427, 1
        %v1432 = vand.u32 %v1428, 1
        %v1433 = vsel %vm1421, %v1429, %v1417
        %v1434 = vsel %vm1422, %v1430, %v1418
        %v1435 = vsel %vm1423, %v1431, %v1419
        %v1436 = vsel %vm1424, %v1432, %v1420
        %vm1437 = vcmp.eq.f32.partialorder %v1088, 9.0
        %vm1438 = vcmp.eq.f32.partialorder %v1089, 9.0
        %vm1439 = vcmp.eq.f32.partialorder %v1090, 9.0
        %vm1440 = vcmp.eq.f32.partialorder %v1091, 9.0
        %v1441 = vshra.s32 %v1293, 9
        %v1442 = vshra.s32 %v1294, 9
        %v1443 = vshra.s32 %v1295, 9
        %v1444 = vshra.s32 %v1296, 9
        %v1445 = vand.u32 %v1441, 1
        %v1446 = vand.u32 %v1442, 1
        %v1447 = vand.u32 %v1443, 1
        %v1448 = vand.u32 %v1444, 1
        %v1449 = vsel %vm1437, %v1445, %v1433
        %v1450 = vsel %vm1438, %v1446, %v1434
        %v1451 = vsel %vm1439, %v1447, %v1435
        %v1452 = vsel %vm1440, %v1448, %v1436
        %vm1453 = vcmp.eq.f32.partialorder %v1088, 10.0
        %vm1454 = vcmp.eq.f32.partialorder %v1089, 10.0
        %vm1455 = vcmp.eq.f32.partialorder %v1090, 10.0
        %vm1456 = vcmp.eq.f32.partialorder %v1091, 10.0
        %v1457 = vshra.s32 %v1293, 10
        %v1458 = vshra.s32 %v1294, 10
        %v1459 = vshra.s32 %v1295, 10
        %v1460 = vshra.s32 %v1296, 10
        %v1461 = vand.u32 %v1457, 1
        %v1462 = vand.u32 %v1458, 1
        %v1463 = vand.u32 %v1459, 1
        %v1464 = vand.u32 %v1460, 1
        %v1465 = vsel %vm1453, %v1461, %v1449
        %v1466 = vsel %vm1454, %v1462, %v1450
        %v1467 = vsel %vm1455, %v1463, %v1451
        %v1468 = vsel %vm1456, %v1464, %v1452
        %vm1469 = vcmp.eq.f32.partialorder %v1088, 11.0
        %vm1470 = vcmp.eq.f32.partialorder %v1089, 11.0
        %vm1471 = vcmp.eq.f32.partialorder %v1090, 11.0
        %vm1472 = vcmp.eq.f32.partialorder %v1091, 11.0
        %v1473 = vshra.s32 %v1293, 11
        %v1474 = vshra.s32 %v1294, 11
        %v1475 = vshra.s32 %v1295, 11
        %v1476 = vshra.s32 %v1296, 11
        %v1477 = vand.u32 %v1473, 1
        %v1478 = vand.u32 %v1474, 1
        %v1479 = vand.u32 %v1475, 1
        %v1480 = vand.u32 %v1476, 1
        %v1481 = vsel %vm1469, %v1477, %v1465
        %v1482 = vsel %vm1470, %v1478, %v1466
        %v1483 = vsel %vm1471, %v1479, %v1467
        %v1484 = vsel %vm1472, %v1480, %v1468
        %vm1485 = vcmp.eq.f32.partialorder %v1088, 12.0
        %vm1486 = vcmp.eq.f32.partialorder %v1089, 12.0
        %vm1487 = vcmp.eq.f32.partialorder %v1090, 12.0
        %vm1488 = vcmp.eq.f32.partialorder %v1091, 12.0
        %v1489 = vshra.s32 %v1293, 12
        %v1490 = vshra.s32 %v1294, 12
        %v1491 = vshra.s32 %v1295, 12
        %v1492 = vshra.s32 %v1296, 12
        %v1493 = vand.u32 %v1489, 1
        %v1494 = vand.u32 %v1490, 1
        %v1495 = vand.u32 %v1491, 1
        %v1496 = vand.u32 %v1492, 1
        %v1497 = vsel %vm1485, %v1493, %v1481
        %v1498 = vsel %vm1486, %v1494, %v1482
        %v1499 = vsel %vm1487, %v1495, %v1483
        %v1500 = vsel %vm1488, %v1496, %v1484
        %vm1501 = vcmp.eq.f32.partialorder %v1088, 13.0
        %vm1502 = vcmp.eq.f32.partialorder %v1089, 13.0
        %vm1503 = vcmp.eq.f32.partialorder %v1090, 13.0
        %vm1504 = vcmp.eq.f32.partialorder %v1091, 13.0
        %v1505 = vshra.s32 %v1293, 13
        %v1506 = vshra.s32 %v1294, 13
        %v1507 = vshra.s32 %v1295, 13
        %v1508 = vshra.s32 %v1296, 13
        %v1509 = vand.u32 %v1505, 1
        %v1510 = vand.u32 %v1506, 1
        %v1511 = vand.u32 %v1507, 1
        %v1512 = vand.u32 %v1508, 1
        %v1513 = vsel %vm1501, %v1509, %v1497
        %v1514 = vsel %vm1502, %v1510, %v1498
        %v1515 = vsel %vm1503, %v1511, %v1499
        %v1516 = vsel %vm1504, %v1512, %v1500
        %vm1517 = vcmp.eq.f32.partialorder %v1088, 14.0
        %vm1518 = vcmp.eq.f32.partialorder %v1089, 14.0
        %vm1519 = vcmp.eq.f32.partialorder %v1090, 14.0
        %vm1520 = vcmp.eq.f32.partialorder %v1091, 14.0
        %v1521 = vshra.s32 %v1293, 14
        %v1522 = vshra.s32 %v1294, 14
        %v1523 = vshra.s32 %v1295, 14
        %v1524 = vshra.s32 %v1296, 14
        %v1525 = vand.u32 %v1521, 1
        %v1526 = vand.u32 %v1522, 1
        %v1527 = vand.u32 %v1523, 1
        %v1528 = vand.u32 %v1524, 1
        %v1529 = vsel %vm1517, %v1525, %v1513
        %v1530 = vsel %vm1518, %v1526, %v1514
        %v1531 = vsel %vm1519, %v1527, %v1515
        %v1532 = vsel %vm1520, %v1528, %v1516
        %vm1533 = vcmp.eq.f32.partialorder %v1088, 15.0
        %vm1534 = vcmp.eq.f32.partialorder %v1089, 15.0
        %vm1535 = vcmp.eq.f32.partialorder %v1090, 15.0
        %vm1536 = vcmp.eq.f32.partialorder %v1091, 15.0
        %v1537 = vshra.s32 %v1293, 15
        %v1538 = vshra.s32 %v1294, 15
        %v1539 = vshra.s32 %v1295, 15
        %v1540 = vshra.s32 %v1296, 15
        %v1541 = vand.u32 %v1537, 1
        %v1542 = vand.u32 %v1538, 1
        %v1543 = vand.u32 %v1539, 1
        %v1544 = vand.u32 %v1540, 1
        %v1545 = vsel %vm1533, %v1541, %v1529
        %v1546 = vsel %vm1534, %v1542, %v1530
        %v1547 = vsel %vm1535, %v1543, %v1531
        %v1548 = vsel %vm1536, %v1544, %v1532
        %vm1549 = vcmp.gt.s32.totalorder %v1545, 0
        %vm1550 = vcmp.gt.s32.totalorder %v1546, 0
        %vm1551 = vcmp.gt.s32.totalorder %v1547, 0
        %vm1552 = vcmp.gt.s32.totalorder %v1548, 0
        %vm1553 = vmand %vm1116, %vm1549
        %vm1554 = vmand %vm1117, %vm1550
        %vm1555 = vmand %vm1118, %vm1551
        %vm1556 = vmand %vm1119, %vm1552
        %v1557 = vsub.f32 %v1064, %v973
        %v1558 = vsub.f32 %v1065, %v974
        %v1559 = vsub.f32 %v1066, %v975
        %v1560 = vsub.f32 %v1067, %v976
        %v1561 = vsub.f32 %v1088, %v999
        %v1562 = vsub.f32 %v1089, %v1000
        %v1563 = vsub.f32 %v1090, %v1001
        %v1564 = vsub.f32 %v1091, %v1002
        %v1565 = vmul.f32 %v1016, %v927
        %v1566 = vmul.f32 %v1017, %v928
        %v1567 = vmul.f32 %v1018, %v929
        %v1568 = vmul.f32 %v1019, %v930
        %v1569 = vmul.f32 %v1557, %v961
        %v1570 = vmul.f32 %v1558, %v962
        %v1571 = vmul.f32 %v1559, %v963
        %v1572 = vmul.f32 %v1560, %v964
        %v1573 = vadd.f32 %v1565, %v1569
        %v1574 = vadd.f32 %v1566, %v1570
        %v1575 = vadd.f32 %v1567, %v1571
        %v1576 = vadd.f32 %v1568, %v1572
        %v1577 = vmul.f32 %v1561, %v987
        %v1578 = vmul.f32 %v1562, %v988
        %v1579 = vmul.f32 %v1563, %v989
        %v1580 = vmul.f32 %v1564, %v990
        %v1581 = vadd.f32 %v1573, %v1577
        %v1582 = vadd.f32 %v1574, %v1578
        %v1583 = vadd.f32 %v1575, %v1579
        %v1584 = vadd.f32 %v1576, %v1580
        %vm1585 = vcmp.gt.f32.partialorder %v1581, 0.0
        %vm1586 = vcmp.gt.f32.partialorder %v1582, 0.0
        %vm1587 = vcmp.gt.f32.partialorder %v1583, 0.0
        %vm1588 = vcmp.gt.f32.partialorder %v1584, 0.0
        %vm1589 = vmand %vm1553, %vm1585
        %vm1590 = vmand %vm1554, %vm1586
        %vm1591 = vmand %vm1555, %vm1587
        %vm1592 = vmand %vm1556, %vm1588
        %v1593 = vmul.f32 %v1016, %v1016
        %v1594 = vmul.f32 %v1017, %v1017
        %v1595 = vmul.f32 %v1018, %v1018
        %v1596 = vmul.f32 %v1019, %v1019
        %v1597 = vmul.f32 %v1557, %v1557
        %v1598 = vmul.f32 %v1558, %v1558
        %v1599 = vmul.f32 %v1559, %v1559
        %v1600 = vmul.f32 %v1560, %v1560
        %v1601 = vadd.f32 %v1593, %v1597
        %v1602 = vadd.f32 %v1594, %v1598
        %v1603 = vadd.f32 %v1595, %v1599
        %v1604 = vadd.f32 %v1596, %v1600
        %v1605 = vmul.f32 %v1561, %v1561
        %v1606 = vmul.f32 %v1562, %v1562
        %v1607 = vmul.f32 %v1563, %v1563
        %v1608 = vmul.f32 %v1564, %v1564
        %v1609 = vadd.f32 %v1601, %v1605
        %v1610 = vadd.f32 %v1602, %v1606
        %v1611 = vadd.f32 %v1603, %v1607
        %v1612 = vadd.f32 %v1604, %v1608
        %vm1613 = vcmp.gt.f32.partialorder %v1609, 1.7
        %vm1614 = vcmp.gt.f32.partialorder %v1610, 1.7
        %vm1615 = vcmp.gt.f32.partialorder %v1611, 1.7
        %vm1616 = vcmp.gt.f32.partialorder %v1612, 1.7
        %vm1617 = vmand %vm1589, %vm1613
        %vm1618 = vmand %vm1590, %vm1614
        %vm1619 = vmand %vm1591, %vm1615
        %vm1620 = vmand %vm1592, %vm1616
        %v1621 = vsel %vm1617, %v1609, 1e+30
        %v1622 = vsel %vm1618, %v1610, 1e+30
        %v1623 = vsel %vm1619, %v1611, 1e+30
        %v1624 = vsel %vm1620, %v1612, 1e+30
        %v1625 = vmin.f32 %v1010, %v1621
        %v1626 = vmin.f32 %v1011, %v1622
        %v1627 = vmin.f32 %v1012, %v1623
        %v1628 = vmin.f32 %v1013, %v1624
      $region29: #{morph_forward.3} parent=23 // loop_footer
        %s1009 = sadd.s32 1, %s1005
      $region30: #{morph_forward.3} parent=23 // loop_footer_branch
        %1004 = sbr.rel target = $region26
      $region31: #{morph_forward.3} parent=23 // loop_exit
        _
      %1629 = vst [vmem:[%s103] sm:$0xff] %v1010
      %1630 = vst [vmem:[%s103 + $0x8] sm:$0xff] %v1011
      %1631 = vst [vmem:[%s103 + $0x10] sm:$0xff] %v1012
      %1632 = vst [vmem:[%s103 + $0x18] sm:$0xff] %v1013
      %p1633 = scmp.lt.s32.totalorder %s19, 2
      %s1634 = scalar_select %p1633, %s19, 2
      %s1635 = smul.addr %s1634, 4
      %s1636 = smul.addr %s1635, 8
      %s1637 = scalar_lea.vmem %s2, %s1636
      // Predicated region
      $region32: #{morph_forward.3} parent=23 // pred_check
        %p1638 = pneg %p58
      $region33: #{morph_forward.3} parent=23 // pred_check_branch
        %1640 = sbr.rel (%p1638) target = $region35
      $region34: #{morph_forward.3} parent=23 // pred_region
        _
      $region35: #{morph_forward.3} parent=23 // pred_fallthru
        _
    $region24: #{morph_forward.3} parent=5 // pred_fallthru
      _
    %p1641 = scmp.le.s32.totalorder 2, %s14
    // Predicated region
    $region36: #{morph_forward.3} parent=5 // pred_check
      %p1642 = pneg %p1641
    $region37: #{morph_forward.3} parent=5 // pred_check_branch
      %1644 = sbr.rel (%p1642) target = $region39
    $region38: #{morph_forward.3} parent=5 // pred_region
      %s1645 = ssub.s32 %s14, 2
      // Predicated region
      $region40: #{morph_forward.3} parent=38 // pred_check
        %p1646 = pneg %p64
      $region41: #{morph_forward.3} parent=38 // pred_check_branch
        %1648 = sbr.rel (%p1646) target = $region43
      $region42: #{morph_forward.3} parent=38 // pred_region
        %p1649 = scmp.lt.s32.totalorder %s20, 2
        %s1650 = scalar_select %p1649, %s20, 2
        %s1651 = smul.addr %s1650, 4
        %s1652 = smul.addr %s1651, 8
        %s1653 = scalar_lea.vmem %s2, %s1652
      $region43: #{morph_forward.3} parent=38 // pred_fallthru
        _
    $region39: #{morph_forward.3} parent=5 // pred_fallthru
      _
  $region6: #{morph_forward.3} parent=0 // loop_footer
    %s18 = sadd.s32 1, %s14
  $region7: #{morph_forward.3} parent=0 // loop_footer_branch
    %13 = sbr.rel target = $region3
  $region8: #{morph_forward.3} parent=0 // loop_exit
    _

// kernel: morph_forward.2
$region0: #{morph_forward.2}
  #allocation0 [shape = 'u32[]', space=smem, size = 0x4, offset = 0x4, fixed_abs, tag = 'smem constant byte address 0x4 - core index']
  #allocation1 [shape = 'u32[144,128]{1,0:T(1,128)}', space=vmem, size = 0x12000, scoped, tag = 'internal scratch']
  %s0 = inlined_call_operand.vmem [shape: f32[16,256], index: 0, kind: input, shape index: {}]
  %s1 = inlined_call_operand.vmem [shape: f32[16,256], index: 1, kind: output, shape index: {0}]
  %s2 = inlined_call_operand.vmem [shape: f32[16,768], index: 2, kind: output, shape index: {1}]
  %s3 = inlined_call_operand.vmem [shape: f32[16,256], index: 3, kind: output, shape index: {2}]
  %4 = xla_tuple %s1, %s2, %s3
  %s5 = sld [smem:[#allocation0]]
  $region30: #{morph_forward.2} parent=0
    _
  %s7 = ssub.s32 1, %s5
  %s8 = scalar_select 0, %s7, %s5
  // Predicated region
  $region2: #{morph_forward.2} parent=0 // pred_check
    _
  $region3: #{morph_forward.2} parent=0 // pred_check_branch
    %10 = sbr.rel (0) target = $region5
  $region4: #{morph_forward.2} parent=0 // pred_region
    _
  $region5: #{morph_forward.2} parent=0 // pred_fallthru
    _
  %v11 = vld [vmem:[%s0] sm:$0xff]
  %v12 = vld [vmem:[%s0 + $0x8] sm:$0xff]
  %v13 = vld [vmem:[%s0 + $0x10] sm:$0xff]
  %v14 = vld [vmem:[%s0 + $0x18] sm:$0xff]
  %v15 = vlaneseq
  %v16 = vand.u32 %v15, 127
  %v17 = vadd.s32 %v16, 128
  %v18 = vlaneseq
  %v19 = vshrl.u32 %v18, 7
  %v20 = vadd.s32 %v19, 8
  %v21 = vand.u32 %v16, 15
  %v22 = vand.u32 %v17, 15
  %v23 = vshra.s32 %v16, 4
  %v24 = vshra.s32 %v17, 4
  %v25 = vand.u32 %v23, 15
  %v26 = vand.u32 %v24, 15
  %vm27 = vcmp.ge.s32.totalorder %v19, 1
  %vm28 = vcmp.ge.s32.totalorder %v20, 1
  %v31 = vrot.slane %v13, 7
  %v32 = vrot.slane %v14, 7
  %vm37 = vcmask 1040384
  %v38 = vrot.slane %v11, 7
  %v39 = vrot.slane %v12, 7
  %v40 = vsel %vm37, %v38, %v31
  %v41 = vsel %vm37, %v39, %v32
  %v46 = vsel %vm37, %v31, %v38
  %v47 = vsel %vm37, %v32, %v39
  %v48 = vsel %vm27, %v46, 0.0
  %v49 = vsel %vm27, %v47, 0.0
  %v50 = vsel %vm28, %v40, 0.0
  %v51 = vsel %vm28, %v41, 0.0
  %v52 = vadd.f32 %v48, %v11
  %v53 = vadd.f32 %v49, %v12
  %v54 = vadd.f32 %v50, %v13
  %v55 = vadd.f32 %v51, %v14
  %vm56 = vcmp.lt.s32.totalorder %v19, 15
  %vm57 = vcmp.lt.s32.totalorder %v20, 15
  %vm58 = vcmask 1046528
  %v59 = vrot.slane %v11, 1
  %v60 = vrot.slane %v13, 1
  %v61 = vsel %vm58, %v59, %v60
  %v62 = vrot.slane %v12, 1
  %v63 = vrot.slane %v14, 1
  %v64 = vsel %vm58, %v62, %v63
  %v71 = vsel %vm58, %v60, %v59
  %v72 = vsel %vm58, %v63, %v62
  %v73 = vsel %vm56, %v61, 0.0
  %v74 = vsel %vm56, %v64, 0.0
  %v75 = vsel %vm57, %v71, 0.0
  %v76 = vsel %vm57, %v72, 0.0
  %v77 = vadd.f32 %v52, %v73
  %v78 = vadd.f32 %v53, %v74
  %v79 = vadd.f32 %v54, %v75
  %v80 = vadd.f32 %v55, %v76
  %vm81 = vcmp.ge.s32.totalorder %v25, 1
  %vm82 = vcmp.ge.s32.totalorder %v26, 1
  %85 = vrot.lane.b32.xlu0 %v78, 16
  %v86 = vpop.permute.xlu0 %85
  %87 = vrot.lane.b32.xlu0 %v80, 16
  %v88 = vpop.permute.xlu0 %87
  %93 = vrot.lane.b32.xlu0 %v77, 16
  %v94 = vpop.permute.xlu0 %93
  %95 = vrot.lane.b32.xlu0 %v79, 16
  %v96 = vpop.permute.xlu0 %95
  %vm97 = vcmask 130048
  %v98 = vsel %vm97, %v94, %v86
  %v99 = vsel %vm97, %v96, %v88
  %v104 = vsel %vm97, %v86, %v94
  %v105 = vsel %vm97, %v88, %v96
  %v106 = vsel %vm81, %v104, 0.0
  %v107 = vsel %vm82, %v98, 0.0
  %v108 = vsel %vm81, %v105, 0.0
  %v109 = vsel %vm82, %v99, 0.0
  %v110 = vadd.f32 %v106, %v77
  %v111 = vadd.f32 %v107, %v78
  %v112 = vadd.f32 %v108, %v79
  %v113 = vadd.f32 %v109, %v80
  %vm114 = vcmp.lt.s32.totalorder %v25, 15
  %vm115 = vcmp.lt.s32.totalorder %v26, 15
  %116 = vrot.lane.b32.xlu0 %v77, 112
  %v117 = vpop.permute.xlu0 %116
  %118 = vrot.lane.b32.xlu0 %v78, 112
  %v119 = vpop.permute.xlu0 %118
  %120 = vrot.lane.b32.xlu0 %v79, 112
  %v121 = vpop.permute.xlu0 %120
  %122 = vrot.lane.b32.xlu0 %v80, 112
  %v123 = vpop.permute.xlu0 %122
  %vm124 = vcmask 916480
  %v125 = vsel %vm124, %v117, %v119
  %v126 = vsel %vm124, %v121, %v123
  %v133 = vsel %vm124, %v119, %v117
  %v134 = vsel %vm124, %v123, %v121
  %v135 = vsel %vm114, %v125, 0.0
  %v136 = vsel %vm115, %v133, 0.0
  %v137 = vsel %vm114, %v126, 0.0
  %v138 = vsel %vm115, %v134, 0.0
  %v139 = vadd.f32 %v110, %v135
  %v140 = vadd.f32 %v111, %v136
  %v141 = vadd.f32 %v112, %v137
  %v142 = vadd.f32 %v113, %v138
  %vm143 = vcmp.ge.s32.totalorder %v21, 1
  %vm144 = vcmp.ge.s32.totalorder %v22, 1
  %147 = vrot.lane.b32.xlu0 %v140, 1
  %v148 = vpop.permute.xlu0 %147
  %149 = vrot.lane.b32.xlu0 %v142, 1
  %v150 = vpop.permute.xlu0 %149
  %155 = vrot.lane.b32.xlu0 %v139, 1
  %v156 = vpop.permute.xlu0 %155
  %157 = vrot.lane.b32.xlu0 %v141, 1
  %v158 = vpop.permute.xlu0 %157
  %vm159 = vcmask 7168
  %v160 = vsel %vm159, %v156, %v148
  %v161 = vsel %vm159, %v158, %v150
  %v166 = vsel %vm159, %v148, %v156
  %v167 = vsel %vm159, %v150, %v158
  %v168 = vsel %vm143, %v166, 0.0
  %v169 = vsel %vm144, %v160, 0.0
  %v170 = vsel %vm143, %v167, 0.0
  %v171 = vsel %vm144, %v161, 0.0
  %v172 = vadd.f32 %v168, %v139
  %v173 = vadd.f32 %v169, %v140
  %v174 = vadd.f32 %v170, %v141
  %v175 = vadd.f32 %v171, %v142
  %vm176 = vcmp.lt.s32.totalorder %v21, 15
  %vm177 = vcmp.lt.s32.totalorder %v22, 15
  %178 = vrot.lane.b32.xlu0 %v139, 127
  %v179 = vpop.permute.xlu0 %178
  %180 = vrot.lane.b32.xlu0 %v140, 127
  %v181 = vpop.permute.xlu0 %180
  %182 = vrot.lane.b32.xlu0 %v141, 127
  %v183 = vpop.permute.xlu0 %182
  %184 = vrot.lane.b32.xlu0 %v142, 127
  %v185 = vpop.permute.xlu0 %184
  %vm186 = vcmask 1039360
  %v187 = vsel %vm186, %v179, %v181
  %v188 = vsel %vm186, %v183, %v185
  %v195 = vsel %vm186, %v181, %v179
  %v196 = vsel %vm186, %v185, %v183
  %v197 = vsel %vm176, %v187, 0.0
  %v198 = vsel %vm177, %v195, 0.0
  %v199 = vsel %vm176, %v188, 0.0
  %v200 = vsel %vm177, %v196, 0.0
  %v201 = vadd.f32 %v172, %v197
  %v202 = vadd.f32 %v173, %v198
  %v203 = vadd.f32 %v174, %v199
  %v204 = vadd.f32 %v175, %v200
  %v205 = vsub.f32 %v201, %v11
  %v206 = vsub.f32 %v202, %v12
  %v207 = vsub.f32 %v203, %v13
  %v208 = vsub.f32 %v204, %v14
  %v209 = vmul.f32 %v205, %v11
  %v210 = vmul.f32 %v206, %v12
  %v211 = vmul.f32 %v207, %v13
  %v212 = vmul.f32 %v208, %v14
  %vm213 = vcmp.eq.f32.partialorder %v209, 0.0
  %vm214 = vcmp.eq.f32.partialorder %v210, 0.0
  %vm215 = vcmp.eq.f32.partialorder %v211, 0.0
  %vm216 = vcmp.eq.f32.partialorder %v212, 0.0
  %v217 = vsel %vm213, 128.0, %v209
  %v218 = vsel %vm214, 128.0, %v210
  %v219 = vsel %vm215, 128.0, %v211
  %v220 = vsel %vm216, 128.0, %v212
  %vm221 = vcmp.lt.f32.partialorder %v217, 26.0
  %vm222 = vcmp.lt.f32.partialorder %v218, 26.0
  %vm223 = vcmp.lt.f32.partialorder %v219, 26.0
  %vm224 = vcmp.lt.f32.partialorder %v220, 26.0
  %v225 = vsel %vm221, 1.0, %v217
  %v226 = vsel %vm222, 1.0, %v218
  %v227 = vsel %vm223, 1.0, %v219
  %v228 = vsel %vm224, 1.0, %v220
  %vm229 = vcmp.eq.f32.partialorder %v225, 128.0
  %vm230 = vcmp.eq.f32.partialorder %v226, 128.0
  %vm231 = vcmp.eq.f32.partialorder %v227, 128.0
  %vm232 = vcmp.eq.f32.partialorder %v228, 128.0
  %v233 = vsel %vm229, 0.0, %v225
  %v234 = vsel %vm230, 0.0, %v226
  %v235 = vsel %vm231, 0.0, %v227
  %v236 = vsel %vm232, 0.0, %v228
  %vm237 = vcmp.eq.f32.partialorder %v233, 1.0
  %vm238 = vcmp.eq.f32.partialorder %v234, 1.0
  %vm239 = vcmp.eq.f32.partialorder %v235, 1.0
  %vm240 = vcmp.eq.f32.partialorder %v236, 1.0
  %v241 = vsel %vm237, 1, 0
  %v242 = vsel %vm238, 1, 0
  %v243 = vsel %vm239, 1, 0
  %v244 = vsel %vm240, 1, 0
  %v245 = vcvt.s32.f32 %v241
  %v246 = vcvt.s32.f32 %v242
  %v247 = vcvt.s32.f32 %v243
  %v248 = vcvt.s32.f32 %v244
  %vm249 = vcmp.eq.f32.partialorder %v233, 26.0
  %vm250 = vcmp.eq.f32.partialorder %v234, 26.0
  %vm251 = vcmp.eq.f32.partialorder %v235, 26.0
  %vm252 = vcmp.eq.f32.partialorder %v236, 26.0
  %v253 = vsel %vm249, 1.0, %v233
  %v254 = vsel %vm250, 1.0, %v234
  %v255 = vsel %vm251, 1.0, %v235
  %v256 = vsel %vm252, 1.0, %v236
  %257 = vst [vmem:[%s1] sm:$0xff] %v245
  %258 = vst [vmem:[%s1 + $0x8] sm:$0xff] %v246
  %259 = vst [vmem:[%s1 + $0x10] sm:$0xff] %v247
  %260 = vst [vmem:[%s1 + $0x18] sm:$0xff] %v248
  %v265 = vrot.slane %v253, 1
  %v266 = vrot.slane %v255, 1
  %v267 = vsel %vm58, %v265, %v266
  %v268 = vrot.slane %v254, 1
  %v269 = vrot.slane %v256, 1
  %v270 = vsel %vm58, %v268, %v269
  %v277 = vsel %vm58, %v266, %v265
  %v278 = vsel %vm58, %v269, %v268
  %v279 = vsel %vm56, %v267, 0.0
  %v280 = vsel %vm56, %v270, 0.0
  %v281 = vsel %vm57, %v277, 0.0
  %v282 = vsel %vm57, %v278, 0.0
  %v283 = vrot.slane %v255, 7
  %v284 = vrot.slane %v256, 7
  %v287 = vrot.slane %v253, 7
  %v288 = vrot.slane %v254, 7
  %v289 = vsel %vm37, %v287, %v283
  %v290 = vsel %vm37, %v288, %v284
  %v295 = vsel %vm37, %v283, %v287
  %v296 = vsel %vm37, %v284, %v288
  %v297 = vsel %vm27, %v295, 0.0
  %v298 = vsel %vm27, %v296, 0.0
  %v299 = vsel %vm28, %v289, 0.0
  %v300 = vsel %vm28, %v290, 0.0
  %v301 = vsub.f32 %v279, %v297
  %v302 = vsub.f32 %v280, %v298
  %v303 = vsub.f32 %v281, %v299
  %v304 = vsub.f32 %v282, %v300
  %307 = vrot.lane.b32.xlu0 %v302, 16
  %v308 = vpop.permute.xlu0 %307
  %309 = vrot.lane.b32.xlu0 %v304, 16
  %v310 = vpop.permute.xlu0 %309
  %315 = vrot.lane.b32.xlu0 %v301, 16
  %v316 = vpop.permute.xlu0 %315
  %317 = vrot.lane.b32.xlu0 %v303, 16
  %v318 = vpop.permute.xlu0 %317
  %v319 = vsel %vm97, %v316, %v308
  %v320 = vsel %vm97, %v318, %v310
  %v325 = vsel %vm97, %v308, %v316
  %v326 = vsel %vm97, %v310, %v318
  %v327 = vsel %vm81, %v325, 0.0
  %v328 = vsel %vm82, %v319, 0.0
  %v329 = vsel %vm81, %v326, 0.0
  %v330 = vsel %vm82, %v320, 0.0
  %v331 = vadd.f32 %v327, %v301
  %v332 = vadd.f32 %v328, %v302
  %v333 = vadd.f32 %v329, %v303
  %v334 = vadd.f32 %v330, %v304
  %335 = vrot.lane.b32.xlu0 %v301, 112
  %v336 = vpop.permute.xlu0 %335
  %337 = vrot.lane.b32.xlu0 %v302, 112
  %v338 = vpop.permute.xlu0 %337
  %339 = vrot.lane.b32.xlu0 %v303, 112
  %v340 = vpop.permute.xlu0 %339
  %341 = vrot.lane.b32.xlu0 %v304, 112
  %v342 = vpop.permute.xlu0 %341
  %v343 = vsel %vm124, %v336, %v338
  %v344 = vsel %vm124, %v340, %v342
  %v351 = vsel %vm124, %v338, %v336
  %v352 = vsel %vm124, %v342, %v340
  %v353 = vsel %vm114, %v343, 0.0
  %v354 = vsel %vm115, %v351, 0.0
  %v355 = vsel %vm114, %v344, 0.0
  %v356 = vsel %vm115, %v352, 0.0
  %v357 = vadd.f32 %v331, %v353
  %v358 = vadd.f32 %v332, %v354
  %v359 = vadd.f32 %v333, %v355
  %v360 = vadd.f32 %v334, %v356
  %363 = vrot.lane.b32.xlu0 %v358, 1
  %v364 = vpop.permute.xlu0 %363
  %365 = vrot.lane.b32.xlu0 %v360, 1
  %v366 = vpop.permute.xlu0 %365
  %371 = vrot.lane.b32.xlu0 %v357, 1
  %v372 = vpop.permute.xlu0 %371
  %373 = vrot.lane.b32.xlu0 %v359, 1
  %v374 = vpop.permute.xlu0 %373
  %v375 = vsel %vm159, %v372, %v364
  %v376 = vsel %vm159, %v374, %v366
  %v381 = vsel %vm159, %v364, %v372
  %v382 = vsel %vm159, %v366, %v374
  %v383 = vsel %vm143, %v381, 0.0
  %v384 = vsel %vm144, %v375, 0.0
  %v385 = vsel %vm143, %v382, 0.0
  %v386 = vsel %vm144, %v376, 0.0
  %v387 = vadd.f32 %v383, %v357
  %v388 = vadd.f32 %v384, %v358
  %v389 = vadd.f32 %v385, %v359
  %v390 = vadd.f32 %v386, %v360
  %391 = vrot.lane.b32.xlu0 %v357, 127
  %v392 = vpop.permute.xlu0 %391
  %393 = vrot.lane.b32.xlu0 %v358, 127
  %v394 = vpop.permute.xlu0 %393
  %395 = vrot.lane.b32.xlu0 %v359, 127
  %v396 = vpop.permute.xlu0 %395
  %397 = vrot.lane.b32.xlu0 %v360, 127
  %v398 = vpop.permute.xlu0 %397
  %v399 = vsel %vm186, %v392, %v394
  %v400 = vsel %vm186, %v396, %v398
  %v407 = vsel %vm186, %v394, %v392
  %v408 = vsel %vm186, %v398, %v396
  %v409 = vsel %vm176, %v399, 0.0
  %v410 = vsel %vm177, %v407, 0.0
  %v411 = vsel %vm176, %v400, 0.0
  %v412 = vsel %vm177, %v408, 0.0
  %v413 = vadd.f32 %v387, %v409
  %v414 = vadd.f32 %v388, %v410
  %v415 = vadd.f32 %v389, %v411
  %v416 = vadd.f32 %v390, %v412
  %v417 = vmul.f32 %v413, %v245
  %v418 = vmul.f32 %v414, %v246
  %v419 = vmul.f32 %v415, %v247
  %v420 = vmul.f32 %v416, %v248
  %421 = vrot.lane.b32.xlu0 %v253, 112
  %v422 = vpop.permute.xlu0 %421
  %423 = vrot.lane.b32.xlu0 %v254, 112
  %v424 = vpop.permute.xlu0 %423
  %425 = vrot.lane.b32.xlu0 %v255, 112
  %v426 = vpop.permute.xlu0 %425
  %427 = vrot.lane.b32.xlu0 %v256, 112
  %v428 = vpop.permute.xlu0 %427
  %v429 = vsel %vm124, %v422, %v424
  %v430 = vsel %vm124, %v426, %v428
  %v437 = vsel %vm124, %v424, %v422
  %v438 = vsel %vm124, %v428, %v426
  %v439 = vsel %vm114, %v429, 0.0
  %v440 = vsel %vm115, %v437, 0.0
  %v441 = vsel %vm114, %v430, 0.0
  %v442 = vsel %vm115, %v438, 0.0
  %443 = vrot.lane.b32.xlu0 %v254, 16
  %v444 = vpop.permute.xlu0 %443
  %445 = vrot.lane.b32.xlu0 %v256, 16
  %v446 = vpop.permute.xlu0 %445
  %449 = vrot.lane.b32.xlu0 %v253, 16
  %v450 = vpop.permute.xlu0 %449
  %451 = vrot.lane.b32.xlu0 %v255, 16
  %v452 = vpop.permute.xlu0 %451
  %v453 = vsel %vm97, %v450, %v444
  %v454 = vsel %vm97, %v452, %v446
  %v459 = vsel %vm97, %v444, %v450
  %v460 = vsel %vm97, %v446, %v452
  %v461 = vsel %vm81, %v459, 0.0
  %v462 = vsel %vm82, %v453, 0.0
  %v463 = vsel %vm81, %v460, 0.0
  %v464 = vsel %vm82, %v454, 0.0
  %v465 = vsub.f32 %v439, %v461
  %v466 = vsub.f32 %v440, %v462
  %v467 = vsub.f32 %v441, %v463
  %v468 = vsub.f32 %v442, %v464
  %v471 = vrot.slane %v467, 7
  %v472 = vrot.slane %v468, 7
  %v477 = vrot.slane %v465, 7
  %v478 = vrot.slane %v466, 7
  %v479 = vsel %vm37, %v477, %v471
  %v480 = vsel %vm37, %v478, %v472
  %v485 = vsel %vm37, %v471, %v477
  %v486 = vsel %vm37, %v472, %v478
  %v487 = vsel %vm27, %v485, 0.0
  %v488 = vsel %vm27, %v486, 0.0
  %v489 = vsel %vm28, %v479, 0.0
  %v490 = vsel %vm28, %v480, 0.0
  %v491 = vadd.f32 %v487, %v465
  %v492 = vadd.f32 %v488, %v466
  %v493 = vadd.f32 %v489, %v467
  %v494 = vadd.f32 %v490, %v468
  %v495 = vrot.slane %v465, 1
  %v496 = vrot.slane %v467, 1
  %v497 = vsel %vm58, %v495, %v496
  %v498 = vrot.slane %v466, 1
  %v499 = vrot.slane %v468, 1
  %v500 = vsel %vm58, %v498, %v499
  %v507 = vsel %vm58, %v496, %v495
  %v508 = vsel %vm58, %v499, %v498
  %v509 = vsel %vm56, %v497, 0.0
  %v510 = vsel %vm56, %v500, 0.0
  %v511 = vsel %vm57, %v507, 0.0
  %v512 = vsel %vm57, %v508, 0.0
  %v513 = vadd.f32 %v491, %v509
  %v514 = vadd.f32 %v492, %v510
  %v515 = vadd.f32 %v493, %v511
  %v516 = vadd.f32 %v494, %v512
  %519 = vrot.lane.b32.xlu0 %v514, 1
  %v520 = vpop.permute.xlu0 %519
  %521 = vrot.lane.b32.xlu0 %v516, 1
  %v522 = vpop.permute.xlu0 %521
  %527 = vrot.lane.b32.xlu0 %v513, 1
  %v528 = vpop.permute.xlu0 %527
  %529 = vrot.lane.b32.xlu0 %v515, 1
  %v530 = vpop.permute.xlu0 %529
  %v531 = vsel %vm159, %v528, %v520
  %v532 = vsel %vm159, %v530, %v522
  %v537 = vsel %vm159, %v520, %v528
  %v538 = vsel %vm159, %v522, %v530
  %v539 = vsel %vm143, %v537, 0.0
  %v540 = vsel %vm144, %v531, 0.0
  %v541 = vsel %vm143, %v538, 0.0
  %v542 = vsel %vm144, %v532, 0.0
  %v543 = vadd.f32 %v539, %v513
  %v544 = vadd.f32 %v540, %v514
  %v545 = vadd.f32 %v541, %v515
  %v546 = vadd.f32 %v542, %v516
  %547 = vrot.lane.b32.xlu0 %v513, 127
  %v548 = vpop.permute.xlu0 %547
  %549 = vrot.lane.b32.xlu0 %v514, 127
  %v550 = vpop.permute.xlu0 %549
  %551 = vrot.lane.b32.xlu0 %v515, 127
  %v552 = vpop.permute.xlu0 %551
  %553 = vrot.lane.b32.xlu0 %v516, 127
  %v554 = vpop.permute.xlu0 %553
  %v555 = vsel %vm186, %v548, %v550
  %v556 = vsel %vm186, %v552, %v554
  %v563 = vsel %vm186, %v550, %v548
  %v564 = vsel %vm186, %v554, %v552
  %v565 = vsel %vm176, %v555, 0.0
  %v566 = vsel %vm177, %v563, 0.0
  %v567 = vsel %vm176, %v556, 0.0
  %v568 = vsel %vm177, %v564, 0.0
  %v569 = vadd.f32 %v543, %v565
  %v570 = vadd.f32 %v544, %v566
  %v571 = vadd.f32 %v545, %v567
  %v572 = vadd.f32 %v546, %v568
  %v573 = vmul.f32 %v569, %v245
  %v574 = vmul.f32 %v570, %v246
  %v575 = vmul.f32 %v571, %v247
  %v576 = vmul.f32 %v572, %v248
  %577 = vrot.lane.b32.xlu0 %v253, 127
  %v578 = vpop.permute.xlu0 %577
  %579 = vrot.lane.b32.xlu0 %v254, 127
  %v580 = vpop.permute.xlu0 %579
  %581 = vrot.lane.b32.xlu0 %v255, 127
  %v582 = vpop.permute.xlu0 %581
  %583 = vrot.lane.b32.xlu0 %v256, 127
  %v584 = vpop.permute.xlu0 %583
  %v585 = vsel %vm186, %v578, %v580
  %v586 = vsel %vm186, %v582, %v584
  %v593 = vsel %vm186, %v580, %v578
  %v594 = vsel %vm186, %v584, %v582
  %v595 = vsel %vm176, %v585, 0.0
  %v596 = vsel %vm177, %v593, 0.0
  %v597 = vsel %vm176, %v586, 0.0
  %v598 = vsel %vm177, %v594, 0.0
  %599 = vrot.lane.b32.xlu0 %v254, 1
  %v600 = vpop.permute.xlu0 %599
  %601 = vrot.lane.b32.xlu0 %v256, 1
  %v602 = vpop.permute.xlu0 %601
  %605 = vrot.lane.b32.xlu0 %v253, 1
  %v606 = vpop.permute.xlu0 %605
  %607 = vrot.lane.b32.xlu0 %v255, 1
  %v608 = vpop.permute.xlu0 %607
  %v609 = vsel %vm159, %v606, %v600
  %v610 = vsel %vm159, %v608, %v602
  %v615 = vsel %vm159, %v600, %v606
  %v616 = vsel %vm159, %v602, %v608
  %v617 = vsel %vm143, %v615, 0.0
  %v618 = vsel %vm144, %v609, 0.0
  %v619 = vsel %vm143, %v616, 0.0
  %v620 = vsel %vm144, %v610, 0.0
  %v621 = vsub.f32 %v595, %v617
  %v622 = vsub.f32 %v596, %v618
  %v623 = vsub.f32 %v597, %v619
  %v624 = vsub.f32 %v598, %v620
  %v627 = vrot.slane %v623, 7
  %v628 = vrot.slane %v624, 7
  %v633 = vrot.slane %v621, 7
  %v634 = vrot.slane %v622, 7
  %v635 = vsel %vm37, %v633, %v627
  %v636 = vsel %vm37, %v634, %v628
  %v641 = vsel %vm37, %v627, %v633
  %v642 = vsel %vm37, %v628, %v634
  %v643 = vsel %vm27, %v641, 0.0
  %v644 = vsel %vm27, %v642, 0.0
  %v645 = vsel %vm28, %v635, 0.0
  %v646 = vsel %vm28, %v636, 0.0
  %v647 = vadd.f32 %v643, %v621
  %v648 = vadd.f32 %v644, %v622
  %v649 = vadd.f32 %v645, %v623
  %v650 = vadd.f32 %v646, %v624
  %v651 = vrot.slane %v621, 1
  %v652 = vrot.slane %v623, 1
  %v653 = vsel %vm58, %v651, %v652
  %v654 = vrot.slane %v622, 1
  %v655 = vrot.slane %v624, 1
  %v656 = vsel %vm58, %v654, %v655
  %v663 = vsel %vm58, %v652, %v651
  %v664 = vsel %vm58, %v655, %v654
  %v665 = vsel %vm56, %v653, 0.0
  %v666 = vsel %vm56, %v656, 0.0
  %v667 = vsel %vm57, %v663, 0.0
  %v668 = vsel %vm57, %v664, 0.0
  %v669 = vadd.f32 %v647, %v665
  %v670 = vadd.f32 %v648, %v666
  %v671 = vadd.f32 %v649, %v667
  %v672 = vadd.f32 %v650, %v668
  %675 = vrot.lane.b32.xlu0 %v670, 16
  %v676 = vpop.permute.xlu0 %675
  %677 = vrot.lane.b32.xlu0 %v672, 16
  %v678 = vpop.permute.xlu0 %677
  %683 = vrot.lane.b32.xlu0 %v669, 16
  %v684 = vpop.permute.xlu0 %683
  %685 = vrot.lane.b32.xlu0 %v671, 16
  %v686 = vpop.permute.xlu0 %685
  %v687 = vsel %vm97, %v684, %v676
  %v688 = vsel %vm97, %v686, %v678
  %v693 = vsel %vm97, %v676, %v684
  %v694 = vsel %vm97, %v678, %v686
  %v695 = vsel %vm81, %v693, 0.0
  %v696 = vsel %vm82, %v687, 0.0
  %v697 = vsel %vm81, %v694, 0.0
  %v698 = vsel %vm82, %v688, 0.0
  %v699 = vadd.f32 %v695, %v669
  %v700 = vadd.f32 %v696, %v670
  %v701 = vadd.f32 %v697, %v671
  %v702 = vadd.f32 %v698, %v672
  %703 = vrot.lane.b32.xlu0 %v669, 112
  %v704 = vpop.permute.xlu0 %703
  %705 = vrot.lane.b32.xlu0 %v670, 112
  %v706 = vpop.permute.xlu0 %705
  %707 = vrot.lane.b32.xlu0 %v671, 112
  %v708 = vpop.permute.xlu0 %707
  %709 = vrot.lane.b32.xlu0 %v672, 112
  %v710 = vpop.permute.xlu0 %709
  %v711 = vsel %vm124, %v704, %v706
  %v712 = vsel %vm124, %v708, %v710
  %v719 = vsel %vm124, %v706, %v704
  %v720 = vsel %vm124, %v710, %v708
  %v721 = vsel %vm114, %v711, 0.0
  %v722 = vsel %vm115, %v719, 0.0
  %v723 = vsel %vm114, %v712, 0.0
  %v724 = vsel %vm115, %v720, 0.0
  %v725 = vadd.f32 %v699, %v721
  %v726 = vadd.f32 %v700, %v722
  %v727 = vadd.f32 %v701, %v723
  %v728 = vadd.f32 %v702, %v724
  %v729 = vmul.f32 %v725, %v245
  %v730 = vmul.f32 %v726, %v246
  %v731 = vmul.f32 %v727, %v247
  %v732 = vmul.f32 %v728, %v248
  %vm733 = vcmp.ne.f32.partialorder %v417, 0.0
  %vm734 = vcmp.ne.f32.partialorder %v418, 0.0
  %vm735 = vcmp.ne.f32.partialorder %v419, 0.0
  %vm736 = vcmp.ne.f32.partialorder %v420, 0.0
  %v737 = vsel %vm733, 1, 0
  %v738 = vsel %vm734, 1, 0
  %v739 = vsel %vm735, 1, 0
  %v740 = vsel %vm736, 1, 0
  %v741 = vcvt.s32.f32 %v737
  %v742 = vcvt.s32.f32 %v738
  %v743 = vcvt.s32.f32 %v739
  %v744 = vcvt.s32.f32 %v740
  %vm745 = vcmp.ne.f32.partialorder %v573, 0.0
  %vm746 = vcmp.ne.f32.partialorder %v574, 0.0
  %vm747 = vcmp.ne.f32.partialorder %v575, 0.0
  %vm748 = vcmp.ne.f32.partialorder %v576, 0.0
  %v749 = vsel %vm745, 1, 0
  %v750 = vsel %vm746, 1, 0
  %v751 = vsel %vm747, 1, 0
  %v752 = vsel %vm748, 1, 0
  %v753 = vcvt.s32.f32 %v749
  %v754 = vcvt.s32.f32 %v750
  %v755 = vcvt.s32.f32 %v751
  %v756 = vcvt.s32.f32 %v752
  %vm757 = vcmp.ne.f32.partialorder %v729, 0.0
  %vm758 = vcmp.ne.f32.partialorder %v730, 0.0
  %vm759 = vcmp.ne.f32.partialorder %v731, 0.0
  %vm760 = vcmp.ne.f32.partialorder %v732, 0.0
  %v761 = vsel %vm757, 1, 0
  %v762 = vsel %vm758, 1, 0
  %v763 = vsel %vm759, 1, 0
  %v764 = vsel %vm760, 1, 0
  %v765 = vcvt.s32.f32 %v761
  %v766 = vcvt.s32.f32 %v762
  %v767 = vcvt.s32.f32 %v763
  %v768 = vcvt.s32.f32 %v764
  %v769 = vadd.s32 %v16, 256
  %v770 = vadd.s32 %v16, 384
  %v771 = vadd.s32 %v16, 512
  %v772 = vadd.s32 %v16, 640
  %v773 = vadd.s32 %v16, 768
  %v774 = vadd.s32 %v16, 896
  %v775 = vadd.s32 %v16, 1024
  %v776 = vadd.s32 %v16, 1152
  %v777 = vadd.s32 %v16, 1280
  %v778 = vadd.s32 %v16, 1408
  %v779 = vand.u32 %v769, 15
  %v780 = vand.u32 %v770, 15
  %v781 = vand.u32 %v771, 15
  %v782 = vand.u32 %v772, 15
  %v783 = vand.u32 %v773, 15
  %v784 = vand.u32 %v774, 15
  %v785 = vand.u32 %v775, 15
  %v786 = vand.u32 %v776, 15
  %v787 = vand.u32 %v777, 15
  %v788 = vand.u32 %v778, 15
  %v789 = vshra.s32 %v769, 4
  %v790 = vshra.s32 %v770, 4
  %v791 = vshra.s32 %v771, 4
  %v792 = vshra.s32 %v772, 4
  %v793 = vshra.s32 %v773, 4
  %v794 = vshra.s32 %v774, 4
  %v795 = vshra.s32 %v775, 4
  %v796 = vshra.s32 %v776, 4
  %v797 = vshra.s32 %v777, 4
  %v798 = vshra.s32 %v778, 4
  %v799 = vand.u32 %v789, 15
  %v800 = vand.u32 %v790, 15
  %v801 = vand.u32 %v791, 15
  %v802 = vand.u32 %v792, 15
  %v803 = vand.u32 %v793, 15
  %v804 = vand.u32 %v794, 15
  %v805 = vand.u32 %v795, 15
  %v806 = vand.u32 %v796, 15
  %v807 = vand.u32 %v797, 15
  %v808 = vand.u32 %v798, 15
  %vm809 = vcmp.ge.s32.totalorder %v19, 2
  %vm810 = vcmp.ge.s32.totalorder %v20, 2
  %v823 = vrot.slane %v419, 6
  %v824 = vrot.slane %v420, 6
  %v825 = vrot.slane %v575, 6
  %v826 = vrot.slane %v576, 6
  %v827 = vrot.slane %v731, 6
  %v828 = vrot.slane %v732, 6
  %v829 = vrot.slane %v743, 6
  %v830 = vrot.slane %v744, 6
  %v831 = vrot.slane %v755, 6
  %v832 = vrot.slane %v756, 6
  %v833 = vrot.slane %v767, 6
  %v834 = vrot.slane %v768, 6
  %vm859 = vcmask 1041408
  %v860 = vrot.slane %v417, 6
  %v861 = vrot.slane %v418, 6
  %v862 = vrot.slane %v573, 6
  %v863 = vrot.slane %v574, 6
  %v864 = vrot.slane %v729, 6
  %v865 = vrot.slane %v730, 6
  %v866 = vrot.slane %v741, 6
  %v867 = vrot.slane %v742, 6
  %v868 = vrot.slane %v753, 6
  %v869 = vrot.slane %v754, 6
  %v870 = vrot.slane %v765, 6
  %v871 = vrot.slane %v766, 6
  %v872 = vsel %vm859, %v860, %v823
  %v873 = vsel %vm859, %v861, %v824
  %v874 = vsel %vm859, %v862, %v825
  %v875 = vsel %vm859, %v863, %v826
  %v876 = vsel %vm859, %v864, %v827
  %v877 = vsel %vm859, %v865, %v828
  %v878 = vsel %vm859, %v866, %v829
  %v879 = vsel %vm859, %v867, %v830
  %v880 = vsel %vm859, %v868, %v831
  %v881 = vsel %vm859, %v869, %v832
  %v882 = vsel %vm859, %v870, %v833
  %v883 = vsel %vm859, %v871, %v834
  %v908 = vsel %vm859, %v823, %v860
  %v909 = vsel %vm859, %v824, %v861
  %v910 = vsel %vm859, %v825, %v862
  %v911 = vsel %vm859, %v826, %v863
  %v912 = vsel %vm859, %v827, %v864
  %v913 = vsel %vm859, %v828, %v865
  %v914 = vsel %vm859, %v829, %v866
  %v915 = vsel %vm859, %v830, %v867
  %v916 = vsel %vm859, %v831, %v868
  %v917 = vsel %vm859, %v832, %v869
  %v918 = vsel %vm859, %v833, %v870
  %v919 = vsel %vm859, %v834, %v871
  %v920 = vsel %vm809, %v908, 0.0
  %v921 = vsel %vm809, %v909, 0.0
  %v922 = vsel %vm809, %v910, 0.0
  %v923 = vsel %vm809, %v911, 0.0
  %v924 = vsel %vm809, %v912, 0.0
  %v925 = vsel %vm809, %v913, 0.0
  %v926 = vsel %vm809, %v914, 0.0
  %v927 = vsel %vm809, %v915, 0.0
  %v928 = vsel %vm809, %v916, 0.0
  %v929 = vsel %vm809, %v917, 0.0
  %v930 = vsel %vm809, %v918, 0.0
  %v931 = vsel %vm809, %v919, 0.0
  %v932 = vsel %vm810, %v872, 0.0
  %v933 = vsel %vm810, %v873, 0.0
  %v934 = vsel %vm810, %v874, 0.0
  %v935 = vsel %vm810, %v875, 0.0
  %v936 = vsel %vm810, %v876, 0.0
  %v937 = vsel %vm810, %v877, 0.0
  %v938 = vsel %vm810, %v878, 0.0
  %v939 = vsel %vm810, %v879, 0.0
  %v940 = vsel %vm810, %v880, 0.0
  %v941 = vsel %vm810, %v881, 0.0
  %v942 = vsel %vm810, %v882, 0.0
  %v943 = vsel %vm810, %v883, 0.0
  %v944 = vrot.slane %v419, 7
  %v945 = vrot.slane %v420, 7
  %v946 = vrot.slane %v575, 7
  %v947 = vrot.slane %v576, 7
  %v948 = vrot.slane %v731, 7
  %v949 = vrot.slane %v732, 7
  %v950 = vrot.slane %v743, 7
  %v951 = vrot.slane %v744, 7
  %v952 = vrot.slane %v755, 7
  %v953 = vrot.slane %v756, 7
  %v954 = vrot.slane %v767, 7
  %v955 = vrot.slane %v768, 7
  %v968 = vrot.slane %v417, 7
  %v969 = vrot.slane %v418, 7
  %v970 = vrot.slane %v573, 7
  %v971 = vrot.slane %v574, 7
  %v972 = vrot.slane %v729, 7
  %v973 = vrot.slane %v730, 7
  %v974 = vrot.slane %v741, 7
  %v975 = vrot.slane %v742, 7
  %v976 = vrot.slane %v753, 7
  %v977 = vrot.slane %v754, 7
  %v978 = vrot.slane %v765, 7
  %v979 = vrot.slane %v766, 7
  %v980 = vsel %vm37, %v968, %v944
  %v981 = vsel %vm37, %v969, %v945
  %v982 = vsel %vm37, %v970, %v946
  %v983 = vsel %vm37, %v971, %v947
  %v984 = vsel %vm37, %v972, %v948
  %v985 = vsel %vm37, %v973, %v949
  %v986 = vsel %vm37, %v974, %v950
  %v987 = vsel %vm37, %v975, %v951
  %v988 = vsel %vm37, %v976, %v952
  %v989 = vsel %vm37, %v977, %v953
  %v990 = vsel %vm37, %v978, %v954
  %v991 = vsel %vm37, %v979, %v955
  %v1016 = vsel %vm37, %v944, %v968
  %v1017 = vsel %vm37, %v945, %v969
  %v1018 = vsel %vm37, %v946, %v970
  %v1019 = vsel %vm37, %v947, %v971
  %v1020 = vsel %vm37, %v948, %v972
  %v1021 = vsel %vm37, %v949, %v973
  %v1022 = vsel %vm37, %v950, %v974
  %v1023 = vsel %vm37, %v951, %v975
  %v1024 = vsel %vm37, %v952, %v976
  %v1025 = vsel %vm37, %v953, %v977
  %v1026 = vsel %vm37, %v954, %v978
  %v1027 = vsel %vm37, %v955, %v979
  %v1028 = vsel %vm27, %v1016, 0.0
  %v1029 = vsel %vm27, %v1017, 0.0
  %v1030 = vsel %vm27, %v1018, 0.0
  %v1031 = vsel %vm27, %v1019, 0.0
  %v1032 = vsel %vm27, %v1020, 0.0
  %v1033 = vsel %vm27, %v1021, 0.0
  %v1034 = vsel %vm27, %v1022, 0.0
  %v1035 = vsel %vm27, %v1023, 0.0
  %v1036 = vsel %vm27, %v1024, 0.0
  %v1037 = vsel %vm27, %v1025, 0.0
  %v1038 = vsel %vm27, %v1026, 0.0
  %v1039 = vsel %vm27, %v1027, 0.0
  %v1040 = vsel %vm28, %v980, 0.0
  %v1041 = vsel %vm28, %v981, 0.0
  %v1042 = vsel %vm28, %v982, 0.0
  %v1043 = vsel %vm28, %v983, 0.0
  %v1044 = vsel %vm28, %v984, 0.0
  %v1045 = vsel %vm28, %v985, 0.0
  %v1046 = vsel %vm28, %v986, 0.0
  %v1047 = vsel %vm28, %v987, 0.0
  %v1048 = vsel %vm28, %v988, 0.0
  %v1049 = vsel %vm28, %v989, 0.0
  %v1050 = vsel %vm28, %v990, 0.0
  %v1051 = vsel %vm28, %v991, 0.0
  %v1052 = vadd.f32 %v920, %v1028
  %v1053 = vadd.f32 %v921, %v1029
  %v1054 = vadd.f32 %v922, %v1030
  %v1055 = vadd.f32 %v923, %v1031
  %v1056 = vadd.f32 %v924, %v1032
  %v1057 = vadd.f32 %v925, %v1033
  %v1058 = vadd.f32 %v926, %v1034
  %v1059 = vadd.f32 %v927, %v1035
  %v1060 = vadd.f32 %v928, %v1036
  %v1061 = vadd.f32 %v929, %v1037
  %v1062 = vadd.f32 %v930, %v1038
  %v1063 = vadd.f32 %v931, %v1039
  %v1064 = vadd.f32 %v932, %v1040
  %v1065 = vadd.f32 %v933, %v1041
  %v1066 = vadd.f32 %v934, %v1042
  %v1067 = vadd.f32 %v935, %v1043
  %v1068 = vadd.f32 %v936, %v1044
  %v1069 = vadd.f32 %v937, %v1045
  %v1070 = vadd.f32 %v938, %v1046
  %v1071 = vadd.f32 %v939, %v1047
  %v1072 = vadd.f32 %v940, %v1048
  %v1073 = vadd.f32 %v941, %v1049
  %v1074 = vadd.f32 %v942, %v1050
  %v1075 = vadd.f32 %v943, %v1051
  %v1076 = vadd.f32 %v1052, %v417
  %v1077 = vadd.f32 %v1053, %v418
  %v1078 = vadd.f32 %v1054, %v573
  %v1079 = vadd.f32 %v1055, %v574
  %v1080 = vadd.f32 %v1056, %v729
  %v1081 = vadd.f32 %v1057, %v730
  %v1082 = vadd.f32 %v1058, %v741
  %v1083 = vadd.f32 %v1059, %v742
  %v1084 = vadd.f32 %v1060, %v753
  %v1085 = vadd.f32 %v1061, %v754
  %v1086 = vadd.f32 %v1062, %v765
  %v1087 = vadd.f32 %v1063, %v766
  %v1088 = vadd.f32 %v1064, %v419
  %v1089 = vadd.f32 %v1065, %v420
  %v1090 = vadd.f32 %v1066, %v575
  %v1091 = vadd.f32 %v1067, %v576
  %v1092 = vadd.f32 %v1068, %v731
  %v1093 = vadd.f32 %v1069, %v732
  %v1094 = vadd.f32 %v1070, %v743
  %v1095 = vadd.f32 %v1071, %v744
  %v1096 = vadd.f32 %v1072, %v755
  %v1097 = vadd.f32 %v1073, %v756
  %v1098 = vadd.f32 %v1074, %v767
  %v1099 = vadd.f32 %v1075, %v768
  %v1100 = vrot.slane %v417, 1
  %v1101 = vrot.slane %v419, 1
  %v1102 = vsel %vm58, %v1100, %v1101
  %v1103 = vrot.slane %v418, 1
  %v1104 = vrot.slane %v420, 1
  %v1105 = vsel %vm58, %v1103, %v1104
  %v1106 = vrot.slane %v573, 1
  %v1107 = vrot.slane %v575, 1
  %v1108 = vsel %vm58, %v1106, %v1107
  %v1109 = vrot.slane %v574, 1
  %v1110 = vrot.slane %v576, 1
  %v1111 = vsel %vm58, %v1109, %v1110
  %v1112 = vrot.slane %v729, 1
  %v1113 = vrot.slane %v731, 1
  %v1114 = vsel %vm58, %v1112, %v1113
  %v1115 = vrot.slane %v730, 1
  %v1116 = vrot.slane %v732, 1
  %v1117 = vsel %vm58, %v1115, %v1116
  %v1118 = vrot.slane %v741, 1
  %v1119 = vrot.slane %v743, 1
  %v1120 = vsel %vm58, %v1118, %v1119
  %v1121 = vrot.slane %v742, 1
  %v1122 = vrot.slane %v744, 1
  %v1123 = vsel %vm58, %v1121, %v1122
  %v1124 = vrot.slane %v753, 1
  %v1125 = vrot.slane %v755, 1
  %v1126 = vsel %vm58, %v1124, %v1125
  %v1127 = vrot.slane %v754, 1
  %v1128 = vrot.slane %v756, 1
  %v1129 = vsel %vm58, %v1127, %v1128
  %v1130 = vrot.slane %v765, 1
  %v1131 = vrot.slane %v767, 1
  %v1132 = vsel %vm58, %v1130, %v1131
  %v1133 = vrot.slane %v766, 1
  %v1134 = vrot.slane %v768, 1
  %v1135 = vsel %vm58, %v1133, %v1134
  %v1172 = vsel %vm58, %v1101, %v1100
  %v1173 = vsel %vm58, %v1104, %v1103
  %v1174 = vsel %vm58, %v1107, %v1106
  %v1175 = vsel %vm58, %v1110, %v1109
  %v1176 = vsel %vm58, %v1113, %v1112
  %v1177 = vsel %vm58, %v1116, %v1115
  %v1178 = vsel %vm58, %v1119, %v1118
  %v1179 = vsel %vm58, %v1122, %v1121
  %v1180 = vsel %vm58, %v1125, %v1124
  %v1181 = vsel %vm58, %v1128, %v1127
  %v1182 = vsel %vm58, %v1131, %v1130
  %v1183 = vsel %vm58, %v1134, %v1133
  %v1184 = vsel %vm56, %v1102, 0.0
  %v1185 = vsel %vm56, %v1105, 0.0
  %v1186 = vsel %vm56, %v1108, 0.0
  %v1187 = vsel %vm56, %v1111, 0.0
  %v1188 = vsel %vm56, %v1114, 0.0
  %v1189 = vsel %vm56, %v1117, 0.0
  %v1190 = vsel %vm56, %v1120, 0.0
  %v1191 = vsel %vm56, %v1123, 0.0
  %v1192 = vsel %vm56, %v1126, 0.0
  %v1193 = vsel %vm56, %v1129, 0.0
  %v1194 = vsel %vm56, %v1132, 0.0
  %v1195 = vsel %vm56, %v1135, 0.0
  %v1196 = vsel %vm57, %v1172, 0.0
  %v1197 = vsel %vm57, %v1173, 0.0
  %v1198 = vsel %vm57, %v1174, 0.0
  %v1199 = vsel %vm57, %v1175, 0.0
  %v1200 = vsel %vm57, %v1176, 0.0
  %v1201 = vsel %vm57, %v1177, 0.0
  %v1202 = vsel %vm57, %v1178, 0.0
  %v1203 = vsel %vm57, %v1179, 0.0
  %v1204 = vsel %vm57, %v1180, 0.0
  %v1205 = vsel %vm57, %v1181, 0.0
  %v1206 = vsel %vm57, %v1182, 0.0
  %v1207 = vsel %vm57, %v1183, 0.0
  %v1208 = vadd.f32 %v1076, %v1184
  %v1209 = vadd.f32 %v1077, %v1185
  %v1210 = vadd.f32 %v1078, %v1186
  %v1211 = vadd.f32 %v1079, %v1187
  %v1212 = vadd.f32 %v1080, %v1188
  %v1213 = vadd.f32 %v1081, %v1189
  %v1214 = vadd.f32 %v1082, %v1190
  %v1215 = vadd.f32 %v1083, %v1191
  %v1216 = vadd.f32 %v1084, %v1192
  %v1217 = vadd.f32 %v1085, %v1193
  %v1218 = vadd.f32 %v1086, %v1194
  %v1219 = vadd.f32 %v1087, %v1195
  %v1220 = vadd.f32 %v1088, %v1196
  %v1221 = vadd.f32 %v1089, %v1197
  %v1222 = vadd.f32 %v1090, %v1198
  %v1223 = vadd.f32 %v1091, %v1199
  %v1224 = vadd.f32 %v1092, %v1200
  %v1225 = vadd.f32 %v1093, %v1201
  %v1226 = vadd.f32 %v1094, %v1202
  %v1227 = vadd.f32 %v1095, %v1203
  %v1228 = vadd.f32 %v1096, %v1204
  %v1229 = vadd.f32 %v1097, %v1205
  %v1230 = vadd.f32 %v1098, %v1206
  %v1231 = vadd.f32 %v1099, %v1207
  %vm1232 = vcmp.lt.s32.totalorder %v19, 14
  %vm1233 = vcmp.lt.s32.totalorder %v20, 14
  %vm1234 = vcmask 1045504
  %v1235 = vrot.slane %v417, 2
  %v1236 = vrot.slane %v419, 2
  %v1237 = vsel %vm1234, %v1235, %v1236
  %v1238 = vrot.slane %v418, 2
  %v1239 = vrot.slane %v420, 2
  %v1240 = vsel %vm1234, %v1238, %v1239
  %v1241 = vrot.slane %v573, 2
  %v1242 = vrot.slane %v575, 2
  %v1243 = vsel %vm1234, %v1241, %v1242
  %v1244 = vrot.slane %v574, 2
  %v1245 = vrot.slane %v576, 2
  %v1246 = vsel %vm1234, %v1244, %v1245
  %v1247 = vrot.slane %v729, 2
  %v1248 = vrot.slane %v731, 2
  %v1249 = vsel %vm1234, %v1247, %v1248
  %v1250 = vrot.slane %v730, 2
  %v1251 = vrot.slane %v732, 2
  %v1252 = vsel %vm1234, %v1250, %v1251
  %v1253 = vrot.slane %v741, 2
  %v1254 = vrot.slane %v743, 2
  %v1255 = vsel %vm1234, %v1253, %v1254
  %v1256 = vrot.slane %v742, 2
  %v1257 = vrot.slane %v744, 2
  %v1258 = vsel %vm1234, %v1256, %v1257
  %v1259 = vrot.slane %v753, 2
  %v1260 = vrot.slane %v755, 2
  %v1261 = vsel %vm1234, %v1259, %v1260
  %v1262 = vrot.slane %v754, 2
  %v1263 = vrot.slane %v756, 2
  %v1264 = vsel %vm1234, %v1262, %v1263
  %v1265 = vrot.slane %v765, 2
  %v1266 = vrot.slane %v767, 2
  %v1267 = vsel %vm1234, %v1265, %v1266
  %v1268 = vrot.slane %v766, 2
  %v1269 = vrot.slane %v768, 2
  %v1270 = vsel %vm1234, %v1268, %v1269
  %v1307 = vsel %vm1234, %v1236, %v1235
  %v1308 = vsel %vm1234, %v1239, %v1238
  %v1309 = vsel %vm1234, %v1242, %v1241
  %v1310 = vsel %vm1234, %v1245, %v1244
  %v1311 = vsel %vm1234, %v1248, %v1247
  %v1312 = vsel %vm1234, %v1251, %v1250
  %v1313 = vsel %vm1234, %v1254, %v1253
  %v1314 = vsel %vm1234, %v1257, %v1256
  %v1315 = vsel %vm1234, %v1260, %v1259
  %v1316 = vsel %vm1234, %v1263, %v1262
  %v1317 = vsel %vm1234, %v1266, %v1265
  %v1318 = vsel %vm1234, %v1269, %v1268
  %v1319 = vsel %vm1232, %v1237, 0.0
  %v1320 = vsel %vm1232, %v1240, 0.0
  %v1321 = vsel %vm1232, %v1243, 0.0
  %v1322 = vsel %vm1232, %v1246, 0.0
  %v1323 = vsel %vm1232, %v1249, 0.0
  %v1324 = vsel %vm1232, %v1252, 0.0
  %v1325 = vsel %vm1232, %v1255, 0.0
  %v1326 = vsel %vm1232, %v1258, 0.0
  %v1327 = vsel %vm1232, %v1261, 0.0
  %v1328 = vsel %vm1232, %v1264, 0.0
  %v1329 = vsel %vm1232, %v1267, 0.0
  %v1330 = vsel %vm1232, %v1270, 0.0
  %v1331 = vsel %vm1233, %v1307, 0.0
  %v1332 = vsel %vm1233, %v1308, 0.0
  %v1333 = vsel %vm1233, %v1309, 0.0
  %v1334 = vsel %vm1233, %v1310, 0.0
  %v1335 = vsel %vm1233, %v1311, 0.0
  %v1336 = vsel %vm1233, %v1312, 0.0
  %v1337 = vsel %vm1233, %v1313, 0.0
  %v1338 = vsel %vm1233, %v1314, 0.0
  %v1339 = vsel %vm1233, %v1315, 0.0
  %v1340 = vsel %vm1233, %v1316, 0.0
  %v1341 = vsel %vm1233, %v1317, 0.0
  %v1342 = vsel %vm1233, %v1318, 0.0
  %v1343 = vadd.f32 %v1208, %v1319
  %v1344 = vadd.f32 %v1209, %v1320
  %v1345 = vadd.f32 %v1210, %v1321
  %v1346 = vadd.f32 %v1211, %v1322
  %v1347 = vadd.f32 %v1212, %v1323
  %v1348 = vadd.f32 %v1213, %v1324
  %v1349 = vadd.f32 %v1214, %v1325
  %v1350 = vadd.f32 %v1215, %v1326
  %v1351 = vadd.f32 %v1216, %v1327
  %v1352 = vadd.f32 %v1217, %v1328
  %v1353 = vadd.f32 %v1218, %v1329
  %v1354 = vadd.f32 %v1219, %v1330
  %v1355 = vadd.f32 %v1220, %v1331
  %v1356 = vadd.f32 %v1221, %v1332
  %v1357 = vadd.f32 %v1222, %v1333
  %v1358 = vadd.f32 %v1223, %v1334
  %v1359 = vadd.f32 %v1224, %v1335
  %v1360 = vadd.f32 %v1225, %v1336
  %v1361 = vadd.f32 %v1226, %v1337
  %v1362 = vadd.f32 %v1227, %v1338
  %v1363 = vadd.f32 %v1228, %v1339
  %v1364 = vadd.f32 %v1229, %v1340
  %v1365 = vadd.f32 %v1230, %v1341
  %v1366 = vadd.f32 %v1231, %v1342
  %vm1367 = vcmp.ge.s32.totalorder %v25, 2
  %vm1368 = vcmp.ge.s32.totalorder %v26, 2
  %vm1369 = vcmp.ge.s32.totalorder %v799, 2
  %vm1370 = vcmp.ge.s32.totalorder %v800, 2
  %vm1371 = vcmp.ge.s32.totalorder %v801, 2
  %vm1372 = vcmp.ge.s32.totalorder %v802, 2
  %vm1373 = vcmp.ge.s32.totalorder %v803, 2
  %vm1374 = vcmp.ge.s32.totalorder %v804, 2
  %vm1375 = vcmp.ge.s32.totalorder %v805, 2
  %vm1376 = vcmp.ge.s32.totalorder %v806, 2
  %vm1377 = vcmp.ge.s32.totalorder %v807, 2
  %vm1378 = vcmp.ge.s32.totalorder %v808, 2
  %1381 = vrot.lane.b32.xlu0 %v1354, 32
  %v1382 = vpop.permute.xlu0 %1381
  %1383 = vrot.lane.b32.xlu0 %v1366, 32
  %v1384 = vpop.permute.xlu0 %1383
  %1409 = vrot.lane.b32.xlu0 %v1343, 32
  %v1410 = vpop.permute.xlu0 %1409
  %1411 = vrot.lane.b32.xlu0 %v1344, 32
  %v1412 = vpop.permute.xlu0 %1411
  %1413 = vrot.lane.b32.xlu0 %v1345, 32
  %v1414 = vpop.permute.xlu0 %1413
  %1415 = vrot.lane.b32.xlu0 %v1346, 32
  %v1416 = vpop.permute.xlu0 %1415
  %1417 = vrot.lane.b32.xlu0 %v1347, 32
  %v1418 = vpop.permute.xlu0 %1417
  %1419 = vrot.lane.b32.xlu0 %v1348, 32
  %v1420 = vpop.permute.xlu0 %1419
  %1421 = vrot.lane.b32.xlu0 %v1349, 32
  %v1422 = vpop.permute.xlu0 %1421
  %1423 = vrot.lane.b32.xlu0 %v1350, 32
  %v1424 = vpop.permute.xlu0 %1423
  %1425 = vrot.lane.b32.xlu0 %v1351, 32
  %v1426 = vpop.permute.xlu0 %1425
  %1427 = vrot.lane.b32.xlu0 %v1352, 32
  %v1428 = vpop.permute.xlu0 %1427
  %1429 = vrot.lane.b32.xlu0 %v1353, 32
  %v1430 = vpop.permute.xlu0 %1429
  %1431 = vrot.lane.b32.xlu0 %v1355, 32
  %v1432 = vpop.permute.xlu0 %1431
  %1433 = vrot.lane.b32.xlu0 %v1356, 32
  %v1434 = vpop.permute.xlu0 %1433
  %1435 = vrot.lane.b32.xlu0 %v1357, 32
  %v1436 = vpop.permute.xlu0 %1435
  %1437 = vrot.lane.b32.xlu0 %v1358, 32
  %v1438 = vpop.permute.xlu0 %1437
  %1439 = vrot.lane.b32.xlu0 %v1359, 32
  %v1440 = vpop.permute.xlu0 %1439
  %1441 = vrot.lane.b32.xlu0 %v1360, 32
  %v1442 = vpop.permute.xlu0 %1441
  %1443 = vrot.lane.b32.xlu0 %v1361, 32
  %v1444 = vpop.permute.xlu0 %1443
  %1445 = vrot.lane.b32.xlu0 %v1362, 32
  %v1446 = vpop.permute.xlu0 %1445
  %1447 = vrot.lane.b32.xlu0 %v1363, 32
  %v1448 = vpop.permute.xlu0 %1447
  %1449 = vrot.lane.b32.xlu0 %v1364, 32
  %v1450 = vpop.permute.xlu0 %1449
  %1451 = vrot.lane.b32.xlu0 %v1365, 32
  %v1452 = vpop.permute.xlu0 %1451
  %vm1453 = vcmask 261120
  %v1454 = vsel %vm1453, %v1410, %v1412
  %v1455 = vsel %vm1453, %v1412, %v1414
  %v1456 = vsel %vm1453, %v1414, %v1416
  %v1457 = vsel %vm1453, %v1416, %v1418
  %v1458 = vsel %vm1453, %v1418, %v1420
  %v1459 = vsel %vm1453, %v1420, %v1422
  %v1460 = vsel %vm1453, %v1422, %v1424
  %v1461 = vsel %vm1453, %v1424, %v1426
  %v1462 = vsel %vm1453, %v1426, %v1428
  %v1463 = vsel %vm1453, %v1428, %v1430
  %v1464 = vsel %vm1453, %v1430, %v1382
  %v1465 = vsel %vm1453, %v1432, %v1434
  %v1466 = vsel %vm1453, %v1434, %v1436
  %v1467 = vsel %vm1453, %v1436, %v1438
  %v1468 = vsel %vm1453, %v1438, %v1440
  %v1469 = vsel %vm1453, %v1440, %v1442
  %v1470 = vsel %vm1453, %v1442, %v1444
  %v1471 = vsel %vm1453, %v1444, %v1446
  %v1472 = vsel %vm1453, %v1446, %v1448
  %v1473 = vsel %vm1453, %v1448, %v1450
  %v1474 = vsel %vm1453, %v1450, %v1452
  %v1475 = vsel %vm1453, %v1452, %v1384
  %v1500 = vsel %vm1453, %v1382, %v1410
  %v1501 = vsel %vm1453, %v1384, %v1432
  %v1502 = vsel %vm1367, %v1500, 0.0
  %v1503 = vsel %vm1368, %v1454, 0.0
  %v1504 = vsel %vm1369, %v1455, 0.0
  %v1505 = vsel %vm1370, %v1456, 0.0
  %v1506 = vsel %vm1371, %v1457, 0.0
  %v1507 = vsel %vm1372, %v1458, 0.0
  %v1508 = vsel %vm1373, %v1459, 0.0
  %v1509 = vsel %vm1374, %v1460, 0.0
  %v1510 = vsel %vm1375, %v1461, 0.0
  %v1511 = vsel %vm1376, %v1462, 0.0
  %v1512 = vsel %vm1377, %v1463, 0.0
  %v1513 = vsel %vm1378, %v1464, 0.0
  %v1514 = vsel %vm1367, %v1501, 0.0
  %v1515 = vsel %vm1368, %v1465, 0.0
  %v1516 = vsel %vm1369, %v1466, 0.0
  %v1517 = vsel %vm1370, %v1467, 0.0
  %v1518 = vsel %vm1371, %v1468, 0.0
  %v1519 = vsel %vm1372, %v1469, 0.0
  %v1520 = vsel %vm1373, %v1470, 0.0
  %v1521 = vsel %vm1374, %v1471, 0.0
  %v1522 = vsel %vm1375, %v1472, 0.0
  %v1523 = vsel %vm1376, %v1473, 0.0
  %v1524 = vsel %vm1377, %v1474, 0.0
  %v1525 = vsel %vm1378, %v1475, 0.0
  %vm1526 = vcmp.ge.s32.totalorder %v799, 1
  %vm1527 = vcmp.ge.s32.totalorder %v800, 1
  %vm1528 = vcmp.ge.s32.totalorder %v801, 1
  %vm1529 = vcmp.ge.s32.totalorder %v802, 1
  %vm1530 = vcmp.ge.s32.totalorder %v803, 1
  %vm1531 = vcmp.ge.s32.totalorder %v804, 1
  %vm1532 = vcmp.ge.s32.totalorder %v805, 1
  %vm1533 = vcmp.ge.s32.totalorder %v806, 1
  %vm1534 = vcmp.ge.s32.totalorder %v807, 1
  %vm1535 = vcmp.ge.s32.totalorder %v808, 1
  %1536 = vrot.lane.b32.xlu0 %v1354, 16
  %v1537 = vpop.permute.xlu0 %1536
  %1538 = vrot.lane.b32.xlu0 %v1366, 16
  %v1539 = vpop.permute.xlu0 %1538
  %1542 = vrot.lane.b32.xlu0 %v1343, 16
  %v1543 = vpop.permute.xlu0 %1542
  %1544 = vrot.lane.b32.xlu0 %v1344, 16
  %v1545 = vpop.permute.xlu0 %1544
  %1546 = vrot.lane.b32.xlu0 %v1345, 16
  %v1547 = vpop.permute.xlu0 %1546
  %1548 = vrot.lane.b32.xlu0 %v1346, 16
  %v1549 = vpop.permute.xlu0 %1548
  %1550 = vrot.lane.b32.xlu0 %v1347, 16
  %v1551 = vpop.permute.xlu0 %1550
  %1552 = vrot.lane.b32.xlu0 %v1348, 16
  %v1553 = vpop.permute.xlu0 %1552
  %1554 = vrot.lane.b32.xlu0 %v1349, 16
  %v1555 = vpop.permute.xlu0 %1554
  %1556 = vrot.lane.b32.xlu0 %v1350, 16
  %v1557 = vpop.permute.xlu0 %1556
  %1558 = vrot.lane.b32.xlu0 %v1351, 16
  %v1559 = vpop.permute.xlu0 %1558
  %1560 = vrot.lane.b32.xlu0 %v1352, 16
  %v1561 = vpop.permute.xlu0 %1560
  %1562 = vrot.lane.b32.xlu0 %v1353, 16
  %v1563 = vpop.permute.xlu0 %1562
  %1564 = vrot.lane.b32.xlu0 %v1355, 16
  %v1565 = vpop.permute.xlu0 %1564
  %1566 = vrot.lane.b32.xlu0 %v1356, 16
  %v1567 = vpop.permute.xlu0 %1566
  %1568 = vrot.lane.b32.xlu0 %v1357, 16
  %v1569 = vpop.permute.xlu0 %1568
  %1570 = vrot.lane.b32.xlu0 %v1358, 16
  %v1571 = vpop.permute.xlu0 %1570
  %1572 = vrot.lane.b32.xlu0 %v1359, 16
  %v1573 = vpop.permute.xlu0 %1572
  %1574 = vrot.lane.b32.xlu0 %v1360, 16
  %v1575 = vpop.permute.xlu0 %1574
  %1576 = vrot.lane.b32.xlu0 %v1361, 16
  %v1577 = vpop.permute.xlu0 %1576
  %1578 = vrot.lane.b32.xlu0 %v1362, 16
  %v1579 = vpop.permute.xlu0 %1578
  %1580 = vrot.lane.b32.xlu0 %v1363, 16
  %v1581 = vpop.permute.xlu0 %1580
  %1582 = vrot.lane.b32.xlu0 %v1364, 16
  %v1583 = vpop.permute.xlu0 %1582
  %1584 = vrot.lane.b32.xlu0 %v1365, 16
  %v1585 = vpop.permute.xlu0 %1584
  %v1586 = vsel %vm97, %v1543, %v1545
  %v1587 = vsel %vm97, %v1545, %v1547
  %v1588 = vsel %vm97, %v1547, %v1549
  %v1589 = vsel %vm97, %v1549, %v1551
  %v1590 = vsel %vm97, %v1551, %v1553
  %v1591 = vsel %vm97, %v1553, %v1555
  %v1592 = vsel %vm97, %v1555, %v1557
  %v1593 = vsel %vm97, %v1557, %v1559
  %v1594 = vsel %vm97, %v1559, %v1561
  %v1595 = vsel %vm97, %v1561, %v1563
  %v1596 = vsel %vm97, %v1563, %v1537
  %v1597 = vsel %vm97, %v1565, %v1567
  %v1598 = vsel %vm97, %v1567, %v1569
  %v1599 = vsel %vm97, %v1569, %v1571
  %v1600 = vsel %vm97, %v1571, %v1573
  %v1601 = vsel %vm97, %v1573, %v1575
  %v1602 = vsel %vm97, %v1575, %v1577
  %v1603 = vsel %vm97, %v1577, %v1579
  %v1604 = vsel %vm97, %v1579, %v1581
  %v1605 = vsel %vm97, %v1581, %v1583
  %v1606 = vsel %vm97, %v1583, %v1585
  %v1607 = vsel %vm97, %v1585, %v1539
  %v1632 = vsel %vm97, %v1537, %v1543
  %v1633 = vsel %vm97, %v1539, %v1565
  %v1634 = vsel %vm81, %v1632, 0.0
  %v1635 = vsel %vm82, %v1586, 0.0
  %v1636 = vsel %vm1526, %v1587, 0.0
  %v1637 = vsel %vm1527, %v1588, 0.0
  %v1638 = vsel %vm1528, %v1589, 0.0
  %v1639 = vsel %vm1529, %v1590, 0.0
  %v1640 = vsel %vm1530, %v1591, 0.0
  %v1641 = vsel %vm1531, %v1592, 0.0
  %v1642 = vsel %vm1532, %v1593, 0.0
  %v1643 = vsel %vm1533, %v1594, 0.0
  %v1644 = vsel %vm1534, %v1595, 0.0
  %v1645 = vsel %vm1535, %v1596, 0.0
  %v1646 = vsel %vm81, %v1633, 0.0
  %v1647 = vsel %vm82, %v1597, 0.0
  %v1648 = vsel %vm1526, %v1598, 0.0
  %v1649 = vsel %vm1527, %v1599, 0.0
  %v1650 = vsel %vm1528, %v1600, 0.0
  %v1651 = vsel %vm1529, %v1601, 0.0
  %v1652 = vsel %vm1530, %v1602, 0.0
  %v1653 = vsel %vm1531, %v1603, 0.0
  %v1654 = vsel %vm1532, %v1604, 0.0
  %v1655 = vsel %vm1533, %v1605, 0.0
  %v1656 = vsel %vm1534, %v1606, 0.0
  %v1657 = vsel %vm1535, %v1607, 0.0
  %v1658 = vadd.f32 %v1502, %v1634
  %v1659 = vadd.f32 %v1503, %v1635
  %v1660 = vadd.f32 %v1504, %v1636
  %v1661 = vadd.f32 %v1505, %v1637
  %v1662 = vadd.f32 %v1506, %v1638
  %v1663 = vadd.f32 %v1507, %v1639
  %v1664 = vadd.f32 %v1508, %v1640
  %v1665 = vadd.f32 %v1509, %v1641
  %v1666 = vadd.f32 %v1510, %v1642
  %v1667 = vadd.f32 %v1511, %v1643
  %v1668 = vadd.f32 %v1512, %v1644
  %v1669 = vadd.f32 %v1513, %v1645
  %v1670 = vadd.f32 %v1514, %v1646
  %v1671 = vadd.f32 %v1515, %v1647
  %v1672 = vadd.f32 %v1516, %v1648
  %v1673 = vadd.f32 %v1517, %v1649
  %v1674 = vadd.f32 %v1518, %v1650
  %v1675 = vadd.f32 %v1519, %v1651
  %v1676 = vadd.f32 %v1520, %v1652
  %v1677 = vadd.f32 %v1521, %v1653
  %v1678 = vadd.f32 %v1522, %v1654
  %v1679 = vadd.f32 %v1523, %v1655
  %v1680 = vadd.f32 %v1524, %v1656
  %v1681 = vadd.f32 %v1525, %v1657
  %v1682 = vadd.f32 %v1658, %v1343
  %v1683 = vadd.f32 %v1659, %v1344
  %v1684 = vadd.f32 %v1660, %v1345
  %v1685 = vadd.f32 %v1661, %v1346
  %v1686 = vadd.f32 %v1662, %v1347
  %v1687 = vadd.f32 %v1663, %v1348
  %v1688 = vadd.f32 %v1664, %v1349
  %v1689 = vadd.f32 %v1665, %v1350
  %v1690 = vadd.f32 %v1666, %v1351
  %v1691 = vadd.f32 %v1667, %v1352
  %v1692 = vadd.f32 %v1668, %v1353
  %v1693 = vadd.f32 %v1669, %v1354
  %v1694 = vadd.f32 %v1670, %v1355
  %v1695 = vadd.f32 %v1671, %v1356
  %v1696 = vadd.f32 %v1672, %v1357
  %v1697 = vadd.f32 %v1673, %v1358
  %v1698 = vadd.f32 %v1674, %v1359
  %v1699 = vadd.f32 %v1675, %v1360
  %v1700 = vadd.f32 %v1676, %v1361
  %v1701 = vadd.f32 %v1677, %v1362
  %v1702 = vadd.f32 %v1678, %v1363
  %v1703 = vadd.f32 %v1679, %v1364
  %v1704 = vadd.f32 %v1680, %v1365
  %v1705 = vadd.f32 %v1681, %v1366
  %vm1706 = vcmp.lt.s32.totalorder %v799, 15
  %vm1707 = vcmp.lt.s32.totalorder %v800, 15
  %vm1708 = vcmp.lt.s32.totalorder %v801, 15
  %vm1709 = vcmp.lt.s32.totalorder %v802, 15
  %vm1710 = vcmp.lt.s32.totalorder %v803, 15
  %vm1711 = vcmp.lt.s32.totalorder %v804, 15
  %vm1712 = vcmp.lt.s32.totalorder %v805, 15
  %vm1713 = vcmp.lt.s32.totalorder %v806, 15
  %vm1714 = vcmp.lt.s32.totalorder %v807, 15
  %vm1715 = vcmp.lt.s32.totalorder %v808, 15
  %1716 = vrot.lane.b32.xlu0 %v1343, 112
  %v1717 = vpop.permute.xlu0 %1716
  %1718 = vrot.lane.b32.xlu0 %v1344, 112
  %v1719 = vpop.permute.xlu0 %1718
  %1720 = vrot.lane.b32.xlu0 %v1345, 112
  %v1721 = vpop.permute.xlu0 %1720
  %1722 = vrot.lane.b32.xlu0 %v1346, 112
  %v1723 = vpop.permute.xlu0 %1722
  %1724 = vrot.lane.b32.xlu0 %v1347, 112
  %v1725 = vpop.permute.xlu0 %1724
  %1726 = vrot.lane.b32.xlu0 %v1348, 112
  %v1727 = vpop.permute.xlu0 %1726
  %1728 = vrot.lane.b32.xlu0 %v1349, 112
  %v1729 = vpop.permute.xlu0 %1728
  %1730 = vrot.lane.b32.xlu0 %v1350, 112
  %v1731 = vpop.permute.xlu0 %1730
  %1732 = vrot.lane.b32.xlu0 %v1351, 112
  %v1733 = vpop.permute.xlu0 %1732
  %1734 = vrot.lane.b32.xlu0 %v1352, 112
  %v1735 = vpop.permute.xlu0 %1734
  %1736 = vrot.lane.b32.xlu0 %v1353, 112
  %v1737 = vpop.permute.xlu0 %1736
  %1738 = vrot.lane.b32.xlu0 %v1354, 112
  %v1739 = vpop.permute.xlu0 %1738
  %1740 = vrot.lane.b32.xlu0 %v1355, 112
  %v1741 = vpop.permute.xlu0 %1740
  %1742 = vrot.lane.b32.xlu0 %v1356, 112
  %v1743 = vpop.permute.xlu0 %1742
  %1744 = vrot.lane.b32.xlu0 %v1357, 112
  %v1745 = vpop.permute.xlu0 %1744
  %1746 = vrot.lane.b32.xlu0 %v1358, 112
  %v1747 = vpop.permute.xlu0 %1746
  %1748 = vrot.lane.b32.xlu0 %v1359, 112
  %v1749 = vpop.permute.xlu0 %1748
  %1750 = vrot.lane.b32.xlu0 %v1360, 112
  %v1751 = vpop.permute.xlu0 %1750
  %1752 = vrot.lane.b32.xlu0 %v1361, 112
  %v1753 = vpop.permute.xlu0 %1752
  %1754 = vrot.lane.b32.xlu0 %v1362, 112
  %v1755 = vpop.permute.xlu0 %1754
  %1756 = vrot.lane.b32.xlu0 %v1363, 112
  %v1757 = vpop.permute.xlu0 %1756
  %1758 = vrot.lane.b32.xlu0 %v1364, 112
  %v1759 = vpop.permute.xlu0 %1758
  %1760 = vrot.lane.b32.xlu0 %v1365, 112
  %v1761 = vpop.permute.xlu0 %1760
  %1762 = vrot.lane.b32.xlu0 %v1366, 112
  %v1763 = vpop.permute.xlu0 %1762
  %v1764 = vsel %vm124, %v1717, %v1719
  %v1765 = vsel %vm124, %v1719, %v1721
  %v1766 = vsel %vm124, %v1721, %v1723
  %v1767 = vsel %vm124, %v1723, %v1725
  %v1768 = vsel %vm124, %v1725, %v1727
  %v1769 = vsel %vm124, %v1727, %v1729
  %v1770 = vsel %vm124, %v1729, %v1731
  %v1771 = vsel %vm124, %v1731, %v1733
  %v1772 = vsel %vm124, %v1733, %v1735
  %v1773 = vsel %vm124, %v1735, %v1737
  %v1774 = vsel %vm124, %v1737, %v1739
  %v1775 = vsel %vm124, %v1741, %v1743
  %v1776 = vsel %vm124, %v1743, %v1745
  %v1777 = vsel %vm124, %v1745, %v1747
  %v1778 = vsel %vm124, %v1747, %v1749
  %v1779 = vsel %vm124, %v1749, %v1751
  %v1780 = vsel %vm124, %v1751, %v1753
  %v1781 = vsel %vm124, %v1753, %v1755
  %v1782 = vsel %vm124, %v1755, %v1757
  %v1783 = vsel %vm124, %v1757, %v1759
  %v1784 = vsel %vm124, %v1759, %v1761
  %v1785 = vsel %vm124, %v1761, %v1763
  %v1812 = vsel %vm124, %v1739, %v1717
  %v1813 = vsel %vm124, %v1763, %v1741
  %v1814 = vsel %vm114, %v1764, 0.0
  %v1815 = vsel %vm115, %v1765, 0.0
  %v1816 = vsel %vm1706, %v1766, 0.0
  %v1817 = vsel %vm1707, %v1767, 0.0
  %v1818 = vsel %vm1708, %v1768, 0.0
  %v1819 = vsel %vm1709, %v1769, 0.0
  %v1820 = vsel %vm1710, %v1770, 0.0
  %v1821 = vsel %vm1711, %v1771, 0.0
  %v1822 = vsel %vm1712, %v1772, 0.0
  %v1823 = vsel %vm1713, %v1773, 0.0
  %v1824 = vsel %vm1714, %v1774, 0.0
  %v1825 = vsel %vm1715, %v1812, 0.0
  %v1826 = vsel %vm114, %v1775, 0.0
  %v1827 = vsel %vm115, %v1776, 0.0
  %v1828 = vsel %vm1706, %v1777, 0.0
  %v1829 = vsel %vm1707, %v1778, 0.0
  %v1830 = vsel %vm1708, %v1779, 0.0
  %v1831 = vsel %vm1709, %v1780, 0.0
  %v1832 = vsel %vm1710, %v1781, 0.0
  %v1833 = vsel %vm1711, %v1782, 0.0
  %v1834 = vsel %vm1712, %v1783, 0.0
  %v1835 = vsel %vm1713, %v1784, 0.0
  %v1836 = vsel %vm1714, %v1785, 0.0
  %v1837 = vsel %vm1715, %v1813, 0.0
  %v1838 = vadd.f32 %v1682, %v1814
  %v1839 = vadd.f32 %v1683, %v1815
  %v1840 = vadd.f32 %v1684, %v1816
  %v1841 = vadd.f32 %v1685, %v1817
  %v1842 = vadd.f32 %v1686, %v1818
  %v1843 = vadd.f32 %v1687, %v1819
  %v1844 = vadd.f32 %v1688, %v1820
  %v1845 = vadd.f32 %v1689, %v1821
  %v1846 = vadd.f32 %v1690, %v1822
  %v1847 = vadd.f32 %v1691, %v1823
  %v1848 = vadd.f32 %v1692, %v1824
  %v1849 = vadd.f32 %v1693, %v1825
  %v1850 = vadd.f32 %v1694, %v1826
  %v1851 = vadd.f32 %v1695, %v1827
  %v1852 = vadd.f32 %v1696, %v1828
  %v1853 = vadd.f32 %v1697, %v1829
  %v1854 = vadd.f32 %v1698, %v1830
  %v1855 = vadd.f32 %v1699, %v1831
  %v1856 = vadd.f32 %v1700, %v1832
  %v1857 = vadd.f32 %v1701, %v1833
  %v1858 = vadd.f32 %v1702, %v1834
  %v1859 = vadd.f32 %v1703, %v1835
  %v1860 = vadd.f32 %v1704, %v1836
  %v1861 = vadd.f32 %v1705, %v1837
  %vm1862 = vcmp.lt.s32.totalorder %v25, 14
  %vm1863 = vcmp.lt.s32.totalorder %v26, 14
  %vm1864 = vcmp.lt.s32.totalorder %v799, 14
  %vm1865 = vcmp.lt.s32.totalorder %v800, 14
  %vm1866 = vcmp.lt.s32.totalorder %v801, 14
  %vm1867 = vcmp.lt.s32.totalorder %v802, 14
  %vm1868 = vcmp.lt.s32.totalorder %v803, 14
  %vm1869 = vcmp.lt.s32.totalorder %v804, 14
  %vm1870 = vcmp.lt.s32.totalorder %v805, 14
  %vm1871 = vcmp.lt.s32.totalorder %v806, 14
  %vm1872 = vcmp.lt.s32.totalorder %v807, 14
  %vm1873 = vcmp.lt.s32.totalorder %v808, 14
  %1874 = vrot.lane.b32.xlu0 %v1343, 96
  %v1875 = vpop.permute.xlu0 %1874
  %1876 = vrot.lane.b32.xlu0 %v1344, 96
  %v1877 = vpop.permute.xlu0 %1876
  %1878 = vrot.lane.b32.xlu0 %v1345, 96
  %v1879 = vpop.permute.xlu0 %1878
  %1880 = vrot.lane.b32.xlu0 %v1346, 96
  %v1881 = vpop.permute.xlu0 %1880
  %1882 = vrot.lane.b32.xlu0 %v1347, 96
  %v1883 = vpop.permute.xlu0 %1882
  %1884 = vrot.lane.b32.xlu0 %v1348, 96
  %v1885 = vpop.permute.xlu0 %1884
  %1886 = vrot.lane.b32.xlu0 %v1349, 96
  %v1887 = vpop.permute.xlu0 %1886
  %1888 = vrot.lane.b32.xlu0 %v1350, 96
  %v1889 = vpop.permute.xlu0 %1888
  %1890 = vrot.lane.b32.xlu0 %v1351, 96
  %v1891 = vpop.permute.xlu0 %1890
  %1892 = vrot.lane.b32.xlu0 %v1352, 96
  %v1893 = vpop.permute.xlu0 %1892
  %1894 = vrot.lane.b32.xlu0 %v1353, 96
  %v1895 = vpop.permute.xlu0 %1894
  %1896 = vrot.lane.b32.xlu0 %v1354, 96
  %v1897 = vpop.permute.xlu0 %1896
  %1898 = vrot.lane.b32.xlu0 %v1355, 96
  %v1899 = vpop.permute.xlu0 %1898
  %1900 = vrot.lane.b32.xlu0 %v1356, 96
  %v1901 = vpop.permute.xlu0 %1900
  %1902 = vrot.lane.b32.xlu0 %v1357, 96
  %v1903 = vpop.permute.xlu0 %1902
  %1904 = vrot.lane.b32.xlu0 %v1358, 96
  %v1905 = vpop.permute.xlu0 %1904
  %1906 = vrot.lane.b32.xlu0 %v1359, 96
  %v1907 = vpop.permute.xlu0 %1906
  %1908 = vrot.lane.b32.xlu0 %v1360, 96
  %v1909 = vpop.permute.xlu0 %1908
  %1910 = vrot.lane.b32.xlu0 %v1361, 96
  %v1911 = vpop.permute.xlu0 %1910
  %1912 = vrot.lane.b32.xlu0 %v1362, 96
  %v1913 = vpop.permute.xlu0 %1912
  %1914 = vrot.lane.b32.xlu0 %v1363, 96
  %v1915 = vpop.permute.xlu0 %1914
  %1916 = vrot.lane.b32.xlu0 %v1364, 96
  %v1917 = vpop.permute.xlu0 %1916
  %1918 = vrot.lane.b32.xlu0 %v1365, 96
  %v1919 = vpop.permute.xlu0 %1918
  %1920 = vrot.lane.b32.xlu0 %v1366, 96
  %v1921 = vpop.permute.xlu0 %1920
  %vm1922 = vcmask 785408
  %v1923 = vsel %vm1922, %v1875, %v1877
  %v1924 = vsel %vm1922, %v1877, %v1879
  %v1925 = vsel %vm1922, %v1879, %v1881
  %v1926 = vsel %vm1922, %v1881, %v1883
  %v1927 = vsel %vm1922, %v1883, %v1885
  %v1928 = vsel %vm1922, %v1885, %v1887
  %v1929 = vsel %vm1922, %v1887, %v1889
  %v1930 = vsel %vm1922, %v1889, %v1891
  %v1931 = vsel %vm1922, %v1891, %v1893
  %v1932 = vsel %vm1922, %v1893, %v1895
  %v1933 = vsel %vm1922, %v1895, %v1897
  %v1934 = vsel %vm1922, %v1899, %v1901
  %v1935 = vsel %vm1922, %v1901, %v1903
  %v1936 = vsel %vm1922, %v1903, %v1905
  %v1937 = vsel %vm1922, %v1905, %v1907
  %v1938 = vsel %vm1922, %v1907, %v1909
  %v1939 = vsel %vm1922, %v1909, %v1911
  %v1940 = vsel %vm1922, %v1911, %v1913
  %v1941 = vsel %vm1922, %v1913, %v1915
  %v1942 = vsel %vm1922, %v1915, %v1917
  %v1943 = vsel %vm1922, %v1917, %v1919
  %v1944 = vsel %vm1922, %v1919, %v1921
  %v1971 = vsel %vm1922, %v1897, %v1875
  %v1972 = vsel %vm1922, %v1921, %v1899
  %v1973 = vsel %vm1862, %v1923, 0.0
  %v1974 = vsel %vm1863, %v1924, 0.0
  %v1975 = vsel %vm1864, %v1925, 0.0
  %v1976 = vsel %vm1865, %v1926, 0.0
  %v1977 = vsel %vm1866, %v1927, 0.0
  %v1978 = vsel %vm1867, %v1928, 0.0
  %v1979 = vsel %vm1868, %v1929, 0.0
  %v1980 = vsel %vm1869, %v1930, 0.0
  %v1981 = vsel %vm1870, %v1931, 0.0
  %v1982 = vsel %vm1871, %v1932, 0.0
  %v1983 = vsel %vm1872, %v1933, 0.0
  %v1984 = vsel %vm1873, %v1971, 0.0
  %v1985 = vsel %vm1862, %v1934, 0.0
  %v1986 = vsel %vm1863, %v1935, 0.0
  %v1987 = vsel %vm1864, %v1936, 0.0
  %v1988 = vsel %vm1865, %v1937, 0.0
  %v1989 = vsel %vm1866, %v1938, 0.0
  %v1990 = vsel %vm1867, %v1939, 0.0
  %v1991 = vsel %vm1868, %v1940, 0.0
  %v1992 = vsel %vm1869, %v1941, 0.0
  %v1993 = vsel %vm1870, %v1942, 0.0
  %v1994 = vsel %vm1871, %v1943, 0.0
  %v1995 = vsel %vm1872, %v1944, 0.0
  %v1996 = vsel %vm1873, %v1972, 0.0
  %v1997 = vadd.f32 %v1838, %v1973
  %v1998 = vadd.f32 %v1839, %v1974
  %v1999 = vadd.f32 %v1840, %v1975
  %v2000 = vadd.f32 %v1841, %v1976
  %v2001 = vadd.f32 %v1842, %v1977
  %v2002 = vadd.f32 %v1843, %v1978
  %v2003 = vadd.f32 %v1844, %v1979
  %v2004 = vadd.f32 %v1845, %v1980
  %v2005 = vadd.f32 %v1846, %v1981
  %v2006 = vadd.f32 %v1847, %v1982
  %v2007 = vadd.f32 %v1848, %v1983
  %v2008 = vadd.f32 %v1849, %v1984
  %v2009 = vadd.f32 %v1850, %v1985
  %v2010 = vadd.f32 %v1851, %v1986
  %v2011 = vadd.f32 %v1852, %v1987
  %v2012 = vadd.f32 %v1853, %v1988
  %v2013 = vadd.f32 %v1854, %v1989
  %v2014 = vadd.f32 %v1855, %v1990
  %v2015 = vadd.f32 %v1856, %v1991
  %v2016 = vadd.f32 %v1857, %v1992
  %v2017 = vadd.f32 %v1858, %v1993
  %v2018 = vadd.f32 %v1859, %v1994
  %v2019 = vadd.f32 %v1860, %v1995
  %v2020 = vadd.f32 %v1861, %v1996
  %vm2021 = vcmp.ge.s32.totalorder %v21, 2
  %vm2022 = vcmp.ge.s32.totalorder %v22, 2
  %vm2023 = vcmp.ge.s32.totalorder %v779, 2
  %vm2024 = vcmp.ge.s32.totalorder %v780, 2
  %vm2025 = vcmp.ge.s32.totalorder %v781, 2
  %vm2026 = vcmp.ge.s32.totalorder %v782, 2
  %vm2027 = vcmp.ge.s32.totalorder %v783, 2
  %vm2028 = vcmp.ge.s32.totalorder %v784, 2
  %vm2029 = vcmp.ge.s32.totalorder %v785, 2
  %vm2030 = vcmp.ge.s32.totalorder %v786, 2
  %vm2031 = vcmp.ge.s32.totalorder %v787, 2
  %vm2032 = vcmp.ge.s32.totalorder %v788, 2
  %2035 = vrot.lane.b32.xlu0 %v2008, 2
  %v2036 = vpop.permute.xlu0 %2035
  %2037 = vrot.lane.b32.xlu0 %v2020, 2
  %v2038 = vpop.permute.xlu0 %2037
  %2063 = vrot.lane.b32.xlu0 %v1997, 2
  %v2064 = vpop.permute.xlu0 %2063
  %2065 = vrot.lane.b32.xlu0 %v1998, 2
  %v2066 = vpop.permute.xlu0 %2065
  %2067 = vrot.lane.b32.xlu0 %v1999, 2
  %v2068 = vpop.permute.xlu0 %2067
  %2069 = vrot.lane.b32.xlu0 %v2000, 2
  %v2070 = vpop.permute.xlu0 %2069
  %2071 = vrot.lane.b32.xlu0 %v2001, 2
  %v2072 = vpop.permute.xlu0 %2071
  %2073 = vrot.lane.b32.xlu0 %v2002, 2
  %v2074 = vpop.permute.xlu0 %2073
  %2075 = vrot.lane.b32.xlu0 %v2003, 2
  %v2076 = vpop.permute.xlu0 %2075
  %2077 = vrot.lane.b32.xlu0 %v2004, 2
  %v2078 = vpop.permute.xlu0 %2077
  %2079 = vrot.lane.b32.xlu0 %v2005, 2
  %v2080 = vpop.permute.xlu0 %2079
  %2081 = vrot.lane.b32.xlu0 %v2006, 2
  %v2082 = vpop.permute.xlu0 %2081
  %2083 = vrot.lane.b32.xlu0 %v2007, 2
  %v2084 = vpop.permute.xlu0 %2083
  %2085 = vrot.lane.b32.xlu0 %v2009, 2
  %v2086 = vpop.permute.xlu0 %2085
  %2087 = vrot.lane.b32.xlu0 %v2010, 2
  %v2088 = vpop.permute.xlu0 %2087
  %2089 = vrot.lane.b32.xlu0 %v2011, 2
  %v2090 = vpop.permute.xlu0 %2089
  %2091 = vrot.lane.b32.xlu0 %v2012, 2
  %v2092 = vpop.permute.xlu0 %2091
  %2093 = vrot.lane.b32.xlu0 %v2013, 2
  %v2094 = vpop.permute.xlu0 %2093
  %2095 = vrot.lane.b32.xlu0 %v2014, 2
  %v2096 = vpop.permute.xlu0 %2095
  %2097 = vrot.lane.b32.xlu0 %v2015, 2
  %v2098 = vpop.permute.xlu0 %2097
  %2099 = vrot.lane.b32.xlu0 %v2016, 2
  %v2100 = vpop.permute.xlu0 %2099
  %2101 = vrot.lane.b32.xlu0 %v2017, 2
  %v2102 = vpop.permute.xlu0 %2101
  %2103 = vrot.lane.b32.xlu0 %v2018, 2
  %v2104 = vpop.permute.xlu0 %2103
  %2105 = vrot.lane.b32.xlu0 %v2019, 2
  %v2106 = vpop.permute.xlu0 %2105
  %vm2107 = vcmask 15360
  %v2108 = vsel %vm2107, %v2064, %v2066
  %v2109 = vsel %vm2107, %v2066, %v2068
  %v2110 = vsel %vm2107, %v2068, %v2070
  %v2111 = vsel %vm2107, %v2070, %v2072
  %v2112 = vsel %vm2107, %v2072, %v2074
  %v2113 = vsel %vm2107, %v2074, %v2076
  %v2114 = vsel %vm2107, %v2076, %v2078
  %v2115 = vsel %vm2107, %v2078, %v2080
  %v2116 = vsel %vm2107, %v2080, %v2082
  %v2117 = vsel %vm2107, %v2082, %v2084
  %v2118 = vsel %vm2107, %v2084, %v2036
  %v2119 = vsel %vm2107, %v2086, %v2088
  %v2120 = vsel %vm2107, %v2088, %v2090
  %v2121 = vsel %vm2107, %v2090, %v2092
  %v2122 = vsel %vm2107, %v2092, %v2094
  %v2123 = vsel %vm2107, %v2094, %v2096
  %v2124 = vsel %vm2107, %v2096, %v2098
  %v2125 = vsel %vm2107, %v2098, %v2100
  %v2126 = vsel %vm2107, %v2100, %v2102
  %v2127 = vsel %vm2107, %v2102, %v2104
  %v2128 = vsel %vm2107, %v2104, %v2106
  %v2129 = vsel %vm2107, %v2106, %v2038
  %v2154 = vsel %vm2107, %v2036, %v2064
  %v2155 = vsel %vm2107, %v2038, %v2086
  %v2156 = vsel %vm2021, %v2154, 0.0
  %v2157 = vsel %vm2022, %v2108, 0.0
  %v2158 = vsel %vm2023, %v2109, 0.0
  %v2159 = vsel %vm2024, %v2110, 0.0
  %v2160 = vsel %vm2025, %v2111, 0.0
  %v2161 = vsel %vm2026, %v2112, 0.0
  %v2162 = vsel %vm2027, %v2113, 0.0
  %v2163 = vsel %vm2028, %v2114, 0.0
  %v2164 = vsel %vm2029, %v2115, 0.0
  %v2165 = vsel %vm2030, %v2116, 0.0
  %v2166 = vsel %vm2031, %v2117, 0.0
  %v2167 = vsel %vm2032, %v2118, 0.0
  %v2168 = vsel %vm2021, %v2155, 0.0
  %v2169 = vsel %vm2022, %v2119, 0.0
  %v2170 = vsel %vm2023, %v2120, 0.0
  %v2171 = vsel %vm2024, %v2121, 0.0
  %v2172 = vsel %vm2025, %v2122, 0.0
  %v2173 = vsel %vm2026, %v2123, 0.0
  %v2174 = vsel %vm2027, %v2124, 0.0
  %v2175 = vsel %vm2028, %v2125, 0.0
  %v2176 = vsel %vm2029, %v2126, 0.0
  %v2177 = vsel %vm2030, %v2127, 0.0
  %v2178 = vsel %vm2031, %v2128, 0.0
  %v2179 = vsel %vm2032, %v2129, 0.0
  %vm2180 = vcmp.ge.s32.totalorder %v779, 1
  %vm2181 = vcmp.ge.s32.totalorder %v780, 1
  %vm2182 = vcmp.ge.s32.totalorder %v781, 1
  %vm2183 = vcmp.ge.s32.totalorder %v782, 1
  %vm2184 = vcmp.ge.s32.totalorder %v783, 1
  %vm2185 = vcmp.ge.s32.totalorder %v784, 1
  %vm2186 = vcmp.ge.s32.totalorder %v785, 1
  %vm2187 = vcmp.ge.s32.totalorder %v786, 1
  %vm2188 = vcmp.ge.s32.totalorder %v787, 1
  %vm2189 = vcmp.ge.s32.totalorder %v788, 1
  %2190 = vrot.lane.b32.xlu0 %v2008, 1
  %v2191 = vpop.permute.xlu0 %2190
  %2192 = vrot.lane.b32.xlu0 %v2020, 1
  %v2193 = vpop.permute.xlu0 %2192
  %2196 = vrot.lane.b32.xlu0 %v1997, 1
  %v2197 = vpop.permute.xlu0 %2196
  %2198 = vrot.lane.b32.xlu0 %v1998, 1
  %v2199 = vpop.permute.xlu0 %2198
  %2200 = vrot.lane.b32.xlu0 %v1999, 1
  %v2201 = vpop.permute.xlu0 %2200
  %2202 = vrot.lane.b32.xlu0 %v2000, 1
  %v2203 = vpop.permute.xlu0 %2202
  %2204 = vrot.lane.b32.xlu0 %v2001, 1
  %v2205 = vpop.permute.xlu0 %2204
  %2206 = vrot.lane.b32.xlu0 %v2002, 1
  %v2207 = vpop.permute.xlu0 %2206
  %2208 = vrot.lane.b32.xlu0 %v2003, 1
  %v2209 = vpop.permute.xlu0 %2208
  %2210 = vrot.lane.b32.xlu0 %v2004, 1
  %v2211 = vpop.permute.xlu0 %2210
  %2212 = vrot.lane.b32.xlu0 %v2005, 1
  %v2213 = vpop.permute.xlu0 %2212
  %2214 = vrot.lane.b32.xlu0 %v2006, 1
  %v2215 = vpop.permute.xlu0 %2214
  %2216 = vrot.lane.b32.xlu0 %v2007, 1
  %v2217 = vpop.permute.xlu0 %2216
  %2218 = vrot.lane.b32.xlu0 %v2009, 1
  %v2219 = vpop.permute.xlu0 %2218
  %2220 = vrot.lane.b32.xlu0 %v2010, 1
  %v2221 = vpop.permute.xlu0 %2220
  %2222 = vrot.lane.b32.xlu0 %v2011, 1
  %v2223 = vpop.permute.xlu0 %2222
  %2224 = vrot.lane.b32.xlu0 %v2012, 1
  %v2225 = vpop.permute.xlu0 %2224
  %2226 = vrot.lane.b32.xlu0 %v2013, 1
  %v2227 = vpop.permute.xlu0 %2226
  %2228 = vrot.lane.b32.xlu0 %v2014, 1
  %v2229 = vpop.permute.xlu0 %2228
  %2230 = vrot.lane.b32.xlu0 %v2015, 1
  %v2231 = vpop.permute.xlu0 %2230
  %2232 = vrot.lane.b32.xlu0 %v2016, 1
  %v2233 = vpop.permute.xlu0 %2232
  %2234 = vrot.lane.b32.xlu0 %v2017, 1
  %v2235 = vpop.permute.xlu0 %2234
  %2236 = vrot.lane.b32.xlu0 %v2018, 1
  %v2237 = vpop.permute.xlu0 %2236
  %2238 = vrot.lane.b32.xlu0 %v2019, 1
  %v2239 = vpop.permute.xlu0 %2238
  %v2240 = vsel %vm159, %v2197, %v2199
  %v2241 = vsel %vm159, %v2199, %v2201
  %v2242 = vsel %vm159, %v2201, %v2203
  %v2243 = vsel %vm159, %v2203, %v2205
  %v2244 = vsel %vm159, %v2205, %v2207
  %v2245 = vsel %vm159, %v2207, %v2209
  %v2246 = vsel %vm159, %v2209, %v2211
  %v2247 = vsel %vm159, %v2211, %v2213
  %v2248 = vsel %vm159, %v2213, %v2215
  %v2249 = vsel %vm159, %v2215, %v2217
  %v2250 = vsel %vm159, %v2217, %v2191
  %v2251 = vsel %vm159, %v2219, %v2221
  %v2252 = vsel %vm159, %v2221, %v2223
  %v2253 = vsel %vm159, %v2223, %v2225
  %v2254 = vsel %vm159, %v2225, %v2227
  %v2255 = vsel %vm159, %v2227, %v2229
  %v2256 = vsel %vm159, %v2229, %v2231
  %v2257 = vsel %vm159, %v2231, %v2233
  %v2258 = vsel %vm159, %v2233, %v2235
  %v2259 = vsel %vm159, %v2235, %v2237
  %v2260 = vsel %vm159, %v2237, %v2239
  %v2261 = vsel %vm159, %v2239, %v2193
  %v2286 = vsel %vm159, %v2191, %v2197
  %v2287 = vsel %vm159, %v2193, %v2219
  %v2288 = vsel %vm143, %v2286, 0.0
  %v2289 = vsel %vm144, %v2240, 0.0
  %v2290 = vsel %vm2180, %v2241, 0.0
  %v2291 = vsel %vm2181, %v2242, 0.0
  %v2292 = vsel %vm2182, %v2243, 0.0
  %v2293 = vsel %vm2183, %v2244, 0.0
  %v2294 = vsel %vm2184, %v2245, 0.0
  %v2295 = vsel %vm2185, %v2246, 0.0
  %v2296 = vsel %vm2186, %v2247, 0.0
  %v2297 = vsel %vm2187, %v2248, 0.0
  %v2298 = vsel %vm2188, %v2249, 0.0
  %v2299 = vsel %vm2189, %v2250, 0.0
  %v2300 = vsel %vm143, %v2287, 0.0
  %v2301 = vsel %vm144, %v2251, 0.0
  %v2302 = vsel %vm2180, %v2252, 0.0
  %v2303 = vsel %vm2181, %v2253, 0.0
  %v2304 = vsel %vm2182, %v2254, 0.0
  %v2305 = vsel %vm2183, %v2255, 0.0
  %v2306 = vsel %vm2184, %v2256, 0.0
  %v2307 = vsel %vm2185, %v2257, 0.0
  %v2308 = vsel %vm2186, %v2258, 0.0
  %v2309 = vsel %vm2187, %v2259, 0.0
  %v2310 = vsel %vm2188, %v2260, 0.0
  %v2311 = vsel %vm2189, %v2261, 0.0
  %v2312 = vadd.f32 %v2156, %v2288
  %v2313 = vadd.f32 %v2157, %v2289
  %v2314 = vadd.f32 %v2158, %v2290
  %v2315 = vadd.f32 %v2159, %v2291
  %v2316 = vadd.f32 %v2160, %v2292
  %v2317 = vadd.f32 %v2161, %v2293
  %v2318 = vadd.f32 %v2162, %v2294
  %v2319 = vadd.f32 %v2163, %v2295
  %v2320 = vadd.f32 %v2164, %v2296
  %v2321 = vadd.f32 %v2165, %v2297
  %v2322 = vadd.f32 %v2166, %v2298
  %v2323 = vadd.f32 %v2167, %v2299
  %v2324 = vadd.f32 %v2168, %v2300
  %v2325 = vadd.f32 %v2169, %v2301
  %v2326 = vadd.f32 %v2170, %v2302
  %v2327 = vadd.f32 %v2171, %v2303
  %v2328 = vadd.f32 %v2172, %v2304
  %v2329 = vadd.f32 %v2173, %v2305
  %v2330 = vadd.f32 %v2174, %v2306
  %v2331 = vadd.f32 %v2175, %v2307
  %v2332 = vadd.f32 %v2176, %v2308
  %v2333 = vadd.f32 %v2177, %v2309
  %v2334 = vadd.f32 %v2178, %v2310
  %v2335 = vadd.f32 %v2179, %v2311
  %v2336 = vadd.f32 %v2312, %v1997
  %v2337 = vadd.f32 %v2313, %v1998
  %v2338 = vadd.f32 %v2314, %v1999
  %v2339 = vadd.f32 %v2315, %v2000
  %v2340 = vadd.f32 %v2316, %v2001
  %v2341 = vadd.f32 %v2317, %v2002
  %v2342 = vadd.f32 %v2318, %v2003
  %v2343 = vadd.f32 %v2319, %v2004
  %v2344 = vadd.f32 %v2320, %v2005
  %v2345 = vadd.f32 %v2321, %v2006
  %v2346 = vadd.f32 %v2322, %v2007
  %v2347 = vadd.f32 %v2323, %v2008
  %v2348 = vadd.f32 %v2324, %v2009
  %v2349 = vadd.f32 %v2325, %v2010
  %v2350 = vadd.f32 %v2326, %v2011
  %v2351 = vadd.f32 %v2327, %v2012
  %v2352 = vadd.f32 %v2328, %v2013
  %v2353 = vadd.f32 %v2329, %v2014
  %v2354 = vadd.f32 %v2330, %v2015
  %v2355 = vadd.f32 %v2331, %v2016
  %v2356 = vadd.f32 %v2332, %v2017
  %v2357 = vadd.f32 %v2333, %v2018
  %v2358 = vadd.f32 %v2334, %v2019
  %v2359 = vadd.f32 %v2335, %v2020
  %vm2360 = vcmp.lt.s32.totalorder %v779, 15
  %vm2361 = vcmp.lt.s32.totalorder %v780, 15
  %vm2362 = vcmp.lt.s32.totalorder %v781, 15
  %vm2363 = vcmp.lt.s32.totalorder %v782, 15
  %vm2364 = vcmp.lt.s32.totalorder %v783, 15
  %vm2365 = vcmp.lt.s32.totalorder %v784, 15
  %vm2366 = vcmp.lt.s32.totalorder %v785, 15
  %vm2367 = vcmp.lt.s32.totalorder %v786, 15
  %vm2368 = vcmp.lt.s32.totalorder %v787, 15
  %vm2369 = vcmp.lt.s32.totalorder %v788, 15
  %2370 = vrot.lane.b32.xlu0 %v1997, 127
  %v2371 = vpop.permute.xlu0 %2370
  %2372 = vrot.lane.b32.xlu0 %v1998, 127
  %v2373 = vpop.permute.xlu0 %2372
  %2374 = vrot.lane.b32.xlu0 %v1999, 127
  %v2375 = vpop.permute.xlu0 %2374
  %2376 = vrot.lane.b32.xlu0 %v2000, 127
  %v2377 = vpop.permute.xlu0 %2376
  %2378 = vrot.lane.b32.xlu0 %v2001, 127
  %v2379 = vpop.permute.xlu0 %2378
  %2380 = vrot.lane.b32.xlu0 %v2002, 127
  %v2381 = vpop.permute.xlu0 %2380
  %2382 = vrot.lane.b32.xlu0 %v2003, 127
  %v2383 = vpop.permute.xlu0 %2382
  %2384 = vrot.lane.b32.xlu0 %v2004, 127
  %v2385 = vpop.permute.xlu0 %2384
  %2386 = vrot.lane.b32.xlu0 %v2005, 127
  %v2387 = vpop.permute.xlu0 %2386
  %2388 = vrot.lane.b32.xlu0 %v2006, 127
  %v2389 = vpop.permute.xlu0 %2388
  %2390 = vrot.lane.b32.xlu0 %v2007, 127
  %v2391 = vpop.permute.xlu0 %2390
  %2392 = vrot.lane.b32.xlu0 %v2008, 127
  %v2393 = vpop.permute.xlu0 %2392
  %2394 = vrot.lane.b32.xlu0 %v2009, 127
  %v2395 = vpop.permute.xlu0 %2394
  %2396 = vrot.lane.b32.xlu0 %v2010, 127
  %v2397 = vpop.permute.xlu0 %2396
  %2398 = vrot.lane.b32.xlu0 %v2011, 127
  %v2399 = vpop.permute.xlu0 %2398
  %2400 = vrot.lane.b32.xlu0 %v2012, 127
  %v2401 = vpop.permute.xlu0 %2400
  %2402 = vrot.lane.b32.xlu0 %v2013, 127
  %v2403 = vpop.permute.xlu0 %2402
  %2404 = vrot.lane.b32.xlu0 %v2014, 127
  %v2405 = vpop.permute.xlu0 %2404
  %2406 = vrot.lane.b32.xlu0 %v2015, 127
  %v2407 = vpop.permute.xlu0 %2406
  %2408 = vrot.lane.b32.xlu0 %v2016, 127
  %v2409 = vpop.permute.xlu0 %2408
  %2410 = vrot.lane.b32.xlu0 %v2017, 127
  %v2411 = vpop.permute.xlu0 %2410
  %2412 = vrot.lane.b32.xlu0 %v2018, 127
  %v2413 = vpop.permute.xlu0 %2412
  %2414 = vrot.lane.b32.xlu0 %v2019, 127
  %v2415 = vpop.permute.xlu0 %2414
  %2416 = vrot.lane.b32.xlu0 %v2020, 127
  %v2417 = vpop.permute.xlu0 %2416
  %v2418 = vsel %vm186, %v2371, %v2373
  %v2419 = vsel %vm186, %v2373, %v2375
  %v2420 = vsel %vm186, %v2375, %v2377
  %v2421 = vsel %vm186, %v2377, %v2379
  %v2422 = vsel %vm186, %v2379, %v2381
  %v2423 = vsel %vm186, %v2381, %v2383
  %v2424 = vsel %vm186, %v2383, %v2385
  %v2425 = vsel %vm186, %v2385, %v2387
  %v2426 = vsel %vm186, %v2387, %v2389
  %v2427 = vsel %vm186, %v2389, %v2391
  %v2428 = vsel %vm186, %v2391, %v2393
  %v2429 = vsel %vm186, %v2395, %v2397
  %v2430 = vsel %vm186, %v2397, %v2399
  %v2431 = vsel %vm186, %v2399, %v2401
  %v2432 = vsel %vm186, %v2401, %v2403
  %v2433 = vsel %vm186, %v2403, %v2405
  %v2434 = vsel %vm186, %v2405, %v2407
  %v2435 = vsel %vm186, %v2407, %v2409
  %v2436 = vsel %vm186, %v2409, %v2411
  %v2437 = vsel %vm186, %v2411, %v2413
  %v2438 = vsel %vm186, %v2413, %v2415
  %v2439 = vsel %vm186, %v2415, %v2417
  %v2466 = vsel %vm186, %v2393, %v2371
  %v2467 = vsel %vm186, %v2417, %v2395
  %v2468 = vsel %vm176, %v2418, 0.0
  %v2469 = vsel %vm177, %v2419, 0.0
  %v2470 = vsel %vm2360, %v2420, 0.0
  %v2471 = vsel %vm2361, %v2421, 0.0
  %v2472 = vsel %vm2362, %v2422, 0.0
  %v2473 = vsel %vm2363, %v2423, 0.0
  %v2474 = vsel %vm2364, %v2424, 0.0
  %v2475 = vsel %vm2365, %v2425, 0.0
  %v2476 = vsel %vm2366, %v2426, 0.0
  %v2477 = vsel %vm2367, %v2427, 0.0
  %v2478 = vsel %vm2368, %v2428, 0.0
  %v2479 = vsel %vm2369, %v2466, 0.0
  %v2480 = vsel %vm176, %v2429, 0.0
  %v2481 = vsel %vm177, %v2430, 0.0
  %v2482 = vsel %vm2360, %v2431, 0.0
  %v2483 = vsel %vm2361, %v2432, 0.0
  %v2484 = vsel %vm2362, %v2433, 0.0
  %v2485 = vsel %vm2363, %v2434, 0.0
  %v2486 = vsel %vm2364, %v2435, 0.0
  %v2487 = vsel %vm2365, %v2436, 0.0
  %v2488 = vsel %vm2366, %v2437, 0.0
  %v2489 = vsel %vm2367, %v2438, 0.0
  %v2490 = vsel %vm2368, %v2439, 0.0
  %v2491 = vsel %vm2369, %v2467, 0.0
  %v2492 = vadd.f32 %v2336, %v2468
  %v2493 = vadd.f32 %v2337, %v2469
  %v2494 = vadd.f32 %v2338, %v2470
  %v2495 = vadd.f32 %v2339, %v2471
  %v2496 = vadd.f32 %v2340, %v2472
  %v2497 = vadd.f32 %v2341, %v2473
  %v2498 = vadd.f32 %v2342, %v2474
  %v2499 = vadd.f32 %v2343, %v2475
  %v2500 = vadd.f32 %v2344, %v2476
  %v2501 = vadd.f32 %v2345, %v2477
  %v2502 = vadd.f32 %v2346, %v2478
  %v2503 = vadd.f32 %v2347, %v2479
  %v2504 = vadd.f32 %v2348, %v2480
  %v2505 = vadd.f32 %v2349, %v2481
  %v2506 = vadd.f32 %v2350, %v2482
  %v2507 = vadd.f32 %v2351, %v2483
  %v2508 = vadd.f32 %v2352, %v2484
  %v2509 = vadd.f32 %v2353, %v2485
  %v2510 = vadd.f32 %v2354, %v2486
  %v2511 = vadd.f32 %v2355, %v2487
  %v2512 = vadd.f32 %v2356, %v2488
  %v2513 = vadd.f32 %v2357, %v2489
  %v2514 = vadd.f32 %v2358, %v2490
  %v2515 = vadd.f32 %v2359, %v2491
  %vm2516 = vcmp.lt.s32.totalorder %v21, 14
  %vm2517 = vcmp.lt.s32.totalorder %v22, 14
  %vm2518 = vcmp.lt.s32.totalorder %v779, 14
  %vm2519 = vcmp.lt.s32.totalorder %v780, 14
  %vm2520 = vcmp.lt.s32.totalorder %v781, 14
  %vm2521 = vcmp.lt.s32.totalorder %v782, 14
  %vm2522 = vcmp.lt.s32.totalorder %v783, 14
  %vm2523 = vcmp.lt.s32.totalorder %v784, 14
  %vm2524 = vcmp.lt.s32.totalorder %v785, 14
  %vm2525 = vcmp.lt.s32.totalorder %v786, 14
  %vm2526 = vcmp.lt.s32.totalorder %v787, 14
  %vm2527 = vcmp.lt.s32.totalorder %v788, 14
  %2528 = vrot.lane.b32.xlu0 %v1997, 126
  %v2529 = vpop.permute.xlu0 %2528
  %2530 = vrot.lane.b32.xlu0 %v1998, 126
  %v2531 = vpop.permute.xlu0 %2530
  %2532 = vrot.lane.b32.xlu0 %v1999, 126
  %v2533 = vpop.permute.xlu0 %2532
  %2534 = vrot.lane.b32.xlu0 %v2000, 126
  %v2535 = vpop.permute.xlu0 %2534
  %2536 = vrot.lane.b32.xlu0 %v2001, 126
  %v2537 = vpop.permute.xlu0 %2536
  %2538 = vrot.lane.b32.xlu0 %v2002, 126
  %v2539 = vpop.permute.xlu0 %2538
  %2540 = vrot.lane.b32.xlu0 %v2003, 126
  %v2541 = vpop.permute.xlu0 %2540
  %2542 = vrot.lane.b32.xlu0 %v2004, 126
  %v2543 = vpop.permute.xlu0 %2542
  %2544 = vrot.lane.b32.xlu0 %v2005, 126
  %v2545 = vpop.permute.xlu0 %2544
  %2546 = vrot.lane.b32.xlu0 %v2006, 126
  %v2547 = vpop.permute.xlu0 %2546
  %2548 = vrot.lane.b32.xlu0 %v2007, 126
  %v2549 = vpop.permute.xlu0 %2548
  %2550 = vrot.lane.b32.xlu0 %v2008, 126
  %v2551 = vpop.permute.xlu0 %2550
  %2552 = vrot.lane.b32.xlu0 %v2009, 126
  %v2553 = vpop.permute.xlu0 %2552
  %2554 = vrot.lane.b32.xlu0 %v2010, 126
  %v2555 = vpop.permute.xlu0 %2554
  %2556 = vrot.lane.b32.xlu0 %v2011, 126
  %v2557 = vpop.permute.xlu0 %2556
  %2558 = vrot.lane.b32.xlu0 %v2012, 126
  %v2559 = vpop.permute.xlu0 %2558
  %2560 = vrot.lane.b32.xlu0 %v2013, 126
  %v2561 = vpop.permute.xlu0 %2560
  %2562 = vrot.lane.b32.xlu0 %v2014, 126
  %v2563 = vpop.permute.xlu0 %2562
  %2564 = vrot.lane.b32.xlu0 %v2015, 126
  %v2565 = vpop.permute.xlu0 %2564
  %2566 = vrot.lane.b32.xlu0 %v2016, 126
  %v2567 = vpop.permute.xlu0 %2566
  %2568 = vrot.lane.b32.xlu0 %v2017, 126
  %v2569 = vpop.permute.xlu0 %2568
  %2570 = vrot.lane.b32.xlu0 %v2018, 126
  %v2571 = vpop.permute.xlu0 %2570
  %2572 = vrot.lane.b32.xlu0 %v2019, 126
  %v2573 = vpop.permute.xlu0 %2572
  %2574 = vrot.lane.b32.xlu0 %v2020, 126
  %v2575 = vpop.permute.xlu0 %2574
  %vm2576 = vcmask 1031168
  %v2577 = vsel %vm2576, %v2529, %v2531
  %v2578 = vsel %vm2576, %v2531, %v2533
  %v2579 = vsel %vm2576, %v2533, %v2535
  %v2580 = vsel %vm2576, %v2535, %v2537
  %v2581 = vsel %vm2576, %v2537, %v2539
  %v2582 = vsel %vm2576, %v2539, %v2541
  %v2583 = vsel %vm2576, %v2541, %v2543
  %v2584 = vsel %vm2576, %v2543, %v2545
  %v2585 = vsel %vm2576, %v2545, %v2547
  %v2586 = vsel %vm2576, %v2547, %v2549
  %v2587 = vsel %vm2576, %v2549, %v2551
  %v2588 = vsel %vm2576, %v2553, %v2555
  %v2589 = vsel %vm2576, %v2555, %v2557
  %v2590 = vsel %vm2576, %v2557, %v2559
  %v2591 = vsel %vm2576, %v2559, %v2561
  %v2592 = vsel %vm2576, %v2561, %v2563
  %v2593 = vsel %vm2576, %v2563, %v2565
  %v2594 = vsel %vm2576, %v2565, %v2567
  %v2595 = vsel %vm2576, %v2567, %v2569
  %v2596 = vsel %vm2576, %v2569, %v2571
  %v2597 = vsel %vm2576, %v2571, %v2573
  %v2598 = vsel %vm2576, %v2573, %v2575
  %v2625 = vsel %vm2576, %v2551, %v2529
  %v2626 = vsel %vm2576, %v2575, %v2553
  %v2627 = vsel %vm2516, %v2577, 0.0
  %v2628 = vsel %vm2517, %v2578, 0.0
  %v2629 = vsel %vm2518, %v2579, 0.0
  %v2630 = vsel %vm2519, %v2580, 0.0
  %v2631 = vsel %vm2520, %v2581, 0.0
  %v2632 = vsel %vm2521, %v2582, 0.0
  %v2633 = vsel %vm2522, %v2583, 0.0
  %v2634 = vsel %vm2523, %v2584, 0.0
  %v2635 = vsel %vm2524, %v2585, 0.0
  %v2636 = vsel %vm2525, %v2586, 0.0
  %v2637 = vsel %vm2526, %v2587, 0.0
  %v2638 = vsel %vm2527, %v2625, 0.0
  %v2639 = vsel %vm2516, %v2588, 0.0
  %v2640 = vsel %vm2517, %v2589, 0.0
  %v2641 = vsel %vm2518, %v2590, 0.0
  %v2642 = vsel %vm2519, %v2591, 0.0
  %v2643 = vsel %vm2520, %v2592, 0.0
  %v2644 = vsel %vm2521, %v2593, 0.0
  %v2645 = vsel %vm2522, %v2594, 0.0
  %v2646 = vsel %vm2523, %v2595, 0.0
  %v2647 = vsel %vm2524, %v2596, 0.0
  %v2648 = vsel %vm2525, %v2597, 0.0
  %v2649 = vsel %vm2526, %v2598, 0.0
  %v2650 = vsel %vm2527, %v2626, 0.0
  %v2651 = vadd.f32 %v2492, %v2627
  %v2652 = vadd.f32 %v2493, %v2628
  %v2653 = vadd.f32 %v2494, %v2629
  %v2654 = vadd.f32 %v2495, %v2630
  %v2655 = vadd.f32 %v2496, %v2631
  %v2656 = vadd.f32 %v2497, %v2632
  %v2657 = vadd.f32 %v2498, %v2633
  %v2658 = vadd.f32 %v2499, %v2634
  %v2659 = vadd.f32 %v2500, %v2635
  %v2660 = vadd.f32 %v2501, %v2636
  %v2661 = vadd.f32 %v2502, %v2637
  %v2662 = vadd.f32 %v2503, %v2638
  %v2663 = vadd.f32 %v2504, %v2639
  %v2664 = vadd.f32 %v2505, %v2640
  %v2665 = vadd.f32 %v2506, %v2641
  %v2666 = vadd.f32 %v2507, %v2642
  %v2667 = vadd.f32 %v2508, %v2643
  %v2668 = vadd.f32 %v2509, %v2644
  %v2669 = vadd.f32 %v2510, %v2645
  %v2670 = vadd.f32 %v2511, %v2646
  %v2671 = vadd.f32 %v2512, %v2647
  %v2672 = vadd.f32 %v2513, %v2648
  %v2673 = vadd.f32 %v2514, %v2649
  %v2674 = vadd.f32 %v2515, %v2650
  %vm2675 = vcmp.eq.f32.partialorder %v2657, 0.0
  %vm2676 = vcmp.eq.f32.partialorder %v2658, 0.0
  %vm2677 = vcmp.eq.f32.partialorder %v2659, 0.0
  %vm2678 = vcmp.eq.f32.partialorder %v2660, 0.0
  %vm2679 = vcmp.eq.f32.partialorder %v2661, 0.0
  %vm2680 = vcmp.eq.f32.partialorder %v2662, 0.0
  %vm2681 = vcmp.eq.f32.partialorder %v2669, 0.0
  %vm2682 = vcmp.eq.f32.partialorder %v2670, 0.0
  %vm2683 = vcmp.eq.f32.partialorder %v2671, 0.0
  %vm2684 = vcmp.eq.f32.partialorder %v2672, 0.0
  %vm2685 = vcmp.eq.f32.partialorder %v2673, 0.0
  %vm2686 = vcmp.eq.f32.partialorder %v2674, 0.0
  %v2687 = vsel %vm2675, 1.0, %v2657
  %v2688 = vsel %vm2676, 1.0, %v2658
  %v2689 = vsel %vm2677, 1.0, %v2659
  %v2690 = vsel %vm2678, 1.0, %v2660
  %v2691 = vsel %vm2679, 1.0, %v2661
  %v2692 = vsel %vm2680, 1.0, %v2662
  %v2693 = vsel %vm2681, 1.0, %v2669
  %v2694 = vsel %vm2682, 1.0, %v2670
  %v2695 = vsel %vm2683, 1.0, %v2671
  %v2696 = vsel %vm2684, 1.0, %v2672
  %v2697 = vsel %vm2685, 1.0, %v2673
  %v2698 = vsel %vm2686, 1.0, %v2674
  %v2699 = vrcp.pop %v2687
  %v2700 = vmul.f32 %v2651, %v2699
  %v2701 = vrcp.pop %v2688
  %v2702 = vmul.f32 %v2652, %v2701
  %v2703 = vrcp.pop %v2689
  %v2704 = vmul.f32 %v2653, %v2703
  %v2705 = vrcp.pop %v2690
  %v2706 = vmul.f32 %v2654, %v2705
  %v2707 = vrcp.pop %v2691
  %v2708 = vmul.f32 %v2655, %v2707
  %v2709 = vrcp.pop %v2692
  %v2710 = vmul.f32 %v2656, %v2709
  %v2711 = vrcp.pop %v2693
  %v2712 = vmul.f32 %v2663, %v2711
  %v2713 = vrcp.pop %v2694
  %v2714 = vmul.f32 %v2664, %v2713
  %v2715 = vrcp.pop %v2695
  %v2716 = vmul.f32 %v2665, %v2715
  %v2717 = vrcp.pop %v2696
  %v2718 = vmul.f32 %v2666, %v2717
  %v2719 = vrcp.pop %v2697
  %v2720 = vmul.f32 %v2667, %v2719
  %v2721 = vrcp.pop %v2698
  %v2722 = vmul.f32 %v2668, %v2721
  %2723 = vst [vmem:[%s2] sm:$0xff] %v2700
  %2724 = vst [vmem:[%s2 + $0x8] sm:$0xff] %v2702
  %2725 = vst [vmem:[%s2 + $0x10] sm:$0xff] %v2704
  %2726 = vst [vmem:[%s2 + $0x18] sm:$0xff] %v2706
  %2727 = vst [vmem:[%s2 + $0x20] sm:$0xff] %v2708
  %2728 = vst [vmem:[%s2 + $0x28] sm:$0xff] %v2710
  %2729 = vst [vmem:[%s2 + $0x30] sm:$0xff] %v2712
  %2730 = vst [vmem:[%s2 + $0x38] sm:$0xff] %v2714
  %2731 = vst [vmem:[%s2 + $0x40] sm:$0xff] %v2716
  %2732 = vst [vmem:[%s2 + $0x48] sm:$0xff] %v2718
  %2733 = vst [vmem:[%s2 + $0x50] sm:$0xff] %v2720
  %2734 = vst [vmem:[%s2 + $0x58] sm:$0xff] %v2722
  %v2735 = vmul.f32 %v2700, %v2700
  %v2736 = vmul.f32 %v2702, %v2702
  %v2737 = vmul.f32 %v2704, %v2704
  %v2738 = vmul.f32 %v2706, %v2706
  %v2739 = vmul.f32 %v2708, %v2708
  %v2740 = vmul.f32 %v2710, %v2710
  %v2741 = vmul.f32 %v2712, %v2712
  %v2742 = vmul.f32 %v2714, %v2714
  %v2743 = vmul.f32 %v2716, %v2716
  %v2744 = vmul.f32 %v2718, %v2718
  %v2745 = vmul.f32 %v2720, %v2720
  %v2746 = vmul.f32 %v2722, %v2722
  %2749 = vrot.lane.b32.xlu0 %v2740, 2
  %v2750 = vpop.permute.xlu0 %2749
  %2751 = vrot.lane.b32.xlu0 %v2746, 2
  %v2752 = vpop.permute.xlu0 %2751
  %2777 = vrot.lane.b32.xlu0 %v2700, 2
  %v2778 = vpop.permute.xlu0 %2777
  %2779 = vrot.lane.b32.xlu0 %v2702, 2
  %v2780 = vpop.permute.xlu0 %2779
  %2781 = vrot.lane.b32.xlu0 %v2704, 2
  %v2782 = vpop.permute.xlu0 %2781
  %2783 = vrot.lane.b32.xlu0 %v2706, 2
  %v2784 = vpop.permute.xlu0 %2783
  %2785 = vrot.lane.b32.xlu0 %v2708, 2
  %v2786 = vpop.permute.xlu0 %2785
  %2787 = vrot.lane.b32.xlu0 %v2710, 2
  %v2788 = vpop.permute.xlu0 %2787
  %2789 = vrot.lane.b32.xlu0 %v2735, 2
  %v2790 = vpop.permute.xlu0 %2789
  %2791 = vrot.lane.b32.xlu0 %v2736, 2
  %v2792 = vpop.permute.xlu0 %2791
  %2793 = vrot.lane.b32.xlu0 %v2737, 2
  %v2794 = vpop.permute.xlu0 %2793
  %2795 = vrot.lane.b32.xlu0 %v2738, 2
  %v2796 = vpop.permute.xlu0 %2795
  %2797 = vrot.lane.b32.xlu0 %v2739, 2
  %v2798 = vpop.permute.xlu0 %2797
  %2799 = vrot.lane.b32.xlu0 %v2712, 2
  %v2800 = vpop.permute.xlu0 %2799
  %2801 = vrot.lane.b32.xlu0 %v2714, 2
  %v2802 = vpop.permute.xlu0 %2801
  %2803 = vrot.lane.b32.xlu0 %v2716, 2
  %v2804 = vpop.permute.xlu0 %2803
  %2805 = vrot.lane.b32.xlu0 %v2718, 2
  %v2806 = vpop.permute.xlu0 %2805
  %2807 = vrot.lane.b32.xlu0 %v2720, 2
  %v2808 = vpop.permute.xlu0 %2807
  %2809 = vrot.lane.b32.xlu0 %v2722, 2
  %v2810 = vpop.permute.xlu0 %2809
  %2811 = vrot.lane.b32.xlu0 %v2741, 2
  %v2812 = vpop.permute.xlu0 %2811
  %2813 = vrot.lane.b32.xlu0 %v2742, 2
  %v2814 = vpop.permute.xlu0 %2813
  %2815 = vrot.lane.b32.xlu0 %v2743, 2
  %v2816 = vpop.permute.xlu0 %2815
  %2817 = vrot.lane.b32.xlu0 %v2744, 2
  %v2818 = vpop.permute.xlu0 %2817
  %2819 = vrot.lane.b32.xlu0 %v2745, 2
  %v2820 = vpop.permute.xlu0 %2819
  %v2821 = vsel %vm2107, %v2778, %v2780
  %v2822 = vsel %vm2107, %v2780, %v2782
  %v2823 = vsel %vm2107, %v2782, %v2784
  %v2824 = vsel %vm2107, %v2784, %v2786
  %v2825 = vsel %vm2107, %v2786, %v2788
  %v2826 = vsel %vm2107, %v2788, %v2790
  %v2827 = vsel %vm2107, %v2790, %v2792
  %v2828 = vsel %vm2107, %v2792, %v2794
  %v2829 = vsel %vm2107, %v2794, %v2796
  %v2830 = vsel %vm2107, %v2796, %v2798
  %v2831 = vsel %vm2107, %v2798, %v2750
  %v2832 = vsel %vm2107, %v2800, %v2802
  %v2833 = vsel %vm2107, %v2802, %v2804
  %v2834 = vsel %vm2107, %v2804, %v2806
  %v2835 = vsel %vm2107, %v2806, %v2808
  %v2836 = vsel %vm2107, %v2808, %v2810
  %v2837 = vsel %vm2107, %v2810, %v2812
  %v2838 = vsel %vm2107, %v2812, %v2814
  %v2839 = vsel %vm2107, %v2814, %v2816
  %v2840 = vsel %vm2107, %v2816, %v2818
  %v2841 = vsel %vm2107, %v2818, %v2820
  %v2842 = vsel %vm2107, %v2820, %v2752
  %v2867 = vsel %vm2107, %v2750, %v2778
  %v2868 = vsel %vm2107, %v2752, %v2800
  %v2869 = vsel %vm2021, %v2867, 0.0
  %v2870 = vsel %vm2022, %v2821, 0.0
  %v2871 = vsel %vm2023, %v2822, 0.0
  %v2872 = vsel %vm2024, %v2823, 0.0
  %v2873 = vsel %vm2025, %v2824, 0.0
  %v2874 = vsel %vm2026, %v2825, 0.0
  %v2875 = vsel %vm2027, %v2826, 0.0
  %v2876 = vsel %vm2028, %v2827, 0.0
  %v2877 = vsel %vm2029, %v2828, 0.0
  %v2878 = vsel %vm2030, %v2829, 0.0
  %v2879 = vsel %vm2031, %v2830, 0.0
  %v2880 = vsel %vm2032, %v2831, 0.0
  %v2881 = vsel %vm2021, %v2868, 0.0
  %v2882 = vsel %vm2022, %v2832, 0.0
  %v2883 = vsel %vm2023, %v2833, 0.0
  %v2884 = vsel %vm2024, %v2834, 0.0
  %v2885 = vsel %vm2025, %v2835, 0.0
  %v2886 = vsel %vm2026, %v2836, 0.0
  %v2887 = vsel %vm2027, %v2837, 0.0
  %v2888 = vsel %vm2028, %v2838, 0.0
  %v2889 = vsel %vm2029, %v2839, 0.0
  %v2890 = vsel %vm2030, %v2840, 0.0
  %v2891 = vsel %vm2031, %v2841, 0.0
  %v2892 = vsel %vm2032, %v2842, 0.0
  %2893 = vrot.lane.b32.xlu0 %v2740, 1
  %v2894 = vpop.permute.xlu0 %2893
  %2895 = vrot.lane.b32.xlu0 %v2746, 1
  %v2896 = vpop.permute.xlu0 %2895
  %2899 = vrot.lane.b32.xlu0 %v2700, 1
  %v2900 = vpop.permute.xlu0 %2899
  %2901 = vrot.lane.b32.xlu0 %v2702, 1
  %v2902 = vpop.permute.xlu0 %2901
  %2903 = vrot.lane.b32.xlu0 %v2704, 1
  %v2904 = vpop.permute.xlu0 %2903
  %2905 = vrot.lane.b32.xlu0 %v2706, 1
  %v2906 = vpop.permute.xlu0 %2905
  %2907 = vrot.lane.b32.xlu0 %v2708, 1
  %v2908 = vpop.permute.xlu0 %2907
  %2909 = vrot.lane.b32.xlu0 %v2710, 1
  %v2910 = vpop.permute.xlu0 %2909
  %2911 = vrot.lane.b32.xlu0 %v2735, 1
  %v2912 = vpop.permute.xlu0 %2911
  %2913 = vrot.lane.b32.xlu0 %v2736, 1
  %v2914 = vpop.permute.xlu0 %2913
  %2915 = vrot.lane.b32.xlu0 %v2737, 1
  %v2916 = vpop.permute.xlu0 %2915
  %2917 = vrot.lane.b32.xlu0 %v2738, 1
  %v2918 = vpop.permute.xlu0 %2917
  %2919 = vrot.lane.b32.xlu0 %v2739, 1
  %v2920 = vpop.permute.xlu0 %2919
  %2921 = vrot.lane.b32.xlu0 %v2712, 1
  %v2922 = vpop.permute.xlu0 %2921
  %2923 = vrot.lane.b32.xlu0 %v2714, 1
  %v2924 = vpop.permute.xlu0 %2923
  %2925 = vrot.lane.b32.xlu0 %v2716, 1
  %v2926 = vpop.permute.xlu0 %2925
  %2927 = vrot.lane.b32.xlu0 %v2718, 1
  %v2928 = vpop.permute.xlu0 %2927
  %2929 = vrot.lane.b32.xlu0 %v2720, 1
  %v2930 = vpop.permute.xlu0 %2929
  %2931 = vrot.lane.b32.xlu0 %v2722, 1
  %v2932 = vpop.permute.xlu0 %2931
  %2933 = vrot.lane.b32.xlu0 %v2741, 1
  %v2934 = vpop.permute.xlu0 %2933
  %2935 = vrot.lane.b32.xlu0 %v2742, 1
  %v2936 = vpop.permute.xlu0 %2935
  %2937 = vrot.lane.b32.xlu0 %v2743, 1
  %v2938 = vpop.permute.xlu0 %2937
  %2939 = vrot.lane.b32.xlu0 %v2744, 1
  %v2940 = vpop.permute.xlu0 %2939
  %2941 = vrot.lane.b32.xlu0 %v2745, 1
  %v2942 = vpop.permute.xlu0 %2941
  %v2943 = vsel %vm159, %v2900, %v2902
  %v2944 = vsel %vm159, %v2902, %v2904
  %v2945 = vsel %vm159, %v2904, %v2906
  %v2946 = vsel %vm159, %v2906, %v2908
  %v2947 = vsel %vm159, %v2908, %v2910
  %v2948 = vsel %vm159, %v2910, %v2912
  %v2949 = vsel %vm159, %v2912, %v2914
  %v2950 = vsel %vm159, %v2914, %v2916
  %v2951 = vsel %vm159, %v2916, %v2918
  %v2952 = vsel %vm159, %v2918, %v2920
  %v2953 = vsel %vm159, %v2920, %v2894
  %v2954 = vsel %vm159, %v2922, %v2924
  %v2955 = vsel %vm159, %v2924, %v2926
  %v2956 = vsel %vm159, %v2926, %v2928
  %v2957 = vsel %vm159, %v2928, %v2930
  %v2958 = vsel %vm159, %v2930, %v2932
  %v2959 = vsel %vm159, %v2932, %v2934
  %v2960 = vsel %vm159, %v2934, %v2936
  %v2961 = vsel %vm159, %v2936, %v2938
  %v2962 = vsel %vm159, %v2938, %v2940
  %v2963 = vsel %vm159, %v2940, %v2942
  %v2964 = vsel %vm159, %v2942, %v2896
  %v2989 = vsel %vm159, %v2894, %v2900
  %v2990 = vsel %vm159, %v2896, %v2922
  %v2991 = vsel %vm143, %v2989, 0.0
  %v2992 = vsel %vm144, %v2943, 0.0
  %v2993 = vsel %vm2180, %v2944, 0.0
  %v2994 = vsel %vm2181, %v2945, 0.0
  %v2995 = vsel %vm2182, %v2946, 0.0
  %v2996 = vsel %vm2183, %v2947, 0.0
  %v2997 = vsel %vm2184, %v2948, 0.0
  %v2998 = vsel %vm2185, %v2949, 0.0
  %v2999 = vsel %vm2186, %v2950, 0.0
  %v3000 = vsel %vm2187, %v2951, 0.0
  %v3001 = vsel %vm2188, %v2952, 0.0
  %v3002 = vsel %vm2189, %v2953, 0.0
  %v3003 = vsel %vm143, %v2990, 0.0
  %v3004 = vsel %vm144, %v2954, 0.0
  %v3005 = vsel %vm2180, %v2955, 0.0
  %v3006 = vsel %vm2181, %v2956, 0.0
  %v3007 = vsel %vm2182, %v2957, 0.0
  %v3008 = vsel %vm2183, %v2958, 0.0
  %v3009 = vsel %vm2184, %v2959, 0.0
  %v3010 = vsel %vm2185, %v2960, 0.0
  %v3011 = vsel %vm2186, %v2961, 0.0
  %v3012 = vsel %vm2187, %v2962, 0.0
  %v3013 = vsel %vm2188, %v2963, 0.0
  %v3014 = vsel %vm2189, %v2964, 0.0
  %3015 = vrot.lane.b32.xlu0 %v2700, 127
  %v3016 = vpop.permute.xlu0 %3015
  %3017 = vrot.lane.b32.xlu0 %v2702, 127
  %v3018 = vpop.permute.xlu0 %3017
  %3019 = vrot.lane.b32.xlu0 %v2704, 127
  %v3020 = vpop.permute.xlu0 %3019
  %3021 = vrot.lane.b32.xlu0 %v2706, 127
  %v3022 = vpop.permute.xlu0 %3021
  %3023 = vrot.lane.b32.xlu0 %v2708, 127
  %v3024 = vpop.permute.xlu0 %3023
  %3025 = vrot.lane.b32.xlu0 %v2710, 127
  %v3026 = vpop.permute.xlu0 %3025
  %3027 = vrot.lane.b32.xlu0 %v2735, 127
  %v3028 = vpop.permute.xlu0 %3027
  %3029 = vrot.lane.b32.xlu0 %v2736, 127
  %v3030 = vpop.permute.xlu0 %3029
  %3031 = vrot.lane.b32.xlu0 %v2737, 127
  %v3032 = vpop.permute.xlu0 %3031
  %3033 = vrot.lane.b32.xlu0 %v2738, 127
  %v3034 = vpop.permute.xlu0 %3033
  %3035 = vrot.lane.b32.xlu0 %v2739, 127
  %v3036 = vpop.permute.xlu0 %3035
  %3037 = vrot.lane.b32.xlu0 %v2740, 127
  %v3038 = vpop.permute.xlu0 %3037
  %3039 = vrot.lane.b32.xlu0 %v2712, 127
  %v3040 = vpop.permute.xlu0 %3039
  %3041 = vrot.lane.b32.xlu0 %v2714, 127
  %v3042 = vpop.permute.xlu0 %3041
  %3043 = vrot.lane.b32.xlu0 %v2716, 127
  %v3044 = vpop.permute.xlu0 %3043
  %3045 = vrot.lane.b32.xlu0 %v2718, 127
  %v3046 = vpop.permute.xlu0 %3045
  %3047 = vrot.lane.b32.xlu0 %v2720, 127
  %v3048 = vpop.permute.xlu0 %3047
  %3049 = vrot.lane.b32.xlu0 %v2722, 127
  %v3050 = vpop.permute.xlu0 %3049
  %3051 = vrot.lane.b32.xlu0 %v2741, 127
  %v3052 = vpop.permute.xlu0 %3051
  %3053 = vrot.lane.b32.xlu0 %v2742, 127
  %v3054 = vpop.permute.xlu0 %3053
  %3055 = vrot.lane.b32.xlu0 %v2743, 127
  %v3056 = vpop.permute.xlu0 %3055
  %3057 = vrot.lane.b32.xlu0 %v2744, 127
  %v3058 = vpop.permute.xlu0 %3057
  %3059 = vrot.lane.b32.xlu0 %v2745, 127
  %v3060 = vpop.permute.xlu0 %3059
  %3061 = vrot.lane.b32.xlu0 %v2746, 127
  %v3062 = vpop.permute.xlu0 %3061
  %v3063 = vsel %vm186, %v3016, %v3018
  %v3064 = vsel %vm186, %v3018, %v3020
  %v3065 = vsel %vm186, %v3020, %v3022
  %v3066 = vsel %vm186, %v3022, %v3024
  %v3067 = vsel %vm186, %v3024, %v3026
  %v3068 = vsel %vm186, %v3026, %v3028
  %v3069 = vsel %vm186, %v3028, %v3030
  %v3070 = vsel %vm186, %v3030, %v3032
  %v3071 = vsel %vm186, %v3032, %v3034
  %v3072 = vsel %vm186, %v3034, %v3036
  %v3073 = vsel %vm186, %v3036, %v3038
  %v3074 = vsel %vm186, %v3040, %v3042
  %v3075 = vsel %vm186, %v3042, %v3044
  %v3076 = vsel %vm186, %v3044, %v3046
  %v3077 = vsel %vm186, %v3046, %v3048
  %v3078 = vsel %vm186, %v3048, %v3050
  %v3079 = vsel %vm186, %v3050, %v3052
  %v3080 = vsel %vm186, %v3052, %v3054
  %v3081 = vsel %vm186, %v3054, %v3056
  %v3082 = vsel %vm186, %v3056, %v3058
  %v3083 = vsel %vm186, %v3058, %v3060
  %v3084 = vsel %vm186, %v3060, %v3062
  %v3111 = vsel %vm186, %v3038, %v3016
  %v3112 = vsel %vm186, %v3062, %v3040
  %v3113 = vsel %vm176, %v3063, 0.0
  %v3114 = vsel %vm177, %v3064, 0.0
  %v3115 = vsel %vm2360, %v3065, 0.0
  %v3116 = vsel %vm2361, %v3066, 0.0
  %v3117 = vsel %vm2362, %v3067, 0.0
  %v3118 = vsel %vm2363, %v3068, 0.0
  %v3119 = vsel %vm2364, %v3069, 0.0
  %v3120 = vsel %vm2365, %v3070, 0.0
  %v3121 = vsel %vm2366, %v3071, 0.0
  %v3122 = vsel %vm2367, %v3072, 0.0
  %v3123 = vsel %vm2368, %v3073, 0.0
  %v3124 = vsel %vm2369, %v3111, 0.0
  %v3125 = vsel %vm176, %v3074, 0.0
  %v3126 = vsel %vm177, %v3075, 0.0
  %v3127 = vsel %vm2360, %v3076, 0.0
  %v3128 = vsel %vm2361, %v3077, 0.0
  %v3129 = vsel %vm2362, %v3078, 0.0
  %v3130 = vsel %vm2363, %v3079, 0.0
  %v3131 = vsel %vm2364, %v3080, 0.0
  %v3132 = vsel %vm2365, %v3081, 0.0
  %v3133 = vsel %vm2366, %v3082, 0.0
  %v3134 = vsel %vm2367, %v3083, 0.0
  %v3135 = vsel %vm2368, %v3084, 0.0
  %v3136 = vsel %vm2369, %v3112, 0.0
  %3137 = vrot.lane.b32.xlu0 %v2700, 126
  %v3138 = vpop.permute.xlu0 %3137
  %3139 = vrot.lane.b32.xlu0 %v2702, 126
  %v3140 = vpop.permute.xlu0 %3139
  %3141 = vrot.lane.b32.xlu0 %v2704, 126
  %v3142 = vpop.permute.xlu0 %3141
  %3143 = vrot.lane.b32.xlu0 %v2706, 126
  %v3144 = vpop.permute.xlu0 %3143
  %3145 = vrot.lane.b32.xlu0 %v2708, 126
  %v3146 = vpop.permute.xlu0 %3145
  %3147 = vrot.lane.b32.xlu0 %v2710, 126
  %v3148 = vpop.permute.xlu0 %3147
  %3149 = vrot.lane.b32.xlu0 %v2735, 126
  %v3150 = vpop.permute.xlu0 %3149
  %3151 = vrot.lane.b32.xlu0 %v2736, 126
  %v3152 = vpop.permute.xlu0 %3151
  %3153 = vrot.lane.b32.xlu0 %v2737, 126
  %v3154 = vpop.permute.xlu0 %3153
  %3155 = vrot.lane.b32.xlu0 %v2738, 126
  %v3156 = vpop.permute.xlu0 %3155
  %3157 = vrot.lane.b32.xlu0 %v2739, 126
  %v3158 = vpop.permute.xlu0 %3157
  %3159 = vrot.lane.b32.xlu0 %v2740, 126
  %v3160 = vpop.permute.xlu0 %3159
  %3161 = vrot.lane.b32.xlu0 %v2712, 126
  %v3162 = vpop.permute.xlu0 %3161
  %3163 = vrot.lane.b32.xlu0 %v2714, 126
  %v3164 = vpop.permute.xlu0 %3163
  %3165 = vrot.lane.b32.xlu0 %v2716, 126
  %v3166 = vpop.permute.xlu0 %3165
  %3167 = vrot.lane.b32.xlu0 %v2718, 126
  %v3168 = vpop.permute.xlu0 %3167
  %3169 = vrot.lane.b32.xlu0 %v2720, 126
  %v3170 = vpop.permute.xlu0 %3169
  %3171 = vrot.lane.b32.xlu0 %v2722, 126
  %v3172 = vpop.permute.xlu0 %3171
  %3173 = vrot.lane.b32.xlu0 %v2741, 126
  %v3174 = vpop.permute.xlu0 %3173
  %3175 = vrot.lane.b32.xlu0 %v2742, 126
  %v3176 = vpop.permute.xlu0 %3175
  %3177 = vrot.lane.b32.xlu0 %v2743, 126
  %v3178 = vpop.permute.xlu0 %3177
  %3179 = vrot.lane.b32.xlu0 %v2744, 126
  %v3180 = vpop.permute.xlu0 %3179
  %3181 = vrot.lane.b32.xlu0 %v2745, 126
  %v3182 = vpop.permute.xlu0 %3181
  %3183 = vrot.lane.b32.xlu0 %v2746, 126
  %v3184 = vpop.permute.xlu0 %3183
  %v3185 = vsel %vm2576, %v3138, %v3140
  %v3186 = vsel %vm2576, %v3140, %v3142
  %v3187 = vsel %vm2576, %v3142, %v3144
  %v3188 = vsel %vm2576, %v3144, %v3146
  %v3189 = vsel %vm2576, %v3146, %v3148
  %v3190 = vsel %vm2576, %v3148, %v3150
  %v3191 = vsel %vm2576, %v3150, %v3152
  %v3192 = vsel %vm2576, %v3152, %v3154
  %v3193 = vsel %vm2576, %v3154, %v3156
  %v3194 = vsel %vm2576, %v3156, %v3158
  %v3195 = vsel %vm2576, %v3158, %v3160
  %v3196 = vsel %vm2576, %v3162, %v3164
  %v3197 = vsel %vm2576, %v3164, %v3166
  %v3198 = vsel %vm2576, %v3166, %v3168
  %v3199 = vsel %vm2576, %v3168, %v3170
  %v3200 = vsel %vm2576, %v3170, %v3172
  %v3201 = vsel %vm2576, %v3172, %v3174
  %v3202 = vsel %vm2576, %v3174, %v3176
  %v3203 = vsel %vm2576, %v3176, %v3178
  %v3204 = vsel %vm2576, %v3178, %v3180
  %v3205 = vsel %vm2576, %v3180, %v3182
  %v3206 = vsel %vm2576, %v3182, %v3184
  %v3233 = vsel %vm2576, %v3160, %v3138
  %v3234 = vsel %vm2576, %v3184, %v3162
  %v3235 = vsel %vm2516, %v3185, 0.0
  %v3236 = vsel %vm2517, %v3186, 0.0
  %v3237 = vsel %vm2518, %v3187, 0.0
  %v3238 = vsel %vm2519, %v3188, 0.0
  %v3239 = vsel %vm2520, %v3189, 0.0
  %v3240 = vsel %vm2521, %v3190, 0.0
  %v3241 = vsel %vm2522, %v3191, 0.0
  %v3242 = vsel %vm2523, %v3192, 0.0
  %v3243 = vsel %vm2524, %v3193, 0.0
  %v3244 = vsel %vm2525, %v3194, 0.0
  %v3245 = vsel %vm2526, %v3195, 0.0
  %v3246 = vsel %vm2527, %v3233, 0.0
  %v3247 = vsel %vm2516, %v3196, 0.0
  %v3248 = vsel %vm2517, %v3197, 0.0
  %v3249 = vsel %vm2518, %v3198, 0.0
  %v3250 = vsel %vm2519, %v3199, 0.0
  %v3251 = vsel %vm2520, %v3200, 0.0
  %v3252 = vsel %vm2521, %v3201, 0.0
  %v3253 = vsel %vm2522, %v3202, 0.0
  %v3254 = vsel %vm2523, %v3203, 0.0
  %v3255 = vsel %vm2524, %v3204, 0.0
  %v3256 = vsel %vm2525, %v3205, 0.0
  %v3257 = vsel %vm2526, %v3206, 0.0
  %v3258 = vsel %vm2527, %v3234, 0.0
  %v3259 = vadd.f32 %v2869, %v2991
  %v3260 = vadd.f32 %v2870, %v2992
  %v3261 = vadd.f32 %v2871, %v2993
  %v3262 = vadd.f32 %v2872, %v2994
  %v3263 = vadd.f32 %v2873, %v2995
  %v3264 = vadd.f32 %v2874, %v2996
  %v3265 = vadd.f32 %v2875, %v2997
  %v3266 = vadd.f32 %v2876, %v2998
  %v3267 = vadd.f32 %v2877, %v2999
  %v3268 = vadd.f32 %v2878, %v3000
  %v3269 = vadd.f32 %v2879, %v3001
  %v3270 = vadd.f32 %v2880, %v3002
  %v3271 = vadd.f32 %v2881, %v3003
  %v3272 = vadd.f32 %v2882, %v3004
  %v3273 = vadd.f32 %v2883, %v3005
  %v3274 = vadd.f32 %v2884, %v3006
  %v3275 = vadd.f32 %v2885, %v3007
  %v3276 = vadd.f32 %v2886, %v3008
  %v3277 = vadd.f32 %v2887, %v3009
  %v3278 = vadd.f32 %v2888, %v3010
  %v3279 = vadd.f32 %v2889, %v3011
  %v3280 = vadd.f32 %v2890, %v3012
  %v3281 = vadd.f32 %v2891, %v3013
  %v3282 = vadd.f32 %v2892, %v3014
  %v3283 = vadd.f32 %v3259, %v2700
  %v3284 = vadd.f32 %v3260, %v2702
  %v3285 = vadd.f32 %v3261, %v2704
  %v3286 = vadd.f32 %v3262, %v2706
  %v3287 = vadd.f32 %v3263, %v2708
  %v3288 = vadd.f32 %v3264, %v2710
  %v3289 = vadd.f32 %v3265, %v2735
  %v3290 = vadd.f32 %v3266, %v2736
  %v3291 = vadd.f32 %v3267, %v2737
  %v3292 = vadd.f32 %v3268, %v2738
  %v3293 = vadd.f32 %v3269, %v2739
  %v3294 = vadd.f32 %v3270, %v2740
  %v3295 = vadd.f32 %v3271, %v2712
  %v3296 = vadd.f32 %v3272, %v2714
  %v3297 = vadd.f32 %v3273, %v2716
  %v3298 = vadd.f32 %v3274, %v2718
  %v3299 = vadd.f32 %v3275, %v2720
  %v3300 = vadd.f32 %v3276, %v2722
  %v3301 = vadd.f32 %v3277, %v2741
  %v3302 = vadd.f32 %v3278, %v2742
  %v3303 = vadd.f32 %v3279, %v2743
  %v3304 = vadd.f32 %v3280, %v2744
  %v3305 = vadd.f32 %v3281, %v2745
  %v3306 = vadd.f32 %v3282, %v2746
  %v3307 = vadd.f32 %v3283, %v3113
  %v3308 = vadd.f32 %v3284, %v3114
  %v3309 = vadd.f32 %v3285, %v3115
  %v3310 = vadd.f32 %v3286, %v3116
  %v3311 = vadd.f32 %v3287, %v3117
  %v3312 = vadd.f32 %v3288, %v3118
  %v3313 = vadd.f32 %v3289, %v3119
  %v3314 = vadd.f32 %v3290, %v3120
  %v3315 = vadd.f32 %v3291, %v3121
  %v3316 = vadd.f32 %v3292, %v3122
  %v3317 = vadd.f32 %v3293, %v3123
  %v3318 = vadd.f32 %v3294, %v3124
  %v3319 = vadd.f32 %v3295, %v3125
  %v3320 = vadd.f32 %v3296, %v3126
  %v3321 = vadd.f32 %v3297, %v3127
  %v3322 = vadd.f32 %v3298, %v3128
  %v3323 = vadd.f32 %v3299, %v3129
  %v3324 = vadd.f32 %v3300, %v3130
  %v3325 = vadd.f32 %v3301, %v3131
  %v3326 = vadd.f32 %v3302, %v3132
  %v3327 = vadd.f32 %v3303, %v3133
  %v3328 = vadd.f32 %v3304, %v3134
  %v3329 = vadd.f32 %v3305, %v3135
  %v3330 = vadd.f32 %v3306, %v3136
  %v3331 = vadd.f32 %v3307, %v3235
  %v3332 = vadd.f32 %v3308, %v3236
  %v3333 = vadd.f32 %v3309, %v3237
  %v3334 = vadd.f32 %v3310, %v3238
  %v3335 = vadd.f32 %v3311, %v3239
  %v3336 = vadd.f32 %v3312, %v3240
  %v3337 = vadd.f32 %v3313, %v3241
  %v3338 = vadd.f32 %v3314, %v3242
  %v3339 = vadd.f32 %v3315, %v3243
  %v3340 = vadd.f32 %v3316, %v3244
  %v3341 = vadd.f32 %v3317, %v3245
  %v3342 = vadd.f32 %v3318, %v3246
  %v3343 = vadd.f32 %v3319, %v3247
  %v3344 = vadd.f32 %v3320, %v3248
  %v3345 = vadd.f32 %v3321, %v3249
  %v3346 = vadd.f32 %v3322, %v3250
  %v3347 = vadd.f32 %v3323, %v3251
  %v3348 = vadd.f32 %v3324, %v3252
  %v3349 = vadd.f32 %v3325, %v3253
  %v3350 = vadd.f32 %v3326, %v3254
  %v3351 = vadd.f32 %v3327, %v3255
  %v3352 = vadd.f32 %v3328, %v3256
  %v3353 = vadd.f32 %v3329, %v3257
  %v3354 = vadd.f32 %v3330, %v3258
  %vm3355 = vcmp.eq.s32.totalorder %v21, 0
  %vm3356 = vcmp.eq.s32.totalorder %v22, 0
  %vm3357 = vcmp.eq.s32.totalorder %v779, 0
  %vm3358 = vcmp.eq.s32.totalorder %v780, 0
  %vm3359 = vcmp.eq.s32.totalorder %v781, 0
  %vm3360 = vcmp.eq.s32.totalorder %v782, 0
  %vm3361 = vcmp.eq.s32.totalorder %v783, 0
  %vm3362 = vcmp.eq.s32.totalorder %v784, 0
  %vm3363 = vcmp.eq.s32.totalorder %v785, 0
  %vm3364 = vcmp.eq.s32.totalorder %v786, 0
  %vm3365 = vcmp.eq.s32.totalorder %v787, 0
  %vm3366 = vcmp.eq.s32.totalorder %v788, 0
  %v3367 = vadd.f32 %v3113, %v3235
  %v3368 = vadd.f32 %v3114, %v3236
  %v3369 = vadd.f32 %v3115, %v3237
  %v3370 = vadd.f32 %v3116, %v3238
  %v3371 = vadd.f32 %v3117, %v3239
  %v3372 = vadd.f32 %v3118, %v3240
  %v3373 = vadd.f32 %v3119, %v3241
  %v3374 = vadd.f32 %v3120, %v3242
  %v3375 = vadd.f32 %v3121, %v3243
  %v3376 = vadd.f32 %v3122, %v3244
  %v3377 = vadd.f32 %v3123, %v3245
  %v3378 = vadd.f32 %v3124, %v3246
  %v3379 = vadd.f32 %v3125, %v3247
  %v3380 = vadd.f32 %v3126, %v3248
  %v3381 = vadd.f32 %v3127, %v3249
  %v3382 = vadd.f32 %v3128, %v3250
  %v3383 = vadd.f32 %v3129, %v3251
  %v3384 = vadd.f32 %v3130, %v3252
  %v3385 = vadd.f32 %v3131, %v3253
  %v3386 = vadd.f32 %v3132, %v3254
  %v3387 = vadd.f32 %v3133, %v3255
  %v3388 = vadd.f32 %v3134, %v3256
  %v3389 = vadd.f32 %v3135, %v3257
  %v3390 = vadd.f32 %v3136, %v3258
  %v3391 = vsel %vm3355, %v3367, 0.0
  %v3392 = vsel %vm3356, %v3368, 0.0
  %v3393 = vsel %vm3357, %v3369, 0.0
  %v3394 = vsel %vm3358, %v3370, 0.0
  %v3395 = vsel %vm3359, %v3371, 0.0
  %v3396 = vsel %vm3360, %v3372, 0.0
  %v3397 = vsel %vm3361, %v3373, 0.0
  %v3398 = vsel %vm3362, %v3374, 0.0
  %v3399 = vsel %vm3363, %v3375, 0.0
  %v3400 = vsel %vm3364, %v3376, 0.0
  %v3401 = vsel %vm3365, %v3377, 0.0
  %v3402 = vsel %vm3366, %v3378, 0.0
  %v3403 = vsel %vm3355, %v3379, 0.0
  %v3404 = vsel %vm3356, %v3380, 0.0
  %v3405 = vsel %vm3357, %v3381, 0.0
  %v3406 = vsel %vm3358, %v3382, 0.0
  %v3407 = vsel %vm3359, %v3383, 0.0
  %v3408 = vsel %vm3360, %v3384, 0.0
  %v3409 = vsel %vm3361, %v3385, 0.0
  %v3410 = vsel %vm3362, %v3386, 0.0
  %v3411 = vsel %vm3363, %v3387, 0.0
  %v3412 = vsel %vm3364, %v3388, 0.0
  %v3413 = vsel %vm3365, %v3389, 0.0
  %v3414 = vsel %vm3366, %v3390, 0.0
  %v3415 = vadd.f32 %v3331, %v3391
  %v3416 = vadd.f32 %v3332, %v3392
  %v3417 = vadd.f32 %v3333, %v3393
  %v3418 = vadd.f32 %v3334, %v3394
  %v3419 = vadd.f32 %v3335, %v3395
  %v3420 = vadd.f32 %v3336, %v3396
  %v3421 = vadd.f32 %v3337, %v3397
  %v3422 = vadd.f32 %v3338, %v3398
  %v3423 = vadd.f32 %v3339, %v3399
  %v3424 = vadd.f32 %v3340, %v3400
  %v3425 = vadd.f32 %v3341, %v3401
  %v3426 = vadd.f32 %v3342, %v3402
  %v3427 = vadd.f32 %v3343, %v3403
  %v3428 = vadd.f32 %v3344, %v3404
  %v3429 = vadd.f32 %v3345, %v3405
  %v3430 = vadd.f32 %v3346, %v3406
  %v3431 = vadd.f32 %v3347, %v3407
  %v3432 = vadd.f32 %v3348, %v3408
  %v3433 = vadd.f32 %v3349, %v3409
  %v3434 = vadd.f32 %v3350, %v3410
  %v3435 = vadd.f32 %v3351, %v3411
  %v3436 = vadd.f32 %v3352, %v3412
  %v3437 = vadd.f32 %v3353, %v3413
  %v3438 = vadd.f32 %v3354, %v3414
  %vm3439 = vcmp.eq.s32.totalorder %v21, 1
  %vm3440 = vcmp.eq.s32.totalorder %v22, 1
  %vm3441 = vcmp.eq.s32.totalorder %v779, 1
  %vm3442 = vcmp.eq.s32.totalorder %v780, 1
  %vm3443 = vcmp.eq.s32.totalorder %v781, 1
  %vm3444 = vcmp.eq.s32.totalorder %v782, 1
  %vm3445 = vcmp.eq.s32.totalorder %v783, 1
  %vm3446 = vcmp.eq.s32.totalorder %v784, 1
  %vm3447 = vcmp.eq.s32.totalorder %v785, 1
  %vm3448 = vcmp.eq.s32.totalorder %v786, 1
  %vm3449 = vcmp.eq.s32.totalorder %v787, 1
  %vm3450 = vcmp.eq.s32.totalorder %v788, 1
  %v3451 = vsel %vm3439, %v2700, 0.0
  %v3452 = vsel %vm3440, %v2702, 0.0
  %v3453 = vsel %vm3441, %v2704, 0.0
  %v3454 = vsel %vm3442, %v2706, 0.0
  %v3455 = vsel %vm3443, %v2708, 0.0
  %v3456 = vsel %vm3444, %v2710, 0.0
  %v3457 = vsel %vm3445, %v2735, 0.0
  %v3458 = vsel %vm3446, %v2736, 0.0
  %v3459 = vsel %vm3447, %v2737, 0.0
  %v3460 = vsel %vm3448, %v2738, 0.0
  %v3461 = vsel %vm3449, %v2739, 0.0
  %v3462 = vsel %vm3450, %v2740, 0.0
  %v3463 = vsel %vm3439, %v2712, 0.0
  %v3464 = vsel %vm3440, %v2714, 0.0
  %v3465 = vsel %vm3441, %v2716, 0.0
  %v3466 = vsel %vm3442, %v2718, 0.0
  %v3467 = vsel %vm3443, %v2720, 0.0
  %v3468 = vsel %vm3444, %v2722, 0.0
  %v3469 = vsel %vm3445, %v2741, 0.0
  %v3470 = vsel %vm3446, %v2742, 0.0
  %v3471 = vsel %vm3447, %v2743, 0.0
  %v3472 = vsel %vm3448, %v2744, 0.0
  %v3473 = vsel %vm3449, %v2745, 0.0
  %v3474 = vsel %vm3450, %v2746, 0.0
  %v3475 = vadd.f32 %v3415, %v3451
  %v3476 = vadd.f32 %v3416, %v3452
  %v3477 = vadd.f32 %v3417, %v3453
  %v3478 = vadd.f32 %v3418, %v3454
  %v3479 = vadd.f32 %v3419, %v3455
  %v3480 = vadd.f32 %v3420, %v3456
  %v3481 = vadd.f32 %v3421, %v3457
  %v3482 = vadd.f32 %v3422, %v3458
  %v3483 = vadd.f32 %v3423, %v3459
  %v3484 = vadd.f32 %v3424, %v3460
  %v3485 = vadd.f32 %v3425, %v3461
  %v3486 = vadd.f32 %v3426, %v3462
  %v3487 = vadd.f32 %v3427, %v3463
  %v3488 = vadd.f32 %v3428, %v3464
  %v3489 = vadd.f32 %v3429, %v3465
  %v3490 = vadd.f32 %v3430, %v3466
  %v3491 = vadd.f32 %v3431, %v3467
  %v3492 = vadd.f32 %v3432, %v3468
  %v3493 = vadd.f32 %v3433, %v3469
  %v3494 = vadd.f32 %v3434, %v3470
  %v3495 = vadd.f32 %v3435, %v3471
  %v3496 = vadd.f32 %v3436, %v3472
  %v3497 = vadd.f32 %v3437, %v3473
  %v3498 = vadd.f32 %v3438, %v3474
  %vm3499 = vcmp.eq.s32.totalorder %v21, 14
  %vm3500 = vcmp.eq.s32.totalorder %v22, 14
  %vm3501 = vcmp.eq.s32.totalorder %v779, 14
  %vm3502 = vcmp.eq.s32.totalorder %v780, 14
  %vm3503 = vcmp.eq.s32.totalorder %v781, 14
  %vm3504 = vcmp.eq.s32.totalorder %v782, 14
  %vm3505 = vcmp.eq.s32.totalorder %v783, 14
  %vm3506 = vcmp.eq.s32.totalorder %v784, 14
  %vm3507 = vcmp.eq.s32.totalorder %v785, 14
  %vm3508 = vcmp.eq.s32.totalorder %v786, 14
  %vm3509 = vcmp.eq.s32.totalorder %v787, 14
  %vm3510 = vcmp.eq.s32.totalorder %v788, 14
  %v3511 = vsel %vm3499, %v2700, 0.0
  %v3512 = vsel %vm3500, %v2702, 0.0
  %v3513 = vsel %vm3501, %v2704, 0.0
  %v3514 = vsel %vm3502, %v2706, 0.0
  %v3515 = vsel %vm3503, %v2708, 0.0
  %v3516 = vsel %vm3504, %v2710, 0.0
  %v3517 = vsel %vm3505, %v2735, 0.0
  %v3518 = vsel %vm3506, %v2736, 0.0
  %v3519 = vsel %vm3507, %v2737, 0.0
  %v3520 = vsel %vm3508, %v2738, 0.0
  %v3521 = vsel %vm3509, %v2739, 0.0
  %v3522 = vsel %vm3510, %v2740, 0.0
  %v3523 = vsel %vm3499, %v2712, 0.0
  %v3524 = vsel %vm3500, %v2714, 0.0
  %v3525 = vsel %vm3501, %v2716, 0.0
  %v3526 = vsel %vm3502, %v2718, 0.0
  %v3527 = vsel %vm3503, %v2720, 0.0
  %v3528 = vsel %vm3504, %v2722, 0.0
  %v3529 = vsel %vm3505, %v2741, 0.0
  %v3530 = vsel %vm3506, %v2742, 0.0
  %v3531 = vsel %vm3507, %v2743, 0.0
  %v3532 = vsel %vm3508, %v2744, 0.0
  %v3533 = vsel %vm3509, %v2745, 0.0
  %v3534 = vsel %vm3510, %v2746, 0.0
  %v3535 = vadd.f32 %v3475, %v3511
  %v3536 = vadd.f32 %v3476, %v3512
  %v3537 = vadd.f32 %v3477, %v3513
  %v3538 = vadd.f32 %v3478, %v3514
  %v3539 = vadd.f32 %v3479, %v3515
  %v3540 = vadd.f32 %v3480, %v3516
  %v3541 = vadd.f32 %v3481, %v3517
  %v3542 = vadd.f32 %v3482, %v3518
  %v3543 = vadd.f32 %v3483, %v3519
  %v3544 = vadd.f32 %v3484, %v3520
  %v3545 = vadd.f32 %v3485, %v3521
  %v3546 = vadd.f32 %v3486, %v3522
  %v3547 = vadd.f32 %v3487, %v3523
  %v3548 = vadd.f32 %v3488, %v3524
  %v3549 = vadd.f32 %v3489, %v3525
  %v3550 = vadd.f32 %v3490, %v3526
  %v3551 = vadd.f32 %v3491, %v3527
  %v3552 = vadd.f32 %v3492, %v3528
  %v3553 = vadd.f32 %v3493, %v3529
  %v3554 = vadd.f32 %v3494, %v3530
  %v3555 = vadd.f32 %v3495, %v3531
  %v3556 = vadd.f32 %v3496, %v3532
  %v3557 = vadd.f32 %v3497, %v3533
  %v3558 = vadd.f32 %v3498, %v3534
  %vm3559 = vcmp.eq.s32.totalorder %v21, 15
  %vm3560 = vcmp.eq.s32.totalorder %v22, 15
  %vm3561 = vcmp.eq.s32.totalorder %v779, 15
  %vm3562 = vcmp.eq.s32.totalorder %v780, 15
  %vm3563 = vcmp.eq.s32.totalorder %v781, 15
  %vm3564 = vcmp.eq.s32.totalorder %v782, 15
  %vm3565 = vcmp.eq.s32.totalorder %v783, 15
  %vm3566 = vcmp.eq.s32.totalorder %v784, 15
  %vm3567 = vcmp.eq.s32.totalorder %v785, 15
  %vm3568 = vcmp.eq.s32.totalorder %v786, 15
  %vm3569 = vcmp.eq.s32.totalorder %v787, 15
  %vm3570 = vcmp.eq.s32.totalorder %v788, 15
  %v3571 = vsel %vm3559, %v3259, 0.0
  %v3572 = vsel %vm3560, %v3260, 0.0
  %v3573 = vsel %vm3561, %v3261, 0.0
  %v3574 = vsel %vm3562, %v3262, 0.0
  %v3575 = vsel %vm3563, %v3263, 0.0
  %v3576 = vsel %vm3564, %v3264, 0.0
  %v3577 = vsel %vm3565, %v3265, 0.0
  %v3578 = vsel %vm3566, %v3266, 0.0
  %v3579 = vsel %vm3567, %v3267, 0.0
  %v3580 = vsel %vm3568, %v3268, 0.0
  %v3581 = vsel %vm3569, %v3269, 0.0
  %v3582 = vsel %vm3570, %v3270, 0.0
  %v3583 = vsel %vm3559, %v3271, 0.0
  %v3584 = vsel %vm3560, %v3272, 0.0
  %v3585 = vsel %vm3561, %v3273, 0.0
  %v3586 = vsel %vm3562, %v3274, 0.0
  %v3587 = vsel %vm3563, %v3275, 0.0
  %v3588 = vsel %vm3564, %v3276, 0.0
  %v3589 = vsel %vm3565, %v3277, 0.0
  %v3590 = vsel %vm3566, %v3278, 0.0
  %v3591 = vsel %vm3567, %v3279, 0.0
  %v3592 = vsel %vm3568, %v3280, 0.0
  %v3593 = vsel %vm3569, %v3281, 0.0
  %v3594 = vsel %vm3570, %v3282, 0.0
  %v3595 = vadd.f32 %v3535, %v3571
  %v3596 = vadd.f32 %v3536, %v3572
  %v3597 = vadd.f32 %v3537, %v3573
  %v3598 = vadd.f32 %v3538, %v3574
  %v3599 = vadd.f32 %v3539, %v3575
  %v3600 = vadd.f32 %v3540, %v3576
  %v3601 = vadd.f32 %v3541, %v3577
  %v3602 = vadd.f32 %v3542, %v3578
  %v3603 = vadd.f32 %v3543, %v3579
  %v3604 = vadd.f32 %v3544, %v3580
  %v3605 = vadd.f32 %v3545, %v3581
  %v3606 = vadd.f32 %v3546, %v3582
  %v3607 = vadd.f32 %v3547, %v3583
  %v3608 = vadd.f32 %v3548, %v3584
  %v3609 = vadd.f32 %v3549, %v3585
  %v3610 = vadd.f32 %v3550, %v3586
  %v3611 = vadd.f32 %v3551, %v3587
  %v3612 = vadd.f32 %v3552, %v3588
  %v3613 = vadd.f32 %v3553, %v3589
  %v3614 = vadd.f32 %v3554, %v3590
  %v3615 = vadd.f32 %v3555, %v3591
  %v3616 = vadd.f32 %v3556, %v3592
  %v3617 = vadd.f32 %v3557, %v3593
  %v3618 = vadd.f32 %v3558, %v3594
  %3621 = vrot.lane.b32.xlu0 %v3606, 32
  %v3622 = vpop.permute.xlu0 %3621
  %3623 = vrot.lane.b32.xlu0 %v3618, 32
  %v3624 = vpop.permute.xlu0 %3623
  %3649 = vrot.lane.b32.xlu0 %v3595, 32
  %v3650 = vpop.permute.xlu0 %3649
  %3651 = vrot.lane.b32.xlu0 %v3596, 32
  %v3652 = vpop.permute.xlu0 %3651
  %3653 = vrot.lane.b32.xlu0 %v3597, 32
  %v3654 = vpop.permute.xlu0 %3653
  %3655 = vrot.lane.b32.xlu0 %v3598, 32
  %v3656 = vpop.permute.xlu0 %3655
  %3657 = vrot.lane.b32.xlu0 %v3599, 32
  %v3658 = vpop.permute.xlu0 %3657
  %3659 = vrot.lane.b32.xlu0 %v3600, 32
  %v3660 = vpop.permute.xlu0 %3659
  %3661 = vrot.lane.b32.xlu0 %v3601, 32
  %v3662 = vpop.permute.xlu0 %3661
  %3663 = vrot.lane.b32.xlu0 %v3602, 32
  %v3664 = vpop.permute.xlu0 %3663
  %3665 = vrot.lane.b32.xlu0 %v3603, 32
  %v3666 = vpop.permute.xlu0 %3665
  %3667 = vrot.lane.b32.xlu0 %v3604, 32
  %v3668 = vpop.permute.xlu0 %3667
  %3669 = vrot.lane.b32.xlu0 %v3605, 32
  %v3670 = vpop.permute.xlu0 %3669
  %3671 = vrot.lane.b32.xlu0 %v3607, 32
  %v3672 = vpop.permute.xlu0 %3671
  %3673 = vrot.lane.b32.xlu0 %v3608, 32
  %v3674 = vpop.permute.xlu0 %3673
  %3675 = vrot.lane.b32.xlu0 %v3609, 32
  %v3676 = vpop.permute.xlu0 %3675
  %3677 = vrot.lane.b32.xlu0 %v3610, 32
  %v3678 = vpop.permute.xlu0 %3677
  %3679 = vrot.lane.b32.xlu0 %v3611, 32
  %v3680 = vpop.permute.xlu0 %3679
  %3681 = vrot.lane.b32.xlu0 %v3612, 32
  %v3682 = vpop.permute.xlu0 %3681
  %3683 = vrot.lane.b32.xlu0 %v3613, 32
  %v3684 = vpop.permute.xlu0 %3683
  %3685 = vrot.lane.b32.xlu0 %v3614, 32
  %v3686 = vpop.permute.xlu0 %3685
  %3687 = vrot.lane.b32.xlu0 %v3615, 32
  %v3688 = vpop.permute.xlu0 %3687
  %3689 = vrot.lane.b32.xlu0 %v3616, 32
  %v3690 = vpop.permute.xlu0 %3689
  %3691 = vrot.lane.b32.xlu0 %v3617, 32
  %v3692 = vpop.permute.xlu0 %3691
  %v3693 = vsel %vm1453, %v3650, %v3652
  %v3694 = vsel %vm1453, %v3652, %v3654
  %v3695 = vsel %vm1453, %v3654, %v3656
  %v3696 = vsel %vm1453, %v3656, %v3658
  %v3697 = vsel %vm1453, %v3658, %v3660
  %v3698 = vsel %vm1453, %v3660, %v3662
  %v3699 = vsel %vm1453, %v3662, %v3664
  %v3700 = vsel %vm1453, %v3664, %v3666
  %v3701 = vsel %vm1453, %v3666, %v3668
  %v3702 = vsel %vm1453, %v3668, %v3670
  %v3703 = vsel %vm1453, %v3670, %v3622
  %v3704 = vsel %vm1453, %v3672, %v3674
  %v3705 = vsel %vm1453, %v3674, %v3676
  %v3706 = vsel %vm1453, %v3676, %v3678
  %v3707 = vsel %vm1453, %v3678, %v3680
  %v3708 = vsel %vm1453, %v3680, %v3682
  %v3709 = vsel %vm1453, %v3682, %v3684
  %v3710 = vsel %vm1453, %v3684, %v3686
  %v3711 = vsel %vm1453, %v3686, %v3688
  %v3712 = vsel %vm1453, %v3688, %v3690
  %v3713 = vsel %vm1453, %v3690, %v3692
  %v3714 = vsel %vm1453, %v3692, %v3624
  %v3739 = vsel %vm1453, %v3622, %v3650
  %v3740 = vsel %vm1453, %v3624, %v3672
  %v3741 = vsel %vm1367, %v3739, 0.0
  %v3742 = vsel %vm1368, %v3693, 0.0
  %v3743 = vsel %vm1369, %v3694, 0.0
  %v3744 = vsel %vm1370, %v3695, 0.0
  %v3745 = vsel %vm1371, %v3696, 0.0
  %v3746 = vsel %vm1372, %v3697, 0.0
  %v3747 = vsel %vm1373, %v3698, 0.0
  %v3748 = vsel %vm1374, %v3699, 0.0
  %v3749 = vsel %vm1375, %v3700, 0.0
  %v3750 = vsel %vm1376, %v3701, 0.0
  %v3751 = vsel %vm1377, %v3702, 0.0
  %v3752 = vsel %vm1378, %v3703, 0.0
  %v3753 = vsel %vm1367, %v3740, 0.0
  %v3754 = vsel %vm1368, %v3704, 0.0
  %v3755 = vsel %vm1369, %v3705, 0.0
  %v3756 = vsel %vm1370, %v3706, 0.0
  %v3757 = vsel %vm1371, %v3707, 0.0
  %v3758 = vsel %vm1372, %v3708, 0.0
  %v3759 = vsel %vm1373, %v3709, 0.0
  %v3760 = vsel %vm1374, %v3710, 0.0
  %v3761 = vsel %vm1375, %v3711, 0.0
  %v3762 = vsel %vm1376, %v3712, 0.0
  %v3763 = vsel %vm1377, %v3713, 0.0
  %v3764 = vsel %vm1378, %v3714, 0.0
  %3765 = vrot.lane.b32.xlu0 %v3606, 16
  %v3766 = vpop.permute.xlu0 %3765
  %3767 = vrot.lane.b32.xlu0 %v3618, 16
  %v3768 = vpop.permute.xlu0 %3767
  %3771 = vrot.lane.b32.xlu0 %v3595, 16
  %v3772 = vpop.permute.xlu0 %3771
  %3773 = vrot.lane.b32.xlu0 %v3596, 16
  %v3774 = vpop.permute.xlu0 %3773
  %3775 = vrot.lane.b32.xlu0 %v3597, 16
  %v3776 = vpop.permute.xlu0 %3775
  %3777 = vrot.lane.b32.xlu0 %v3598, 16
  %v3778 = vpop.permute.xlu0 %3777
  %3779 = vrot.lane.b32.xlu0 %v3599, 16
  %v3780 = vpop.permute.xlu0 %3779
  %3781 = vrot.lane.b32.xlu0 %v3600, 16
  %v3782 = vpop.permute.xlu0 %3781
  %3783 = vrot.lane.b32.xlu0 %v3601, 16
  %v3784 = vpop.permute.xlu0 %3783
  %3785 = vrot.lane.b32.xlu0 %v3602, 16
  %v3786 = vpop.permute.xlu0 %3785
  %3787 = vrot.lane.b32.xlu0 %v3603, 16
  %v3788 = vpop.permute.xlu0 %3787
  %3789 = vrot.lane.b32.xlu0 %v3604, 16
  %v3790 = vpop.permute.xlu0 %3789
  %3791 = vrot.lane.b32.xlu0 %v3605, 16
  %v3792 = vpop.permute.xlu0 %3791
  %3793 = vrot.lane.b32.xlu0 %v3607, 16
  %v3794 = vpop.permute.xlu0 %3793
  %3795 = vrot.lane.b32.xlu0 %v3608, 16
  %v3796 = vpop.permute.xlu0 %3795
  %3797 = vrot.lane.b32.xlu0 %v3609, 16
  %v3798 = vpop.permute.xlu0 %3797
  %3799 = vrot.lane.b32.xlu0 %v3610, 16
  %v3800 = vpop.permute.xlu0 %3799
  %3801 = vrot.lane.b32.xlu0 %v3611, 16
  %v3802 = vpop.permute.xlu0 %3801
  %3803 = vrot.lane.b32.xlu0 %v3612, 16
  %v3804 = vpop.permute.xlu0 %3803
  %3805 = vrot.lane.b32.xlu0 %v3613, 16
  %v3806 = vpop.permute.xlu0 %3805
  %3807 = vrot.lane.b32.xlu0 %v3614, 16
  %v3808 = vpop.permute.xlu0 %3807
  %3809 = vrot.lane.b32.xlu0 %v3615, 16
  %v3810 = vpop.permute.xlu0 %3809
  %3811 = vrot.lane.b32.xlu0 %v3616, 16
  %v3812 = vpop.permute.xlu0 %3811
  %3813 = vrot.lane.b32.xlu0 %v3617, 16
  %v3814 = vpop.permute.xlu0 %3813
  %v3815 = vsel %vm97, %v3772, %v3774
  %v3816 = vsel %vm97, %v3774, %v3776
  %v3817 = vsel %vm97, %v3776, %v3778
  %v3818 = vsel %vm97, %v3778, %v3780
  %v3819 = vsel %vm97, %v3780, %v3782
  %v3820 = vsel %vm97, %v3782, %v3784
  %v3821 = vsel %vm97, %v3784, %v3786
  %v3822 = vsel %vm97, %v3786, %v3788
  %v3823 = vsel %vm97, %v3788, %v3790
  %v3824 = vsel %vm97, %v3790, %v3792
  %v3825 = vsel %vm97, %v3792, %v3766
  %v3826 = vsel %vm97, %v3794, %v3796
  %v3827 = vsel %vm97, %v3796, %v3798
  %v3828 = vsel %vm97, %v3798, %v3800
  %v3829 = vsel %vm97, %v3800, %v3802
  %v3830 = vsel %vm97, %v3802, %v3804
  %v3831 = vsel %vm97, %v3804, %v3806
  %v3832 = vsel %vm97, %v3806, %v3808
  %v3833 = vsel %vm97, %v3808, %v3810
  %v3834 = vsel %vm97, %v3810, %v3812
  %v3835 = vsel %vm97, %v3812, %v3814
  %v3836 = vsel %vm97, %v3814, %v3768
  %v3861 = vsel %vm97, %v3766, %v3772
  %v3862 = vsel %vm97, %v3768, %v3794
  %v3863 = vsel %vm81, %v3861, 0.0
  %v3864 = vsel %vm82, %v3815, 0.0
  %v3865 = vsel %vm1526, %v3816, 0.0
  %v3866 = vsel %vm1527, %v3817, 0.0
  %v3867 = vsel %vm1528, %v3818, 0.0
  %v3868 = vsel %vm1529, %v3819, 0.0
  %v3869 = vsel %vm1530, %v3820, 0.0
  %v3870 = vsel %vm1531, %v3821, 0.0
  %v3871 = vsel %vm1532, %v3822, 0.0
  %v3872 = vsel %vm1533, %v3823, 0.0
  %v3873 = vsel %vm1534, %v3824, 0.0
  %v3874 = vsel %vm1535, %v3825, 0.0
  %v3875 = vsel %vm81, %v3862, 0.0
  %v3876 = vsel %vm82, %v3826, 0.0
  %v3877 = vsel %vm1526, %v3827, 0.0
  %v3878 = vsel %vm1527, %v3828, 0.0
  %v3879 = vsel %vm1528, %v3829, 0.0
  %v3880 = vsel %vm1529, %v3830, 0.0
  %v3881 = vsel %vm1530, %v3831, 0.0
  %v3882 = vsel %vm1531, %v3832, 0.0
  %v3883 = vsel %vm1532, %v3833, 0.0
  %v3884 = vsel %vm1533, %v3834, 0.0
  %v3885 = vsel %vm1534, %v3835, 0.0
  %v3886 = vsel %vm1535, %v3836, 0.0
  %3887 = vrot.lane.b32.xlu0 %v3595, 112
  %v3888 = vpop.permute.xlu0 %3887
  %3889 = vrot.lane.b32.xlu0 %v3596, 112
  %v3890 = vpop.permute.xlu0 %3889
  %3891 = vrot.lane.b32.xlu0 %v3597, 112
  %v3892 = vpop.permute.xlu0 %3891
  %3893 = vrot.lane.b32.xlu0 %v3598, 112
  %v3894 = vpop.permute.xlu0 %3893
  %3895 = vrot.lane.b32.xlu0 %v3599, 112
  %v3896 = vpop.permute.xlu0 %3895
  %3897 = vrot.lane.b32.xlu0 %v3600, 112
  %v3898 = vpop.permute.xlu0 %3897
  %3899 = vrot.lane.b32.xlu0 %v3601, 112
  %v3900 = vpop.permute.xlu0 %3899
  %3901 = vrot.lane.b32.xlu0 %v3602, 112
  %v3902 = vpop.permute.xlu0 %3901
  %3903 = vrot.lane.b32.xlu0 %v3603, 112
  %v3904 = vpop.permute.xlu0 %3903
  %3905 = vrot.lane.b32.xlu0 %v3604, 112
  %v3906 = vpop.permute.xlu0 %3905
  %3907 = vrot.lane.b32.xlu0 %v3605, 112
  %v3908 = vpop.permute.xlu0 %3907
  %3909 = vrot.lane.b32.xlu0 %v3606, 112
  %v3910 = vpop.permute.xlu0 %3909
  %3911 = vrot.lane.b32.xlu0 %v3607, 112
  %v3912 = vpop.permute.xlu0 %3911
  %3913 = vrot.lane.b32.xlu0 %v3608, 112
  %v3914 = vpop.permute.xlu0 %3913
  %3915 = vrot.lane.b32.xlu0 %v3609, 112
  %v3916 = vpop.permute.xlu0 %3915
  %3917 = vrot.lane.b32.xlu0 %v3610, 112
  %v3918 = vpop.permute.xlu0 %3917
  %3919 = vrot.lane.b32.xlu0 %v3611, 112
  %v3920 = vpop.permute.xlu0 %3919
  %3921 = vrot.lane.b32.xlu0 %v3612, 112
  %v3922 = vpop.permute.xlu0 %3921
  %3923 = vrot.lane.b32.xlu0 %v3613, 112
  %v3924 = vpop.permute.xlu0 %3923
  %3925 = vrot.lane.b32.xlu0 %v3614, 112
  %v3926 = vpop.permute.xlu0 %3925
  %3927 = vrot.lane.b32.xlu0 %v3615, 112
  %v3928 = vpop.permute.xlu0 %3927
  %3929 = vrot.lane.b32.xlu0 %v3616, 112
  %v3930 = vpop.permute.xlu0 %3929
  %3931 = vrot.lane.b32.xlu0 %v3617, 112
  %v3932 = vpop.permute.xlu0 %3931
  %3933 = vrot.lane.b32.xlu0 %v3618, 112
  %v3934 = vpop.permute.xlu0 %3933
  %v3935 = vsel %vm124, %v3888, %v3890
  %v3936 = vsel %vm124, %v3890, %v3892
  %v3937 = vsel %vm124, %v3892, %v3894
  %v3938 = vsel %vm124, %v3894, %v3896
  %v3939 = vsel %vm124, %v3896, %v3898
  %v3940 = vsel %vm124, %v3898, %v3900
  %v3941 = vsel %vm124, %v3900, %v3902
  %v3942 = vsel %vm124, %v3902, %v3904
  %v3943 = vsel %vm124, %v3904, %v3906
  %v3944 = vsel %vm124, %v3906, %v3908
  %v3945 = vsel %vm124, %v3908, %v3910
  %v3946 = vsel %vm124, %v3912, %v3914
  %v3947 = vsel %vm124, %v3914, %v3916
  %v3948 = vsel %vm124, %v3916, %v3918
  %v3949 = vsel %vm124, %v3918, %v3920
  %v3950 = vsel %vm124, %v3920, %v3922
  %v3951 = vsel %vm124, %v3922, %v3924
  %v3952 = vsel %vm124, %v3924, %v3926
  %v3953 = vsel %vm124, %v3926, %v3928
  %v3954 = vsel %vm124, %v3928, %v3930
  %v3955 = vsel %vm124, %v3930, %v3932
  %v3956 = vsel %vm124, %v3932, %v3934
  %v3983 = vsel %vm124, %v3910, %v3888
  %v3984 = vsel %vm124, %v3934, %v3912
  %v3985 = vsel %vm114, %v3935, 0.0
  %v3986 = vsel %vm115, %v3936, 0.0
  %v3987 = vsel %vm1706, %v3937, 0.0
  %v3988 = vsel %vm1707, %v3938, 0.0
  %v3989 = vsel %vm1708, %v3939, 0.0
  %v3990 = vsel %vm1709, %v3940, 0.0
  %v3991 = vsel %vm1710, %v3941, 0.0
  %v3992 = vsel %vm1711, %v3942, 0.0
  %v3993 = vsel %vm1712, %v3943, 0.0
  %v3994 = vsel %vm1713, %v3944, 0.0
  %v3995 = vsel %vm1714, %v3945, 0.0
  %v3996 = vsel %vm1715, %v3983, 0.0
  %v3997 = vsel %vm114, %v3946, 0.0
  %v3998 = vsel %vm115, %v3947, 0.0
  %v3999 = vsel %vm1706, %v3948, 0.0
  %v4000 = vsel %vm1707, %v3949, 0.0
  %v4001 = vsel %vm1708, %v3950, 0.0
  %v4002 = vsel %vm1709, %v3951, 0.0
  %v4003 = vsel %vm1710, %v3952, 0.0
  %v4004 = vsel %vm1711, %v3953, 0.0
  %v4005 = vsel %vm1712, %v3954, 0.0
  %v4006 = vsel %vm1713, %v3955, 0.0
  %v4007 = vsel %vm1714, %v3956, 0.0
  %v4008 = vsel %vm1715, %v3984, 0.0
  %4009 = vrot.lane.b32.xlu0 %v3595, 96
  %v4010 = vpop.permute.xlu0 %4009
  %4011 = vrot.lane.b32.xlu0 %v3596, 96
  %v4012 = vpop.permute.xlu0 %4011
  %4013 = vrot.lane.b32.xlu0 %v3597, 96
  %v4014 = vpop.permute.xlu0 %4013
  %4015 = vrot.lane.b32.xlu0 %v3598, 96
  %v4016 = vpop.permute.xlu0 %4015
  %4017 = vrot.lane.b32.xlu0 %v3599, 96
  %v4018 = vpop.permute.xlu0 %4017
  %4019 = vrot.lane.b32.xlu0 %v3600, 96
  %v4020 = vpop.permute.xlu0 %4019
  %4021 = vrot.lane.b32.xlu0 %v3601, 96
  %v4022 = vpop.permute.xlu0 %4021
  %4023 = vrot.lane.b32.xlu0 %v3602, 96
  %v4024 = vpop.permute.xlu0 %4023
  %4025 = vrot.lane.b32.xlu0 %v3603, 96
  %v4026 = vpop.permute.xlu0 %4025
  %4027 = vrot.lane.b32.xlu0 %v3604, 96
  %v4028 = vpop.permute.xlu0 %4027
  %4029 = vrot.lane.b32.xlu0 %v3605, 96
  %v4030 = vpop.permute.xlu0 %4029
  %4031 = vrot.lane.b32.xlu0 %v3606, 96
  %v4032 = vpop.permute.xlu0 %4031
  %4033 = vrot.lane.b32.xlu0 %v3607, 96
  %v4034 = vpop.permute.xlu0 %4033
  %4035 = vrot.lane.b32.xlu0 %v3608, 96
  %v4036 = vpop.permute.xlu0 %4035
  %4037 = vrot.lane.b32.xlu0 %v3609, 96
  %v4038 = vpop.permute.xlu0 %4037
  %4039 = vrot.lane.b32.xlu0 %v3610, 96
  %v4040 = vpop.permute.xlu0 %4039
  %4041 = vrot.lane.b32.xlu0 %v3611, 96
  %v4042 = vpop.permute.xlu0 %4041
  %4043 = vrot.lane.b32.xlu0 %v3612, 96
  %v4044 = vpop.permute.xlu0 %4043
  %4045 = vrot.lane.b32.xlu0 %v3613, 96
  %v4046 = vpop.permute.xlu0 %4045
  %4047 = vrot.lane.b32.xlu0 %v3614, 96
  %v4048 = vpop.permute.xlu0 %4047
  %4049 = vrot.lane.b32.xlu0 %v3615, 96
  %v4050 = vpop.permute.xlu0 %4049
  %4051 = vrot.lane.b32.xlu0 %v3616, 96
  %v4052 = vpop.permute.xlu0 %4051
  %4053 = vrot.lane.b32.xlu0 %v3617, 96
  %v4054 = vpop.permute.xlu0 %4053
  %4055 = vrot.lane.b32.xlu0 %v3618, 96
  %v4056 = vpop.permute.xlu0 %4055
  %v4057 = vsel %vm1922, %v4010, %v4012
  %v4058 = vsel %vm1922, %v4012, %v4014
  %v4059 = vsel %vm1922, %v4014, %v4016
  %v4060 = vsel %vm1922, %v4016, %v4018
  %v4061 = vsel %vm1922, %v4018, %v4020
  %v4062 = vsel %vm1922, %v4020, %v4022
  %v4063 = vsel %vm1922, %v4022, %v4024
  %v4064 = vsel %vm1922, %v4024, %v4026
  %v4065 = vsel %vm1922, %v4026, %v4028
  %v4066 = vsel %vm1922, %v4028, %v4030
  %v4067 = vsel %vm1922, %v4030, %v4032
  %v4068 = vsel %vm1922, %v4034, %v4036
  %v4069 = vsel %vm1922, %v4036, %v4038
  %v4070 = vsel %vm1922, %v4038, %v4040
  %v4071 = vsel %vm1922, %v4040, %v4042
  %v4072 = vsel %vm1922, %v4042, %v4044
  %v4073 = vsel %vm1922, %v4044, %v4046
  %v4074 = vsel %vm1922, %v4046, %v4048
  %v4075 = vsel %vm1922, %v4048, %v4050
  %v4076 = vsel %vm1922, %v4050, %v4052
  %v4077 = vsel %vm1922, %v4052, %v4054
  %v4078 = vsel %vm1922, %v4054, %v4056
  %v4105 = vsel %vm1922, %v4032, %v4010
  %v4106 = vsel %vm1922, %v4056, %v4034
  %v4107 = vsel %vm1862, %v4057, 0.0
  %v4108 = vsel %vm1863, %v4058, 0.0
  %v4109 = vsel %vm1864, %v4059, 0.0
  %v4110 = vsel %vm1865, %v4060, 0.0
  %v4111 = vsel %vm1866, %v4061, 0.0
  %v4112 = vsel %vm1867, %v4062, 0.0
  %v4113 = vsel %vm1868, %v4063, 0.0
  %v4114 = vsel %vm1869, %v4064, 0.0
  %v4115 = vsel %vm1870, %v4065, 0.0
  %v4116 = vsel %vm1871, %v4066, 0.0
  %v4117 = vsel %vm1872, %v4067, 0.0
  %v4118 = vsel %vm1873, %v4105, 0.0
  %v4119 = vsel %vm1862, %v4068, 0.0
  %v4120 = vsel %vm1863, %v4069, 0.0
  %v4121 = vsel %vm1864, %v4070, 0.0
  %v4122 = vsel %vm1865, %v4071, 0.0
  %v4123 = vsel %vm1866, %v4072, 0.0
  %v4124 = vsel %vm1867, %v4073, 0.0
  %v4125 = vsel %vm1868, %v4074, 0.0
  %v4126 = vsel %vm1869, %v4075, 0.0
  %v4127 = vsel %vm1870, %v4076, 0.0
  %v4128 = vsel %vm1871, %v4077, 0.0
  %v4129 = vsel %vm1872, %v4078, 0.0
  %v4130 = vsel %vm1873, %v4106, 0.0
  %v4131 = vadd.f32 %v3741, %v3863
  %v4132 = vadd.f32 %v3742, %v3864
  %v4133 = vadd.f32 %v3743, %v3865
  %v4134 = vadd.f32 %v3744, %v3866
  %v4135 = vadd.f32 %v3745, %v3867
  %v4136 = vadd.f32 %v3746, %v3868
  %v4137 = vadd.f32 %v3747, %v3869
  %v4138 = vadd.f32 %v3748, %v3870
  %v4139 = vadd.f32 %v3749, %v3871
  %v4140 = vadd.f32 %v3750, %v3872
  %v4141 = vadd.f32 %v3751, %v3873
  %v4142 = vadd.f32 %v3752, %v3874
  %v4143 = vadd.f32 %v3753, %v3875
  %v4144 = vadd.f32 %v3754, %v3876
  %v4145 = vadd.f32 %v3755, %v3877
  %v4146 = vadd.f32 %v3756, %v3878
  %v4147 = vadd.f32 %v3757, %v3879
  %v4148 = vadd.f32 %v3758, %v3880
  %v4149 = vadd.f32 %v3759, %v3881
  %v4150 = vadd.f32 %v3760, %v3882
  %v4151 = vadd.f32 %v3761, %v3883
  %v4152 = vadd.f32 %v3762, %v3884
  %v4153 = vadd.f32 %v3763, %v3885
  %v4154 = vadd.f32 %v3764, %v3886
  %v4155 = vadd.f32 %v4131, %v3595
  %v4156 = vadd.f32 %v4132, %v3596
  %v4157 = vadd.f32 %v4133, %v3597
  %v4158 = vadd.f32 %v4134, %v3598
  %v4159 = vadd.f32 %v4135, %v3599
  %v4160 = vadd.f32 %v4136, %v3600
  %v4161 = vadd.f32 %v4137, %v3601
  %v4162 = vadd.f32 %v4138, %v3602
  %v4163 = vadd.f32 %v4139, %v3603
  %v4164 = vadd.f32 %v4140, %v3604
  %v4165 = vadd.f32 %v4141, %v3605
  %v4166 = vadd.f32 %v4142, %v3606
  %v4167 = vadd.f32 %v4143, %v3607
  %v4168 = vadd.f32 %v4144, %v3608
  %v4169 = vadd.f32 %v4145, %v3609
  %v4170 = vadd.f32 %v4146, %v3610
  %v4171 = vadd.f32 %v4147, %v3611
  %v4172 = vadd.f32 %v4148, %v3612
  %v4173 = vadd.f32 %v4149, %v3613
  %v4174 = vadd.f32 %v4150, %v3614
  %v4175 = vadd.f32 %v4151, %v3615
  %v4176 = vadd.f32 %v4152, %v3616
  %v4177 = vadd.f32 %v4153, %v3617
  %v4178 = vadd.f32 %v4154, %v3618
  %v4179 = vadd.f32 %v4155, %v3985
  %v4180 = vadd.f32 %v4156, %v3986
  %v4181 = vadd.f32 %v4157, %v3987
  %v4182 = vadd.f32 %v4158, %v3988
  %v4183 = vadd.f32 %v4159, %v3989
  %v4184 = vadd.f32 %v4160, %v3990
  %v4185 = vadd.f32 %v4161, %v3991
  %v4186 = vadd.f32 %v4162, %v3992
  %v4187 = vadd.f32 %v4163, %v3993
  %v4188 = vadd.f32 %v4164, %v3994
  %v4189 = vadd.f32 %v4165, %v3995
  %v4190 = vadd.f32 %v4166, %v3996
  %v4191 = vadd.f32 %v4167, %v3997
  %v4192 = vadd.f32 %v4168, %v3998
  %v4193 = vadd.f32 %v4169, %v3999
  %v4194 = vadd.f32 %v4170, %v4000
  %v4195 = vadd.f32 %v4171, %v4001
  %v4196 = vadd.f32 %v4172, %v4002
  %v4197 = vadd.f32 %v4173, %v4003
  %v4198 = vadd.f32 %v4174, %v4004
  %v4199 = vadd.f32 %v4175, %v4005
  %v4200 = vadd.f32 %v4176, %v4006
  %v4201 = vadd.f32 %v4177, %v4007
  %v4202 = vadd.f32 %v4178, %v4008
  %v4203 = vadd.f32 %v4179, %v4107
  %v4204 = vadd.f32 %v4180, %v4108
  %v4205 = vadd.f32 %v4181, %v4109
  %v4206 = vadd.f32 %v4182, %v4110
  %v4207 = vadd.f32 %v4183, %v4111
  %v4208 = vadd.f32 %v4184, %v4112
  %v4209 = vadd.f32 %v4185, %v4113
  %v4210 = vadd.f32 %v4186, %v4114
  %v4211 = vadd.f32 %v4187, %v4115
  %v4212 = vadd.f32 %v4188, %v4116
  %v4213 = vadd.f32 %v4189, %v4117
  %v4214 = vadd.f32 %v4190, %v4118
  %v4215 = vadd.f32 %v4191, %v4119
  %v4216 = vadd.f32 %v4192, %v4120
  %v4217 = vadd.f32 %v4193, %v4121
  %v4218 = vadd.f32 %v4194, %v4122
  %v4219 = vadd.f32 %v4195, %v4123
  %v4220 = vadd.f32 %v4196, %v4124
  %v4221 = vadd.f32 %v4197, %v4125
  %v4222 = vadd.f32 %v4198, %v4126
  %v4223 = vadd.f32 %v4199, %v4127
  %v4224 = vadd.f32 %v4200, %v4128
  %v4225 = vadd.f32 %v4201, %v4129
  %v4226 = vadd.f32 %v4202, %v4130
  %vm4227 = vcmp.eq.s32.totalorder %v25, 0
  %vm4228 = vcmp.eq.s32.totalorder %v26, 0
  %vm4229 = vcmp.eq.s32.totalorder %v799, 0
  %vm4230 = vcmp.eq.s32.totalorder %v800, 0
  %vm4231 = vcmp.eq.s32.totalorder %v801, 0
  %vm4232 = vcmp.eq.s32.totalorder %v802, 0
  %vm4233 = vcmp.eq.s32.totalorder %v803, 0
  %vm4234 = vcmp.eq.s32.totalorder %v804, 0
  %vm4235 = vcmp.eq.s32.totalorder %v805, 0
  %vm4236 = vcmp.eq.s32.totalorder %v806, 0
  %vm4237 = vcmp.eq.s32.totalorder %v807, 0
  %vm4238 = vcmp.eq.s32.totalorder %v808, 0
  %v4239 = vadd.f32 %v3985, %v4107
  %v4240 = vadd.f32 %v3986, %v4108
  %v4241 = vadd.f32 %v3987, %v4109
  %v4242 = vadd.f32 %v3988, %v4110
  %v4243 = vadd.f32 %v3989, %v4111
  %v4244 = vadd.f32 %v3990, %v4112
  %v4245 = vadd.f32 %v3991, %v4113
  %v4246 = vadd.f32 %v3992, %v4114
  %v4247 = vadd.f32 %v3993, %v4115
  %v4248 = vadd.f32 %v3994, %v4116
  %v4249 = vadd.f32 %v3995, %v4117
  %v4250 = vadd.f32 %v3996, %v4118
  %v4251 = vadd.f32 %v3997, %v4119
  %v4252 = vadd.f32 %v3998, %v4120
  %v4253 = vadd.f32 %v3999, %v4121
  %v4254 = vadd.f32 %v4000, %v4122
  %v4255 = vadd.f32 %v4001, %v4123
  %v4256 = vadd.f32 %v4002, %v4124
  %v4257 = vadd.f32 %v4003, %v4125
  %v4258 = vadd.f32 %v4004, %v4126
  %v4259 = vadd.f32 %v4005, %v4127
  %v4260 = vadd.f32 %v4006, %v4128
  %v4261 = vadd.f32 %v4007, %v4129
  %v4262 = vadd.f32 %v4008, %v4130
  %v4263 = vsel %vm4227, %v4239, 0.0
  %v4264 = vsel %vm4228, %v4240, 0.0
  %v4265 = vsel %vm4229, %v4241, 0.0
  %v4266 = vsel %vm4230, %v4242, 0.0
  %v4267 = vsel %vm4231, %v4243, 0.0
  %v4268 = vsel %vm4232, %v4244, 0.0
  %v4269 = vsel %vm4233, %v4245, 0.0
  %v4270 = vsel %vm4234, %v4246, 0.0
  %v4271 = vsel %vm4235, %v4247, 0.0
  %v4272 = vsel %vm4236, %v4248, 0.0
  %v4273 = vsel %vm4237, %v4249, 0.0
  %v4274 = vsel %vm4238, %v4250, 0.0
  %v4275 = vsel %vm4227, %v4251, 0.0
  %v4276 = vsel %vm4228, %v4252, 0.0
  %v4277 = vsel %vm4229, %v4253, 0.0
  %v4278 = vsel %vm4230, %v4254, 0.0
  %v4279 = vsel %vm4231, %v4255, 0.0
  %v4280 = vsel %vm4232, %v4256, 0.0
  %v4281 = vsel %vm4233, %v4257, 0.0
  %v4282 = vsel %vm4234, %v4258, 0.0
  %v4283 = vsel %vm4235, %v4259, 0.0
  %v4284 = vsel %vm4236, %v4260, 0.0
  %v4285 = vsel %vm4237, %v4261, 0.0
  %v4286 = vsel %vm4238, %v4262, 0.0
  %v4287 = vadd.f32 %v4203, %v4263
  %v4288 = vadd.f32 %v4204, %v4264
  %v4289 = vadd.f32 %v4205, %v4265
  %v4290 = vadd.f32 %v4206, %v4266
  %v4291 = vadd.f32 %v4207, %v4267
  %v4292 = vadd.f32 %v4208, %v4268
  %v4293 = vadd.f32 %v4209, %v4269
  %v4294 = vadd.f32 %v4210, %v4270
  %v4295 = vadd.f32 %v4211, %v4271
  %v4296 = vadd.f32 %v4212, %v4272
  %v4297 = vadd.f32 %v4213, %v4273
  %v4298 = vadd.f32 %v4214, %v4274
  %v4299 = vadd.f32 %v4215, %v4275
  %v4300 = vadd.f32 %v4216, %v4276
  %v4301 = vadd.f32 %v4217, %v4277
  %v4302 = vadd.f32 %v4218, %v4278
  %v4303 = vadd.f32 %v4219, %v4279
  %v4304 = vadd.f32 %v4220, %v4280
  %v4305 = vadd.f32 %v4221, %v4281
  %v4306 = vadd.f32 %v4222, %v4282
  %v4307 = vadd.f32 %v4223, %v4283
  %v4308 = vadd.f32 %v4224, %v4284
  %v4309 = vadd.f32 %v4225, %v4285
  %v4310 = vadd.f32 %v4226, %v4286
  %vm4311 = vcmp.eq.s32.totalorder %v25, 1
  %vm4312 = vcmp.eq.s32.totalorder %v26, 1
  %vm4313 = vcmp.eq.s32.totalorder %v799, 1
  %vm4314 = vcmp.eq.s32.totalorder %v800, 1
  %vm4315 = vcmp.eq.s32.totalorder %v801, 1
  %vm4316 = vcmp.eq.s32.totalorder %v802, 1
  %vm4317 = vcmp.eq.s32.totalorder %v803, 1
  %vm4318 = vcmp.eq.s32.totalorder %v804, 1
  %vm4319 = vcmp.eq.s32.totalorder %v805, 1
  %vm4320 = vcmp.eq.s32.totalorder %v806, 1
  %vm4321 = vcmp.eq.s32.totalorder %v807, 1
  %vm4322 = vcmp.eq.s32.totalorder %v808, 1
  %v4323 = vsel %vm4311, %v3595, 0.0
  %v4324 = vsel %vm4312, %v3596, 0.0
  %v4325 = vsel %vm4313, %v3597, 0.0
  %v4326 = vsel %vm4314, %v3598, 0.0
  %v4327 = vsel %vm4315, %v3599, 0.0
  %v4328 = vsel %vm4316, %v3600, 0.0
  %v4329 = vsel %vm4317, %v3601, 0.0
  %v4330 = vsel %vm4318, %v3602, 0.0
  %v4331 = vsel %vm4319, %v3603, 0.0
  %v4332 = vsel %vm4320, %v3604, 0.0
  %v4333 = vsel %vm4321, %v3605, 0.0
  %v4334 = vsel %vm4322, %v3606, 0.0
  %v4335 = vsel %vm4311, %v3607, 0.0
  %v4336 = vsel %vm4312, %v3608, 0.0
  %v4337 = vsel %vm4313, %v3609, 0.0
  %v4338 = vsel %vm4314, %v3610, 0.0
  %v4339 = vsel %vm4315, %v3611, 0.0
  %v4340 = vsel %vm4316, %v3612, 0.0
  %v4341 = vsel %vm4317, %v3613, 0.0
  %v4342 = vsel %vm4318, %v3614, 0.0
  %v4343 = vsel %vm4319, %v3615, 0.0
  %v4344 = vsel %vm4320, %v3616, 0.0
  %v4345 = vsel %vm4321, %v3617, 0.0
  %v4346 = vsel %vm4322, %v3618, 0.0
  %v4347 = vadd.f32 %v4287, %v4323
  %v4348 = vadd.f32 %v4288, %v4324
  %v4349 = vadd.f32 %v4289, %v4325
  %v4350 = vadd.f32 %v4290, %v4326
  %v4351 = vadd.f32 %v4291, %v4327
  %v4352 = vadd.f32 %v4292, %v4328
  %v4353 = vadd.f32 %v4293, %v4329
  %v4354 = vadd.f32 %v4294, %v4330
  %v4355 = vadd.f32 %v4295, %v4331
  %v4356 = vadd.f32 %v4296, %v4332
  %v4357 = vadd.f32 %v4297, %v4333
  %v4358 = vadd.f32 %v4298, %v4334
  %v4359 = vadd.f32 %v4299, %v4335
  %v4360 = vadd.f32 %v4300, %v4336
  %v4361 = vadd.f32 %v4301, %v4337
  %v4362 = vadd.f32 %v4302, %v4338
  %v4363 = vadd.f32 %v4303, %v4339
  %v4364 = vadd.f32 %v4304, %v4340
  %v4365 = vadd.f32 %v4305, %v4341
  %v4366 = vadd.f32 %v4306, %v4342
  %v4367 = vadd.f32 %v4307, %v4343
  %v4368 = vadd.f32 %v4308, %v4344
  %v4369 = vadd.f32 %v4309, %v4345
  %v4370 = vadd.f32 %v4310, %v4346
  %vm4371 = vcmp.eq.s32.totalorder %v25, 14
  %vm4372 = vcmp.eq.s32.totalorder %v26, 14
  %vm4373 = vcmp.eq.s32.totalorder %v799, 14
  %vm4374 = vcmp.eq.s32.totalorder %v800, 14
  %vm4375 = vcmp.eq.s32.totalorder %v801, 14
  %vm4376 = vcmp.eq.s32.totalorder %v802, 14
  %vm4377 = vcmp.eq.s32.totalorder %v803, 14
  %vm4378 = vcmp.eq.s32.totalorder %v804, 14
  %vm4379 = vcmp.eq.s32.totalorder %v805, 14
  %vm4380 = vcmp.eq.s32.totalorder %v806, 14
  %vm4381 = vcmp.eq.s32.totalorder %v807, 14
  %vm4382 = vcmp.eq.s32.totalorder %v808, 14
  %v4383 = vsel %vm4371, %v3595, 0.0
  %v4384 = vsel %vm4372, %v3596, 0.0
  %v4385 = vsel %vm4373, %v3597, 0.0
  %v4386 = vsel %vm4374, %v3598, 0.0
  %v4387 = vsel %vm4375, %v3599, 0.0
  %v4388 = vsel %vm4376, %v3600, 0.0
  %v4389 = vsel %vm4377, %v3601, 0.0
  %v4390 = vsel %vm4378, %v3602, 0.0
  %v4391 = vsel %vm4379, %v3603, 0.0
  %v4392 = vsel %vm4380, %v3604, 0.0
  %v4393 = vsel %vm4381, %v3605, 0.0
  %v4394 = vsel %vm4382, %v3606, 0.0
  %v4395 = vsel %vm4371, %v3607, 0.0
  %v4396 = vsel %vm4372, %v3608, 0.0
  %v4397 = vsel %vm4373, %v3609, 0.0
  %v4398 = vsel %vm4374, %v3610, 0.0
  %v4399 = vsel %vm4375, %v3611, 0.0
  %v4400 = vsel %vm4376, %v3612, 0.0
  %v4401 = vsel %vm4377, %v3613, 0.0
  %v4402 = vsel %vm4378, %v3614, 0.0
  %v4403 = vsel %vm4379, %v3615, 0.0
  %v4404 = vsel %vm4380, %v3616, 0.0
  %v4405 = vsel %vm4381, %v3617, 0.0
  %v4406 = vsel %vm4382, %v3618, 0.0
  %v4407 = vadd.f32 %v4347, %v4383
  %v4408 = vadd.f32 %v4348, %v4384
  %v4409 = vadd.f32 %v4349, %v4385
  %v4410 = vadd.f32 %v4350, %v4386
  %v4411 = vadd.f32 %v4351, %v4387
  %v4412 = vadd.f32 %v4352, %v4388
  %v4413 = vadd.f32 %v4353, %v4389
  %v4414 = vadd.f32 %v4354, %v4390
  %v4415 = vadd.f32 %v4355, %v4391
  %v4416 = vadd.f32 %v4356, %v4392
  %v4417 = vadd.f32 %v4357, %v4393
  %v4418 = vadd.f32 %v4358, %v4394
  %v4419 = vadd.f32 %v4359, %v4395
  %v4420 = vadd.f32 %v4360, %v4396
  %v4421 = vadd.f32 %v4361, %v4397
  %v4422 = vadd.f32 %v4362, %v4398
  %v4423 = vadd.f32 %v4363, %v4399
  %v4424 = vadd.f32 %v4364, %v4400
  %v4425 = vadd.f32 %v4365, %v4401
  %v4426 = vadd.f32 %v4366, %v4402
  %v4427 = vadd.f32 %v4367, %v4403
  %v4428 = vadd.f32 %v4368, %v4404
  %v4429 = vadd.f32 %v4369, %v4405
  %v4430 = vadd.f32 %v4370, %v4406
  %vm4431 = vcmp.eq.s32.totalorder %v25, 15
  %vm4432 = vcmp.eq.s32.totalorder %v26, 15
  %vm4433 = vcmp.eq.s32.totalorder %v799, 15
  %vm4434 = vcmp.eq.s32.totalorder %v800, 15
  %vm4435 = vcmp.eq.s32.totalorder %v801, 15
  %vm4436 = vcmp.eq.s32.totalorder %v802, 15
  %vm4437 = vcmp.eq.s32.totalorder %v803, 15
  %vm4438 = vcmp.eq.s32.totalorder %v804, 15
  %vm4439 = vcmp.eq.s32.totalorder %v805, 15
  %vm4440 = vcmp.eq.s32.totalorder %v806, 15
  %vm4441 = vcmp.eq.s32.totalorder %v807, 15
  %vm4442 = vcmp.eq.s32.totalorder %v808, 15
  %v4443 = vsel %vm4431, %v4131, 0.0
  %v4444 = vsel %vm4432, %v4132, 0.0
  %v4445 = vsel %vm4433, %v4133, 0.0
  %v4446 = vsel %vm4434, %v4134, 0.0
  %v4447 = vsel %vm4435, %v4135, 0.0
  %v4448 = vsel %vm4436, %v4136, 0.0
  %v4449 = vsel %vm4437, %v4137, 0.0
  %v4450 = vsel %vm4438, %v4138, 0.0
  %v4451 = vsel %vm4439, %v4139, 0.0
  %v4452 = vsel %vm4440, %v4140, 0.0
  %v4453 = vsel %vm4441, %v4141, 0.0
  %v4454 = vsel %vm4442, %v4142, 0.0
  %v4455 = vsel %vm4431, %v4143, 0.0
  %v4456 = vsel %vm4432, %v4144, 0.0
  %v4457 = vsel %vm4433, %v4145, 0.0
  %v4458 = vsel %vm4434, %v4146, 0.0
  %v4459 = vsel %vm4435, %v4147, 0.0
  %v4460 = vsel %vm4436, %v4148, 0.0
  %v4461 = vsel %vm4437, %v4149, 0.0
  %v4462 = vsel %vm4438, %v4150, 0.0
  %v4463 = vsel %vm4439, %v4151, 0.0
  %v4464 = vsel %vm4440, %v4152, 0.0
  %v4465 = vsel %vm4441, %v4153, 0.0
  %v4466 = vsel %vm4442, %v4154, 0.0
  %v4467 = vadd.f32 %v4407, %v4443
  %v4468 = vadd.f32 %v4408, %v4444
  %v4469 = vadd.f32 %v4409, %v4445
  %v4470 = vadd.f32 %v4410, %v4446
  %v4471 = vadd.f32 %v4411, %v4447
  %v4472 = vadd.f32 %v4412, %v4448
  %v4473 = vadd.f32 %v4413, %v4449
  %v4474 = vadd.f32 %v4414, %v4450
  %v4475 = vadd.f32 %v4415, %v4451
  %v4476 = vadd.f32 %v4416, %v4452
  %v4477 = vadd.f32 %v4417, %v4453
  %v4478 = vadd.f32 %v4418, %v4454
  %v4479 = vadd.f32 %v4419, %v4455
  %v4480 = vadd.f32 %v4420, %v4456
  %v4481 = vadd.f32 %v4421, %v4457
  %v4482 = vadd.f32 %v4422, %v4458
  %v4483 = vadd.f32 %v4423, %v4459
  %v4484 = vadd.f32 %v4424, %v4460
  %v4485 = vadd.f32 %v4425, %v4461
  %v4486 = vadd.f32 %v4426, %v4462
  %v4487 = vadd.f32 %v4427, %v4463
  %v4488 = vadd.f32 %v4428, %v4464
  %v4489 = vadd.f32 %v4429, %v4465
  %v4490 = vadd.f32 %v4430, %v4466
  %v4503 = vrot.slane %v4479, 6
  %v4504 = vrot.slane %v4480, 6
  %v4505 = vrot.slane %v4481, 6
  %v4506 = vrot.slane %v4482, 6
  %v4507 = vrot.slane %v4483, 6
  %v4508 = vrot.slane %v4484, 6
  %v4509 = vrot.slane %v4485, 6
  %v4510 = vrot.slane %v4486, 6
  %v4511 = vrot.slane %v4487, 6
  %v4512 = vrot.slane %v4488, 6
  %v4513 = vrot.slane %v4489, 6
  %v4514 = vrot.slane %v4490, 6
  %v4539 = vrot.slane %v4467, 6
  %v4540 = vrot.slane %v4468, 6
  %v4541 = vrot.slane %v4469, 6
  %v4542 = vrot.slane %v4470, 6
  %v4543 = vrot.slane %v4471, 6
  %v4544 = vrot.slane %v4472, 6
  %v4545 = vrot.slane %v4473, 6
  %v4546 = vrot.slane %v4474, 6
  %v4547 = vrot.slane %v4475, 6
  %v4548 = vrot.slane %v4476, 6
  %v4549 = vrot.slane %v4477, 6
  %v4550 = vrot.slane %v4478, 6
  %v4551 = vsel %vm859, %v4539, %v4503
  %v4552 = vsel %vm859, %v4540, %v4504
  %v4553 = vsel %vm859, %v4541, %v4505
  %v4554 = vsel %vm859, %v4542, %v4506
  %v4555 = vsel %vm859, %v4543, %v4507
  %v4556 = vsel %vm859, %v4544, %v4508
  %v4557 = vsel %vm859, %v4545, %v4509
  %v4558 = vsel %vm859, %v4546, %v4510
  %v4559 = vsel %vm859, %v4547, %v4511
  %v4560 = vsel %vm859, %v4548, %v4512
  %v4561 = vsel %vm859, %v4549, %v4513
  %v4562 = vsel %vm859, %v4550, %v4514
  %v4587 = vsel %vm859, %v4503, %v4539
  %v4588 = vsel %vm859, %v4504, %v4540
  %v4589 = vsel %vm859, %v4505, %v4541
  %v4590 = vsel %vm859, %v4506, %v4542
  %v4591 = vsel %vm859, %v4507, %v4543
  %v4592 = vsel %vm859, %v4508, %v4544
  %v4593 = vsel %vm859, %v4509, %v4545
  %v4594 = vsel %vm859, %v4510, %v4546
  %v4595 = vsel %vm859, %v4511, %v4547
  %v4596 = vsel %vm859, %v4512, %v4548
  %v4597 = vsel %vm859, %v4513, %v4549
  %v4598 = vsel %vm859, %v4514, %v4550
  %v4599 = vsel %vm809, %v4587, 0.0
  %v4600 = vsel %vm809, %v4588, 0.0
  %v4601 = vsel %vm809, %v4589, 0.0
  %v4602 = vsel %vm809, %v4590, 0.0
  %v4603 = vsel %vm809, %v4591, 0.0
  %v4604 = vsel %vm809, %v4592, 0.0
  %v4605 = vsel %vm809, %v4593, 0.0
  %v4606 = vsel %vm809, %v4594, 0.0
  %v4607 = vsel %vm809, %v4595, 0.0
  %v4608 = vsel %vm809, %v4596, 0.0
  %v4609 = vsel %vm809, %v4597, 0.0
  %v4610 = vsel %vm809, %v4598, 0.0
  %v4611 = vsel %vm810, %v4551, 0.0
  %v4612 = vsel %vm810, %v4552, 0.0
  %v4613 = vsel %vm810, %v4553, 0.0
  %v4614 = vsel %vm810, %v4554, 0.0
  %v4615 = vsel %vm810, %v4555, 0.0
  %v4616 = vsel %vm810, %v4556, 0.0
  %v4617 = vsel %vm810, %v4557, 0.0
  %v4618 = vsel %vm810, %v4558, 0.0
  %v4619 = vsel %vm810, %v4559, 0.0
  %v4620 = vsel %vm810, %v4560, 0.0
  %v4621 = vsel %vm810, %v4561, 0.0
  %v4622 = vsel %vm810, %v4562, 0.0
  %v4623 = vrot.slane %v4479, 7
  %v4624 = vrot.slane %v4480, 7
  %v4625 = vrot.slane %v4481, 7
  %v4626 = vrot.slane %v4482, 7
  %v4627 = vrot.slane %v4483, 7
  %v4628 = vrot.slane %v4484, 7
  %v4629 = vrot.slane %v4485, 7
  %v4630 = vrot.slane %v4486, 7
  %v4631 = vrot.slane %v4487, 7
  %v4632 = vrot.slane %v4488, 7
  %v4633 = vrot.slane %v4489, 7
  %v4634 = vrot.slane %v4490, 7
  %v4647 = vrot.slane %v4467, 7
  %v4648 = vrot.slane %v4468, 7
  %v4649 = vrot.slane %v4469, 7
  %v4650 = vrot.slane %v4470, 7
  %v4651 = vrot.slane %v4471, 7
  %v4652 = vrot.slane %v4472, 7
  %v4653 = vrot.slane %v4473, 7
  %v4654 = vrot.slane %v4474, 7
  %v4655 = vrot.slane %v4475, 7
  %v4656 = vrot.slane %v4476, 7
  %v4657 = vrot.slane %v4477, 7
  %v4658 = vrot.slane %v4478, 7
  %v4659 = vsel %vm37, %v4647, %v4623
  %v4660 = vsel %vm37, %v4648, %v4624
  %v4661 = vsel %vm37, %v4649, %v4625
  %v4662 = vsel %vm37, %v4650, %v4626
  %v4663 = vsel %vm37, %v4651, %v4627
  %v4664 = vsel %vm37, %v4652, %v4628
  %v4665 = vsel %vm37, %v4653, %v4629
  %v4666 = vsel %vm37, %v4654, %v4630
  %v4667 = vsel %vm37, %v4655, %v4631
  %v4668 = vsel %vm37, %v4656, %v4632
  %v4669 = vsel %vm37, %v4657, %v4633
  %v4670 = vsel %vm37, %v4658, %v4634
  %v4695 = vsel %vm37, %v4623, %v4647
  %v4696 = vsel %vm37, %v4624, %v4648
  %v4697 = vsel %vm37, %v4625, %v4649
  %v4698 = vsel %vm37, %v4626, %v4650
  %v4699 = vsel %vm37, %v4627, %v4651
  %v4700 = vsel %vm37, %v4628, %v4652
  %v4701 = vsel %vm37, %v4629, %v4653
  %v4702 = vsel %vm37, %v4630, %v4654
  %v4703 = vsel %vm37, %v4631, %v4655
  %v4704 = vsel %vm37, %v4632, %v4656
  %v4705 = vsel %vm37, %v4633, %v4657
  %v4706 = vsel %vm37, %v4634, %v4658
  %v4707 = vsel %vm27, %v4695, 0.0
  %v4708 = vsel %vm27, %v4696, 0.0
  %v4709 = vsel %vm27, %v4697, 0.0
  %v4710 = vsel %vm27, %v4698, 0.0
  %v4711 = vsel %vm27, %v4699, 0.0
  %v4712 = vsel %vm27, %v4700, 0.0
  %v4713 = vsel %vm27, %v4701, 0.0
  %v4714 = vsel %vm27, %v4702, 0.0
  %v4715 = vsel %vm27, %v4703, 0.0
  %v4716 = vsel %vm27, %v4704, 0.0
  %v4717 = vsel %vm27, %v4705, 0.0
  %v4718 = vsel %vm27, %v4706, 0.0
  %v4719 = vsel %vm28, %v4659, 0.0
  %v4720 = vsel %vm28, %v4660, 0.0
  %v4721 = vsel %vm28, %v4661, 0.0
  %v4722 = vsel %vm28, %v4662, 0.0
  %v4723 = vsel %vm28, %v4663, 0.0
  %v4724 = vsel %vm28, %v4664, 0.0
  %v4725 = vsel %vm28, %v4665, 0.0
  %v4726 = vsel %vm28, %v4666, 0.0
  %v4727 = vsel %vm28, %v4667, 0.0
  %v4728 = vsel %vm28, %v4668, 0.0
  %v4729 = vsel %vm28, %v4669, 0.0
  %v4730 = vsel %vm28, %v4670, 0.0
  %v4731 = vrot.slane %v4467, 1
  %v4732 = vrot.slane %v4479, 1
  %v4733 = vsel %vm58, %v4731, %v4732
  %v4734 = vrot.slane %v4468, 1
  %v4735 = vrot.slane %v4480, 1
  %v4736 = vsel %vm58, %v4734, %v4735
  %v4737 = vrot.slane %v4469, 1
  %v4738 = vrot.slane %v4481, 1
  %v4739 = vsel %vm58, %v4737, %v4738
  %v4740 = vrot.slane %v4470, 1
  %v4741 = vrot.slane %v4482, 1
  %v4742 = vsel %vm58, %v4740, %v4741
  %v4743 = vrot.slane %v4471, 1
  %v4744 = vrot.slane %v4483, 1
  %v4745 = vsel %vm58, %v4743, %v4744
  %v4746 = vrot.slane %v4472, 1
  %v4747 = vrot.slane %v4484, 1
  %v4748 = vsel %vm58, %v4746, %v4747
  %v4749 = vrot.slane %v4473, 1
  %v4750 = vrot.slane %v4485, 1
  %v4751 = vsel %vm58, %v4749, %v4750
  %v4752 = vrot.slane %v4474, 1
  %v4753 = vrot.slane %v4486, 1
  %v4754 = vsel %vm58, %v4752, %v4753
  %v4755 = vrot.slane %v4475, 1
  %v4756 = vrot.slane %v4487, 1
  %v4757 = vsel %vm58, %v4755, %v4756
  %v4758 = vrot.slane %v4476, 1
  %v4759 = vrot.slane %v4488, 1
  %v4760 = vsel %vm58, %v4758, %v4759
  %v4761 = vrot.slane %v4477, 1
  %v4762 = vrot.slane %v4489, 1
  %v4763 = vsel %vm58, %v4761, %v4762
  %v4764 = vrot.slane %v4478, 1
  %v4765 = vrot.slane %v4490, 1
  %v4766 = vsel %vm58, %v4764, %v4765
  %v4803 = vsel %vm58, %v4732, %v4731
  %v4804 = vsel %vm58, %v4735, %v4734
  %v4805 = vsel %vm58, %v4738, %v4737
  %v4806 = vsel %vm58, %v4741, %v4740
  %v4807 = vsel %vm58, %v4744, %v4743
  %v4808 = vsel %vm58, %v4747, %v4746
  %v4809 = vsel %vm58, %v4750, %v4749
  %v4810 = vsel %vm58, %v4753, %v4752
  %v4811 = vsel %vm58, %v4756, %v4755
  %v4812 = vsel %vm58, %v4759, %v4758
  %v4813 = vsel %vm58, %v4762, %v4761
  %v4814 = vsel %vm58, %v4765, %v4764
  %v4815 = vsel %vm56, %v4733, 0.0
  %v4816 = vsel %vm56, %v4736, 0.0
  %v4817 = vsel %vm56, %v4739, 0.0
  %v4818 = vsel %vm56, %v4742, 0.0
  %v4819 = vsel %vm56, %v4745, 0.0
  %v4820 = vsel %vm56, %v4748, 0.0
  %v4821 = vsel %vm56, %v4751, 0.0
  %v4822 = vsel %vm56, %v4754, 0.0
  %v4823 = vsel %vm56, %v4757, 0.0
  %v4824 = vsel %vm56, %v4760, 0.0
  %v4825 = vsel %vm56, %v4763, 0.0
  %v4826 = vsel %vm56, %v4766, 0.0
  %v4827 = vsel %vm57, %v4803, 0.0
  %v4828 = vsel %vm57, %v4804, 0.0
  %v4829 = vsel %vm57, %v4805, 0.0
  %v4830 = vsel %vm57, %v4806, 0.0
  %v4831 = vsel %vm57, %v4807, 0.0
  %v4832 = vsel %vm57, %v4808, 0.0
  %v4833 = vsel %vm57, %v4809, 0.0
  %v4834 = vsel %vm57, %v4810, 0.0
  %v4835 = vsel %vm57, %v4811, 0.0
  %v4836 = vsel %vm57, %v4812, 0.0
  %v4837 = vsel %vm57, %v4813, 0.0
  %v4838 = vsel %vm57, %v4814, 0.0
  %v4839 = vrot.slane %v4467, 2
  %v4840 = vrot.slane %v4479, 2
  %v4841 = vsel %vm1234, %v4839, %v4840
  %v4842 = vrot.slane %v4468, 2
  %v4843 = vrot.slane %v4480, 2
  %v4844 = vsel %vm1234, %v4842, %v4843
  %v4845 = vrot.slane %v4469, 2
  %v4846 = vrot.slane %v4481, 2
  %v4847 = vsel %vm1234, %v4845, %v4846
  %v4848 = vrot.slane %v4470, 2
  %v4849 = vrot.slane %v4482, 2
  %v4850 = vsel %vm1234, %v4848, %v4849
  %v4851 = vrot.slane %v4471, 2
  %v4852 = vrot.slane %v4483, 2
  %v4853 = vsel %vm1234, %v4851, %v4852
  %v4854 = vrot.slane %v4472, 2
  %v4855 = vrot.slane %v4484, 2
  %v4856 = vsel %vm1234, %v4854, %v4855
  %v4857 = vrot.slane %v4473, 2
  %v4858 = vrot.slane %v4485, 2
  %v4859 = vsel %vm1234, %v4857, %v4858
  %v4860 = vrot.slane %v4474, 2
  %v4861 = vrot.slane %v4486, 2
  %v4862 = vsel %vm1234, %v4860, %v4861
  %v4863 = vrot.slane %v4475, 2
  %v4864 = vrot.slane %v4487, 2
  %v4865 = vsel %vm1234, %v4863, %v4864
  %v4866 = vrot.slane %v4476, 2
  %v4867 = vrot.slane %v4488, 2
  %v4868 = vsel %vm1234, %v4866, %v4867
  %v4869 = vrot.slane %v4477, 2
  %v4870 = vrot.slane %v4489, 2
  %v4871 = vsel %vm1234, %v4869, %v4870
  %v4872 = vrot.slane %v4478, 2
  %v4873 = vrot.slane %v4490, 2
  %v4874 = vsel %vm1234, %v4872, %v4873
  %v4911 = vsel %vm1234, %v4840, %v4839
  %v4912 = vsel %vm1234, %v4843, %v4842
  %v4913 = vsel %vm1234, %v4846, %v4845
  %v4914 = vsel %vm1234, %v4849, %v4848
  %v4915 = vsel %vm1234, %v4852, %v4851
  %v4916 = vsel %vm1234, %v4855, %v4854
  %v4917 = vsel %vm1234, %v4858, %v4857
  %v4918 = vsel %vm1234, %v4861, %v4860
  %v4919 = vsel %vm1234, %v4864, %v4863
  %v4920 = vsel %vm1234, %v4867, %v4866
  %v4921 = vsel %vm1234, %v4870, %v4869
  %v4922 = vsel %vm1234, %v4873, %v4872
  %v4923 = vsel %vm1232, %v4841, 0.0
  %v4924 = vsel %vm1232, %v4844, 0.0
  %v4925 = vsel %vm1232, %v4847, 0.0
  %v4926 = vsel %vm1232, %v4850, 0.0
  %v4927 = vsel %vm1232, %v4853, 0.0
  %v4928 = vsel %vm1232, %v4856, 0.0
  %v4929 = vsel %vm1232, %v4859, 0.0
  %v4930 = vsel %vm1232, %v4862, 0.0
  %v4931 = vsel %vm1232, %v4865, 0.0
  %v4932 = vsel %vm1232, %v4868, 0.0
  %v4933 = vsel %vm1232, %v4871, 0.0
  %v4934 = vsel %vm1232, %v4874, 0.0
  %v4935 = vsel %vm1233, %v4911, 0.0
  %v4936 = vsel %vm1233, %v4912, 0.0
  %v4937 = vsel %vm1233, %v4913, 0.0
  %v4938 = vsel %vm1233, %v4914, 0.0
  %v4939 = vsel %vm1233, %v4915, 0.0
  %v4940 = vsel %vm1233, %v4916, 0.0
  %v4941 = vsel %vm1233, %v4917, 0.0
  %v4942 = vsel %vm1233, %v4918, 0.0
  %v4943 = vsel %vm1233, %v4919, 0.0
  %v4944 = vsel %vm1233, %v4920, 0.0
  %v4945 = vsel %vm1233, %v4921, 0.0
  %v4946 = vsel %vm1233, %v4922, 0.0
  %v4947 = vadd.f32 %v4599, %v4707
  %v4948 = vadd.f32 %v4600, %v4708
  %v4949 = vadd.f32 %v4601, %v4709
  %v4950 = vadd.f32 %v4602, %v4710
  %v4951 = vadd.f32 %v4603, %v4711
  %v4952 = vadd.f32 %v4604, %v4712
  %v4953 = vadd.f32 %v4605, %v4713
  %v4954 = vadd.f32 %v4606, %v4714
  %v4955 = vadd.f32 %v4607, %v4715
  %v4956 = vadd.f32 %v4608, %v4716
  %v4957 = vadd.f32 %v4609, %v4717
  %v4958 = vadd.f32 %v4610, %v4718
  %v4959 = vadd.f32 %v4611, %v4719
  %v4960 = vadd.f32 %v4612, %v4720
  %v4961 = vadd.f32 %v4613, %v4721
  %v4962 = vadd.f32 %v4614, %v4722
  %v4963 = vadd.f32 %v4615, %v4723
  %v4964 = vadd.f32 %v4616, %v4724
  %v4965 = vadd.f32 %v4617, %v4725
  %v4966 = vadd.f32 %v4618, %v4726
  %v4967 = vadd.f32 %v4619, %v4727
  %v4968 = vadd.f32 %v4620, %v4728
  %v4969 = vadd.f32 %v4621, %v4729
  %v4970 = vadd.f32 %v4622, %v4730
  %v4971 = vadd.f32 %v4947, %v4467
  %v4972 = vadd.f32 %v4948, %v4468
  %v4973 = vadd.f32 %v4949, %v4469
  %v4974 = vadd.f32 %v4950, %v4470
  %v4975 = vadd.f32 %v4951, %v4471
  %v4976 = vadd.f32 %v4952, %v4472
  %v4977 = vadd.f32 %v4953, %v4473
  %v4978 = vadd.f32 %v4954, %v4474
  %v4979 = vadd.f32 %v4955, %v4475
  %v4980 = vadd.f32 %v4956, %v4476
  %v4981 = vadd.f32 %v4957, %v4477
  %v4982 = vadd.f32 %v4958, %v4478
  %v4983 = vadd.f32 %v4959, %v4479
  %v4984 = vadd.f32 %v4960, %v4480
  %v4985 = vadd.f32 %v4961, %v4481
  %v4986 = vadd.f32 %v4962, %v4482
  %v4987 = vadd.f32 %v4963, %v4483
  %v4988 = vadd.f32 %v4964, %v4484
  %v4989 = vadd.f32 %v4965, %v4485
  %v4990 = vadd.f32 %v4966, %v4486
  %v4991 = vadd.f32 %v4967, %v4487
  %v4992 = vadd.f32 %v4968, %v4488
  %v4993 = vadd.f32 %v4969, %v4489
  %v4994 = vadd.f32 %v4970, %v4490
  %v4995 = vadd.f32 %v4971, %v4815
  %v4996 = vadd.f32 %v4972, %v4816
  %v4997 = vadd.f32 %v4973, %v4817
  %v4998 = vadd.f32 %v4974, %v4818
  %v4999 = vadd.f32 %v4975, %v4819
  %v5000 = vadd.f32 %v4976, %v4820
  %v5001 = vadd.f32 %v4977, %v4821
  %v5002 = vadd.f32 %v4978, %v4822
  %v5003 = vadd.f32 %v4979, %v4823
  %v5004 = vadd.f32 %v4980, %v4824
  %v5005 = vadd.f32 %v4981, %v4825
  %v5006 = vadd.f32 %v4982, %v4826
  %v5007 = vadd.f32 %v4983, %v4827
  %v5008 = vadd.f32 %v4984, %v4828
  %v5009 = vadd.f32 %v4985, %v4829
  %v5010 = vadd.f32 %v4986, %v4830
  %v5011 = vadd.f32 %v4987, %v4831
  %v5012 = vadd.f32 %v4988, %v4832
  %v5013 = vadd.f32 %v4989, %v4833
  %v5014 = vadd.f32 %v4990, %v4834
  %v5015 = vadd.f32 %v4991, %v4835
  %v5016 = vadd.f32 %v4992, %v4836
  %v5017 = vadd.f32 %v4993, %v4837
  %v5018 = vadd.f32 %v4994, %v4838
  %v5019 = vadd.f32 %v4995, %v4923
  %v5020 = vadd.f32 %v4996, %v4924
  %v5021 = vadd.f32 %v4997, %v4925
  %v5022 = vadd.f32 %v4998, %v4926
  %v5023 = vadd.f32 %v4999, %v4927
  %v5024 = vadd.f32 %v5000, %v4928
  %v5025 = vadd.f32 %v5001, %v4929
  %v5026 = vadd.f32 %v5002, %v4930
  %v5027 = vadd.f32 %v5003, %v4931
  %v5028 = vadd.f32 %v5004, %v4932
  %v5029 = vadd.f32 %v5005, %v4933
  %v5030 = vadd.f32 %v5006, %v4934
  %v5031 = vadd.f32 %v5007, %v4935
  %v5032 = vadd.f32 %v5008, %v4936
  %v5033 = vadd.f32 %v5009, %v4937
  %v5034 = vadd.f32 %v5010, %v4938
  %v5035 = vadd.f32 %v5011, %v4939
  %v5036 = vadd.f32 %v5012, %v4940
  %v5037 = vadd.f32 %v5013, %v4941
  %v5038 = vadd.f32 %v5014, %v4942
  %v5039 = vadd.f32 %v5015, %v4943
  %v5040 = vadd.f32 %v5016, %v4944
  %v5041 = vadd.f32 %v5017, %v4945
  %v5042 = vadd.f32 %v5018, %v4946
  %vm5043 = vcmp.eq.s32.totalorder %v19, 0
  %vm5044 = vcmp.eq.s32.totalorder %v20, 0
  %v5045 = vadd.f32 %v4815, %v4923
  %v5046 = vadd.f32 %v4816, %v4924
  %v5047 = vadd.f32 %v4817, %v4925
  %v5048 = vadd.f32 %v4818, %v4926
  %v5049 = vadd.f32 %v4819, %v4927
  %v5050 = vadd.f32 %v4820, %v4928
  %v5051 = vadd.f32 %v4821, %v4929
  %v5052 = vadd.f32 %v4822, %v4930
  %v5053 = vadd.f32 %v4823, %v4931
  %v5054 = vadd.f32 %v4824, %v4932
  %v5055 = vadd.f32 %v4825, %v4933
  %v5056 = vadd.f32 %v4826, %v4934
  %v5057 = vadd.f32 %v4827, %v4935
  %v5058 = vadd.f32 %v4828, %v4936
  %v5059 = vadd.f32 %v4829, %v4937
  %v5060 = vadd.f32 %v4830, %v4938
  %v5061 = vadd.f32 %v4831, %v4939
  %v5062 = vadd.f32 %v4832, %v4940
  %v5063 = vadd.f32 %v4833, %v4941
  %v5064 = vadd.f32 %v4834, %v4942
  %v5065 = vadd.f32 %v4835, %v4943
  %v5066 = vadd.f32 %v4836, %v4944
  %v5067 = vadd.f32 %v4837, %v4945
  %v5068 = vadd.f32 %v4838, %v4946
  %v5069 = vsel %vm5043, %v5045, 0.0
  %v5070 = vsel %vm5043, %v5046, 0.0
  %v5071 = vsel %vm5043, %v5047, 0.0
  %v5072 = vsel %vm5043, %v5048, 0.0
  %v5073 = vsel %vm5043, %v5049, 0.0
  %v5074 = vsel %vm5043, %v5050, 0.0
  %v5075 = vsel %vm5043, %v5051, 0.0
  %v5076 = vsel %vm5043, %v5052, 0.0
  %v5077 = vsel %vm5043, %v5053, 0.0
  %v5078 = vsel %vm5043, %v5054, 0.0
  %v5079 = vsel %vm5043, %v5055, 0.0
  %v5080 = vsel %vm5043, %v5056, 0.0
  %v5081 = vsel %vm5044, %v5057, 0.0
  %v5082 = vsel %vm5044, %v5058, 0.0
  %v5083 = vsel %vm5044, %v5059, 0.0
  %v5084 = vsel %vm5044, %v5060, 0.0
  %v5085 = vsel %vm5044, %v5061, 0.0
  %v5086 = vsel %vm5044, %v5062, 0.0
  %v5087 = vsel %vm5044, %v5063, 0.0
  %v5088 = vsel %vm5044, %v5064, 0.0
  %v5089 = vsel %vm5044, %v5065, 0.0
  %v5090 = vsel %vm5044, %v5066, 0.0
  %v5091 = vsel %vm5044, %v5067, 0.0
  %v5092 = vsel %vm5044, %v5068, 0.0
  %v5093 = vadd.f32 %v5019, %v5069
  %v5094 = vadd.f32 %v5020, %v5070
  %v5095 = vadd.f32 %v5021, %v5071
  %v5096 = vadd.f32 %v5022, %v5072
  %v5097 = vadd.f32 %v5023, %v5073
  %v5098 = vadd.f32 %v5024, %v5074
  %v5099 = vadd.f32 %v5025, %v5075
  %v5100 = vadd.f32 %v5026, %v5076
  %v5101 = vadd.f32 %v5027, %v5077
  %v5102 = vadd.f32 %v5028, %v5078
  %v5103 = vadd.f32 %v5029, %v5079
  %v5104 = vadd.f32 %v5030, %v5080
  %v5105 = vadd.f32 %v5031, %v5081
  %v5106 = vadd.f32 %v5032, %v5082
  %v5107 = vadd.f32 %v5033, %v5083
  %v5108 = vadd.f32 %v5034, %v5084
  %v5109 = vadd.f32 %v5035, %v5085
  %v5110 = vadd.f32 %v5036, %v5086
  %v5111 = vadd.f32 %v5037, %v5087
  %v5112 = vadd.f32 %v5038, %v5088
  %v5113 = vadd.f32 %v5039, %v5089
  %v5114 = vadd.f32 %v5040, %v5090
  %v5115 = vadd.f32 %v5041, %v5091
  %v5116 = vadd.f32 %v5042, %v5092
  %vm5117 = vcmp.eq.s32.totalorder %v19, 1
  %vm5118 = vcmp.eq.s32.totalorder %v20, 1
  %v5119 = vsel %vm5117, %v4467, 0.0
  %v5120 = vsel %vm5117, %v4468, 0.0
  %v5121 = vsel %vm5117, %v4469, 0.0
  %v5122 = vsel %vm5117, %v4470, 0.0
  %v5123 = vsel %vm5117, %v4471, 0.0
  %v5124 = vsel %vm5117, %v4472, 0.0
  %v5125 = vsel %vm5117, %v4473, 0.0
  %v5126 = vsel %vm5117, %v4474, 0.0
  %v5127 = vsel %vm5117, %v4475, 0.0
  %v5128 = vsel %vm5117, %v4476, 0.0
  %v5129 = vsel %vm5117, %v4477, 0.0
  %v5130 = vsel %vm5117, %v4478, 0.0
  %v5131 = vsel %vm5118, %v4479, 0.0
  %v5132 = vsel %vm5118, %v4480, 0.0
  %v5133 = vsel %vm5118, %v4481, 0.0
  %v5134 = vsel %vm5118, %v4482, 0.0
  %v5135 = vsel %vm5118, %v4483, 0.0
  %v5136 = vsel %vm5118, %v4484, 0.0
  %v5137 = vsel %vm5118, %v4485, 0.0
  %v5138 = vsel %vm5118, %v4486, 0.0
  %v5139 = vsel %vm5118, %v4487, 0.0
  %v5140 = vsel %vm5118, %v4488, 0.0
  %v5141 = vsel %vm5118, %v4489, 0.0
  %v5142 = vsel %vm5118, %v4490, 0.0
  %v5143 = vadd.f32 %v5093, %v5119
  %v5144 = vadd.f32 %v5094, %v5120
  %v5145 = vadd.f32 %v5095, %v5121
  %v5146 = vadd.f32 %v5096, %v5122
  %v5147 = vadd.f32 %v5097, %v5123
  %v5148 = vadd.f32 %v5098, %v5124
  %v5149 = vadd.f32 %v5099, %v5125
  %v5150 = vadd.f32 %v5100, %v5126
  %v5151 = vadd.f32 %v5101, %v5127
  %v5152 = vadd.f32 %v5102, %v5128
  %v5153 = vadd.f32 %v5103, %v5129
  %v5154 = vadd.f32 %v5104, %v5130
  %v5155 = vadd.f32 %v5105, %v5131
  %v5156 = vadd.f32 %v5106, %v5132
  %v5157 = vadd.f32 %v5107, %v5133
  %v5158 = vadd.f32 %v5108, %v5134
  %v5159 = vadd.f32 %v5109, %v5135
  %v5160 = vadd.f32 %v5110, %v5136
  %v5161 = vadd.f32 %v5111, %v5137
  %v5162 = vadd.f32 %v5112, %v5138
  %v5163 = vadd.f32 %v5113, %v5139
  %v5164 = vadd.f32 %v5114, %v5140
  %v5165 = vadd.f32 %v5115, %v5141
  %v5166 = vadd.f32 %v5116, %v5142
  %vm5167 = vcmp.eq.s32.totalorder %v19, 14
  %vm5168 = vcmp.eq.s32.totalorder %v20, 14
  %v5169 = vsel %vm5167, %v4467, 0.0
  %v5170 = vsel %vm5167, %v4468, 0.0
  %v5171 = vsel %vm5167, %v4469, 0.0
  %v5172 = vsel %vm5167, %v4470, 0.0
  %v5173 = vsel %vm5167, %v4471, 0.0
  %v5174 = vsel %vm5167, %v4472, 0.0
  %v5175 = vsel %vm5167, %v4473, 0.0
  %v5176 = vsel %vm5167, %v4474, 0.0
  %v5177 = vsel %vm5167, %v4475, 0.0
  %v5178 = vsel %vm5167, %v4476, 0.0
  %v5179 = vsel %vm5167, %v4477, 0.0
  %v5180 = vsel %vm5167, %v4478, 0.0
  %v5181 = vsel %vm5168, %v4479, 0.0
  %v5182 = vsel %vm5168, %v4480, 0.0
  %v5183 = vsel %vm5168, %v4481, 0.0
  %v5184 = vsel %vm5168, %v4482, 0.0
  %v5185 = vsel %vm5168, %v4483, 0.0
  %v5186 = vsel %vm5168, %v4484, 0.0
  %v5187 = vsel %vm5168, %v4485, 0.0
  %v5188 = vsel %vm5168, %v4486, 0.0
  %v5189 = vsel %vm5168, %v4487, 0.0
  %v5190 = vsel %vm5168, %v4488, 0.0
  %v5191 = vsel %vm5168, %v4489, 0.0
  %v5192 = vsel %vm5168, %v4490, 0.0
  %v5193 = vadd.f32 %v5143, %v5169
  %v5194 = vadd.f32 %v5144, %v5170
  %v5195 = vadd.f32 %v5145, %v5171
  %v5196 = vadd.f32 %v5146, %v5172
  %v5197 = vadd.f32 %v5147, %v5173
  %v5198 = vadd.f32 %v5148, %v5174
  %v5199 = vadd.f32 %v5149, %v5175
  %v5200 = vadd.f32 %v5150, %v5176
  %v5201 = vadd.f32 %v5151, %v5177
  %v5202 = vadd.f32 %v5152, %v5178
  %v5203 = vadd.f32 %v5153, %v5179
  %v5204 = vadd.f32 %v5154, %v5180
  %v5205 = vadd.f32 %v5155, %v5181
  %v5206 = vadd.f32 %v5156, %v5182
  %v5207 = vadd.f32 %v5157, %v5183
  %v5208 = vadd.f32 %v5158, %v5184
  %v5209 = vadd.f32 %v5159, %v5185
  %v5210 = vadd.f32 %v5160, %v5186
  %v5211 = vadd.f32 %v5161, %v5187
  %v5212 = vadd.f32 %v5162, %v5188
  %v5213 = vadd.f32 %v5163, %v5189
  %v5214 = vadd.f32 %v5164, %v5190
  %v5215 = vadd.f32 %v5165, %v5191
  %v5216 = vadd.f32 %v5166, %v5192
  %vm5217 = vcmp.eq.s32.totalorder %v19, 15
  %vm5218 = vcmp.eq.s32.totalorder %v20, 15
  %v5219 = vsel %vm5217, %v4947, 0.0
  %v5220 = vsel %vm5217, %v4948, 0.0
  %v5221 = vsel %vm5217, %v4949, 0.0
  %v5222 = vsel %vm5217, %v4950, 0.0
  %v5223 = vsel %vm5217, %v4951, 0.0
  %v5224 = vsel %vm5217, %v4952, 0.0
  %v5225 = vsel %vm5217, %v4953, 0.0
  %v5226 = vsel %vm5217, %v4954, 0.0
  %v5227 = vsel %vm5217, %v4955, 0.0
  %v5228 = vsel %vm5217, %v4956, 0.0
  %v5229 = vsel %vm5217, %v4957, 0.0
  %v5230 = vsel %vm5217, %v4958, 0.0
  %v5231 = vsel %vm5218, %v4959, 0.0
  %v5232 = vsel %vm5218, %v4960, 0.0
  %v5233 = vsel %vm5218, %v4961, 0.0
  %v5234 = vsel %vm5218, %v4962, 0.0
  %v5235 = vsel %vm5218, %v4963, 0.0
  %v5236 = vsel %vm5218, %v4964, 0.0
  %v5237 = vsel %vm5218, %v4965, 0.0
  %v5238 = vsel %vm5218, %v4966, 0.0
  %v5239 = vsel %vm5218, %v4967, 0.0
  %v5240 = vsel %vm5218, %v4968, 0.0
  %v5241 = vsel %vm5218, %v4969, 0.0
  %v5242 = vsel %vm5218, %v4970, 0.0
  %v5243 = vadd.f32 %v5193, %v5219
  %v5244 = vadd.f32 %v5194, %v5220
  %v5245 = vadd.f32 %v5195, %v5221
  %v5246 = vadd.f32 %v5196, %v5222
  %v5247 = vadd.f32 %v5197, %v5223
  %v5248 = vadd.f32 %v5198, %v5224
  %v5249 = vadd.f32 %v5199, %v5225
  %v5250 = vadd.f32 %v5200, %v5226
  %v5251 = vadd.f32 %v5201, %v5227
  %v5252 = vadd.f32 %v5202, %v5228
  %v5253 = vadd.f32 %v5203, %v5229
  %v5254 = vadd.f32 %v5204, %v5230
  %v5255 = vadd.f32 %v5205, %v5231
  %v5256 = vadd.f32 %v5206, %v5232
  %v5257 = vadd.f32 %v5207, %v5233
  %v5258 = vadd.f32 %v5208, %v5234
  %v5259 = vadd.f32 %v5209, %v5235
  %v5260 = vadd.f32 %v5210, %v5236
  %v5261 = vadd.f32 %v5211, %v5237
  %v5262 = vadd.f32 %v5212, %v5238
  %v5263 = vadd.f32 %v5213, %v5239
  %v5264 = vadd.f32 %v5214, %v5240
  %v5265 = vadd.f32 %v5215, %v5241
  %v5266 = vadd.f32 %v5216, %v5242
  %v5267 = vmul.f32 %v5243, 0.008
  %v5268 = vmul.f32 %v5244, 0.008
  %v5269 = vmul.f32 %v5245, 0.008
  %v5270 = vmul.f32 %v5246, 0.008
  %v5271 = vmul.f32 %v5247, 0.008
  %v5272 = vmul.f32 %v5248, 0.008
  %v5273 = vmul.f32 %v5255, 0.008
  %v5274 = vmul.f32 %v5256, 0.008
  %v5275 = vmul.f32 %v5257, 0.008
  %v5276 = vmul.f32 %v5258, 0.008
  %v5277 = vmul.f32 %v5259, 0.008
  %v5278 = vmul.f32 %v5260, 0.008
  %v5279 = vmul.f32 %v5267, 125.0
  %v5280 = vmul.f32 %v5268, 125.0
  %v5281 = vmul.f32 %v5269, 125.0
  %v5282 = vmul.f32 %v5270, 125.0
  %v5283 = vmul.f32 %v5271, 125.0
  %v5284 = vmul.f32 %v5272, 125.0
  %v5285 = vmul.f32 %v5273, 125.0
  %v5286 = vmul.f32 %v5274, 125.0
  %v5287 = vmul.f32 %v5275, 125.0
  %v5288 = vmul.f32 %v5276, 125.0
  %v5289 = vmul.f32 %v5277, 125.0
  %v5290 = vmul.f32 %v5278, 125.0
  %v5291 = vmul.f32 %v5279, %v5267
  %v5292 = vmul.f32 %v5280, %v5268
  %v5293 = vmul.f32 %v5281, %v5269
  %v5294 = vmul.f32 %v5282, %v5270
  %v5295 = vmul.f32 %v5283, %v5271
  %v5296 = vmul.f32 %v5284, %v5272
  %v5297 = vmul.f32 %v5285, %v5273
  %v5298 = vmul.f32 %v5286, %v5274
  %v5299 = vmul.f32 %v5287, %v5275
  %v5300 = vmul.f32 %v5288, %v5276
  %v5301 = vmul.f32 %v5289, %v5277
  %v5302 = vmul.f32 %v5290, %v5278
  %v5303 = vsub.f32 %v5249, %v5291
  %v5304 = vsub.f32 %v5250, %v5292
  %v5305 = vsub.f32 %v5251, %v5293
  %v5306 = vsub.f32 %v5252, %v5294
  %v5307 = vsub.f32 %v5253, %v5295
  %v5308 = vsub.f32 %v5254, %v5296
  %v5309 = vsub.f32 %v5261, %v5297
  %v5310 = vsub.f32 %v5262, %v5298
  %v5311 = vsub.f32 %v5263, %v5299
  %v5312 = vsub.f32 %v5264, %v5300
  %v5313 = vsub.f32 %v5265, %v5301
  %v5314 = vsub.f32 %v5266, %v5302
  %v5315 = vmul.f32 %v5303, 0.008064516
  %v5316 = vmul.f32 %v5304, 0.008064516
  %v5317 = vmul.f32 %v5305, 0.008064516
  %v5318 = vmul.f32 %v5306, 0.008064516
  %v5319 = vmul.f32 %v5307, 0.008064516
  %v5320 = vmul.f32 %v5308, 0.008064516
  %v5321 = vmul.f32 %v5309, 0.008064516
  %v5322 = vmul.f32 %v5310, 0.008064516
  %v5323 = vmul.f32 %v5311, 0.008064516
  %v5324 = vmul.f32 %v5312, 0.008064516
  %v5325 = vmul.f32 %v5313, 0.008064516
  %v5326 = vmul.f32 %v5314, 0.008064516
  %v5327 = vmax.f32 %v5315, 0.0
  %v5328 = vmax.f32 %v5316, 0.0
  %v5329 = vmax.f32 %v5317, 0.0
  %v5330 = vmax.f32 %v5318, 0.0
  %v5331 = vmax.f32 %v5319, 0.0
  %v5332 = vmax.f32 %v5320, 0.0
  %v5333 = vmax.f32 %v5321, 0.0
  %v5334 = vmax.f32 %v5322, 0.0
  %v5335 = vmax.f32 %v5323, 0.0
  %v5336 = vmax.f32 %v5324, 0.0
  %v5337 = vmax.f32 %v5325, 0.0
  %v5338 = vmax.f32 %v5326, 0.0
  %v5339 = vadd.f32 %v5327, %v5329
  %v5340 = vadd.f32 %v5328, %v5330
  %v5341 = vadd.f32 %v5333, %v5335
  %v5342 = vadd.f32 %v5334, %v5336
  %v5343 = vadd.f32 %v5339, %v5331
  %v5344 = vadd.f32 %v5340, %v5332
  %v5345 = vadd.f32 %v5341, %v5337
  %v5346 = vadd.f32 %v5342, %v5338
  %vm5347 = vcmp.eq.f32.partialorder %v245, 0.0
  %vm5348 = vcmp.eq.f32.partialorder %v246, 0.0
  %vm5349 = vcmp.eq.f32.partialorder %v247, 0.0
  %vm5350 = vcmp.eq.f32.partialorder %v248, 0.0
  %v5351 = vsel %vm5347, 0.0, %v5343
  %v5352 = vsel %vm5348, 0.0, %v5344
  %v5353 = vsel %vm5349, 0.0, %v5345
  %v5354 = vsel %vm5350, 0.0, %v5346
  %v5357 = vrot.slane %v5353, 6
  %v5358 = vrot.slane %v5354, 6
  %v5363 = vrot.slane %v5351, 6
  %v5364 = vrot.slane %v5352, 6
  %v5365 = vsel %vm859, %v5363, %v5357
  %v5366 = vsel %vm859, %v5364, %v5358
  %v5371 = vsel %vm859, %v5357, %v5363
  %v5372 = vsel %vm859, %v5358, %v5364
  %v5373 = vsel %vm809, %v5371, 0.0
  %v5374 = vsel %vm809, %v5372, 0.0
  %v5375 = vsel %vm810, %v5365, 0.0
  %v5376 = vsel %vm810, %v5366, 0.0
  %v5377 = vrot.slane %v5353, 7
  %v5378 = vrot.slane %v5354, 7
  %v5381 = vrot.slane %v5351, 7
  %v5382 = vrot.slane %v5352, 7
  %v5383 = vsel %vm37, %v5381, %v5377
  %v5384 = vsel %vm37, %v5382, %v5378
  %v5389 = vsel %vm37, %v5377, %v5381
  %v5390 = vsel %vm37, %v5378, %v5382
  %v5391 = vsel %vm27, %v5389, 0.0
  %v5392 = vsel %vm27, %v5390, 0.0
  %v5393 = vsel %vm28, %v5383, 0.0
  %v5394 = vsel %vm28, %v5384, 0.0
  %v5395 = vadd.f32 %v5373, %v5391
  %v5396 = vadd.f32 %v5374, %v5392
  %v5397 = vadd.f32 %v5375, %v5393
  %v5398 = vadd.f32 %v5376, %v5394
  %v5399 = vadd.f32 %v5395, %v5351
  %v5400 = vadd.f32 %v5396, %v5352
  %v5401 = vadd.f32 %v5397, %v5353
  %v5402 = vadd.f32 %v5398, %v5354
  %v5403 = vrot.slane %v5351, 1
  %v5404 = vrot.slane %v5353, 1
  %v5405 = vsel %vm58, %v5403, %v5404
  %v5406 = vrot.slane %v5352, 1
  %v5407 = vrot.slane %v5354, 1
  %v5408 = vsel %vm58, %v5406, %v5407
  %v5415 = vsel %vm58, %v5404, %v5403
  %v5416 = vsel %vm58, %v5407, %v5406
  %v5417 = vsel %vm56, %v5405, 0.0
  %v5418 = vsel %vm56, %v5408, 0.0
  %v5419 = vsel %vm57, %v5415, 0.0
  %v5420 = vsel %vm57, %v5416, 0.0
  %v5421 = vadd.f32 %v5399, %v5417
  %v5422 = vadd.f32 %v5400, %v5418
  %v5423 = vadd.f32 %v5401, %v5419
  %v5424 = vadd.f32 %v5402, %v5420
  %v5425 = vrot.slane %v5351, 2
  %v5426 = vrot.slane %v5353, 2
  %v5427 = vsel %vm1234, %v5425, %v5426
  %v5428 = vrot.slane %v5352, 2
  %v5429 = vrot.slane %v5354, 2
  %v5430 = vsel %vm1234, %v5428, %v5429
  %v5437 = vsel %vm1234, %v5426, %v5425
  %v5438 = vsel %vm1234, %v5429, %v5428
  %v5439 = vsel %vm1232, %v5427, 0.0
  %v5440 = vsel %vm1232, %v5430, 0.0
  %v5441 = vsel %vm1233, %v5437, 0.0
  %v5442 = vsel %vm1233, %v5438, 0.0
  %v5443 = vadd.f32 %v5421, %v5439
  %v5444 = vadd.f32 %v5422, %v5440
  %v5445 = vadd.f32 %v5423, %v5441
  %v5446 = vadd.f32 %v5424, %v5442
  %5449 = vrot.lane.b32.xlu0 %v5444, 32
  %v5450 = vpop.permute.xlu0 %5449
  %5451 = vrot.lane.b32.xlu0 %v5446, 32
  %v5452 = vpop.permute.xlu0 %5451
  %5457 = vrot.lane.b32.xlu0 %v5443, 32
  %v5458 = vpop.permute.xlu0 %5457
  %5459 = vrot.lane.b32.xlu0 %v5445, 32
  %v5460 = vpop.permute.xlu0 %5459
  %v5461 = vsel %vm1453, %v5458, %v5450
  %v5462 = vsel %vm1453, %v5460, %v5452
  %v5467 = vsel %vm1453, %v5450, %v5458
  %v5468 = vsel %vm1453, %v5452, %v5460
  %v5469 = vsel %vm1367, %v5467, 0.0
  %v5470 = vsel %vm1368, %v5461, 0.0
  %v5471 = vsel %vm1367, %v5468, 0.0
  %v5472 = vsel %vm1368, %v5462, 0.0
  %5473 = vrot.lane.b32.xlu0 %v5444, 16
  %v5474 = vpop.permute.xlu0 %5473
  %5475 = vrot.lane.b32.xlu0 %v5446, 16
  %v5476 = vpop.permute.xlu0 %5475
  %5479 = vrot.lane.b32.xlu0 %v5443, 16
  %v5480 = vpop.permute.xlu0 %5479
  %5481 = vrot.lane.b32.xlu0 %v5445, 16
  %v5482 = vpop.permute.xlu0 %5481
  %v5483 = vsel %vm97, %v5480, %v5474
  %v5484 = vsel %vm97, %v5482, %v5476
  %v5489 = vsel %vm97, %v5474, %v5480
  %v5490 = vsel %vm97, %v5476, %v5482
  %v5491 = vsel %vm81, %v5489, 0.0
  %v5492 = vsel %vm82, %v5483, 0.0
  %v5493 = vsel %vm81, %v5490, 0.0
  %v5494 = vsel %vm82, %v5484, 0.0
  %v5495 = vadd.f32 %v5469, %v5491
  %v5496 = vadd.f32 %v5470, %v5492
  %v5497 = vadd.f32 %v5471, %v5493
  %v5498 = vadd.f32 %v5472, %v5494
  %v5499 = vadd.f32 %v5495, %v5443
  %v5500 = vadd.f32 %v5496, %v5444
  %v5501 = vadd.f32 %v5497, %v5445
  %v5502 = vadd.f32 %v5498, %v5446
  %5503 = vrot.lane.b32.xlu0 %v5443, 112
  %v5504 = vpop.permute.xlu0 %5503
  %5505 = vrot.lane.b32.xlu0 %v5444, 112
  %v5506 = vpop.permute.xlu0 %5505
  %5507 = vrot.lane.b32.xlu0 %v5445, 112
  %v5508 = vpop.permute.xlu0 %5507
  %5509 = vrot.lane.b32.xlu0 %v5446, 112
  %v5510 = vpop.permute.xlu0 %5509
  %v5511 = vsel %vm124, %v5504, %v5506
  %v5512 = vsel %vm124, %v5508, %v5510
  %v5519 = vsel %vm124, %v5506, %v5504
  %v5520 = vsel %vm124, %v5510, %v5508
  %v5521 = vsel %vm114, %v5511, 0.0
  %v5522 = vsel %vm115, %v5519, 0.0
  %v5523 = vsel %vm114, %v5512, 0.0
  %v5524 = vsel %vm115, %v5520, 0.0
  %v5525 = vadd.f32 %v5499, %v5521
  %v5526 = vadd.f32 %v5500, %v5522
  %v5527 = vadd.f32 %v5501, %v5523
  %v5528 = vadd.f32 %v5502, %v5524
  %5529 = vrot.lane.b32.xlu0 %v5443, 96
  %v5530 = vpop.permute.xlu0 %5529
  %5531 = vrot.lane.b32.xlu0 %v5444, 96
  %v5532 = vpop.permute.xlu0 %5531
  %5533 = vrot.lane.b32.xlu0 %v5445, 96
  %v5534 = vpop.permute.xlu0 %5533
  %5535 = vrot.lane.b32.xlu0 %v5446, 96
  %v5536 = vpop.permute.xlu0 %5535
  %v5537 = vsel %vm1922, %v5530, %v5532
  %v5538 = vsel %vm1922, %v5534, %v5536
  %v5545 = vsel %vm1922, %v5532, %v5530
  %v5546 = vsel %vm1922, %v5536, %v5534
  %v5547 = vsel %vm1862, %v5537, 0.0
  %v5548 = vsel %vm1863, %v5545, 0.0
  %v5549 = vsel %vm1862, %v5538, 0.0
  %v5550 = vsel %vm1863, %v5546, 0.0
  %v5551 = vadd.f32 %v5525, %v5547
  %v5552 = vadd.f32 %v5526, %v5548
  %v5553 = vadd.f32 %v5527, %v5549
  %v5554 = vadd.f32 %v5528, %v5550
  %5557 = vrot.lane.b32.xlu0 %v5552, 2
  %v5558 = vpop.permute.xlu0 %5557
  %5559 = vrot.lane.b32.xlu0 %v5554, 2
  %v5560 = vpop.permute.xlu0 %5559
  %5565 = vrot.lane.b32.xlu0 %v5551, 2
  %v5566 = vpop.permute.xlu0 %5565
  %5567 = vrot.lane.b32.xlu0 %v5553, 2
  %v5568 = vpop.permute.xlu0 %5567
  %v5569 = vsel %vm2107, %v5566, %v5558
  %v5570 = vsel %vm2107, %v5568, %v5560
  %v5575 = vsel %vm2107, %v5558, %v5566
  %v5576 = vsel %vm2107, %v5560, %v5568
  %v5577 = vsel %vm2021, %v5575, 0.0
  %v5578 = vsel %vm2022, %v5569, 0.0
  %v5579 = vsel %vm2021, %v5576, 0.0
  %v5580 = vsel %vm2022, %v5570, 0.0
  %5581 = vrot.lane.b32.xlu0 %v5552, 1
  %v5582 = vpop.permute.xlu0 %5581
  %5583 = vrot.lane.b32.xlu0 %v5554, 1
  %v5584 = vpop.permute.xlu0 %5583
  %5587 = vrot.lane.b32.xlu0 %v5551, 1
  %v5588 = vpop.permute.xlu0 %5587
  %5589 = vrot.lane.b32.xlu0 %v5553, 1
  %v5590 = vpop.permute.xlu0 %5589
  %v5591 = vsel %vm159, %v5588, %v5582
  %v5592 = vsel %vm159, %v5590, %v5584
  %v5597 = vsel %vm159, %v5582, %v5588
  %v5598 = vsel %vm159, %v5584, %v5590
  %v5599 = vsel %vm143, %v5597, 0.0
  %v5600 = vsel %vm144, %v5591, 0.0
  %v5601 = vsel %vm143, %v5598, 0.0
  %v5602 = vsel %vm144, %v5592, 0.0
  %v5603 = vadd.f32 %v5577, %v5599
  %v5604 = vadd.f32 %v5578, %v5600
  %v5605 = vadd.f32 %v5579, %v5601
  %v5606 = vadd.f32 %v5580, %v5602
  %v5607 = vadd.f32 %v5603, %v5551
  %v5608 = vadd.f32 %v5604, %v5552
  %v5609 = vadd.f32 %v5605, %v5553
  %v5610 = vadd.f32 %v5606, %v5554
  %5611 = vrot.lane.b32.xlu0 %v5551, 127
  %v5612 = vpop.permute.xlu0 %5611
  %5613 = vrot.lane.b32.xlu0 %v5552, 127
  %v5614 = vpop.permute.xlu0 %5613
  %5615 = vrot.lane.b32.xlu0 %v5553, 127
  %v5616 = vpop.permute.xlu0 %5615
  %5617 = vrot.lane.b32.xlu0 %v5554, 127
  %v5618 = vpop.permute.xlu0 %5617
  %v5619 = vsel %vm186, %v5612, %v5614
  %v5620 = vsel %vm186, %v5616, %v5618
  %v5627 = vsel %vm186, %v5614, %v5612
  %v5628 = vsel %vm186, %v5618, %v5616
  %v5629 = vsel %vm176, %v5619, 0.0
  %v5630 = vsel %vm177, %v5627, 0.0
  %v5631 = vsel %vm176, %v5620, 0.0
  %v5632 = vsel %vm177, %v5628, 0.0
  %v5633 = vadd.f32 %v5607, %v5629
  %v5634 = vadd.f32 %v5608, %v5630
  %v5635 = vadd.f32 %v5609, %v5631
  %v5636 = vadd.f32 %v5610, %v5632
  %5637 = vrot.lane.b32.xlu0 %v5551, 126
  %v5638 = vpop.permute.xlu0 %5637
  %5639 = vrot.lane.b32.xlu0 %v5552, 126
  %v5640 = vpop.permute.xlu0 %5639
  %5641 = vrot.lane.b32.xlu0 %v5553, 126
  %v5642 = vpop.permute.xlu0 %5641
  %5643 = vrot.lane.b32.xlu0 %v5554, 126
  %v5644 = vpop.permute.xlu0 %5643
  %v5645 = vsel %vm2576, %v5638, %v5640
  %v5646 = vsel %vm2576, %v5642, %v5644
  %v5653 = vsel %vm2576, %v5640, %v5638
  %v5654 = vsel %vm2576, %v5644, %v5642
  %v5655 = vsel %vm2516, %v5645, 0.0
  %v5656 = vsel %vm2517, %v5653, 0.0
  %v5657 = vsel %vm2516, %v5646, 0.0
  %v5658 = vsel %vm2517, %v5654, 0.0
  %v5659 = vadd.f32 %v5633, %v5655
  %v5660 = vadd.f32 %v5634, %v5656
  %v5661 = vadd.f32 %v5635, %v5657
  %v5662 = vadd.f32 %v5636, %v5658
  %v5663 = vsel %vm5347, 0.0, %v5659
  %v5664 = vsel %vm5348, 0.0, %v5660
  %v5665 = vsel %vm5349, 0.0, %v5661
  %v5666 = vsel %vm5350, 0.0, %v5662
  %5667 = vst [vmem:[%s3] sm:$0xff] %v5663
  %5668 = vst [vmem:[%s3 + $0x8] sm:$0xff] %v5664
  %5669 = vst [vmem:[%s3 + $0x10] sm:$0xff] %v5665
  %5670 = vst [vmem:[%s3 + $0x18] sm:$0xff] %v5666
  // Predicated region
  $region6: #{morph_forward.2} parent=0 // pred_check
    _
  $region7: #{morph_forward.2} parent=0 // pred_check_branch
    %5672 = sbr.rel (0) target = $region9
  $region8: #{morph_forward.2} parent=0 // pred_region
    _
  $region9: #{morph_forward.2} parent=0 // pred_fallthru
    _
  // Predicated region
  $region10: #{morph_forward.2} parent=0 // pred_check
    _
  $region11: #{morph_forward.2} parent=0 // pred_check_branch
    %5674 = sbr.rel (0) target = $region13
  $region12: #{morph_forward.2} parent=0 // pred_region
    _
  $region13: #{morph_forward.2} parent=0 // pred_fallthru
    _
  // Predicated region
  $region14: #{morph_forward.2} parent=0 // pred_check
    _
  $region15: #{morph_forward.2} parent=0 // pred_check_branch
    %5676 = sbr.rel (0) target = $region17
  $region16: #{morph_forward.2} parent=0 // pred_region
    _
  $region17: #{morph_forward.2} parent=0 // pred_fallthru
    _
  // Predicated region
  $region18: #{morph_forward.2} parent=0 // pred_check
    _
  $region19: #{morph_forward.2} parent=0 // pred_check_branch
    %5678 = sbr.rel (0) target = $region21
  $region20: #{morph_forward.2} parent=0 // pred_region
    _
  $region21: #{morph_forward.2} parent=0 // pred_fallthru
    _
  // Predicated region
  $region22: #{morph_forward.2} parent=0 // pred_check
    _
  $region23: #{morph_forward.2} parent=0 // pred_check_branch
    %5680 = sbr.rel (0) target = $region25
  $region24: #{morph_forward.2} parent=0 // pred_region
    _
  $region25: #{morph_forward.2} parent=0 // pred_fallthru
    _
  // Predicated region
  $region26: #{morph_forward.2} parent=0 // pred_check
    _
  $region27: #{morph_forward.2} parent=0 // pred_check_branch
    %5682 = sbr.rel (0) target = $region29
  $region28: #{morph_forward.2} parent=0 // pred_region
    _
  $region29: #{morph_forward.2} parent=0 // pred_fallthru
    _

</llo_original>
